<compile_context>
chip_gen: v6e
topology: v6e:2x2x1
jax: 0.10.0
libtpu: 0.0.40
codegen_flags: <defaults>
</compile_context>

<pallas_src>
import math
import functools

import jax
import jax.numpy as jnp
from jax import lax
from jax.experimental import pallas as pl
from jax.experimental.pallas import tpu as pltpu

SQRT2 = math.sqrt(2.0)
_TAPS3 = tuple((dy, dx) for dy in range(3) for dx in range(3))   # t = dy*3 + dx


def _round_up(x, m):
    return (x + m - 1) // m * m


# --------------------------------- kernel -----------------------------------

def _resblock_kernel(x_ref, w1_ref, b1_ref, w2_ref, b2_ref, ws_ref,
                     o_ref, s1_ref, s2_ref, so_ref, *, H, W, NB):
    """Whole ResBlock for NB images, fully VMEM resident.

    x_ref  : (NB, H+2, W+2, CI) bf16   input, zero-padded 1 px per side (host)
    w1_ref : (9, CI, CI)  bf16         conv1 3x3 (EqualConv2d scale folded in)
    b1_ref : (1, CI)      f32          conv1 FusedLeakyReLU bias
    w2_ref : (9, CI, CO)  bf16         conv2 3x3 (scale * sqrt(2) * 1/16 folded)
    b2_ref : (1, CO)      f32          conv2 FusedLeakyReLU bias
    ws_ref : (CI, CO)     bf16         skip 1x1 (scale / 16 / sqrt(2) folded)
    o_ref  : (NB, H/2, W/2, CO) f32    final ResBlock output (NHWC)
    s1_ref : (NB, H+2, W+2, CI) bf16   scratch: zero-bordered conv1 output
    s2_ref : (NB, H+2, W+2, CI) bf16   scratch: zero-bordered blur(conv1 out)
    so_ref : (NB, H/2, W, CO)   f32    scratch: even-row result before W::2
    """
    CI = x_ref.shape[-1]
    CO = o_ref.shape[-1]
    Ho, Wo = H // 2, W // 2
    M1 = NB * H * W            # conv1 pixels (full res)
    M2 = NB * Ho * W           # conv2/skip pixels (even rows, all cols)
    f32 = jnp.float32
    bf16 = jnp.bfloat16

    # ---- conv1: 3x3 s1 p1 (no conv bias) + bias + leaky(0.2) -----------------
    # FusedLeakyReLU's sqrt(2) gain is folded into w2 (blur+conv2 are linear).
    acc1 = jnp.zeros((M1, CI), f32)
    for t, (dy, dx) in enumerate(_TAPS3):
        win = x_ref[:, dy:dy + H, dx:dx + W, :].reshape(M1, CI)
        acc1 = acc1 + jnp.dot(win, w1_ref[t], preferred_element_type=f32)
    y1 = acc1 + b1_ref[...]
    out1 = jnp.maximum(y1, 0.2 * y1).astype(bf16)

    # ---- stash out1 in a zero-bordered bf16 scratch (thin-border zeroing) ----
    zrow = jnp.zeros((NB, 1, W + 2, CI), bf16)
    zcol = jnp.zeros((NB, H + 2, 1, CI), bf16)
    s1_ref[:, 0:1, :, :] = zrow
    s1_ref[:, H + 1:H + 2, :, :] = zrow
    s1_ref[:, :, 0:1, :] = zcol
    s1_ref[:, :, W + 1:W + 2, :] = zcol
    s1_ref[:, 1:H + 1, 1:W + 1, :] = out1.reshape(NB, H, W, CI)

    # ---- Blur(out1): separable [1,2,1] x [1,2,1]; the 1/16 lives in w2 -------
    r0 = s1_ref[:, :, 0:W, :].astype(f32)
    r1 = s1_ref[:, :, 1:W + 1, :].astype(f32)
    r2 = s1_ref[:, :, 2:W + 2, :].astype(f32)
    rs = r0 + 2.0 * r1 + r2                                   # (NB, H+2, W, CI)
    blur1 = rs[:, 0:H] + 2.0 * rs[:, 1:H + 1] + rs[:, 2:H + 2]

    s2_ref[:, 0:1, :, :] = zrow
    s2_ref[:, H + 1:H + 2, :, :] = zrow
    s2_ref[:, :, 0:1, :] = zcol
    s2_ref[:, :, W + 1:W + 2, :] = zcol
    s2_ref[:, 1:H + 1, 1:W + 1, :] = blur1.astype(bf16)

    # ---- conv2: 3x3 p1, evaluated only at even output rows (stride-2 in H) ---
    acc2 = jnp.zeros((M2, CO), f32)
    for t, (dy, dx) in enumerate(_TAPS3):
        win = s2_ref[:, dy:dy + H, dx:dx + W, :]               # (NB, H, W, CI)
        win = win.reshape(NB, Ho, 2, W, CI)[:, :, 0]           # even rows only
        acc2 = acc2 + jnp.dot(win.reshape(M2, CI), w2_ref[t],
                              preferred_element_type=f32)
    y2 = acc2 + b2_ref[...]
    # FusedLeakyReLU's *sqrt(2) cancels the residual's /sqrt(2): neither emitted.
    out2 = jnp.maximum(y2, 0.2 * y2)

    # ---- skip: Blur(x) (even rows) -> 1x1 conv (scale/16/sqrt2 in ws) --------
    x0 = x_ref[:, :, 0:W, :].astype(f32)
    x1 = x_ref[:, :, 1:W + 1, :].astype(f32)
    x2 = x_ref[:, :, 2:W + 2, :].astype(f32)
    xr = x0 + 2.0 * x1 + x2
    blurx = xr[:, 0:H] + 2.0 * xr[:, 1:H + 1] + xr[:, 2:H + 2]
    blurx_e = blurx.reshape(NB, Ho, 2, W, CI)[:, :, 0]          # even rows
    skip = jnp.dot(blurx_e.reshape(M2, CI).astype(bf16), ws_ref[...],
                   preferred_element_type=f32)

    # ---- combine, then stride-2 W subsample in-kernel (strided ref read) -----
    so_ref[...] = (out2 + skip).reshape(NB, Ho, W, CO)
    o_ref[...] = so_ref[:, :, pl.ds(0, Wo, 2), :]


# ------------------------------ host-side glue -------------------------------

def pack_resblock_params(params, in_channel, out_channel):
    """One-time packing OUTSIDE the jitted forward: EqualConv2d scaling, layout
    transpose to matmul form, constant folding (sqrt(2), 1/16, 1/sqrt(2)),
    output-channel padding to the lane width, bf16 cast."""
    cpo = _round_up(out_channel, 128)
    s_conv = 1.0 / math.sqrt(in_channel * 9)     # EqualConv2d scale (3x3)
    s_skip = 1.0 / math.sqrt(in_channel)         # EqualConv2d scale (1x1)

    def pack3x3(w, scale, co_pad):
        co = w.shape[0]
        wm = jnp.transpose(w.astype(jnp.float32), (2, 3, 1, 0)) * scale  # (3,3,ci,co)
        wp = jnp.zeros((3, 3, in_channel, co_pad), jnp.float32).at[..., :co].set(wm)
        return wp.reshape(9, in_channel, co_pad).astype(jnp.bfloat16)

    def pack_bias(b, c_pad):
        return (jnp.zeros((1, c_pad), jnp.float32)
                .at[0, :b.shape[0]].set(b.astype(jnp.float32)))

    # skip: (co, ci, 1, 1) -> (ci, co), residual /sqrt(2) and blur 1/16 folded in
    ws = jnp.zeros((in_channel, cpo), jnp.float32)
    ws = ws.at[:, :out_channel].set(
        jnp.transpose(params['skip_w'][:, :, 0, 0].astype(jnp.float32))
        * (s_skip / (16.0 * SQRT2)))

    return {
        'w1': pack3x3(params['conv1_w'], s_conv, in_channel),
        'b1': pack_bias(params['conv1_b'], in_channel),
        # conv1's FusedLeakyReLU gain sqrt(2) and the blur's 1/16 folded into w2
        'w2': pack3x3(params['conv2_w'], s_conv * SQRT2 / 16.0, cpo),
        'b2': pack_bias(params['conv2_b'], cpo),
        'ws': ws.astype(jnp.bfloat16),
    }


def make_resblock_forward(in_channel, out_channel, H, W, images_per_block=1):
    assert H % 2 == 0 and W % 2 == 0
    cpo = _round_up(out_channel, 128)
    NB = images_per_block
    Ho, Wo = H // 2, W // 2
    kernel = functools.partial(_resblock_kernel, H=H, W=W, NB=NB)

    def forward(x_nchw, packed):
        B = x_nchw.shape[0]
        assert B % NB == 0
        # NCHW -> NHWC, zero-pad 1 px each side (the convs'/blur's padding=1),
        # cast to bf16; input channels stay DENSE (no lane padding).
        x = jnp.transpose(x_nchw, (0, 2, 3, 1))
        xpad = jnp.pad(x, ((0, 0), (1, 1), (1, 1), (0, 0))).astype(jnp.bfloat16)

        y = pl.pallas_call(
            kernel,
            out_shape=jax.ShapeDtypeStruct((B, Ho, Wo, cpo), jnp.float32),
            grid_spec=pltpu.PrefetchScalarGridSpec(
                num_scalar_prefetch=0,
                grid=(B // NB,),
                in_specs=[
                    pl.BlockSpec((NB, H + 2, W + 2, in_channel),
                                 lambda b: (b, 0, 0, 0)),
                    pl.BlockSpec((9, in_channel, in_channel), lambda b: (0, 0, 0)),
                    pl.BlockSpec((1, in_channel), lambda b: (0, 0)),
                    pl.BlockSpec((9, in_channel, cpo), lambda b: (0, 0, 0)),
                    pl.BlockSpec((1, cpo), lambda b: (0, 0)),
                    pl.BlockSpec((in_channel, cpo), lambda b: (0, 0)),
                ],
                out_specs=pl.BlockSpec((NB, Ho, Wo, cpo), lambda b: (b, 0, 0, 0)),
                scratch_shapes=[
                    pltpu.VMEM((NB, H + 2, W + 2, in_channel), jnp.bfloat16),
                    pltpu.VMEM((NB, H + 2, W + 2, in_channel), jnp.bfloat16),
                    pltpu.VMEM((NB, Ho, W, cpo), jnp.float32),
                ],
            ),
            compiler_params=pltpu.CompilerParams(
                dimension_semantics=("parallel",)),
        )(xpad, packed['w1'], packed['b1'], packed['w2'], packed['b2'],
          packed['ws'])

        # drop any output-channel padding; back to PyTorch's NCHW layout
        y = y[..., :out_channel]
        return jnp.transpose(y, (0, 3, 1, 2))

    return jax.jit(forward)


# ------------------------- pure-XLA reference (f32) --------------------------

def resblock_reference(x_nchw, params, in_channel, out_channel):
    dn = ('NCHW', 'OIHW', 'NCHW')
    hi = lax.Precision.HIGHEST

    def eq_conv(x, w, stride, pad):
        k = w.shape[-1]
        scale = 1.0 / math.sqrt(in_channel * k * k)
        return lax.conv_general_dilated(
            x, w.astype(jnp.float32) * scale, (stride, stride),
            ((pad, pad), (pad, pad)), dimension_numbers=dn, precision=hi)

    def blur(x):
        f = jnp.array([1.0, 2.0, 1.0], jnp.float32)
        kern = (f[:, None] * f[None, :]) / 16.0
        c = x.shape[1]
        w = jnp.tile(kern[None, None], (c, 1, 1, 1))
        return lax.conv_general_dilated(
            x, w, (1, 1), ((1, 1), (1, 1)), dimension_numbers=dn,
            feature_group_count=c, precision=hi)

    def fused_lrelu(x, b):
        y = x + b[None, :, None, None]
        return jnp.maximum(y, 0.2 * y) * SQRT2

    out = fused_lrelu(eq_conv(x_nchw, params['conv1_w'], 1, 1), params['conv1_b'])
    out = fused_lrelu(eq_conv(blur(out), params['conv2_w'], 2, 1), params['conv2_b'])
    skip = eq_conv(blur(x_nchw), params['skip_w'], 2, 0)
    return (out + skip) / SQRT2


# ----------------------------------- main -------------------------------------

if __name__ == "__main__":
    B, CIN, COUT, H, W = 2, 64, 128, 16, 16
    key = jax.random.PRNGKey(0)
    kx, k1, k2, k3, kb1, kb2 = jax.random.split(key, 6)

    x = jax.random.normal(kx, (B, CIN, H, W), jnp.float32)      # NCHW, as in PyTorch
    params = {
        'conv1_w': jax.random.normal(k1, (CIN, CIN, 3, 3), jnp.float32),
        'conv1_b': 0.1 * jax.random.normal(kb1, (CIN,), jnp.float32),
        'conv2_w': jax.random.normal(k2, (COUT, CIN, 3, 3), jnp.float32),
        'conv2_b': 0.1 * jax.random.normal(kb2, (COUT,), jnp.float32),
        'skip_w':  jax.random.normal(k3, (COUT, CIN, 1, 1), jnp.float32),
    }
    # NOTE: NoiseInjection / spectral_norm exist on the module but are never
    # executed in this forward path (ConvLayer.forward never calls self.noise;
    # sn=False), so nothing is omitted.

    packed = pack_resblock_params(params, CIN, COUT)            # one-time packing
    forward = make_resblock_forward(CIN, COUT, H, W, images_per_block=1)

    out = forward(x, packed)
    jax.block_until_ready(out)
    assert out.shape == (B, COUT, H // 2, W // 2), out.shape

    # sanity check vs a pure-XLA f32 reference (bf16 activations/weights in the
    # kernel => loose absolute tolerance)
    ref = resblock_reference(x, params, CIN, COUT)
    max_err = float(jnp.max(jnp.abs(out - ref)))
    assert max_err < 1e-1, f"max abs err {max_err}"

    print("KERNEL_OK")
</pallas_src>

<mosaic_0001>
module attributes {stable_mosaic.version = 11 : i64} {
  func.func @_resblock_kernel(%arg0: i32, %arg1: memref<1x18x18x64xbf16, #tpu.memory_space<vmem>>, %arg2: memref<9x64x64xbf16, #tpu.memory_space<vmem>>, %arg3: memref<1x64xf32, #tpu.memory_space<vmem>>, %arg4: memref<9x64x128xbf16, #tpu.memory_space<vmem>>, %arg5: memref<1x128xf32, #tpu.memory_space<vmem>>, %arg6: memref<64x128xbf16, #tpu.memory_space<vmem>>, %arg7: memref<1x8x8x128xf32, #tpu.memory_space<vmem>>, %arg8: memref<1x18x18x64xbf16, #tpu.memory_space<vmem>>, %arg9: memref<1x18x18x64xbf16, #tpu.memory_space<vmem>>, %arg10: memref<1x8x16x128xf32, #tpu.memory_space<vmem>>) attributes {dimension_semantics = [#tpu.dimension_semantics<parallel>], iteration_bounds = array<i64: 2>, scalar_prefetch = 0 : i64, scratch_operands = 3 : i64, tpu.core_type = #tpu.core_type<tc>, window_params = [{transform_indices = @transform_0, window_bounds = array<i64: 1, 18, 18, 64>}, {pipeline_mode = #tpu.pipeline_mode<synchronous>, transform_indices = @transform_1, window_bounds = array<i64: 9, 64, 64>}, {pipeline_mode = #tpu.pipeline_mode<synchronous>, transform_indices = @transform_2, window_bounds = array<i64: 1, 64>}, {pipeline_mode = #tpu.pipeline_mode<synchronous>, transform_indices = @transform_3, window_bounds = array<i64: 9, 64, 128>}, {pipeline_mode = #tpu.pipeline_mode<synchronous>, transform_indices = @transform_4, window_bounds = array<i64: 1, 128>}, {pipeline_mode = #tpu.pipeline_mode<synchronous>, transform_indices = @transform_5, window_bounds = array<i64: 64, 128>}, {transform_indices = @transform_6, window_bounds = array<i64: 1, 8, 8, 128>}]} {
    %cst = arith.constant 0.000000e+00 : f32
    %0 = vector.broadcast %cst : f32 to vector<256x64xf32>
    %c0 = arith.constant 0 : index
    %c0_0 = arith.constant 0 : index
    %c0_1 = arith.constant 0 : index
    %c0_2 = arith.constant 0 : index
    %1 = vector.load %arg1[%c0, %c0_0, %c0_1, %c0_2] : memref<1x18x18x64xbf16, #tpu.memory_space<vmem>>, vector<1x16x16x64xbf16>
    %2 = vector.shape_cast %1 : vector<1x16x16x64xbf16> to vector<256x64xbf16>
    %c0_3 = arith.constant 0 : index
    %c0_4 = arith.constant 0 : index
    %c0_5 = arith.constant 0 : index
    %3 = vector.load %arg2[%c0_3, %c0_4, %c0_5] : memref<9x64x64xbf16, #tpu.memory_space<vmem>>, vector<1x64x64xbf16>
    %4 = vector.shape_cast %3 : vector<1x64x64xbf16> to vector<64x64xbf16>
    %cst_6 = arith.constant dense<0.000000e+00> : vector<256x64xf32>
    %5 = tpu.matmul %2, %4, %cst_6 {dimension_numbers = #tpu.dot_dimension_numbers<[1], [0], [0], [1], [0, 0, 1, 1], [], []>} : vector<256x64xbf16>, vector<64x64xbf16>, vector<256x64xf32> -> vector<256x64xf32>
    %6 = arith.addf %0, %5 : vector<256x64xf32>
    %c0_7 = arith.constant 0 : index
    %c0_8 = arith.constant 0 : index
    %c1 = arith.constant 1 : index
    %c0_9 = arith.constant 0 : index
    %7 = vector.load %arg1[%c0_7, %c0_8, %c1, %c0_9] : memref<1x18x18x64xbf16, #tpu.memory_space<vmem>>, vector<1x16x16x64xbf16>
    %8 = vector.shape_cast %7 : vector<1x16x16x64xbf16> to vector<256x64xbf16>
    %c1_10 = arith.constant 1 : index
    %c0_11 = arith.constant 0 : index
    %c0_12 = arith.constant 0 : index
    %9 = vector.load %arg2[%c1_10, %c0_11, %c0_12] : memref<9x64x64xbf16, #tpu.memory_space<vmem>>, vector<1x64x64xbf16>
    %10 = vector.shape_cast %9 : vector<1x64x64xbf16> to vector<64x64xbf16>
    %cst_13 = arith.constant dense<0.000000e+00> : vector<256x64xf32>
    %11 = tpu.matmul %8, %10, %cst_13 {dimension_numbers = #tpu.dot_dimension_numbers<[1], [0], [0], [1], [0, 0, 1, 1], [], []>} : vector<256x64xbf16>, vector<64x64xbf16>, vector<256x64xf32> -> vector<256x64xf32>
    %12 = arith.addf %6, %11 : vector<256x64xf32>
    %c0_14 = arith.constant 0 : index
    %c0_15 = arith.constant 0 : index
    %c2 = arith.constant 2 : index
    %c0_16 = arith.constant 0 : index
    %13 = vector.load %arg1[%c0_14, %c0_15, %c2, %c0_16] : memref<1x18x18x64xbf16, #tpu.memory_space<vmem>>, vector<1x16x16x64xbf16>
    %14 = vector.shape_cast %13 : vector<1x16x16x64xbf16> to vector<256x64xbf16>
    %c2_17 = arith.constant 2 : index
    %c0_18 = arith.constant 0 : index
    %c0_19 = arith.constant 0 : index
    %15 = vector.load %arg2[%c2_17, %c0_18, %c0_19] : memref<9x64x64xbf16, #tpu.memory_space<vmem>>, vector<1x64x64xbf16>
    %16 = vector.shape_cast %15 : vector<1x64x64xbf16> to vector<64x64xbf16>
    %cst_20 = arith.constant dense<0.000000e+00> : vector<256x64xf32>
    %17 = tpu.matmul %14, %16, %cst_20 {dimension_numbers = #tpu.dot_dimension_numbers<[1], [0], [0], [1], [0, 0, 1, 1], [], []>} : vector<256x64xbf16>, vector<64x64xbf16>, vector<256x64xf32> -> vector<256x64xf32>
    %18 = arith.addf %12, %17 : vector<256x64xf32>
    %c0_21 = arith.constant 0 : index
    %c1_22 = arith.constant 1 : index
    %c0_23 = arith.constant 0 : index
    %c0_24 = arith.constant 0 : index
    %19 = vector.load %arg1[%c0_21, %c1_22, %c0_23, %c0_24] : memref<1x18x18x64xbf16, #tpu.memory_space<vmem>>, vector<1x16x16x64xbf16>
    %20 = vector.shape_cast %19 : vector<1x16x16x64xbf16> to vector<256x64xbf16>
    %c3 = arith.constant 3 : index
    %c0_25 = arith.constant 0 : index
    %c0_26 = arith.constant 0 : index
    %21 = vector.load %arg2[%c3, %c0_25, %c0_26] : memref<9x64x64xbf16, #tpu.memory_space<vmem>>, vector<1x64x64xbf16>
    %22 = vector.shape_cast %21 : vector<1x64x64xbf16> to vector<64x64xbf16>
    %cst_27 = arith.constant dense<0.000000e+00> : vector<256x64xf32>
    %23 = tpu.matmul %20, %22, %cst_27 {dimension_numbers = #tpu.dot_dimension_numbers<[1], [0], [0], [1], [0, 0, 1, 1], [], []>} : vector<256x64xbf16>, vector<64x64xbf16>, vector<256x64xf32> -> vector<256x64xf32>
    %24 = arith.addf %18, %23 : vector<256x64xf32>
    %c0_28 = arith.constant 0 : index
    %c1_29 = arith.constant 1 : index
    %c1_30 = arith.constant 1 : index
    %c0_31 = arith.constant 0 : index
    %25 = vector.load %arg1[%c0_28, %c1_29, %c1_30, %c0_31] : memref<1x18x18x64xbf16, #tpu.memory_space<vmem>>, vector<1x16x16x64xbf16>
    %26 = vector.shape_cast %25 : vector<1x16x16x64xbf16> to vector<256x64xbf16>
    %c4 = arith.constant 4 : index
    %c0_32 = arith.constant 0 : index
    %c0_33 = arith.constant 0 : index
    %27 = vector.load %arg2[%c4, %c0_32, %c0_33] : memref<9x64x64xbf16, #tpu.memory_space<vmem>>, vector<1x64x64xbf16>
    %28 = vector.shape_cast %27 : vector<1x64x64xbf16> to vector<64x64xbf16>
    %cst_34 = arith.constant dense<0.000000e+00> : vector<256x64xf32>
    %29 = tpu.matmul %26, %28, %cst_34 {dimension_numbers = #tpu.dot_dimension_numbers<[1], [0], [0], [1], [0, 0, 1, 1], [], []>} : vector<256x64xbf16>, vector<64x64xbf16>, vector<256x64xf32> -> vector<256x64xf32>
    %30 = arith.addf %24, %29 : vector<256x64xf32>
    %c0_35 = arith.constant 0 : index
    %c1_36 = arith.constant 1 : index
    %c2_37 = arith.constant 2 : index
    %c0_38 = arith.constant 0 : index
    %31 = vector.load %arg1[%c0_35, %c1_36, %c2_37, %c0_38] : memref<1x18x18x64xbf16, #tpu.memory_space<vmem>>, vector<1x16x16x64xbf16>
    %32 = vector.shape_cast %31 : vector<1x16x16x64xbf16> to vector<256x64xbf16>
    %c5 = arith.constant 5 : index
    %c0_39 = arith.constant 0 : index
    %c0_40 = arith.constant 0 : index
    %33 = vector.load %arg2[%c5, %c0_39, %c0_40] : memref<9x64x64xbf16, #tpu.memory_space<vmem>>, vector<1x64x64xbf16>
    %34 = vector.shape_cast %33 : vector<1x64x64xbf16> to vector<64x64xbf16>
    %cst_41 = arith.constant dense<0.000000e+00> : vector<256x64xf32>
    %35 = tpu.matmul %32, %34, %cst_41 {dimension_numbers = #tpu.dot_dimension_numbers<[1], [0], [0], [1], [0, 0, 1, 1], [], []>} : vector<256x64xbf16>, vector<64x64xbf16>, vector<256x64xf32> -> vector<256x64xf32>
    %36 = arith.addf %30, %35 : vector<256x64xf32>
    %c0_42 = arith.constant 0 : index
    %c2_43 = arith.constant 2 : index
    %c0_44 = arith.constant 0 : index
    %c0_45 = arith.constant 0 : index
    %37 = vector.load %arg1[%c0_42, %c2_43, %c0_44, %c0_45] : memref<1x18x18x64xbf16, #tpu.memory_space<vmem>>, vector<1x16x16x64xbf16>
    %38 = vector.shape_cast %37 : vector<1x16x16x64xbf16> to vector<256x64xbf16>
    %c6 = arith.constant 6 : index
    %c0_46 = arith.constant 0 : index
    %c0_47 = arith.constant 0 : index
    %39 = vector.load %arg2[%c6, %c0_46, %c0_47] : memref<9x64x64xbf16, #tpu.memory_space<vmem>>, vector<1x64x64xbf16>
    %40 = vector.shape_cast %39 : vector<1x64x64xbf16> to vector<64x64xbf16>
    %cst_48 = arith.constant dense<0.000000e+00> : vector<256x64xf32>
    %41 = tpu.matmul %38, %40, %cst_48 {dimension_numbers = #tpu.dot_dimension_numbers<[1], [0], [0], [1], [0, 0, 1, 1], [], []>} : vector<256x64xbf16>, vector<64x64xbf16>, vector<256x64xf32> -> vector<256x64xf32>
    %42 = arith.addf %36, %41 : vector<256x64xf32>
    %c0_49 = arith.constant 0 : index
    %c2_50 = arith.constant 2 : index
    %c1_51 = arith.constant 1 : index
    %c0_52 = arith.constant 0 : index
    %43 = vector.load %arg1[%c0_49, %c2_50, %c1_51, %c0_52] : memref<1x18x18x64xbf16, #tpu.memory_space<vmem>>, vector<1x16x16x64xbf16>
    %44 = vector.shape_cast %43 : vector<1x16x16x64xbf16> to vector<256x64xbf16>
    %c7 = arith.constant 7 : index
    %c0_53 = arith.constant 0 : index
    %c0_54 = arith.constant 0 : index
    %45 = vector.load %arg2[%c7, %c0_53, %c0_54] : memref<9x64x64xbf16, #tpu.memory_space<vmem>>, vector<1x64x64xbf16>
    %46 = vector.shape_cast %45 : vector<1x64x64xbf16> to vector<64x64xbf16>
    %cst_55 = arith.constant dense<0.000000e+00> : vector<256x64xf32>
    %47 = tpu.matmul %44, %46, %cst_55 {dimension_numbers = #tpu.dot_dimension_numbers<[1], [0], [0], [1], [0, 0, 1, 1], [], []>} : vector<256x64xbf16>, vector<64x64xbf16>, vector<256x64xf32> -> vector<256x64xf32>
    %48 = arith.addf %42, %47 : vector<256x64xf32>
    %c0_56 = arith.constant 0 : index
    %c2_57 = arith.constant 2 : index
    %c2_58 = arith.constant 2 : index
    %c0_59 = arith.constant 0 : index
    %49 = vector.load %arg1[%c0_56, %c2_57, %c2_58, %c0_59] : memref<1x18x18x64xbf16, #tpu.memory_space<vmem>>, vector<1x16x16x64xbf16>
    %50 = vector.shape_cast %49 : vector<1x16x16x64xbf16> to vector<256x64xbf16>
    %c8 = arith.constant 8 : index
    %c0_60 = arith.constant 0 : index
    %c0_61 = arith.constant 0 : index
    %51 = vector.load %arg2[%c8, %c0_60, %c0_61] : memref<9x64x64xbf16, #tpu.memory_space<vmem>>, vector<1x64x64xbf16>
    %52 = vector.shape_cast %51 : vector<1x64x64xbf16> to vector<64x64xbf16>
    %cst_62 = arith.constant dense<0.000000e+00> : vector<256x64xf32>
    %53 = tpu.matmul %50, %52, %cst_62 {dimension_numbers = #tpu.dot_dimension_numbers<[1], [0], [0], [1], [0, 0, 1, 1], [], []>} : vector<256x64xbf16>, vector<64x64xbf16>, vector<256x64xf32> -> vector<256x64xf32>
    %54 = arith.addf %48, %53 : vector<256x64xf32>
    %c0_63 = arith.constant 0 : index
    %c0_64 = arith.constant 0 : index
    %55 = vector.load %arg3[%c0_63, %c0_64] : memref<1x64xf32, #tpu.memory_space<vmem>>, vector<1x64xf32>
    %56 = vector.broadcast %55 : vector<1x64xf32> to vector<256x64xf32>
    %57 = arith.addf %54, %56 : vector<256x64xf32>
    %cst_65 = arith.constant 2.000000e-01 : f32
    %58 = vector.broadcast %cst_65 : f32 to vector<256x64xf32>
    %59 = arith.mulf %58, %57 : vector<256x64xf32>
    %60 = arith.maximumf %57, %59 : vector<256x64xf32>
    %61 = arith.truncf %60 : vector<256x64xf32> to vector<256x64xbf16>
    %cst_66 = arith.constant 0.000000e+00 : bf16
    %62 = vector.broadcast %cst_66 : bf16 to vector<1x1x18x64xbf16>
    %cst_67 = arith.constant 0.000000e+00 : bf16
    %63 = vector.broadcast %cst_67 : bf16 to vector<1x18x1x64xbf16>
    %c0_68 = arith.constant 0 : index
    %c0_69 = arith.constant 0 : index
    %c0_70 = arith.constant 0 : index
    %c0_71 = arith.constant 0 : index
    %64 = vector.load %arg8[%c0_68, %c0_69, %c0_70, %c0_71] : memref<1x18x18x64xbf16, #tpu.memory_space<vmem>>, vector<1x1x18x64xbf16>
    tpu.vector_store %arg8[%c0_68, %c0_69, %c0_70, %c0_71], %62 {strides = array<i32>} : memref<1x18x18x64xbf16, #tpu.memory_space<vmem>>, vector<1x1x18x64xbf16>,
    %c0_72 = arith.constant 0 : index
    %c17 = arith.constant 17 : index
    %c0_73 = arith.constant 0 : index
    %c0_74 = arith.constant 0 : index
    %65 = vector.load %arg8[%c0_72, %c17, %c0_73, %c0_74] : memref<1x18x18x64xbf16, #tpu.memory_space<vmem>>, vector<1x1x18x64xbf16>
    tpu.vector_store %arg8[%c0_72, %c17, %c0_73, %c0_74], %62 {strides = array<i32>} : memref<1x18x18x64xbf16, #tpu.memory_space<vmem>>, vector<1x1x18x64xbf16>,
    %c0_75 = arith.constant 0 : index
    %c0_76 = arith.constant 0 : index
    %c0_77 = arith.constant 0 : index
    %c0_78 = arith.constant 0 : index
    %66 = vector.load %arg8[%c0_75, %c0_76, %c0_77, %c0_78] : memref<1x18x18x64xbf16, #tpu.memory_space<vmem>>, vector<1x18x1x64xbf16>
    tpu.vector_store %arg8[%c0_75, %c0_76, %c0_77, %c0_78], %63 {strides = array<i32>} : memref<1x18x18x64xbf16, #tpu.memory_space<vmem>>, vector<1x18x1x64xbf16>,
    %c0_79 = arith.constant 0 : index
    %c0_80 = arith.constant 0 : index
    %c17_81 = arith.constant 17 : index
    %c0_82 = arith.constant 0 : index
    %67 = vector.load %arg8[%c0_79, %c0_80, %c17_81, %c0_82] : memref<1x18x18x64xbf16, #tpu.memory_space<vmem>>, vector<1x18x1x64xbf16>
    tpu.vector_store %arg8[%c0_79, %c0_80, %c17_81, %c0_82], %63 {strides = array<i32>} : memref<1x18x18x64xbf16, #tpu.memory_space<vmem>>, vector<1x18x1x64xbf16>,
    %68 = vector.shape_cast %61 : vector<256x64xbf16> to vector<1x16x16x64xbf16>
    %c0_83 = arith.constant 0 : index
    %c1_84 = arith.constant 1 : index
    %c1_85 = arith.constant 1 : index
    %c0_86 = arith.constant 0 : index
    %69 = vector.load %arg8[%c0_83, %c1_84, %c1_85, %c0_86] : memref<1x18x18x64xbf16, #tpu.memory_space<vmem>>, vector<1x16x16x64xbf16>
    tpu.vector_store %arg8[%c0_83, %c1_84, %c1_85, %c0_86], %68 {strides = array<i32>} : memref<1x18x18x64xbf16, #tpu.memory_space<vmem>>, vector<1x16x16x64xbf16>,
    %c0_87 = arith.constant 0 : index
    %c0_88 = arith.constant 0 : index
    %c0_89 = arith.constant 0 : index
    %c0_90 = arith.constant 0 : index
    %70 = vector.load %arg8[%c0_87, %c0_88, %c0_89, %c0_90] : memref<1x18x18x64xbf16, #tpu.memory_space<vmem>>, vector<1x18x16x64xbf16>
    %71 = arith.extf %70 : vector<1x18x16x64xbf16> to vector<1x18x16x64xf32>
    %c0_91 = arith.constant 0 : index
    %c0_92 = arith.constant 0 : index
    %c1_93 = arith.constant 1 : index
    %c0_94 = arith.constant 0 : index
    %72 = vector.load %arg8[%c0_91, %c0_92, %c1_93, %c0_94] : memref<1x18x18x64xbf16, #tpu.memory_space<vmem>>, vector<1x18x16x64xbf16>
    %73 = arith.extf %72 : vector<1x18x16x64xbf16> to vector<1x18x16x64xf32>
    %c0_95 = arith.constant 0 : index
    %c0_96 = arith.constant 0 : index
    %c2_97 = arith.constant 2 : index
    %c0_98 = arith.constant 0 : index
    %74 = vector.load %arg8[%c0_95, %c0_96, %c2_97, %c0_98] : memref<1x18x18x64xbf16, #tpu.memory_space<vmem>>, vector<1x18x16x64xbf16>
    %75 = arith.extf %74 : vector<1x18x16x64xbf16> to vector<1x18x16x64xf32>
    %cst_99 = arith.constant 2.000000e+00 : f32
    %76 = vector.broadcast %cst_99 : f32 to vector<1x18x16x64xf32>
    %77 = arith.mulf %76, %73 : vector<1x18x16x64xf32>
    %78 = arith.addf %71, %77 : vector<1x18x16x64xf32>
    %79 = arith.addf %78, %75 : vector<1x18x16x64xf32>
    %80 = vector.extract_strided_slice %79 {offsets = [0, 0, 0, 0], sizes = [1, 16, 16, 64], strides = [1, 1, 1, 1]} : vector<1x18x16x64xf32> to vector<1x16x16x64xf32>
    %81 = vector.extract_strided_slice %79 {offsets = [0, 1, 0, 0], sizes = [1, 16, 16, 64], strides = [1, 1, 1, 1]} : vector<1x18x16x64xf32> to vector<1x16x16x64xf32>
    %cst_100 = arith.constant 2.000000e+00 : f32
    %82 = vector.broadcast %cst_100 : f32 to vector<1x16x16x64xf32>
    %83 = arith.mulf %82, %81 : vector<1x16x16x64xf32>
    %84 = arith.addf %80, %83 : vector<1x16x16x64xf32>
    %85 = vector.extract_strided_slice %79 {offsets = [0, 2, 0, 0], sizes = [1, 16, 16, 64], strides = [1, 1, 1, 1]} : vector<1x18x16x64xf32> to vector<1x16x16x64xf32>
    %86 = arith.addf %84, %85 : vector<1x16x16x64xf32>
    %c0_101 = arith.constant 0 : index
    %c0_102 = arith.constant 0 : index
    %c0_103 = arith.constant 0 : index
    %c0_104 = arith.constant 0 : index
    %87 = vector.load %arg9[%c0_101, %c0_102, %c0_103, %c0_104] : memref<1x18x18x64xbf16, #tpu.memory_space<vmem>>, vector<1x1x18x64xbf16>
    tpu.vector_store %arg9[%c0_101, %c0_102, %c0_103, %c0_104], %62 {strides = array<i32>} : memref<1x18x18x64xbf16, #tpu.memory_space<vmem>>, vector<1x1x18x64xbf16>,
    %c0_105 = arith.constant 0 : index
    %c17_106 = arith.constant 17 : index
    %c0_107 = arith.constant 0 : index
    %c0_108 = arith.constant 0 : index
    %88 = vector.load %arg9[%c0_105, %c17_106, %c0_107, %c0_108] : memref<1x18x18x64xbf16, #tpu.memory_space<vmem>>, vector<1x1x18x64xbf16>
    tpu.vector_store %arg9[%c0_105, %c17_106, %c0_107, %c0_108], %62 {strides = array<i32>} : memref<1x18x18x64xbf16, #tpu.memory_space<vmem>>, vector<1x1x18x64xbf16>,
    %c0_109 = arith.constant 0 : index
    %c0_110 = arith.constant 0 : index
    %c0_111 = arith.constant 0 : index
    %c0_112 = arith.constant 0 : index
    %89 = vector.load %arg9[%c0_109, %c0_110, %c0_111, %c0_112] : memref<1x18x18x64xbf16, #tpu.memory_space<vmem>>, vector<1x18x1x64xbf16>
    tpu.vector_store %arg9[%c0_109, %c0_110, %c0_111, %c0_112], %63 {strides = array<i32>} : memref<1x18x18x64xbf16, #tpu.memory_space<vmem>>, vector<1x18x1x64xbf16>,
    %c0_113 = arith.constant 0 : index
    %c0_114 = arith.constant 0 : index
    %c17_115 = arith.constant 17 : index
    %c0_116 = arith.constant 0 : index
    %90 = vector.load %arg9[%c0_113, %c0_114, %c17_115, %c0_116] : memref<1x18x18x64xbf16, #tpu.memory_space<vmem>>, vector<1x18x1x64xbf16>
    tpu.vector_store %arg9[%c0_113, %c0_114, %c17_115, %c0_116], %63 {strides = array<i32>} : memref<1x18x18x64xbf16, #tpu.memory_space<vmem>>, vector<1x18x1x64xbf16>,
    %91 = arith.truncf %86 : vector<1x16x16x64xf32> to vector<1x16x16x64xbf16>
    %c0_117 = arith.constant 0 : index
    %c1_118 = arith.constant 1 : index
    %c1_119 = arith.constant 1 : index
    %c0_120 = arith.constant 0 : index
    %92 = vector.load %arg9[%c0_117, %c1_118, %c1_119, %c0_120] : memref<1x18x18x64xbf16, #tpu.memory_space<vmem>>, vector<1x16x16x64xbf16>
    tpu.vector_store %arg9[%c0_117, %c1_118, %c1_119, %c0_120], %91 {strides = array<i32>} : memref<1x18x18x64xbf16, #tpu.memory_space<vmem>>, vector<1x16x16x64xbf16>,
    %cst_121 = arith.constant 0.000000e+00 : f32
    %93 = vector.broadcast %cst_121 : f32 to vector<128x128xf32>
    %c0_122 = arith.constant 0 : index
    %c0_123 = arith.constant 0 : index
    %c0_124 = arith.constant 0 : index
    %c0_125 = arith.constant 0 : index
    %94 = vector.load %arg9[%c0_122, %c0_123, %c0_124, %c0_125] : memref<1x18x18x64xbf16, #tpu.memory_space<vmem>>, vector<1x16x16x64xbf16>
    %95 = vector.shape_cast %94 : vector<1x16x16x64xbf16> to vector<1x8x2x16x64xbf16>
    %96 = vector.extract_strided_slice %95 {offsets = [0, 0, 0, 0, 0], sizes = [1, 8, 1, 16, 64], strides = [1, 1, 1, 1, 1]} : vector<1x8x2x16x64xbf16> to vector<1x8x1x16x64xbf16>
    %97 = vector.shape_cast %96 : vector<1x8x1x16x64xbf16> to vector<1x8x16x64xbf16>
    %98 = vector.shape_cast %97 : vector<1x8x16x64xbf16> to vector<128x64xbf16>
    %c0_126 = arith.constant 0 : index
    %c0_127 = arith.constant 0 : index
    %c0_128 = arith.constant 0 : index
    %99 = vector.load %arg4[%c0_126, %c0_127, %c0_128] : memref<9x64x128xbf16, #tpu.memory_space<vmem>>, vector<1x64x128xbf16>
    %100 = vector.shape_cast %99 : vector<1x64x128xbf16> to vector<64x128xbf16>
    %cst_129 = arith.constant dense<0.000000e+00> : vector<128x128xf32>
    %101 = tpu.matmul %98, %100, %cst_129 {dimension_numbers = #tpu.dot_dimension_numbers<[1], [0], [0], [1], [0, 0, 1, 1], [], []>} : vector<128x64xbf16>, vector<64x128xbf16>, vector<128x128xf32> -> vector<128x128xf32>
    %102 = arith.addf %93, %101 : vector<128x128xf32>
    %c0_130 = arith.constant 0 : index
    %c0_131 = arith.constant 0 : index
    %c1_132 = arith.constant 1 : index
    %c0_133 = arith.constant 0 : index
    %103 = vector.load %arg9[%c0_130, %c0_131, %c1_132, %c0_133] : memref<1x18x18x64xbf16, #tpu.memory_space<vmem>>, vector<1x16x16x64xbf16>
    %104 = vector.shape_cast %103 : vector<1x16x16x64xbf16> to vector<1x8x2x16x64xbf16>
    %105 = vector.extract_strided_slice %104 {offsets = [0, 0, 0, 0, 0], sizes = [1, 8, 1, 16, 64], strides = [1, 1, 1, 1, 1]} : vector<1x8x2x16x64xbf16> to vector<1x8x1x16x64xbf16>
    %106 = vector.shape_cast %105 : vector<1x8x1x16x64xbf16> to vector<1x8x16x64xbf16>
    %107 = vector.shape_cast %106 : vector<1x8x16x64xbf16> to vector<128x64xbf16>
    %c1_134 = arith.constant 1 : index
    %c0_135 = arith.constant 0 : index
    %c0_136 = arith.constant 0 : index
    %108 = vector.load %arg4[%c1_134, %c0_135, %c0_136] : memref<9x64x128xbf16, #tpu.memory_space<vmem>>, vector<1x64x128xbf16>
    %109 = vector.shape_cast %108 : vector<1x64x128xbf16> to vector<64x128xbf16>
    %cst_137 = arith.constant dense<0.000000e+00> : vector<128x128xf32>
    %110 = tpu.matmul %107, %109, %cst_137 {dimension_numbers = #tpu.dot_dimension_numbers<[1], [0], [0], [1], [0, 0, 1, 1], [], []>} : vector<128x64xbf16>, vector<64x128xbf16>, vector<128x128xf32> -> vector<128x128xf32>
    %111 = arith.addf %102, %110 : vector<128x128xf32>
    %c0_138 = arith.constant 0 : index
    %c0_139 = arith.constant 0 : index
    %c2_140 = arith.constant 2 : index
    %c0_141 = arith.constant 0 : index
    %112 = vector.load %arg9[%c0_138, %c0_139, %c2_140, %c0_141] : memref<1x18x18x64xbf16, #tpu.memory_space<vmem>>, vector<1x16x16x64xbf16>
    %113 = vector.shape_cast %112 : vector<1x16x16x64xbf16> to vector<1x8x2x16x64xbf16>
    %114 = vector.extract_strided_slice %113 {offsets = [0, 0, 0, 0, 0], sizes = [1, 8, 1, 16, 64], strides = [1, 1, 1, 1, 1]} : vector<1x8x2x16x64xbf16> to vector<1x8x1x16x64xbf16>
    %115 = vector.shape_cast %114 : vector<1x8x1x16x64xbf16> to vector<1x8x16x64xbf16>
    %116 = vector.shape_cast %115 : vector<1x8x16x64xbf16> to vector<128x64xbf16>
    %c2_142 = arith.constant 2 : index
    %c0_143 = arith.constant 0 : index
    %c0_144 = arith.constant 0 : index
    %117 = vector.load %arg4[%c2_142, %c0_143, %c0_144] : memref<9x64x128xbf16, #tpu.memory_space<vmem>>, vector<1x64x128xbf16>
    %118 = vector.shape_cast %117 : vector<1x64x128xbf16> to vector<64x128xbf16>
    %cst_145 = arith.constant dense<0.000000e+00> : vector<128x128xf32>
    %119 = tpu.matmul %116, %118, %cst_145 {dimension_numbers = #tpu.dot_dimension_numbers<[1], [0], [0], [1], [0, 0, 1, 1], [], []>} : vector<128x64xbf16>, vector<64x128xbf16>, vector<128x128xf32> -> vector<128x128xf32>
    %120 = arith.addf %111, %119 : vector<128x128xf32>
    %c0_146 = arith.constant 0 : index
    %c1_147 = arith.constant 1 : index
    %c0_148 = arith.constant 0 : index
    %c0_149 = arith.constant 0 : index
    %121 = vector.load %arg9[%c0_146, %c1_147, %c0_148, %c0_149] : memref<1x18x18x64xbf16, #tpu.memory_space<vmem>>, vector<1x16x16x64xbf16>
    %122 = vector.shape_cast %121 : vector<1x16x16x64xbf16> to vector<1x8x2x16x64xbf16>
    %123 = vector.extract_strided_slice %122 {offsets = [0, 0, 0, 0, 0], sizes = [1, 8, 1, 16, 64], strides = [1, 1, 1, 1, 1]} : vector<1x8x2x16x64xbf16> to vector<1x8x1x16x64xbf16>
    %124 = vector.shape_cast %123 : vector<1x8x1x16x64xbf16> to vector<1x8x16x64xbf16>
    %125 = vector.shape_cast %124 : vector<1x8x16x64xbf16> to vector<128x64xbf16>
    %c3_150 = arith.constant 3 : index
    %c0_151 = arith.constant 0 : index
    %c0_152 = arith.constant 0 : index
    %126 = vector.load %arg4[%c3_150, %c0_151, %c0_152] : memref<9x64x128xbf16, #tpu.memory_space<vmem>>, vector<1x64x128xbf16>
    %127 = vector.shape_cast %126 : vector<1x64x128xbf16> to vector<64x128xbf16>
    %cst_153 = arith.constant dense<0.000000e+00> : vector<128x128xf32>
    %128 = tpu.matmul %125, %127, %cst_153 {dimension_numbers = #tpu.dot_dimension_numbers<[1], [0], [0], [1], [0, 0, 1, 1], [], []>} : vector<128x64xbf16>, vector<64x128xbf16>, vector<128x128xf32> -> vector<128x128xf32>
    %129 = arith.addf %120, %128 : vector<128x128xf32>
    %c0_154 = arith.constant 0 : index
    %c1_155 = arith.constant 1 : index
    %c1_156 = arith.constant 1 : index
    %c0_157 = arith.constant 0 : index
    %130 = vector.load %arg9[%c0_154, %c1_155, %c1_156, %c0_157] : memref<1x18x18x64xbf16, #tpu.memory_space<vmem>>, vector<1x16x16x64xbf16>
    %131 = vector.shape_cast %130 : vector<1x16x16x64xbf16> to vector<1x8x2x16x64xbf16>
    %132 = vector.extract_strided_slice %131 {offsets = [0, 0, 0, 0, 0], sizes = [1, 8, 1, 16, 64], strides = [1, 1, 1, 1, 1]} : vector<1x8x2x16x64xbf16> to vector<1x8x1x16x64xbf16>
    %133 = vector.shape_cast %132 : vector<1x8x1x16x64xbf16> to vector<1x8x16x64xbf16>
    %134 = vector.shape_cast %133 : vector<1x8x16x64xbf16> to vector<128x64xbf16>
    %c4_158 = arith.constant 4 : index
    %c0_159 = arith.constant 0 : index
    %c0_160 = arith.constant 0 : index
    %135 = vector.load %arg4[%c4_158, %c0_159, %c0_160] : memref<9x64x128xbf16, #tpu.memory_space<vmem>>, vector<1x64x128xbf16>
    %136 = vector.shape_cast %135 : vector<1x64x128xbf16> to vector<64x128xbf16>
    %cst_161 = arith.constant dense<0.000000e+00> : vector<128x128xf32>
    %137 = tpu.matmul %134, %136, %cst_161 {dimension_numbers = #tpu.dot_dimension_numbers<[1], [0], [0], [1], [0, 0, 1, 1], [], []>} : vector<128x64xbf16>, vector<64x128xbf16>, vector<128x128xf32> -> vector<128x128xf32>
    %138 = arith.addf %129, %137 : vector<128x128xf32>
    %c0_162 = arith.constant 0 : index
    %c1_163 = arith.constant 1 : index
    %c2_164 = arith.constant 2 : index
    %c0_165 = arith.constant 0 : index
    %139 = vector.load %arg9[%c0_162, %c1_163, %c2_164, %c0_165] : memref<1x18x18x64xbf16, #tpu.memory_space<vmem>>, vector<1x16x16x64xbf16>
    %140 = vector.shape_cast %139 : vector<1x16x16x64xbf16> to vector<1x8x2x16x64xbf16>
    %141 = vector.extract_strided_slice %140 {offsets = [0, 0, 0, 0, 0], sizes = [1, 8, 1, 16, 64], strides = [1, 1, 1, 1, 1]} : vector<1x8x2x16x64xbf16> to vector<1x8x1x16x64xbf16>
    %142 = vector.shape_cast %141 : vector<1x8x1x16x64xbf16> to vector<1x8x16x64xbf16>
    %143 = vector.shape_cast %142 : vector<1x8x16x64xbf16> to vector<128x64xbf16>
    %c5_166 = arith.constant 5 : index
    %c0_167 = arith.constant 0 : index
    %c0_168 = arith.constant 0 : index
    %144 = vector.load %arg4[%c5_166, %c0_167, %c0_168] : memref<9x64x128xbf16, #tpu.memory_space<vmem>>, vector<1x64x128xbf16>
    %145 = vector.shape_cast %144 : vector<1x64x128xbf16> to vector<64x128xbf16>
    %cst_169 = arith.constant dense<0.000000e+00> : vector<128x128xf32>
    %146 = tpu.matmul %143, %145, %cst_169 {dimension_numbers = #tpu.dot_dimension_numbers<[1], [0], [0], [1], [0, 0, 1, 1], [], []>} : vector<128x64xbf16>, vector<64x128xbf16>, vector<128x128xf32> -> vector<128x128xf32>
    %147 = arith.addf %138, %146 : vector<128x128xf32>
    %c0_170 = arith.constant 0 : index
    %c2_171 = arith.constant 2 : index
    %c0_172 = arith.constant 0 : index
    %c0_173 = arith.constant 0 : index
    %148 = vector.load %arg9[%c0_170, %c2_171, %c0_172, %c0_173] : memref<1x18x18x64xbf16, #tpu.memory_space<vmem>>, vector<1x16x16x64xbf16>
    %149 = vector.shape_cast %148 : vector<1x16x16x64xbf16> to vector<1x8x2x16x64xbf16>
    %150 = vector.extract_strided_slice %149 {offsets = [0, 0, 0, 0, 0], sizes = [1, 8, 1, 16, 64], strides = [1, 1, 1, 1, 1]} : vector<1x8x2x16x64xbf16> to vector<1x8x1x16x64xbf16>
    %151 = vector.shape_cast %150 : vector<1x8x1x16x64xbf16> to vector<1x8x16x64xbf16>
    %152 = vector.shape_cast %151 : vector<1x8x16x64xbf16> to vector<128x64xbf16>
    %c6_174 = arith.constant 6 : index
    %c0_175 = arith.constant 0 : index
    %c0_176 = arith.constant 0 : index
    %153 = vector.load %arg4[%c6_174, %c0_175, %c0_176] : memref<9x64x128xbf16, #tpu.memory_space<vmem>>, vector<1x64x128xbf16>
    %154 = vector.shape_cast %153 : vector<1x64x128xbf16> to vector<64x128xbf16>
    %cst_177 = arith.constant dense<0.000000e+00> : vector<128x128xf32>
    %155 = tpu.matmul %152, %154, %cst_177 {dimension_numbers = #tpu.dot_dimension_numbers<[1], [0], [0], [1], [0, 0, 1, 1], [], []>} : vector<128x64xbf16>, vector<64x128xbf16>, vector<128x128xf32> -> vector<128x128xf32>
    %156 = arith.addf %147, %155 : vector<128x128xf32>
    %c0_178 = arith.constant 0 : index
    %c2_179 = arith.constant 2 : index
    %c1_180 = arith.constant 1 : index
    %c0_181 = arith.constant 0 : index
    %157 = vector.load %arg9[%c0_178, %c2_179, %c1_180, %c0_181] : memref<1x18x18x64xbf16, #tpu.memory_space<vmem>>, vector<1x16x16x64xbf16>
    %158 = vector.shape_cast %157 : vector<1x16x16x64xbf16> to vector<1x8x2x16x64xbf16>
    %159 = vector.extract_strided_slice %158 {offsets = [0, 0, 0, 0, 0], sizes = [1, 8, 1, 16, 64], strides = [1, 1, 1, 1, 1]} : vector<1x8x2x16x64xbf16> to vector<1x8x1x16x64xbf16>
    %160 = vector.shape_cast %159 : vector<1x8x1x16x64xbf16> to vector<1x8x16x64xbf16>
    %161 = vector.shape_cast %160 : vector<1x8x16x64xbf16> to vector<128x64xbf16>
    %c7_182 = arith.constant 7 : index
    %c0_183 = arith.constant 0 : index
    %c0_184 = arith.constant 0 : index
    %162 = vector.load %arg4[%c7_182, %c0_183, %c0_184] : memref<9x64x128xbf16, #tpu.memory_space<vmem>>, vector<1x64x128xbf16>
    %163 = vector.shape_cast %162 : vector<1x64x128xbf16> to vector<64x128xbf16>
    %cst_185 = arith.constant dense<0.000000e+00> : vector<128x128xf32>
    %164 = tpu.matmul %161, %163, %cst_185 {dimension_numbers = #tpu.dot_dimension_numbers<[1], [0], [0], [1], [0, 0, 1, 1], [], []>} : vector<128x64xbf16>, vector<64x128xbf16>, vector<128x128xf32> -> vector<128x128xf32>
    %165 = arith.addf %156, %164 : vector<128x128xf32>
    %c0_186 = arith.constant 0 : index
    %c2_187 = arith.constant 2 : index
    %c2_188 = arith.constant 2 : index
    %c0_189 = arith.constant 0 : index
    %166 = vector.load %arg9[%c0_186, %c2_187, %c2_188, %c0_189] : memref<1x18x18x64xbf16, #tpu.memory_space<vmem>>, vector<1x16x16x64xbf16>
    %167 = vector.shape_cast %166 : vector<1x16x16x64xbf16> to vector<1x8x2x16x64xbf16>
    %168 = vector.extract_strided_slice %167 {offsets = [0, 0, 0, 0, 0], sizes = [1, 8, 1, 16, 64], strides = [1, 1, 1, 1, 1]} : vector<1x8x2x16x64xbf16> to vector<1x8x1x16x64xbf16>
    %169 = vector.shape_cast %168 : vector<1x8x1x16x64xbf16> to vector<1x8x16x64xbf16>
    %170 = vector.shape_cast %169 : vector<1x8x16x64xbf16> to vector<128x64xbf16>
    %c8_190 = arith.constant 8 : index
    %c0_191 = arith.constant 0 : index
    %c0_192 = arith.constant 0 : index
    %171 = vector.load %arg4[%c8_190, %c0_191, %c0_192] : memref<9x64x128xbf16, #tpu.memory_space<vmem>>, vector<1x64x128xbf16>
    %172 = vector.shape_cast %171 : vector<1x64x128xbf16> to vector<64x128xbf16>
    %cst_193 = arith.constant dense<0.000000e+00> : vector<128x128xf32>
    %173 = tpu.matmul %170, %172, %cst_193 {dimension_numbers = #tpu.dot_dimension_numbers<[1], [0], [0], [1], [0, 0, 1, 1], [], []>} : vector<128x64xbf16>, vector<64x128xbf16>, vector<128x128xf32> -> vector<128x128xf32>
    %174 = arith.addf %165, %173 : vector<128x128xf32>
    %c0_194 = arith.constant 0 : index
    %c0_195 = arith.constant 0 : index
    %175 = vector.load %arg5[%c0_194, %c0_195] : memref<1x128xf32, #tpu.memory_space<vmem>>, vector<1x128xf32>
    %176 = vector.broadcast %175 : vector<1x128xf32> to vector<128x128xf32>
    %177 = arith.addf %174, %176 : vector<128x128xf32>
    %cst_196 = arith.constant 2.000000e-01 : f32
    %178 = vector.broadcast %cst_196 : f32 to vector<128x128xf32>
    %179 = arith.mulf %178, %177 : vector<128x128xf32>
    %180 = arith.maximumf %177, %179 : vector<128x128xf32>
    %c0_197 = arith.constant 0 : index
    %c0_198 = arith.constant 0 : index
    %c0_199 = arith.constant 0 : index
    %c0_200 = arith.constant 0 : index
    %181 = vector.load %arg1[%c0_197, %c0_198, %c0_199, %c0_200] : memref<1x18x18x64xbf16, #tpu.memory_space<vmem>>, vector<1x18x16x64xbf16>
    %182 = arith.extf %181 : vector<1x18x16x64xbf16> to vector<1x18x16x64xf32>
    %c0_201 = arith.constant 0 : index
    %c0_202 = arith.constant 0 : index
    %c1_203 = arith.constant 1 : index
    %c0_204 = arith.constant 0 : index
    %183 = vector.load %arg1[%c0_201, %c0_202, %c1_203, %c0_204] : memref<1x18x18x64xbf16, #tpu.memory_space<vmem>>, vector<1x18x16x64xbf16>
    %184 = arith.extf %183 : vector<1x18x16x64xbf16> to vector<1x18x16x64xf32>
    %c0_205 = arith.constant 0 : index
    %c0_206 = arith.constant 0 : index
    %c2_207 = arith.constant 2 : index
    %c0_208 = arith.constant 0 : index
    %185 = vector.load %arg1[%c0_205, %c0_206, %c2_207, %c0_208] : memref<1x18x18x64xbf16, #tpu.memory_space<vmem>>, vector<1x18x16x64xbf16>
    %186 = arith.extf %185 : vector<1x18x16x64xbf16> to vector<1x18x16x64xf32>
    %cst_209 = arith.constant 2.000000e+00 : f32
    %187 = vector.broadcast %cst_209 : f32 to vector<1x18x16x64xf32>
    %188 = arith.mulf %187, %184 : vector<1x18x16x64xf32>
    %189 = arith.addf %182, %188 : vector<1x18x16x64xf32>
    %190 = arith.addf %189, %186 : vector<1x18x16x64xf32>
    %191 = vector.extract_strided_slice %190 {offsets = [0, 0, 0, 0], sizes = [1, 16, 16, 64], strides = [1, 1, 1, 1]} : vector<1x18x16x64xf32> to vector<1x16x16x64xf32>
    %192 = vector.extract_strided_slice %190 {offsets = [0, 1, 0, 0], sizes = [1, 16, 16, 64], strides = [1, 1, 1, 1]} : vector<1x18x16x64xf32> to vector<1x16x16x64xf32>
    %cst_210 = arith.constant 2.000000e+00 : f32
    %193 = vector.broadcast %cst_210 : f32 to vector<1x16x16x64xf32>
    %194 = arith.mulf %193, %192 : vector<1x16x16x64xf32>
    %195 = arith.addf %191, %194 : vector<1x16x16x64xf32>
    %196 = vector.extract_strided_slice %190 {offsets = [0, 2, 0, 0], sizes = [1, 16, 16, 64], strides = [1, 1, 1, 1]} : vector<1x18x16x64xf32> to vector<1x16x16x64xf32>
    %197 = arith.addf %195, %196 : vector<1x16x16x64xf32>
    %198 = vector.shape_cast %197 : vector<1x16x16x64xf32> to vector<1x8x2x16x64xf32>
    %199 = vector.extract_strided_slice %198 {offsets = [0, 0, 0, 0, 0], sizes = [1, 8, 1, 16, 64], strides = [1, 1, 1, 1, 1]} : vector<1x8x2x16x64xf32> to vector<1x8x1x16x64xf32>
    %200 = vector.shape_cast %199 : vector<1x8x1x16x64xf32> to vector<1x8x16x64xf32>
    %201 = vector.shape_cast %200 : vector<1x8x16x64xf32> to vector<128x64xf32>
    %202 = arith.truncf %201 : vector<128x64xf32> to vector<128x64xbf16>
    %c0_211 = arith.constant 0 : index
    %c0_212 = arith.constant 0 : index
    %203 = vector.load %arg6[%c0_211, %c0_212] : memref<64x128xbf16, #tpu.memory_space<vmem>>, vector<64x128xbf16>
    %cst_213 = arith.constant dense<0.000000e+00> : vector<128x128xf32>
    %204 = tpu.matmul %202, %203, %cst_213 {dimension_numbers = #tpu.dot_dimension_numbers<[1], [0], [0], [1], [0, 0, 1, 1], [], []>} : vector<128x64xbf16>, vector<64x128xbf16>, vector<128x128xf32> -> vector<128x128xf32>
    %205 = arith.addf %180, %204 : vector<128x128xf32>
    %206 = vector.shape_cast %205 : vector<128x128xf32> to vector<1x8x16x128xf32>
    %c0_214 = arith.constant 0 : index
    %c0_215 = arith.constant 0 : index
    %c0_216 = arith.constant 0 : index
    %c0_217 = arith.constant 0 : index
    %207 = vector.load %arg10[%c0_214, %c0_215, %c0_216, %c0_217] : memref<1x8x16x128xf32, #tpu.memory_space<vmem>>, vector<1x8x16x128xf32>
    tpu.vector_store %arg10[%c0_214, %c0_215, %c0_216, %c0_217], %206 {strides = array<i32>} : memref<1x8x16x128xf32, #tpu.memory_space<vmem>>, vector<1x8x16x128xf32>,
    %c0_218 = arith.constant 0 : index
    %c0_219 = arith.constant 0 : index
    %c0_220 = arith.constant 0 : index
    %c0_221 = arith.constant 0 : index
    %208 = tpu.strided_load %arg10[%c0_218, %c0_219, %c0_220, %c0_221] {strides = array<i32: 1, 1, 2, 1>} : memref<1x8x16x128xf32, #tpu.memory_space<vmem>>, vector<1x8x8x128xf32>
    %c0_222 = arith.constant 0 : index
    %c0_223 = arith.constant 0 : index
    %c0_224 = arith.constant 0 : index
    %c0_225 = arith.constant 0 : index
    %209 = vector.load %arg7[%c0_222, %c0_223, %c0_224, %c0_225] : memref<1x8x8x128xf32, #tpu.memory_space<vmem>>, vector<1x8x8x128xf32>
    tpu.vector_store %arg7[%c0_222, %c0_223, %c0_224, %c0_225], %208 {strides = array<i32>} : memref<1x8x8x128xf32, #tpu.memory_space<vmem>>, vector<1x8x8x128xf32>,
    return
  }
  func.func @transform_0(%arg0: i32) -> (i32, i32, i32, i32) {
    %c0_i32 = arith.constant 0 : i32
    %c0_i32_0 = arith.constant 0 : i32
    %c0_i32_1 = arith.constant 0 : i32
    %c0_i32_2 = arith.constant 0 : i32
    return %arg0, %c0_i32, %c0_i32_0, %c0_i32_1 : i32, i32, i32, i32
  }
  func.func @transform_1(%arg0: i32) -> (i32, i32, i32) {
    %c0_i32 = arith.constant 0 : i32
    %c0_i32_0 = arith.constant 0 : i32
    %c0_i32_1 = arith.constant 0 : i32
    %c0_i32_2 = arith.constant 0 : i32
    return %c0_i32, %c0_i32_0, %c0_i32_1 : i32, i32, i32
  }
  func.func @transform_2(%arg0: i32) -> (i32, i32) {
    %c0_i32 = arith.constant 0 : i32
    %c0_i32_0 = arith.constant 0 : i32
    %c0_i32_1 = arith.constant 0 : i32
    return %c0_i32, %c0_i32_0 : i32, i32
  }
  func.func @transform_3(%arg0: i32) -> (i32, i32, i32) {
    %c0_i32 = arith.constant 0 : i32
    %c0_i32_0 = arith.constant 0 : i32
    %c0_i32_1 = arith.constant 0 : i32
    %c0_i32_2 = arith.constant 0 : i32
    return %c0_i32, %c0_i32_0, %c0_i32_1 : i32, i32, i32
  }
  func.func @transform_4(%arg0: i32) -> (i32, i32) {
    %c0_i32 = arith.constant 0 : i32
    %c0_i32_0 = arith.constant 0 : i32
    %c0_i32_1 = arith.constant 0 : i32
    return %c0_i32, %c0_i32_0 : i32, i32
  }
  func.func @transform_5(%arg0: i32) -> (i32, i32) {
    %c0_i32 = arith.constant 0 : i32
    %c0_i32_0 = arith.constant 0 : i32
    %c0_i32_1 = arith.constant 0 : i32
    return %c0_i32, %c0_i32_0 : i32, i32
  }
  func.func @transform_6(%arg0: i32) -> (i32, i32, i32, i32) {
    %c0_i32 = arith.constant 0 : i32
    %c0_i32_0 = arith.constant 0 : i32
    %c0_i32_1 = arith.constant 0 : i32
    %c0_i32_2 = arith.constant 0 : i32
    return %arg0, %c0_i32, %c0_i32_0, %c0_i32_1 : i32, i32, i32, i32
  }
}

</mosaic_0001>

<llo_original>
// kernel: forward.1
$region0: #{forward.1}
  #allocation0 [shape = 'u32[]', space=smem, size = 0x4, offset = 0x4, fixed_abs, tag = 'smem constant byte address 0x4 - core index']
  #allocation1 [shape = 'u32[144,128]{1,0:T(1,128)}', space=vmem, size = 0x12000, scoped, tag = 'internal scratch']
  #allocation2 [shape = 'bf16[1,18,18,64]{3,2,1,0:T(8,128)(2,1)}', space=vmem, size = 0x1b000, scoped, tag = 'scratch operand']
  #allocation3 [shape = 'bf16[1,18,18,64]{3,2,1,0:T(8,128)(2,1)}', space=vmem, size = 0x1b000, scoped, tag = 'scratch operand']
  #allocation4 [shape = 'f32[1,8,16,128]{3,2,1,0:T(8,128)}', space=vmem, size = 0x10000, scoped, tag = 'scratch operand']
  %s0 = inlined_call_operand.vmem [shape: bf16[2,18,18,64], index: 0, kind: input, shape index: {}]
  %s1 = inlined_call_operand.vmem [shape: bf16[9,64,64], index: 1, kind: input, shape index: {}]
  %s2 = inlined_call_operand.vmem [shape: f32[1,64], index: 2, kind: input, shape index: {}]
  %s3 = inlined_call_operand.vmem [shape: bf16[9,64,128], index: 3, kind: input, shape index: {}]
  %s4 = inlined_call_operand.vmem [shape: f32[1,128], index: 4, kind: input, shape index: {}]
  %s5 = inlined_call_operand.vmem [shape: bf16[64,128], index: 5, kind: input, shape index: {}]
  %s6 = inlined_call_operand.hbm [shape: f32[2,8,8,128], index: 6, kind: output, shape index: {}]
  %s7 = sld [smem:[#allocation0]]
  $region57: #{forward.1} parent=0
    _
  %s9 = ssub.s32 1, %s7
  %s10 = scalar_select 0, %s9, %s7
  $region1: #{forward.1} parent=0
    #allocation5 [shape = 'u8[65536]{0}', space=vmem, size = 0x10000, scoped, tag = 'output window, operand 0']
    #allocation6 [shape = 's32[2]{0}', space=sflag, size = 0x8, scoped, tag = 'scoped memory for forward.1']
    %11 = vsyncpa [#allocation6], 0
    %s12 = scalar_lea.sflag [#allocation6], 1
    %13 = vsyncpa %s12, 0
    loop: start=0, step=1, limit=4
    $region2: #{forward.1} parent=1 // loop_pre_header
      _
    $region3: #{forward.1} parent=1 // loop_header
      %s15 = sphi 0, %s19
      %p16 = scmp.ge.s32.totalorder %s15, 4
      %s25 = sphi 0, %s27
      %s28 = sphi 0, %s25
      %s29 = sphi 0, %s28
      %s45 = sphi 0, %s29
      %s49 = sphi 0, %s49
      %s51 = sphi 0, %s49
      %s52 = sphi 0, %s51
      %s66 = sphi 0, %s52
      %s70 = sphi 0, %s70
      %s72 = sphi 0, %s70
      %s73 = sphi 0, %s72
      %s87 = sphi 0, %s73
      %s91 = sphi 0, %s91
      %s93 = sphi 0, %s91
      %s94 = sphi 0, %s93
      %s108 = sphi 0, %s94
      %s112 = sphi 0, %s112
      %s114 = sphi 0, %s112
      %s115 = sphi 0, %s114
      %s129 = sphi 0, %s115
      %s133 = sphi 0, %s133
      %s135 = sphi 0, %s133
      %s136 = sphi 0, %s135
      %s150 = sphi 0, %s136
      %s156 = sphi 0, %s158
      %s159 = sphi 0, %s156
      %s160 = sphi 0, %s159
      %s176 = sphi 0, %s160
    $region4: #{forward.1} parent=1 // loop_header_branch
      %18 = sbr.rel (%p16) target = $region8
    $region5: #{forward.1} parent=1 // loop_body
      %s20 = ssub.s32 %s15, 1
      %s21 = ssub.s32 %s15, 2
      %s22 = sadd.s32 %s15, 1
      %s23 = ssub.s32 %s15, %s22
      %p24 = scmp.eq.s32.totalorder %s23, 0
      %s26 = sadd.s32 %s25, 1
      %s27 = scalar_select %p24, %s25, %s26
      %p30 = pneg %p24
      %p31 = scmp.eq.s32.totalorder %s15, 1
      %p32 = por %p30, %p31
      %p33 = scmp.ne.s32.totalorder %s25, %s28
      %p34 = scmp.eq.s32.totalorder %s15, 0
      %p35 = por %p33, %p34
      %p36 = scmp.ne.s32.totalorder %s25, %s28
      %p37 = scmp.eq.s32.totalorder %s20, 1
      %p38 = por %p36, %p37
      %p39 = scmp.ne.s32.totalorder %s28, %s29
      %p40 = scmp.eq.s32.totalorder %s20, 0
      %p41 = por %p39, %p40
      %p42 = scmp.ne.s32.totalorder %s28, %s29
      %p43 = scmp.eq.s32.totalorder %s21, 1
      %p44 = por %p42, %p43
      %p46 = scmp.ne.s32.totalorder %s29, %s45
      %p47 = scmp.eq.s32.totalorder %s21, 0
      %p48 = por %p46, %p47
      %s50 = sadd.s32 %s49, 1
      %p53 = scmp.eq.s32.totalorder %s15, 1
      %p54 = scmp.ne.s32.totalorder %s49, %s51
      %p55 = scmp.eq.s32.totalorder %s15, 0
      %p56 = por %p54, %p55
      %p57 = scmp.ne.s32.totalorder %s49, %s51
      %p58 = scmp.eq.s32.totalorder %s20, 1
      %p59 = por %p57, %p58
      %p60 = scmp.ne.s32.totalorder %s51, %s52
      %p61 = scmp.eq.s32.totalorder %s20, 0
      %p62 = por %p60, %p61
      %p63 = scmp.ne.s32.totalorder %s51, %s52
      %p64 = scmp.eq.s32.totalorder %s21, 1
      %p65 = por %p63, %p64
      %p67 = scmp.ne.s32.totalorder %s52, %s66
      %p68 = scmp.eq.s32.totalorder %s21, 0
      %p69 = por %p67, %p68
      %s71 = sadd.s32 %s70, 1
      %p74 = scmp.eq.s32.totalorder %s15, 1
      %p75 = scmp.ne.s32.totalorder %s70, %s72
      %p76 = scmp.eq.s32.totalorder %s15, 0
      %p77 = por %p75, %p76
      %p78 = scmp.ne.s32.totalorder %s70, %s72
      %p79 = scmp.eq.s32.totalorder %s20, 1
      %p80 = por %p78, %p79
      %p81 = scmp.ne.s32.totalorder %s72, %s73
      %p82 = scmp.eq.s32.totalorder %s20, 0
      %p83 = por %p81, %p82
      %p84 = scmp.ne.s32.totalorder %s72, %s73
      %p85 = scmp.eq.s32.totalorder %s21, 1
      %p86 = por %p84, %p85
      %p88 = scmp.ne.s32.totalorder %s73, %s87
      %p89 = scmp.eq.s32.totalorder %s21, 0
      %p90 = por %p88, %p89
      %s92 = sadd.s32 %s91, 1
      %p95 = scmp.eq.s32.totalorder %s15, 1
      %p96 = scmp.ne.s32.totalorder %s91, %s93
      %p97 = scmp.eq.s32.totalorder %s15, 0
      %p98 = por %p96, %p97
      %p99 = scmp.ne.s32.totalorder %s91, %s93
      %p100 = scmp.eq.s32.totalorder %s20, 1
      %p101 = por %p99, %p100
      %p102 = scmp.ne.s32.totalorder %s93, %s94
      %p103 = scmp.eq.s32.totalorder %s20, 0
      %p104 = por %p102, %p103
      %p105 = scmp.ne.s32.totalorder %s93, %s94
      %p106 = scmp.eq.s32.totalorder %s21, 1
      %p107 = por %p105, %p106
      %p109 = scmp.ne.s32.totalorder %s94, %s108
      %p110 = scmp.eq.s32.totalorder %s21, 0
      %p111 = por %p109, %p110
      %s113 = sadd.s32 %s112, 1
      %p116 = scmp.eq.s32.totalorder %s15, 1
      %p117 = scmp.ne.s32.totalorder %s112, %s114
      %p118 = scmp.eq.s32.totalorder %s15, 0
      %p119 = por %p117, %p118
      %p120 = scmp.ne.s32.totalorder %s112, %s114
      %p121 = scmp.eq.s32.totalorder %s20, 1
      %p122 = por %p120, %p121
      %p123 = scmp.ne.s32.totalorder %s114, %s115
      %p124 = scmp.eq.s32.totalorder %s20, 0
      %p125 = por %p123, %p124
      %p126 = scmp.ne.s32.totalorder %s114, %s115
      %p127 = scmp.eq.s32.totalorder %s21, 1
      %p128 = por %p126, %p127
      %p130 = scmp.ne.s32.totalorder %s115, %s129
      %p131 = scmp.eq.s32.totalorder %s21, 0
      %p132 = por %p130, %p131
      %s134 = sadd.s32 %s133, 1
      %p137 = scmp.eq.s32.totalorder %s15, 1
      %p138 = scmp.ne.s32.totalorder %s133, %s135
      %p139 = scmp.eq.s32.totalorder %s15, 0
      %p140 = por %p138, %p139
      %p141 = scmp.ne.s32.totalorder %s133, %s135
      %p142 = scmp.eq.s32.totalorder %s20, 1
      %p143 = por %p141, %p142
      %p144 = scmp.ne.s32.totalorder %s135, %s136
      %p145 = scmp.eq.s32.totalorder %s20, 0
      %p146 = por %p144, %p145
      %p147 = scmp.ne.s32.totalorder %s135, %s136
      %p148 = scmp.eq.s32.totalorder %s21, 1
      %p149 = por %p147, %p148
      %p151 = scmp.ne.s32.totalorder %s136, %s150
      %p152 = scmp.eq.s32.totalorder %s21, 0
      %p153 = por %p151, %p152
      %s154 = ssub.s32 %s15, %s22
      %p155 = scmp.eq.s32.totalorder %s154, 0
      %s157 = sadd.s32 %s156, 1
      %s158 = scalar_select %p155, %s156, %s157
      %p161 = pneg %p155
      %p162 = scmp.eq.s32.totalorder %s15, 1
      %p163 = por %p161, %p162
      %p164 = scmp.ne.s32.totalorder %s156, %s159
      %p165 = scmp.eq.s32.totalorder %s15, 0
      %p166 = por %p164, %p165
      %p167 = scmp.ne.s32.totalorder %s156, %s159
      %p168 = scmp.eq.s32.totalorder %s20, 1
      %p169 = por %p167, %p168
      %p170 = scmp.ne.s32.totalorder %s159, %s160
      %p171 = scmp.eq.s32.totalorder %s20, 0
      %p172 = por %p170, %p171
      %p173 = scmp.ne.s32.totalorder %s159, %s160
      %p174 = scmp.eq.s32.totalorder %s21, 1
      %p175 = por %p173, %p174
      %p177 = scmp.ne.s32.totalorder %s160, %s176
      %p178 = scmp.eq.s32.totalorder %s21, 0
      %p179 = por %p177, %p178
      %p180 = scmp.le.s32.totalorder 1, %s15
      %p181 = scmp.lt.s32.totalorder %s15, 3
      %p182 = pnand %p180, %p181
      %p183 = pneg %p182
      // Predicated region
      $region9: #{forward.1} parent=5 // pred_check
        _
      $region10: #{forward.1} parent=5 // pred_check_branch
        %185 = sbr.rel (%p182) target = $region12
      $region11: #{forward.1} parent=5 // pred_region
        %s186 = ssub.s32 %s15, 1
        // Predicated region
        $region13: #{forward.1} parent=11 // pred_check
          %p187 = pneg %p62
        $region14: #{forward.1} parent=11 // pred_check_branch
          %189 = sbr.rel (%p187) target = $region16
        $region15: #{forward.1} parent=11 // pred_region
          _
        $region16: #{forward.1} parent=11 // pred_fallthru
          _
        // Predicated region
        $region17: #{forward.1} parent=11 // pred_check
          %p190 = pneg %p83
        $region18: #{forward.1} parent=11 // pred_check_branch
          %192 = sbr.rel (%p190) target = $region20
        $region19: #{forward.1} parent=11 // pred_region
          _
        $region20: #{forward.1} parent=11 // pred_fallthru
          _
        // Predicated region
        $region21: #{forward.1} parent=11 // pred_check
          %p193 = pneg %p104
        $region22: #{forward.1} parent=11 // pred_check_branch
          %195 = sbr.rel (%p193) target = $region24
        $region23: #{forward.1} parent=11 // pred_region
          _
        $region24: #{forward.1} parent=11 // pred_fallthru
          _
        // Predicated region
        $region25: #{forward.1} parent=11 // pred_check
          %p196 = pneg %p125
        $region26: #{forward.1} parent=11 // pred_check_branch
          %198 = sbr.rel (%p196) target = $region28
        $region27: #{forward.1} parent=11 // pred_region
          _
        $region28: #{forward.1} parent=11 // pred_fallthru
          _
        // Predicated region
        $region29: #{forward.1} parent=11 // pred_check
          %p199 = pneg %p146
        $region30: #{forward.1} parent=11 // pred_check_branch
          %201 = sbr.rel (%p199) target = $region32
        $region31: #{forward.1} parent=11 // pred_region
          _
        $region32: #{forward.1} parent=11 // pred_fallthru
          _
      $region12: #{forward.1} parent=5 // pred_fallthru
        _
      %p202 = scmp.lt.s32.totalorder %s15, 2
      // Predicated region
      $region33: #{forward.1} parent=5 // pred_check
        %p203 = pneg %p202
      $region34: #{forward.1} parent=5 // pred_check_branch
        %205 = sbr.rel (%p203) target = $region36
      $region35: #{forward.1} parent=5 // pred_region
        // Predicated region
        $region37: #{forward.1} parent=35 // pred_check
          %p206 = pneg %p35
        $region38: #{forward.1} parent=35 // pred_check_branch
          %208 = sbr.rel (%p206) target = $region40
        $region39: #{forward.1} parent=35 // pred_region
          %p209 = scmp.lt.s32.totalorder %s15, 1
          %s210 = scalar_select %p209, %s15, 1
          %s211 = smul.addr %s210, 54
          %s212 = smul.addr %s211, 4
          %s213 = scalar_lea.vmem %s0, %s212
        $region40: #{forward.1} parent=35 // pred_fallthru
          _
      $region36: #{forward.1} parent=5 // pred_fallthru
        _
      %p214 = scmp.le.s32.totalorder 1, %s15
      %p215 = scmp.lt.s32.totalorder %s15, 3
      %p216 = pnand %p214, %p215
      %p217 = pneg %p216
      // Predicated region
      $region41: #{forward.1} parent=5 // pred_check
        _
      $region42: #{forward.1} parent=5 // pred_check_branch
        %219 = sbr.rel (%p216) target = $region44
      $region43: #{forward.1} parent=5 // pred_region
        %s220 = ssub.s32 %s15, 1
        %p221 = scmp.lt.s32.totalorder %s20, 1
        %s222 = scalar_select %p221, %s20, 1
        %s223 = smul.addr %s222, 54
        %s224 = smul.addr %s223, 4
        %s225 = scalar_lea.vmem %s0, %s224
        %p226 = pneg %p41
        %p227 = pneg %p38
        %p228 = pneg %p62
        %p229 = pneg %p59
        %p230 = pneg %p83
        %p231 = pneg %p80
        %p232 = pneg %p104
        %p233 = pneg %p101
        %p234 = pneg %p125
        %p235 = pneg %p122
        %p236 = pneg %p146
        %p237 = pneg %p143
        %p238 = pneg %p172
        %p239 = pneg %p169
        %s240 = sand.u32 %s159, 1
        %s241 = scalar_lea.sflag [#allocation6], %s240
        %s242 = sand.u32 %s159, 1
        %s243 = smul.addr %s242, 64
        %s244 = scalar_lea.vmem [#allocation5], %s243
        %p245 = scmp.lt.s32.totalorder %s20, 1
        %s246 = scalar_select %p245, %s20, 1
        %s247 = smul.addr %s246, 54
        %s248 = smul.addr %s247, 4
        %s249 = scalar_lea.vmem %s0, %s248
        %v251 = vld [vmem:[%s249] sm:$0xf]
        %v252 = vld [vmem:[%s249 + $0x4] sm:$0xf]
        %v253 = vld [vmem:[%s249 + $0xc] sm:$0xf]
        %v254 = vld [vmem:[%s249 + $0x10] sm:$0xf]
        %v255 = vld [vmem:[%s249 + $0x18] sm:$0xf]
        %v256 = vld [vmem:[%s249 + $0x1c] sm:$0xf]
        %v257 = vld [vmem:[%s249 + $0x24] sm:$0xf]
        %v258 = vld [vmem:[%s249 + $0x28] sm:$0xf]
        %v259 = vld [vmem:[%s249 + $0x30] sm:$0xf]
        %v260 = vld [vmem:[%s249 + $0x34] sm:$0xf]
        %v261 = vld [vmem:[%s249 + $0x3c] sm:$0xf]
        %v262 = vld [vmem:[%s249 + $0x40] sm:$0xf]
        %v263 = vld [vmem:[%s249 + $0x48] sm:$0xf]
        %v264 = vld [vmem:[%s249 + $0x4c] sm:$0xf]
        %v265 = vld [vmem:[%s249 + $0x54] sm:$0xf]
        %v266 = vld [vmem:[%s249 + $0x58] sm:$0xf]
        %v267 = vld [vmem:[%s249 + $0x60] sm:$0xf]
        %v268 = vld [vmem:[%s249 + $0x64] sm:$0xf]
        %v269 = vld [vmem:[%s249 + $0x6c] sm:$0xf]
        %v270 = vld [vmem:[%s249 + $0x70] sm:$0xf]
        %v271 = vld [vmem:[%s249 + $0x78] sm:$0xf]
        %v272 = vld [vmem:[%s249 + $0x7c] sm:$0xf]
        %v273 = vld [vmem:[%s249 + $0x84] sm:$0xf]
        %v274 = vld [vmem:[%s249 + $0x88] sm:$0xf]
        %v275 = vld [vmem:[%s249 + $0x90] sm:$0xf]
        %v276 = vld [vmem:[%s249 + $0x94] sm:$0xf]
        %v277 = vld [vmem:[%s249 + $0x9c] sm:$0xf]
        %v278 = vld [vmem:[%s249 + $0xa0] sm:$0xf]
        %v279 = vld [vmem:[%s249 + $0xa8] sm:$0xf]
        %v280 = vld [vmem:[%s249 + $0xac] sm:$0xf]
        %v281 = vld [vmem:[%s249 + $0xb4] sm:$0xf]
        %v282 = vld [vmem:[%s249 + $0xb8] sm:$0xf]
        %v283 = vld [vmem:[%s1] sm:$0xf]
        %v284 = vld [vmem:[%s1 + $0x4] sm:$0xf]
        %v285 = vld [vmem:[%s1 + $0x8] sm:$0xf]
        %v286 = vld [vmem:[%s1 + $0xc] sm:$0xf]
        %v287 = vld [vmem:[%s1 + $0x10] sm:$0xf]
        %v288 = vld [vmem:[%s1 + $0x14] sm:$0xf]
        %v289 = vld [vmem:[%s1 + $0x18] sm:$0xf]
        %v290 = vld [vmem:[%s1 + $0x1c] sm:$0xf]
        %v291 = vld [vmem:[%s249 + $0x8] sm:$0x1]
        %v292 = vld [vmem:[%s249 + $0x14] sm:$0x1]
        %v293 = vld [vmem:[%s249 + $0x20] sm:$0x1]
        %v294 = vld [vmem:[%s249 + $0x2c] sm:$0x1]
        %v295 = vld [vmem:[%s249 + $0x38] sm:$0x1]
        %v296 = vld [vmem:[%s249 + $0x44] sm:$0x1]
        %v297 = vld [vmem:[%s249 + $0x50] sm:$0x1]
        %v298 = vld [vmem:[%s249 + $0x5c] sm:$0x1]
        %v299 = vld [vmem:[%s249 + $0x68] sm:$0x1]
        %v300 = vld [vmem:[%s249 + $0x74] sm:$0x1]
        %v301 = vld [vmem:[%s249 + $0x80] sm:$0x1]
        %v302 = vld [vmem:[%s249 + $0x8c] sm:$0x1]
        %v303 = vld [vmem:[%s249 + $0x98] sm:$0x1]
        %v304 = vld [vmem:[%s249 + $0xa4] sm:$0x1]
        %v305 = vld [vmem:[%s249 + $0xb0] sm:$0x1]
        %v306 = vld [vmem:[%s249 + $0xbc] sm:$0x1]
        %vm307 = vsmask.f32 3328
        %vm308 = vsmask.f32 7440
        %vm309 = vmor %vm307, %vm308
        %v311 = vshrl.u32 %v251, 16
        %v313 = vrot.slane %v311, 4
        %v314 = vshll.u32 %v251, 16
        %v316 = vrot.slane %v314, 5
        %v317 = vor.u32 %v313, %v316
        %v318 = vrot.slane %v317, 4
        %v320 = vshll.u32 %v252, 16
        %v322 = vrot.slane %v320, 5
        %v323 = vsel %vm309, %v318, %v322
        %v324 = vshrl.u32 %v252, 16
        %v326 = vrot.slane %v324, 4
        %v327 = vor.u32 %v326, %v322
        %v328 = vrot.slane %v327, 4
        %v330 = vshll.u32 %v291, 16
        %v332 = vrot.slane %v330, 5
        %v333 = vsel %vm309, %v328, %v332
        %v335 = vshrl.u32 %v253, 16
        %v337 = vrot.slane %v335, 4
        %v338 = vshll.u32 %v253, 16
        %v340 = vrot.slane %v338, 5
        %v341 = vor.u32 %v337, %v340
        %v342 = vrot.slane %v341, 4
        %v344 = vshll.u32 %v254, 16
        %v346 = vrot.slane %v344, 5
        %v347 = vsel %vm309, %v342, %v346
        %v348 = vshrl.u32 %v254, 16
        %v350 = vrot.slane %v348, 4
        %v351 = vor.u32 %v350, %v346
        %v352 = vrot.slane %v351, 4
        %v354 = vshll.u32 %v292, 16
        %v356 = vrot.slane %v354, 5
        %v357 = vsel %vm309, %v352, %v356
        %v359 = vshrl.u32 %v255, 16
        %v361 = vrot.slane %v359, 4
        %v362 = vshll.u32 %v255, 16
        %v364 = vrot.slane %v362, 5
        %v365 = vor.u32 %v361, %v364
        %v366 = vrot.slane %v365, 4
        %v368 = vshll.u32 %v256, 16
        %v370 = vrot.slane %v368, 5
        %v371 = vsel %vm309, %v366, %v370
        %v372 = vshrl.u32 %v256, 16
        %v374 = vrot.slane %v372, 4
        %v375 = vor.u32 %v374, %v370
        %v376 = vrot.slane %v375, 4
        %v378 = vshll.u32 %v293, 16
        %v380 = vrot.slane %v378, 5
        %v381 = vsel %vm309, %v376, %v380
        %v383 = vshrl.u32 %v257, 16
        %v385 = vrot.slane %v383, 4
        %v386 = vshll.u32 %v257, 16
        %v388 = vrot.slane %v386, 5
        %v389 = vor.u32 %v385, %v388
        %v390 = vrot.slane %v389, 4
        %v392 = vshll.u32 %v258, 16
        %v394 = vrot.slane %v392, 5
        %v395 = vsel %vm309, %v390, %v394
        %v396 = vshrl.u32 %v258, 16
        %v398 = vrot.slane %v396, 4
        %v399 = vor.u32 %v398, %v394
        %v400 = vrot.slane %v399, 4
        %v402 = vshll.u32 %v294, 16
        %v404 = vrot.slane %v402, 5
        %v405 = vsel %vm309, %v400, %v404
        %v407 = vshrl.u32 %v259, 16
        %v409 = vrot.slane %v407, 4
        %v410 = vshll.u32 %v259, 16
        %v412 = vrot.slane %v410, 5
        %v413 = vor.u32 %v409, %v412
        %v414 = vrot.slane %v413, 4
        %v416 = vshll.u32 %v260, 16
        %v418 = vrot.slane %v416, 5
        %v419 = vsel %vm309, %v414, %v418
        %v420 = vshrl.u32 %v260, 16
        %v422 = vrot.slane %v420, 4
        %v423 = vor.u32 %v422, %v418
        %v424 = vrot.slane %v423, 4
        %v426 = vshll.u32 %v295, 16
        %v428 = vrot.slane %v426, 5
        %v429 = vsel %vm309, %v424, %v428
        %v431 = vshrl.u32 %v261, 16
        %v433 = vrot.slane %v431, 4
        %v434 = vshll.u32 %v261, 16
        %v436 = vrot.slane %v434, 5
        %v437 = vor.u32 %v433, %v436
        %v438 = vrot.slane %v437, 4
        %v440 = vshll.u32 %v262, 16
        %v442 = vrot.slane %v440, 5
        %v443 = vsel %vm309, %v438, %v442
        %v444 = vshrl.u32 %v262, 16
        %v446 = vrot.slane %v444, 4
        %v447 = vor.u32 %v446, %v442
        %v448 = vrot.slane %v447, 4
        %v450 = vshll.u32 %v296, 16
        %v452 = vrot.slane %v450, 5
        %v453 = vsel %vm309, %v448, %v452
        %v455 = vshrl.u32 %v263, 16
        %v457 = vrot.slane %v455, 4
        %v458 = vshll.u32 %v263, 16
        %v460 = vrot.slane %v458, 5
        %v461 = vor.u32 %v457, %v460
        %v462 = vrot.slane %v461, 4
        %v464 = vshll.u32 %v264, 16
        %v466 = vrot.slane %v464, 5
        %v467 = vsel %vm309, %v462, %v466
        %v468 = vshrl.u32 %v264, 16
        %v470 = vrot.slane %v468, 4
        %v471 = vor.u32 %v470, %v466
        %v472 = vrot.slane %v471, 4
        %v474 = vshll.u32 %v297, 16
        %v476 = vrot.slane %v474, 5
        %v477 = vsel %vm309, %v472, %v476
        %v479 = vshrl.u32 %v265, 16
        %v481 = vrot.slane %v479, 4
        %v482 = vshll.u32 %v265, 16
        %v484 = vrot.slane %v482, 5
        %v485 = vor.u32 %v481, %v484
        %v486 = vrot.slane %v485, 4
        %v488 = vshll.u32 %v266, 16
        %v490 = vrot.slane %v488, 5
        %v491 = vsel %vm309, %v486, %v490
        %v492 = vshrl.u32 %v266, 16
        %v494 = vrot.slane %v492, 4
        %v495 = vor.u32 %v494, %v490
        %v496 = vrot.slane %v495, 4
        %v498 = vshll.u32 %v298, 16
        %v500 = vrot.slane %v498, 5
        %v501 = vsel %vm309, %v496, %v500
        %v503 = vshrl.u32 %v267, 16
        %v505 = vrot.slane %v503, 4
        %v506 = vshll.u32 %v267, 16
        %v508 = vrot.slane %v506, 5
        %v509 = vor.u32 %v505, %v508
        %v510 = vrot.slane %v509, 4
        %v512 = vshll.u32 %v268, 16
        %v514 = vrot.slane %v512, 5
        %v515 = vsel %vm309, %v510, %v514
        %v516 = vshrl.u32 %v268, 16
        %v518 = vrot.slane %v516, 4
        %v519 = vor.u32 %v518, %v514
        %v520 = vrot.slane %v519, 4
        %v522 = vshll.u32 %v299, 16
        %v524 = vrot.slane %v522, 5
        %v525 = vsel %vm309, %v520, %v524
        %v527 = vshrl.u32 %v269, 16
        %v529 = vrot.slane %v527, 4
        %v530 = vshll.u32 %v269, 16
        %v532 = vrot.slane %v530, 5
        %v533 = vor.u32 %v529, %v532
        %v534 = vrot.slane %v533, 4
        %v536 = vshll.u32 %v270, 16
        %v538 = vrot.slane %v536, 5
        %v539 = vsel %vm309, %v534, %v538
        %v540 = vshrl.u32 %v270, 16
        %v542 = vrot.slane %v540, 4
        %v543 = vor.u32 %v542, %v538
        %v544 = vrot.slane %v543, 4
        %v546 = vshll.u32 %v300, 16
        %v548 = vrot.slane %v546, 5
        %v549 = vsel %vm309, %v544, %v548
        %v551 = vshrl.u32 %v271, 16
        %v553 = vrot.slane %v551, 4
        %v554 = vshll.u32 %v271, 16
        %v556 = vrot.slane %v554, 5
        %v557 = vor.u32 %v553, %v556
        %v558 = vrot.slane %v557, 4
        %v560 = vshll.u32 %v272, 16
        %v562 = vrot.slane %v560, 5
        %v563 = vsel %vm309, %v558, %v562
        %v564 = vshrl.u32 %v272, 16
        %v566 = vrot.slane %v564, 4
        %v567 = vor.u32 %v566, %v562
        %v568 = vrot.slane %v567, 4
        %v570 = vshll.u32 %v301, 16
        %v572 = vrot.slane %v570, 5
        %v573 = vsel %vm309, %v568, %v572
        %v575 = vshrl.u32 %v273, 16
        %v577 = vrot.slane %v575, 4
        %v578 = vshll.u32 %v273, 16
        %v580 = vrot.slane %v578, 5
        %v581 = vor.u32 %v577, %v580
        %v582 = vrot.slane %v581, 4
        %v584 = vshll.u32 %v274, 16
        %v586 = vrot.slane %v584, 5
        %v587 = vsel %vm309, %v582, %v586
        %v588 = vshrl.u32 %v274, 16
        %v590 = vrot.slane %v588, 4
        %v591 = vor.u32 %v590, %v586
        %v592 = vrot.slane %v591, 4
        %v594 = vshll.u32 %v302, 16
        %v596 = vrot.slane %v594, 5
        %v597 = vsel %vm309, %v592, %v596
        %v599 = vshrl.u32 %v275, 16
        %v601 = vrot.slane %v599, 4
        %v602 = vshll.u32 %v275, 16
        %v604 = vrot.slane %v602, 5
        %v605 = vor.u32 %v601, %v604
        %v606 = vrot.slane %v605, 4
        %v608 = vshll.u32 %v276, 16
        %v610 = vrot.slane %v608, 5
        %v611 = vsel %vm309, %v606, %v610
        %v612 = vshrl.u32 %v276, 16
        %v614 = vrot.slane %v612, 4
        %v615 = vor.u32 %v614, %v610
        %v616 = vrot.slane %v615, 4
        %v618 = vshll.u32 %v303, 16
        %v620 = vrot.slane %v618, 5
        %v621 = vsel %vm309, %v616, %v620
        %v623 = vshrl.u32 %v277, 16
        %v625 = vrot.slane %v623, 4
        %v626 = vshll.u32 %v277, 16
        %v628 = vrot.slane %v626, 5
        %v629 = vor.u32 %v625, %v628
        %v630 = vrot.slane %v629, 4
        %v632 = vshll.u32 %v278, 16
        %v634 = vrot.slane %v632, 5
        %v635 = vsel %vm309, %v630, %v634
        %v636 = vshrl.u32 %v278, 16
        %v638 = vrot.slane %v636, 4
        %v639 = vor.u32 %v638, %v634
        %v640 = vrot.slane %v639, 4
        %v642 = vshll.u32 %v304, 16
        %v644 = vrot.slane %v642, 5
        %v645 = vsel %vm309, %v640, %v644
        %v647 = vshrl.u32 %v279, 16
        %v649 = vrot.slane %v647, 4
        %v650 = vshll.u32 %v279, 16
        %v652 = vrot.slane %v650, 5
        %v653 = vor.u32 %v649, %v652
        %v654 = vrot.slane %v653, 4
        %v656 = vshll.u32 %v280, 16
        %v658 = vrot.slane %v656, 5
        %v659 = vsel %vm309, %v654, %v658
        %v660 = vshrl.u32 %v280, 16
        %v662 = vrot.slane %v660, 4
        %v663 = vor.u32 %v662, %v658
        %v664 = vrot.slane %v663, 4
        %v666 = vshll.u32 %v305, 16
        %v668 = vrot.slane %v666, 5
        %v669 = vsel %vm309, %v664, %v668
        %v671 = vshrl.u32 %v281, 16
        %v673 = vrot.slane %v671, 4
        %v674 = vshll.u32 %v281, 16
        %v676 = vrot.slane %v674, 5
        %v677 = vor.u32 %v673, %v676
        %v678 = vrot.slane %v677, 4
        %v680 = vshll.u32 %v282, 16
        %v682 = vrot.slane %v680, 5
        %v683 = vsel %vm309, %v678, %v682
        %v684 = vshrl.u32 %v282, 16
        %v686 = vrot.slane %v684, 4
        %v687 = vor.u32 %v686, %v682
        %v688 = vrot.slane %v687, 4
        %v690 = vshll.u32 %v306, 16
        %v692 = vrot.slane %v690, 5
        %v693 = vsel %vm309, %v688, %v692
        %s694 = scalar_lea.vmem %s1, 32
        %v695 = vld [vmem:[%s694] sm:$0xf]
        %v696 = vld [vmem:[%s694 + $0x4] sm:$0xf]
        %v697 = vld [vmem:[%s694 + $0x8] sm:$0xf]
        %v698 = vld [vmem:[%s694 + $0xc] sm:$0xf]
        %v699 = vld [vmem:[%s694 + $0x10] sm:$0xf]
        %v700 = vld [vmem:[%s694 + $0x14] sm:$0xf]
        %v701 = vld [vmem:[%s694 + $0x18] sm:$0xf]
        %v702 = vld [vmem:[%s694 + $0x1c] sm:$0xf]
        %v703 = vunpack.c.l.b16 %v323
        %v704 = vunpack.c.l.b16 %v333
        %v705 = vunpack.c.l.b16 %v347
        %v706 = vunpack.c.l.b16 %v357
        %v707 = vunpack.c.l.b16 %v371
        %v708 = vunpack.c.l.b16 %v381
        %v709 = vunpack.c.l.b16 %v395
        %v710 = vunpack.c.l.b16 %v405
        %v711 = vunpack.c.l.b16 %v419
        %v712 = vunpack.c.l.b16 %v429
        %v713 = vunpack.c.l.b16 %v443
        %v714 = vunpack.c.l.b16 %v453
        %v715 = vunpack.c.l.b16 %v467
        %v716 = vunpack.c.l.b16 %v477
        %v717 = vunpack.c.l.b16 %v491
        %v718 = vunpack.c.l.b16 %v501
        %v719 = vunpack.c.l.b16 %v515
        %v720 = vunpack.c.l.b16 %v525
        %v721 = vunpack.c.l.b16 %v539
        %v722 = vunpack.c.l.b16 %v549
        %v723 = vunpack.c.l.b16 %v563
        %v724 = vunpack.c.l.b16 %v573
        %v725 = vunpack.c.l.b16 %v587
        %v726 = vunpack.c.l.b16 %v597
        %v727 = vunpack.c.l.b16 %v611
        %v728 = vunpack.c.l.b16 %v621
        %v729 = vunpack.c.l.b16 %v635
        %v730 = vunpack.c.l.b16 %v645
        %v731 = vunpack.c.l.b16 %v659
        %v732 = vunpack.c.l.b16 %v669
        %v733 = vunpack.c.l.b16 %v683
        %v734 = vunpack.c.l.b16 %v693
        %v735 = vpack.c.b16 %v704, %v703
        %v736 = vpack.c.b16 %v706, %v705
        %v737 = vpack.c.b16 %v708, %v707
        %v738 = vpack.c.b16 %v710, %v709
        %v739 = vpack.c.b16 %v712, %v711
        %v740 = vpack.c.b16 %v714, %v713
        %v741 = vpack.c.b16 %v716, %v715
        %v742 = vpack.c.b16 %v718, %v717
        %v743 = vpack.c.b16 %v720, %v719
        %v744 = vpack.c.b16 %v722, %v721
        %v745 = vpack.c.b16 %v724, %v723
        %v746 = vpack.c.b16 %v726, %v725
        %v747 = vpack.c.b16 %v728, %v727
        %v748 = vpack.c.b16 %v730, %v729
        %v749 = vpack.c.b16 %v732, %v731
        %v750 = vpack.c.b16 %v734, %v733
        %v759 = vunpack.c.l.b16 %v695
        %v760 = vunpack.c.l.b16 %v696
        %v761 = vunpack.c.l.b16 %v697
        %v762 = vunpack.c.l.b16 %v698
        %v763 = vunpack.c.l.b16 %v699
        %v764 = vunpack.c.l.b16 %v700
        %v765 = vunpack.c.l.b16 %v701
        %v766 = vunpack.c.l.b16 %v702
        %v767 = vpack.c.b16 %v760, %v759
        %v768 = vpack.c.b16 %v762, %v761
        %v769 = vpack.c.b16 %v764, %v763
        %v770 = vpack.c.b16 %v766, %v765
        %vm775 = vcmask 523264
        %v777 = vsel %vm775, %v735, 0
        %v780 = vsel %vm775, %v736, 0
        %v783 = vsel %vm775, %v737, 0
        %v786 = vsel %vm775, %v738, 0
        %v789 = vsel %vm775, %v739, 0
        %v792 = vsel %vm775, %v740, 0
        %v795 = vsel %vm775, %v741, 0
        %v798 = vsel %vm775, %v742, 0
        %v801 = vsel %vm775, %v743, 0
        %v804 = vsel %vm775, %v744, 0
        %v807 = vsel %vm775, %v745, 0
        %v810 = vsel %vm775, %v746, 0
        %v813 = vsel %vm775, %v747, 0
        %v816 = vsel %vm775, %v748, 0
        %v819 = vsel %vm775, %v749, 0
        %v822 = vsel %vm775, %v750, 0
        %824 = vmatprep.subr.bf16.mxu0 0
        %825 = vmatpush1.bf16.msra.mxu0 0
        %826 = vmatprep.subr.bf16.mxu0 0
        %827 = vmatpush1.bf16.msra.mxu0 0
        %828 = vmatprep.subr.bf16.mxu0 0
        %829 = vmatpush1.bf16.msra.mxu0 0
        %830 = vmatprep.subr.bf16.mxu0 0
        %831 = vmatpush1.bf16.msra.mxu0 0
        %832 = vmatprep.subr.bf16.mxu0 0
        %833 = vmatpush1.bf16.msra.mxu0 %v770
        %834 = vmatprep.subr.bf16.mxu0 0
        %835 = vmatpush1.bf16.msra.mxu0 %v769
        %836 = vmatprep.subr.bf16.mxu0 0
        %837 = vmatpush1.bf16.msra.mxu0 %v768
        %838 = vmatprep.subr.bf16.mxu0 0
        %839 = vmatpush1.bf16.msra.mxu0 %v767
        %840 = vmatprep.subr.bf16.mxu0 0
        %841 = vmatpush2.bf16.msra.mxu0 0
        %842 = vmatprep.subr.bf16.mxu0 0
        %843 = vmatpush2.bf16.msra.mxu0 0
        %844 = vmatprep.subr.bf16.mxu0 0
        %845 = vmatpush2.bf16.msra.mxu0 0
        %846 = vmatprep.subr.bf16.mxu0 0
        %847 = vmatpush2.bf16.msra.mxu0 0
        %848 = vmatprep.subr.bf16.mxu0 0
        %849 = vmatpush2.bf16.msra.mxu0 0
        %850 = vmatprep.subr.bf16.mxu0 0
        %851 = vmatpush2.bf16.msra.mxu0 0
        %852 = vmatprep.subr.bf16.mxu0 0
        %853 = vmatpush2.bf16.msra.mxu0 0
        %854 = vmatprep.subr.bf16.mxu0 0
        %855 = vmatpush2.bf16.msra.mxu0 0
        %856 = vmatprep.mubr.bf16.mxu0 0
        %857 = vmatmul.mubr.bf16.gmra.mxu0 %v777
        %v858 = vpop.f32.mrf.mxu0
        %v859 = vadd.f32 0.0, %v858
        %v860 = vpop.f32.mrf.mxu0
        %v861 = vpop.f32.mrf.mxu0
        %v862 = vadd.f32 0.0, %v861
        %v863 = vpop.f32.mrf.mxu0
        %864 = vmatprep.mubr.bf16.mxu0 0
        %865 = vmatmul.mubr.bf16.gmra.mxu0 %v780
        %v866 = vpop.f32.mrf.mxu0
        %v867 = vadd.f32 0.0, %v866
        %v868 = vpop.f32.mrf.mxu0
        %v869 = vpop.f32.mrf.mxu0
        %v870 = vadd.f32 0.0, %v869
        %v871 = vpop.f32.mrf.mxu0
        %872 = vmatprep.mubr.bf16.mxu0 0
        %873 = vmatmul.mubr.bf16.gmra.mxu0 %v783
        %v874 = vpop.f32.mrf.mxu0
        %v875 = vadd.f32 0.0, %v874
        %v876 = vpop.f32.mrf.mxu0
        %v877 = vpop.f32.mrf.mxu0
        %v878 = vadd.f32 0.0, %v877
        %v879 = vpop.f32.mrf.mxu0
        %880 = vmatprep.mubr.bf16.mxu0 0
        %881 = vmatmul.mubr.bf16.gmra.mxu0 %v786
        %v882 = vpop.f32.mrf.mxu0
        %v883 = vadd.f32 0.0, %v882
        %v884 = vpop.f32.mrf.mxu0
        %v885 = vpop.f32.mrf.mxu0
        %v886 = vadd.f32 0.0, %v885
        %v887 = vpop.f32.mrf.mxu0
        %888 = vmatprep.mubr.bf16.mxu0 0
        %889 = vmatmul.mubr.bf16.gmra.mxu0 %v789
        %v890 = vpop.f32.mrf.mxu0
        %v891 = vadd.f32 0.0, %v890
        %v892 = vpop.f32.mrf.mxu0
        %v893 = vpop.f32.mrf.mxu0
        %v894 = vadd.f32 0.0, %v893
        %v895 = vpop.f32.mrf.mxu0
        %896 = vmatprep.mubr.bf16.mxu0 0
        %897 = vmatmul.mubr.bf16.gmra.mxu0 %v792
        %v898 = vpop.f32.mrf.mxu0
        %v899 = vadd.f32 0.0, %v898
        %v900 = vpop.f32.mrf.mxu0
        %v901 = vpop.f32.mrf.mxu0
        %v902 = vadd.f32 0.0, %v901
        %v903 = vpop.f32.mrf.mxu0
        %904 = vmatprep.mubr.bf16.mxu0 0
        %905 = vmatmul.mubr.bf16.gmra.mxu0 %v795
        %v906 = vpop.f32.mrf.mxu0
        %v907 = vadd.f32 0.0, %v906
        %v908 = vpop.f32.mrf.mxu0
        %v909 = vpop.f32.mrf.mxu0
        %v910 = vadd.f32 0.0, %v909
        %v911 = vpop.f32.mrf.mxu0
        %912 = vmatprep.mubr.bf16.mxu0 0
        %913 = vmatmul.mubr.bf16.gmra.mxu0 %v798
        %v914 = vpop.f32.mrf.mxu0
        %v915 = vadd.f32 0.0, %v914
        %v916 = vpop.f32.mrf.mxu0
        %v917 = vpop.f32.mrf.mxu0
        %v918 = vadd.f32 0.0, %v917
        %v919 = vpop.f32.mrf.mxu0
        %920 = vmatprep.mubr.bf16.mxu0 0
        %921 = vmatmul.mubr.bf16.gmra.mxu0 %v801
        %v922 = vpop.f32.mrf.mxu0
        %v923 = vadd.f32 0.0, %v922
        %v924 = vpop.f32.mrf.mxu0
        %v925 = vpop.f32.mrf.mxu0
        %v926 = vadd.f32 0.0, %v925
        %v927 = vpop.f32.mrf.mxu0
        %928 = vmatprep.mubr.bf16.mxu0 0
        %929 = vmatmul.mubr.bf16.gmra.mxu0 %v804
        %v930 = vpop.f32.mrf.mxu0
        %v931 = vadd.f32 0.0, %v930
        %v932 = vpop.f32.mrf.mxu0
        %v933 = vpop.f32.mrf.mxu0
        %v934 = vadd.f32 0.0, %v933
        %v935 = vpop.f32.mrf.mxu0
        %936 = vmatprep.mubr.bf16.mxu0 0
        %937 = vmatmul.mubr.bf16.gmra.mxu0 %v807
        %v938 = vpop.f32.mrf.mxu0
        %v939 = vadd.f32 0.0, %v938
        %v940 = vpop.f32.mrf.mxu0
        %v941 = vpop.f32.mrf.mxu0
        %v942 = vadd.f32 0.0, %v941
        %v943 = vpop.f32.mrf.mxu0
        %944 = vmatprep.mubr.bf16.mxu0 0
        %945 = vmatmul.mubr.bf16.gmra.mxu0 %v810
        %v946 = vpop.f32.mrf.mxu0
        %v947 = vadd.f32 0.0, %v946
        %v948 = vpop.f32.mrf.mxu0
        %v949 = vpop.f32.mrf.mxu0
        %v950 = vadd.f32 0.0, %v949
        %v951 = vpop.f32.mrf.mxu0
        %952 = vmatprep.mubr.bf16.mxu0 0
        %953 = vmatmul.mubr.bf16.gmra.mxu0 %v813
        %v954 = vpop.f32.mrf.mxu0
        %v955 = vadd.f32 0.0, %v954
        %v956 = vpop.f32.mrf.mxu0
        %v957 = vpop.f32.mrf.mxu0
        %v958 = vadd.f32 0.0, %v957
        %v959 = vpop.f32.mrf.mxu0
        %960 = vmatprep.mubr.bf16.mxu0 0
        %961 = vmatmul.mubr.bf16.gmra.mxu0 %v816
        %v962 = vpop.f32.mrf.mxu0
        %v963 = vadd.f32 0.0, %v962
        %v964 = vpop.f32.mrf.mxu0
        %v965 = vpop.f32.mrf.mxu0
        %v966 = vadd.f32 0.0, %v965
        %v967 = vpop.f32.mrf.mxu0
        %968 = vmatprep.mubr.bf16.mxu0 0
        %969 = vmatmul.mubr.bf16.gmra.mxu0 %v819
        %v970 = vpop.f32.mrf.mxu0
        %v971 = vadd.f32 0.0, %v970
        %v972 = vpop.f32.mrf.mxu0
        %v973 = vpop.f32.mrf.mxu0
        %v974 = vadd.f32 0.0, %v973
        %v975 = vpop.f32.mrf.mxu0
        %976 = vmatprep.mubr.bf16.mxu0 0
        %977 = vmatmul.mubr.bf16.gmra.mxu0 %v822
        %v978 = vpop.f32.mrf.mxu0
        %v979 = vadd.f32 0.0, %v978
        %v980 = vpop.f32.mrf.mxu0
        %v981 = vpop.f32.mrf.mxu0
        %v982 = vadd.f32 0.0, %v981
        %v983 = vpop.f32.mrf.mxu0
        %984 = vdwg.mxu0
        %v1017 = vunpack.c.l.b16 %v251
        %v1018 = vunpack.c.l.b16 %v252
        %v1019 = vunpack.c.l.b16 %v253
        %v1020 = vunpack.c.l.b16 %v254
        %v1021 = vunpack.c.l.b16 %v255
        %v1022 = vunpack.c.l.b16 %v256
        %v1023 = vunpack.c.l.b16 %v257
        %v1024 = vunpack.c.l.b16 %v258
        %v1025 = vunpack.c.l.b16 %v259
        %v1026 = vunpack.c.l.b16 %v260
        %v1027 = vunpack.c.l.b16 %v261
        %v1028 = vunpack.c.l.b16 %v262
        %v1029 = vunpack.c.l.b16 %v263
        %v1030 = vunpack.c.l.b16 %v264
        %v1031 = vunpack.c.l.b16 %v265
        %v1032 = vunpack.c.l.b16 %v266
        %v1033 = vunpack.c.l.b16 %v267
        %v1034 = vunpack.c.l.b16 %v268
        %v1035 = vunpack.c.l.b16 %v269
        %v1036 = vunpack.c.l.b16 %v270
        %v1037 = vunpack.c.l.b16 %v271
        %v1038 = vunpack.c.l.b16 %v272
        %v1039 = vunpack.c.l.b16 %v273
        %v1040 = vunpack.c.l.b16 %v274
        %v1041 = vunpack.c.l.b16 %v275
        %v1042 = vunpack.c.l.b16 %v276
        %v1043 = vunpack.c.l.b16 %v277
        %v1044 = vunpack.c.l.b16 %v278
        %v1045 = vunpack.c.l.b16 %v279
        %v1046 = vunpack.c.l.b16 %v280
        %v1047 = vunpack.c.l.b16 %v281
        %v1048 = vunpack.c.l.b16 %v282
        %v1049 = vpack.c.b16 %v1018, %v1017
        %v1050 = vpack.c.b16 %v1020, %v1019
        %v1051 = vpack.c.b16 %v1022, %v1021
        %v1052 = vpack.c.b16 %v1024, %v1023
        %v1053 = vpack.c.b16 %v1026, %v1025
        %v1054 = vpack.c.b16 %v1028, %v1027
        %v1055 = vpack.c.b16 %v1030, %v1029
        %v1056 = vpack.c.b16 %v1032, %v1031
        %v1057 = vpack.c.b16 %v1034, %v1033
        %v1058 = vpack.c.b16 %v1036, %v1035
        %v1059 = vpack.c.b16 %v1038, %v1037
        %v1060 = vpack.c.b16 %v1040, %v1039
        %v1061 = vpack.c.b16 %v1042, %v1041
        %v1062 = vpack.c.b16 %v1044, %v1043
        %v1063 = vpack.c.b16 %v1046, %v1045
        %v1064 = vpack.c.b16 %v1048, %v1047
        %v1073 = vunpack.c.l.b16 %v283
        %v1074 = vunpack.c.l.b16 %v284
        %v1075 = vunpack.c.l.b16 %v285
        %v1076 = vunpack.c.l.b16 %v286
        %v1077 = vunpack.c.l.b16 %v287
        %v1078 = vunpack.c.l.b16 %v288
        %v1079 = vunpack.c.l.b16 %v289
        %v1080 = vunpack.c.l.b16 %v290
        %v1081 = vpack.c.b16 %v1074, %v1073
        %v1082 = vpack.c.b16 %v1076, %v1075
        %v1083 = vpack.c.b16 %v1078, %v1077
        %v1084 = vpack.c.b16 %v1080, %v1079
        %v1090 = vsel %vm775, %v1049, 0
        %v1093 = vsel %vm775, %v1050, 0
        %v1096 = vsel %vm775, %v1051, 0
        %v1099 = vsel %vm775, %v1052, 0
        %v1102 = vsel %vm775, %v1053, 0
        %v1105 = vsel %vm775, %v1054, 0
        %v1108 = vsel %vm775, %v1055, 0
        %v1111 = vsel %vm775, %v1056, 0
        %v1114 = vsel %vm775, %v1057, 0
        %v1117 = vsel %vm775, %v1058, 0
        %v1120 = vsel %vm775, %v1059, 0
        %v1123 = vsel %vm775, %v1060, 0
        %v1126 = vsel %vm775, %v1061, 0
        %v1129 = vsel %vm775, %v1062, 0
        %v1132 = vsel %vm775, %v1063, 0
        %v1135 = vsel %vm775, %v1064, 0
        %1137 = vmatprep.subr.bf16.mxu0 0
        %1138 = vmatpush1.bf16.msra.mxu0 0
        %1139 = vmatprep.subr.bf16.mxu0 0
        %1140 = vmatpush1.bf16.msra.mxu0 0
        %1141 = vmatprep.subr.bf16.mxu0 0
        %1142 = vmatpush1.bf16.msra.mxu0 0
        %1143 = vmatprep.subr.bf16.mxu0 0
        %1144 = vmatpush1.bf16.msra.mxu0 0
        %1145 = vmatprep.subr.bf16.mxu0 0
        %1146 = vmatpush1.bf16.msra.mxu0 %v1084
        %1147 = vmatprep.subr.bf16.mxu0 0
        %1148 = vmatpush1.bf16.msra.mxu0 %v1083
        %1149 = vmatprep.subr.bf16.mxu0 0
        %1150 = vmatpush1.bf16.msra.mxu0 %v1082
        %1151 = vmatprep.subr.bf16.mxu0 0
        %1152 = vmatpush1.bf16.msra.mxu0 %v1081
        %1153 = vmatprep.subr.bf16.mxu0 0
        %1154 = vmatpush2.bf16.msra.mxu0 0
        %1155 = vmatprep.subr.bf16.mxu0 0
        %1156 = vmatpush2.bf16.msra.mxu0 0
        %1157 = vmatprep.subr.bf16.mxu0 0
        %1158 = vmatpush2.bf16.msra.mxu0 0
        %1159 = vmatprep.subr.bf16.mxu0 0
        %1160 = vmatpush2.bf16.msra.mxu0 0
        %1161 = vmatprep.subr.bf16.mxu0 0
        %1162 = vmatpush2.bf16.msra.mxu0 0
        %1163 = vmatprep.subr.bf16.mxu0 0
        %1164 = vmatpush2.bf16.msra.mxu0 0
        %1165 = vmatprep.subr.bf16.mxu0 0
        %1166 = vmatpush2.bf16.msra.mxu0 0
        %1167 = vmatprep.subr.bf16.mxu0 0
        %1168 = vmatpush2.bf16.msra.mxu0 0
        %1169 = vmatprep.mubr.bf16.mxu0 0
        %1170 = vmatmul.mubr.bf16.gmra.mxu0 %v1090
        %v1171 = vpop.f32.mrf.mxu0
        %v1172 = vadd.f32 %v859, %v1171
        %v1173 = vpop.f32.mrf.mxu0
        %v1174 = vpop.f32.mrf.mxu0
        %v1175 = vadd.f32 %v862, %v1174
        %v1176 = vpop.f32.mrf.mxu0
        %1177 = vmatprep.mubr.bf16.mxu0 0
        %1178 = vmatmul.mubr.bf16.gmra.mxu0 %v1093
        %v1179 = vpop.f32.mrf.mxu0
        %v1180 = vadd.f32 %v867, %v1179
        %v1181 = vpop.f32.mrf.mxu0
        %v1182 = vpop.f32.mrf.mxu0
        %v1183 = vadd.f32 %v870, %v1182
        %v1184 = vpop.f32.mrf.mxu0
        %1185 = vmatprep.mubr.bf16.mxu0 0
        %1186 = vmatmul.mubr.bf16.gmra.mxu0 %v1096
        %v1187 = vpop.f32.mrf.mxu0
        %v1188 = vadd.f32 %v875, %v1187
        %v1189 = vpop.f32.mrf.mxu0
        %v1190 = vpop.f32.mrf.mxu0
        %v1191 = vadd.f32 %v878, %v1190
        %v1192 = vpop.f32.mrf.mxu0
        %1193 = vmatprep.mubr.bf16.mxu0 0
        %1194 = vmatmul.mubr.bf16.gmra.mxu0 %v1099
        %v1195 = vpop.f32.mrf.mxu0
        %v1196 = vadd.f32 %v883, %v1195
        %v1197 = vpop.f32.mrf.mxu0
        %v1198 = vpop.f32.mrf.mxu0
        %v1199 = vadd.f32 %v886, %v1198
        %v1200 = vpop.f32.mrf.mxu0
        %1201 = vmatprep.mubr.bf16.mxu0 0
        %1202 = vmatmul.mubr.bf16.gmra.mxu0 %v1102
        %v1203 = vpop.f32.mrf.mxu0
        %v1204 = vadd.f32 %v891, %v1203
        %v1205 = vpop.f32.mrf.mxu0
        %v1206 = vpop.f32.mrf.mxu0
        %v1207 = vadd.f32 %v894, %v1206
        %v1208 = vpop.f32.mrf.mxu0
        %1209 = vmatprep.mubr.bf16.mxu0 0
        %1210 = vmatmul.mubr.bf16.gmra.mxu0 %v1105
        %v1211 = vpop.f32.mrf.mxu0
        %v1212 = vadd.f32 %v899, %v1211
        %v1213 = vpop.f32.mrf.mxu0
        %v1214 = vpop.f32.mrf.mxu0
        %v1215 = vadd.f32 %v902, %v1214
        %v1216 = vpop.f32.mrf.mxu0
        %1217 = vmatprep.mubr.bf16.mxu0 0
        %1218 = vmatmul.mubr.bf16.gmra.mxu0 %v1108
        %v1219 = vpop.f32.mrf.mxu0
        %v1220 = vadd.f32 %v907, %v1219
        %v1221 = vpop.f32.mrf.mxu0
        %v1222 = vpop.f32.mrf.mxu0
        %v1223 = vadd.f32 %v910, %v1222
        %v1224 = vpop.f32.mrf.mxu0
        %1225 = vmatprep.mubr.bf16.mxu0 0
        %1226 = vmatmul.mubr.bf16.gmra.mxu0 %v1111
        %v1227 = vpop.f32.mrf.mxu0
        %v1228 = vadd.f32 %v915, %v1227
        %v1229 = vpop.f32.mrf.mxu0
        %v1230 = vpop.f32.mrf.mxu0
        %v1231 = vadd.f32 %v918, %v1230
        %v1232 = vpop.f32.mrf.mxu0
        %1233 = vmatprep.mubr.bf16.mxu0 0
        %1234 = vmatmul.mubr.bf16.gmra.mxu0 %v1114
        %v1235 = vpop.f32.mrf.mxu0
        %v1236 = vadd.f32 %v923, %v1235
        %v1237 = vpop.f32.mrf.mxu0
        %v1238 = vpop.f32.mrf.mxu0
        %v1239 = vadd.f32 %v926, %v1238
        %v1240 = vpop.f32.mrf.mxu0
        %1241 = vmatprep.mubr.bf16.mxu0 0
        %1242 = vmatmul.mubr.bf16.gmra.mxu0 %v1117
        %v1243 = vpop.f32.mrf.mxu0
        %v1244 = vadd.f32 %v931, %v1243
        %v1245 = vpop.f32.mrf.mxu0
        %v1246 = vpop.f32.mrf.mxu0
        %v1247 = vadd.f32 %v934, %v1246
        %v1248 = vpop.f32.mrf.mxu0
        %1249 = vmatprep.mubr.bf16.mxu0 0
        %1250 = vmatmul.mubr.bf16.gmra.mxu0 %v1120
        %v1251 = vpop.f32.mrf.mxu0
        %v1252 = vadd.f32 %v939, %v1251
        %v1253 = vpop.f32.mrf.mxu0
        %v1254 = vpop.f32.mrf.mxu0
        %v1255 = vadd.f32 %v942, %v1254
        %v1256 = vpop.f32.mrf.mxu0
        %1257 = vmatprep.mubr.bf16.mxu0 0
        %1258 = vmatmul.mubr.bf16.gmra.mxu0 %v1123
        %v1259 = vpop.f32.mrf.mxu0
        %v1260 = vadd.f32 %v947, %v1259
        %v1261 = vpop.f32.mrf.mxu0
        %v1262 = vpop.f32.mrf.mxu0
        %v1263 = vadd.f32 %v950, %v1262
        %v1264 = vpop.f32.mrf.mxu0
        %1265 = vmatprep.mubr.bf16.mxu0 0
        %1266 = vmatmul.mubr.bf16.gmra.mxu0 %v1126
        %v1267 = vpop.f32.mrf.mxu0
        %v1268 = vadd.f32 %v955, %v1267
        %v1269 = vpop.f32.mrf.mxu0
        %v1270 = vpop.f32.mrf.mxu0
        %v1271 = vadd.f32 %v958, %v1270
        %v1272 = vpop.f32.mrf.mxu0
        %1273 = vmatprep.mubr.bf16.mxu0 0
        %1274 = vmatmul.mubr.bf16.gmra.mxu0 %v1129
        %v1275 = vpop.f32.mrf.mxu0
        %v1276 = vadd.f32 %v963, %v1275
        %v1277 = vpop.f32.mrf.mxu0
        %v1278 = vpop.f32.mrf.mxu0
        %v1279 = vadd.f32 %v966, %v1278
        %v1280 = vpop.f32.mrf.mxu0
        %1281 = vmatprep.mubr.bf16.mxu0 0
        %1282 = vmatmul.mubr.bf16.gmra.mxu0 %v1132
        %v1283 = vpop.f32.mrf.mxu0
        %v1284 = vadd.f32 %v971, %v1283
        %v1285 = vpop.f32.mrf.mxu0
        %v1286 = vpop.f32.mrf.mxu0
        %v1287 = vadd.f32 %v974, %v1286
        %v1288 = vpop.f32.mrf.mxu0
        %1289 = vmatprep.mubr.bf16.mxu0 0
        %1290 = vmatmul.mubr.bf16.gmra.mxu0 %v1135
        %v1291 = vpop.f32.mrf.mxu0
        %v1292 = vadd.f32 %v979, %v1291
        %v1293 = vpop.f32.mrf.mxu0
        %v1294 = vpop.f32.mrf.mxu0
        %v1295 = vadd.f32 %v982, %v1294
        %v1296 = vpop.f32.mrf.mxu0
        %1297 = vdwg.mxu0
        %v1298 = vld [vmem:[%s249] sm:$0xe]
        %v1299 = vld [vmem:[%s249 + $0xc] sm:$0xe]
        %v1300 = vld [vmem:[%s249 + $0x18] sm:$0xe]
        %v1301 = vld [vmem:[%s249 + $0x24] sm:$0xe]
        %v1302 = vld [vmem:[%s249 + $0x30] sm:$0xe]
        %v1303 = vld [vmem:[%s249 + $0x3c] sm:$0xe]
        %v1304 = vld [vmem:[%s249 + $0x48] sm:$0xe]
        %v1305 = vld [vmem:[%s249 + $0x54] sm:$0xe]
        %v1306 = vld [vmem:[%s249 + $0x60] sm:$0xe]
        %v1307 = vld [vmem:[%s249 + $0x6c] sm:$0xe]
        %v1308 = vld [vmem:[%s249 + $0x78] sm:$0xe]
        %v1309 = vld [vmem:[%s249 + $0x84] sm:$0xe]
        %v1310 = vld [vmem:[%s249 + $0x90] sm:$0xe]
        %v1311 = vld [vmem:[%s249 + $0x9c] sm:$0xe]
        %v1312 = vld [vmem:[%s249 + $0xa8] sm:$0xe]
        %v1313 = vld [vmem:[%s249 + $0xb4] sm:$0xe]
        %vm1346 = vcmask 1042432
        %vm1347 = vcmask 1046532
        %vm1348 = vmor %vm1346, %vm1347
        %v1349 = vrot.slane %v1298, 5
        %v1350 = vrot.slane %v1349, 4
        %v1351 = vrot.slane %v252, 5
        %v1352 = vsel %vm1348, %v1350, %v1351
        %v1353 = vrot.slane %v1351, 4
        %v1354 = vrot.slane %v291, 5
        %v1355 = vsel %vm1348, %v1353, %v1354
        %v1356 = vrot.slane %v1299, 5
        %v1357 = vrot.slane %v1356, 4
        %v1358 = vrot.slane %v254, 5
        %v1359 = vsel %vm1348, %v1357, %v1358
        %v1360 = vrot.slane %v1358, 4
        %v1361 = vrot.slane %v292, 5
        %v1362 = vsel %vm1348, %v1360, %v1361
        %v1363 = vrot.slane %v1300, 5
        %v1364 = vrot.slane %v1363, 4
        %v1365 = vrot.slane %v256, 5
        %v1366 = vsel %vm1348, %v1364, %v1365
        %v1367 = vrot.slane %v1365, 4
        %v1368 = vrot.slane %v293, 5
        %v1369 = vsel %vm1348, %v1367, %v1368
        %v1370 = vrot.slane %v1301, 5
        %v1371 = vrot.slane %v1370, 4
        %v1372 = vrot.slane %v258, 5
        %v1373 = vsel %vm1348, %v1371, %v1372
        %v1374 = vrot.slane %v1372, 4
        %v1375 = vrot.slane %v294, 5
        %v1376 = vsel %vm1348, %v1374, %v1375
        %v1377 = vrot.slane %v1302, 5
        %v1378 = vrot.slane %v1377, 4
        %v1379 = vrot.slane %v260, 5
        %v1380 = vsel %vm1348, %v1378, %v1379
        %v1381 = vrot.slane %v1379, 4
        %v1382 = vrot.slane %v295, 5
        %v1383 = vsel %vm1348, %v1381, %v1382
        %v1384 = vrot.slane %v1303, 5
        %v1385 = vrot.slane %v1384, 4
        %v1386 = vrot.slane %v262, 5
        %v1387 = vsel %vm1348, %v1385, %v1386
        %v1388 = vrot.slane %v1386, 4
        %v1389 = vrot.slane %v296, 5
        %v1390 = vsel %vm1348, %v1388, %v1389
        %v1391 = vrot.slane %v1304, 5
        %v1392 = vrot.slane %v1391, 4
        %v1393 = vrot.slane %v264, 5
        %v1394 = vsel %vm1348, %v1392, %v1393
        %v1395 = vrot.slane %v1393, 4
        %v1396 = vrot.slane %v297, 5
        %v1397 = vsel %vm1348, %v1395, %v1396
        %v1398 = vrot.slane %v1305, 5
        %v1399 = vrot.slane %v1398, 4
        %v1400 = vrot.slane %v266, 5
        %v1401 = vsel %vm1348, %v1399, %v1400
        %v1402 = vrot.slane %v1400, 4
        %v1403 = vrot.slane %v298, 5
        %v1404 = vsel %vm1348, %v1402, %v1403
        %v1405 = vrot.slane %v1306, 5
        %v1406 = vrot.slane %v1405, 4
        %v1407 = vrot.slane %v268, 5
        %v1408 = vsel %vm1348, %v1406, %v1407
        %v1409 = vrot.slane %v1407, 4
        %v1410 = vrot.slane %v299, 5
        %v1411 = vsel %vm1348, %v1409, %v1410
        %v1412 = vrot.slane %v1307, 5
        %v1413 = vrot.slane %v1412, 4
        %v1414 = vrot.slane %v270, 5
        %v1415 = vsel %vm1348, %v1413, %v1414
        %v1416 = vrot.slane %v1414, 4
        %v1417 = vrot.slane %v300, 5
        %v1418 = vsel %vm1348, %v1416, %v1417
        %v1419 = vrot.slane %v1308, 5
        %v1420 = vrot.slane %v1419, 4
        %v1421 = vrot.slane %v272, 5
        %v1422 = vsel %vm1348, %v1420, %v1421
        %v1423 = vrot.slane %v1421, 4
        %v1424 = vrot.slane %v301, 5
        %v1425 = vsel %vm1348, %v1423, %v1424
        %v1426 = vrot.slane %v1309, 5
        %v1427 = vrot.slane %v1426, 4
        %v1428 = vrot.slane %v274, 5
        %v1429 = vsel %vm1348, %v1427, %v1428
        %v1430 = vrot.slane %v1428, 4
        %v1431 = vrot.slane %v302, 5
        %v1432 = vsel %vm1348, %v1430, %v1431
        %v1433 = vrot.slane %v1310, 5
        %v1434 = vrot.slane %v1433, 4
        %v1435 = vrot.slane %v276, 5
        %v1436 = vsel %vm1348, %v1434, %v1435
        %v1437 = vrot.slane %v1435, 4
        %v1438 = vrot.slane %v303, 5
        %v1439 = vsel %vm1348, %v1437, %v1438
        %v1440 = vrot.slane %v1311, 5
        %v1441 = vrot.slane %v1440, 4
        %v1442 = vrot.slane %v278, 5
        %v1443 = vsel %vm1348, %v1441, %v1442
        %v1444 = vrot.slane %v1442, 4
        %v1445 = vrot.slane %v304, 5
        %v1446 = vsel %vm1348, %v1444, %v1445
        %v1447 = vrot.slane %v1312, 5
        %v1448 = vrot.slane %v1447, 4
        %v1449 = vrot.slane %v280, 5
        %v1450 = vsel %vm1348, %v1448, %v1449
        %v1451 = vrot.slane %v1449, 4
        %v1452 = vrot.slane %v305, 5
        %v1453 = vsel %vm1348, %v1451, %v1452
        %v1454 = vrot.slane %v1313, 5
        %v1455 = vrot.slane %v1454, 4
        %v1456 = vrot.slane %v282, 5
        %v1457 = vsel %vm1348, %v1455, %v1456
        %v1458 = vrot.slane %v1456, 4
        %v1459 = vrot.slane %v306, 5
        %v1460 = vsel %vm1348, %v1458, %v1459
        %s1461 = scalar_lea.vmem %s1, 64
        %v1462 = vld [vmem:[%s1461] sm:$0xf]
        %v1463 = vld [vmem:[%s1461 + $0x4] sm:$0xf]
        %v1464 = vld [vmem:[%s1461 + $0x8] sm:$0xf]
        %v1465 = vld [vmem:[%s1461 + $0xc] sm:$0xf]
        %v1466 = vld [vmem:[%s1461 + $0x10] sm:$0xf]
        %v1467 = vld [vmem:[%s1461 + $0x14] sm:$0xf]
        %v1468 = vld [vmem:[%s1461 + $0x18] sm:$0xf]
        %v1469 = vld [vmem:[%s1461 + $0x1c] sm:$0xf]
        %v1470 = vunpack.c.l.b16 %v1352
        %v1471 = vunpack.c.l.b16 %v1355
        %v1472 = vunpack.c.l.b16 %v1359
        %v1473 = vunpack.c.l.b16 %v1362
        %v1474 = vunpack.c.l.b16 %v1366
        %v1475 = vunpack.c.l.b16 %v1369
        %v1476 = vunpack.c.l.b16 %v1373
        %v1477 = vunpack.c.l.b16 %v1376
        %v1478 = vunpack.c.l.b16 %v1380
        %v1479 = vunpack.c.l.b16 %v1383
        %v1480 = vunpack.c.l.b16 %v1387
        %v1481 = vunpack.c.l.b16 %v1390
        %v1482 = vunpack.c.l.b16 %v1394
        %v1483 = vunpack.c.l.b16 %v1397
        %v1484 = vunpack.c.l.b16 %v1401
        %v1485 = vunpack.c.l.b16 %v1404
        %v1486 = vunpack.c.l.b16 %v1408
        %v1487 = vunpack.c.l.b16 %v1411
        %v1488 = vunpack.c.l.b16 %v1415
        %v1489 = vunpack.c.l.b16 %v1418
        %v1490 = vunpack.c.l.b16 %v1422
        %v1491 = vunpack.c.l.b16 %v1425
        %v1492 = vunpack.c.l.b16 %v1429
        %v1493 = vunpack.c.l.b16 %v1432
        %v1494 = vunpack.c.l.b16 %v1436
        %v1495 = vunpack.c.l.b16 %v1439
        %v1496 = vunpack.c.l.b16 %v1443
        %v1497 = vunpack.c.l.b16 %v1446
        %v1498 = vunpack.c.l.b16 %v1450
        %v1499 = vunpack.c.l.b16 %v1453
        %v1500 = vunpack.c.l.b16 %v1457
        %v1501 = vunpack.c.l.b16 %v1460
        %v1502 = vpack.c.b16 %v1471, %v1470
        %v1503 = vpack.c.b16 %v1473, %v1472
        %v1504 = vpack.c.b16 %v1475, %v1474
        %v1505 = vpack.c.b16 %v1477, %v1476
        %v1506 = vpack.c.b16 %v1479, %v1478
        %v1507 = vpack.c.b16 %v1481, %v1480
        %v1508 = vpack.c.b16 %v1483, %v1482
        %v1509 = vpack.c.b16 %v1485, %v1484
        %v1510 = vpack.c.b16 %v1487, %v1486
        %v1511 = vpack.c.b16 %v1489, %v1488
        %v1512 = vpack.c.b16 %v1491, %v1490
        %v1513 = vpack.c.b16 %v1493, %v1492
        %v1514 = vpack.c.b16 %v1495, %v1494
        %v1515 = vpack.c.b16 %v1497, %v1496
        %v1516 = vpack.c.b16 %v1499, %v1498
        %v1517 = vpack.c.b16 %v1501, %v1500
        %v1526 = vunpack.c.l.b16 %v1462
        %v1527 = vunpack.c.l.b16 %v1463
        %v1528 = vunpack.c.l.b16 %v1464
        %v1529 = vunpack.c.l.b16 %v1465
        %v1530 = vunpack.c.l.b16 %v1466
        %v1531 = vunpack.c.l.b16 %v1467
        %v1532 = vunpack.c.l.b16 %v1468
        %v1533 = vunpack.c.l.b16 %v1469
        %v1534 = vpack.c.b16 %v1527, %v1526
        %v1535 = vpack.c.b16 %v1529, %v1528
        %v1536 = vpack.c.b16 %v1531, %v1530
        %v1537 = vpack.c.b16 %v1533, %v1532
        %v1543 = vsel %vm775, %v1502, 0
        %v1546 = vsel %vm775, %v1503, 0
        %v1549 = vsel %vm775, %v1504, 0
        %v1552 = vsel %vm775, %v1505, 0
        %v1555 = vsel %vm775, %v1506, 0
        %v1558 = vsel %vm775, %v1507, 0
        %v1561 = vsel %vm775, %v1508, 0
        %v1564 = vsel %vm775, %v1509, 0
        %v1567 = vsel %vm775, %v1510, 0
        %v1570 = vsel %vm775, %v1511, 0
        %v1573 = vsel %vm775, %v1512, 0
        %v1576 = vsel %vm775, %v1513, 0
        %v1579 = vsel %vm775, %v1514, 0
        %v1582 = vsel %vm775, %v1515, 0
        %v1585 = vsel %vm775, %v1516, 0
        %v1588 = vsel %vm775, %v1517, 0
        %1590 = vmatprep.subr.bf16.mxu0 0
        %1591 = vmatpush1.bf16.msra.mxu0 0
        %1592 = vmatprep.subr.bf16.mxu0 0
        %1593 = vmatpush1.bf16.msra.mxu0 0
        %1594 = vmatprep.subr.bf16.mxu0 0
        %1595 = vmatpush1.bf16.msra.mxu0 0
        %1596 = vmatprep.subr.bf16.mxu0 0
        %1597 = vmatpush1.bf16.msra.mxu0 0
        %1598 = vmatprep.subr.bf16.mxu0 0
        %1599 = vmatpush1.bf16.msra.mxu0 %v1537
        %1600 = vmatprep.subr.bf16.mxu0 0
        %1601 = vmatpush1.bf16.msra.mxu0 %v1536
        %1602 = vmatprep.subr.bf16.mxu0 0
        %1603 = vmatpush1.bf16.msra.mxu0 %v1535
        %1604 = vmatprep.subr.bf16.mxu0 0
        %1605 = vmatpush1.bf16.msra.mxu0 %v1534
        %1606 = vmatprep.subr.bf16.mxu0 0
        %1607 = vmatpush2.bf16.msra.mxu0 0
        %1608 = vmatprep.subr.bf16.mxu0 0
        %1609 = vmatpush2.bf16.msra.mxu0 0
        %1610 = vmatprep.subr.bf16.mxu0 0
        %1611 = vmatpush2.bf16.msra.mxu0 0
        %1612 = vmatprep.subr.bf16.mxu0 0
        %1613 = vmatpush2.bf16.msra.mxu0 0
        %1614 = vmatprep.subr.bf16.mxu0 0
        %1615 = vmatpush2.bf16.msra.mxu0 0
        %1616 = vmatprep.subr.bf16.mxu0 0
        %1617 = vmatpush2.bf16.msra.mxu0 0
        %1618 = vmatprep.subr.bf16.mxu0 0
        %1619 = vmatpush2.bf16.msra.mxu0 0
        %1620 = vmatprep.subr.bf16.mxu0 0
        %1621 = vmatpush2.bf16.msra.mxu0 0
        %1622 = vmatprep.mubr.bf16.mxu0 0
        %1623 = vmatmul.mubr.bf16.gmra.mxu0 %v1543
        %v1624 = vpop.f32.mrf.mxu0
        %v1625 = vadd.f32 0.0, %v1624
        %v1626 = vpop.f32.mrf.mxu0
        %v1627 = vpop.f32.mrf.mxu0
        %v1628 = vadd.f32 0.0, %v1627
        %v1629 = vpop.f32.mrf.mxu0
        %1630 = vmatprep.mubr.bf16.mxu0 0
        %1631 = vmatmul.mubr.bf16.gmra.mxu0 %v1546
        %v1632 = vpop.f32.mrf.mxu0
        %v1633 = vadd.f32 0.0, %v1632
        %v1634 = vpop.f32.mrf.mxu0
        %v1635 = vpop.f32.mrf.mxu0
        %v1636 = vadd.f32 0.0, %v1635
        %v1637 = vpop.f32.mrf.mxu0
        %1638 = vmatprep.mubr.bf16.mxu0 0
        %1639 = vmatmul.mubr.bf16.gmra.mxu0 %v1549
        %v1640 = vpop.f32.mrf.mxu0
        %v1641 = vadd.f32 0.0, %v1640
        %v1642 = vpop.f32.mrf.mxu0
        %v1643 = vpop.f32.mrf.mxu0
        %v1644 = vadd.f32 0.0, %v1643
        %v1645 = vpop.f32.mrf.mxu0
        %1646 = vmatprep.mubr.bf16.mxu0 0
        %1647 = vmatmul.mubr.bf16.gmra.mxu0 %v1552
        %v1648 = vpop.f32.mrf.mxu0
        %v1649 = vadd.f32 0.0, %v1648
        %v1650 = vpop.f32.mrf.mxu0
        %v1651 = vpop.f32.mrf.mxu0
        %v1652 = vadd.f32 0.0, %v1651
        %v1653 = vpop.f32.mrf.mxu0
        %1654 = vmatprep.mubr.bf16.mxu0 0
        %1655 = vmatmul.mubr.bf16.gmra.mxu0 %v1555
        %v1656 = vpop.f32.mrf.mxu0
        %v1657 = vadd.f32 0.0, %v1656
        %v1658 = vpop.f32.mrf.mxu0
        %v1659 = vpop.f32.mrf.mxu0
        %v1660 = vadd.f32 0.0, %v1659
        %v1661 = vpop.f32.mrf.mxu0
        %1662 = vmatprep.mubr.bf16.mxu0 0
        %1663 = vmatmul.mubr.bf16.gmra.mxu0 %v1558
        %v1664 = vpop.f32.mrf.mxu0
        %v1665 = vadd.f32 0.0, %v1664
        %v1666 = vpop.f32.mrf.mxu0
        %v1667 = vpop.f32.mrf.mxu0
        %v1668 = vadd.f32 0.0, %v1667
        %v1669 = vpop.f32.mrf.mxu0
        %1670 = vmatprep.mubr.bf16.mxu0 0
        %1671 = vmatmul.mubr.bf16.gmra.mxu0 %v1561
        %v1672 = vpop.f32.mrf.mxu0
        %v1673 = vadd.f32 0.0, %v1672
        %v1674 = vpop.f32.mrf.mxu0
        %v1675 = vpop.f32.mrf.mxu0
        %v1676 = vadd.f32 0.0, %v1675
        %v1677 = vpop.f32.mrf.mxu0
        %1678 = vmatprep.mubr.bf16.mxu0 0
        %1679 = vmatmul.mubr.bf16.gmra.mxu0 %v1564
        %v1680 = vpop.f32.mrf.mxu0
        %v1681 = vadd.f32 0.0, %v1680
        %v1682 = vpop.f32.mrf.mxu0
        %v1683 = vpop.f32.mrf.mxu0
        %v1684 = vadd.f32 0.0, %v1683
        %v1685 = vpop.f32.mrf.mxu0
        %1686 = vmatprep.mubr.bf16.mxu0 0
        %1687 = vmatmul.mubr.bf16.gmra.mxu0 %v1567
        %v1688 = vpop.f32.mrf.mxu0
        %v1689 = vadd.f32 0.0, %v1688
        %v1690 = vpop.f32.mrf.mxu0
        %v1691 = vpop.f32.mrf.mxu0
        %v1692 = vadd.f32 0.0, %v1691
        %v1693 = vpop.f32.mrf.mxu0
        %1694 = vmatprep.mubr.bf16.mxu0 0
        %1695 = vmatmul.mubr.bf16.gmra.mxu0 %v1570
        %v1696 = vpop.f32.mrf.mxu0
        %v1697 = vadd.f32 0.0, %v1696
        %v1698 = vpop.f32.mrf.mxu0
        %v1699 = vpop.f32.mrf.mxu0
        %v1700 = vadd.f32 0.0, %v1699
        %v1701 = vpop.f32.mrf.mxu0
        %1702 = vmatprep.mubr.bf16.mxu0 0
        %1703 = vmatmul.mubr.bf16.gmra.mxu0 %v1573
        %v1704 = vpop.f32.mrf.mxu0
        %v1705 = vadd.f32 0.0, %v1704
        %v1706 = vpop.f32.mrf.mxu0
        %v1707 = vpop.f32.mrf.mxu0
        %v1708 = vadd.f32 0.0, %v1707
        %v1709 = vpop.f32.mrf.mxu0
        %1710 = vmatprep.mubr.bf16.mxu0 0
        %1711 = vmatmul.mubr.bf16.gmra.mxu0 %v1576
        %v1712 = vpop.f32.mrf.mxu0
        %v1713 = vadd.f32 0.0, %v1712
        %v1714 = vpop.f32.mrf.mxu0
        %v1715 = vpop.f32.mrf.mxu0
        %v1716 = vadd.f32 0.0, %v1715
        %v1717 = vpop.f32.mrf.mxu0
        %1718 = vmatprep.mubr.bf16.mxu0 0
        %1719 = vmatmul.mubr.bf16.gmra.mxu0 %v1579
        %v1720 = vpop.f32.mrf.mxu0
        %v1721 = vadd.f32 0.0, %v1720
        %v1722 = vpop.f32.mrf.mxu0
        %v1723 = vpop.f32.mrf.mxu0
        %v1724 = vadd.f32 0.0, %v1723
        %v1725 = vpop.f32.mrf.mxu0
        %1726 = vmatprep.mubr.bf16.mxu0 0
        %1727 = vmatmul.mubr.bf16.gmra.mxu0 %v1582
        %v1728 = vpop.f32.mrf.mxu0
        %v1729 = vadd.f32 0.0, %v1728
        %v1730 = vpop.f32.mrf.mxu0
        %v1731 = vpop.f32.mrf.mxu0
        %v1732 = vadd.f32 0.0, %v1731
        %v1733 = vpop.f32.mrf.mxu0
        %1734 = vmatprep.mubr.bf16.mxu0 0
        %1735 = vmatmul.mubr.bf16.gmra.mxu0 %v1585
        %v1736 = vpop.f32.mrf.mxu0
        %v1737 = vadd.f32 0.0, %v1736
        %v1738 = vpop.f32.mrf.mxu0
        %v1739 = vpop.f32.mrf.mxu0
        %v1740 = vadd.f32 0.0, %v1739
        %v1741 = vpop.f32.mrf.mxu0
        %1742 = vmatprep.mubr.bf16.mxu0 0
        %1743 = vmatmul.mubr.bf16.gmra.mxu0 %v1588
        %v1744 = vpop.f32.mrf.mxu0
        %v1745 = vadd.f32 0.0, %v1744
        %v1746 = vpop.f32.mrf.mxu0
        %v1747 = vpop.f32.mrf.mxu0
        %v1748 = vadd.f32 0.0, %v1747
        %v1749 = vpop.f32.mrf.mxu0
        %1750 = vdwg.mxu0
        %v1751 = vadd.f32 %v1172, %v1625
        %v1752 = vadd.f32 %v1175, %v1628
        %v1753 = vadd.f32 %v1180, %v1633
        %v1754 = vadd.f32 %v1183, %v1636
        %v1755 = vadd.f32 %v1188, %v1641
        %v1756 = vadd.f32 %v1191, %v1644
        %v1757 = vadd.f32 %v1196, %v1649
        %v1758 = vadd.f32 %v1199, %v1652
        %v1759 = vadd.f32 %v1204, %v1657
        %v1760 = vadd.f32 %v1207, %v1660
        %v1761 = vadd.f32 %v1212, %v1665
        %v1762 = vadd.f32 %v1215, %v1668
        %v1763 = vadd.f32 %v1220, %v1673
        %v1764 = vadd.f32 %v1223, %v1676
        %v1765 = vadd.f32 %v1228, %v1681
        %v1766 = vadd.f32 %v1231, %v1684
        %v1767 = vadd.f32 %v1236, %v1689
        %v1768 = vadd.f32 %v1239, %v1692
        %v1769 = vadd.f32 %v1244, %v1697
        %v1770 = vadd.f32 %v1247, %v1700
        %v1771 = vadd.f32 %v1252, %v1705
        %v1772 = vadd.f32 %v1255, %v1708
        %v1773 = vadd.f32 %v1260, %v1713
        %v1774 = vadd.f32 %v1263, %v1716
        %v1775 = vadd.f32 %v1268, %v1721
        %v1776 = vadd.f32 %v1271, %v1724
        %v1777 = vadd.f32 %v1276, %v1729
        %v1778 = vadd.f32 %v1279, %v1732
        %v1779 = vadd.f32 %v1284, %v1737
        %v1780 = vadd.f32 %v1287, %v1740
        %v1781 = vadd.f32 %v1292, %v1745
        %v1782 = vadd.f32 %v1295, %v1748
        %s1783 = scalar_lea.vmem %s249, 12
        %v1784 = vld [vmem:[%s1783] sm:$0xf]
        %v1785 = vld [vmem:[%s1783 + $0x4] sm:$0xf]
        %v1786 = vld [vmem:[%s1783 + $0xc] sm:$0xf]
        %v1787 = vld [vmem:[%s1783 + $0x10] sm:$0xf]
        %v1788 = vld [vmem:[%s1783 + $0x18] sm:$0xf]
        %v1789 = vld [vmem:[%s1783 + $0x1c] sm:$0xf]
        %v1790 = vld [vmem:[%s1783 + $0x24] sm:$0xf]
        %v1791 = vld [vmem:[%s1783 + $0x28] sm:$0xf]
        %v1792 = vld [vmem:[%s1783 + $0x30] sm:$0xf]
        %v1793 = vld [vmem:[%s1783 + $0x34] sm:$0xf]
        %v1794 = vld [vmem:[%s1783 + $0x3c] sm:$0xf]
        %v1795 = vld [vmem:[%s1783 + $0x40] sm:$0xf]
        %v1796 = vld [vmem:[%s1783 + $0x48] sm:$0xf]
        %v1797 = vld [vmem:[%s1783 + $0x4c] sm:$0xf]
        %v1798 = vld [vmem:[%s1783 + $0x54] sm:$0xf]
        %v1799 = vld [vmem:[%s1783 + $0x58] sm:$0xf]
        %v1800 = vld [vmem:[%s1783 + $0x60] sm:$0xf]
        %v1801 = vld [vmem:[%s1783 + $0x64] sm:$0xf]
        %v1802 = vld [vmem:[%s1783 + $0x6c] sm:$0xf]
        %v1803 = vld [vmem:[%s1783 + $0x70] sm:$0xf]
        %v1804 = vld [vmem:[%s1783 + $0x78] sm:$0xf]
        %v1805 = vld [vmem:[%s1783 + $0x7c] sm:$0xf]
        %v1806 = vld [vmem:[%s1783 + $0x84] sm:$0xf]
        %v1807 = vld [vmem:[%s1783 + $0x88] sm:$0xf]
        %v1808 = vld [vmem:[%s1783 + $0x90] sm:$0xf]
        %v1809 = vld [vmem:[%s1783 + $0x94] sm:$0xf]
        %v1810 = vld [vmem:[%s1783 + $0x9c] sm:$0xf]
        %v1811 = vld [vmem:[%s1783 + $0xa0] sm:$0xf]
        %v1812 = vld [vmem:[%s1783 + $0xa8] sm:$0xf]
        %v1813 = vld [vmem:[%s1783 + $0xac] sm:$0xf]
        %v1814 = vld [vmem:[%s1783 + $0xb4] sm:$0xf]
        %v1815 = vld [vmem:[%s1783 + $0xb8] sm:$0xf]
        %s1816 = scalar_lea.vmem %s1, 96
        %v1817 = vld [vmem:[%s1816] sm:$0xf]
        %v1818 = vld [vmem:[%s1816 + $0x4] sm:$0xf]
        %v1819 = vld [vmem:[%s1816 + $0x8] sm:$0xf]
        %v1820 = vld [vmem:[%s1816 + $0xc] sm:$0xf]
        %v1821 = vld [vmem:[%s1816 + $0x10] sm:$0xf]
        %v1822 = vld [vmem:[%s1816 + $0x14] sm:$0xf]
        %v1823 = vld [vmem:[%s1816 + $0x18] sm:$0xf]
        %v1824 = vld [vmem:[%s1816 + $0x1c] sm:$0xf]
        %v1857 = vunpack.c.l.b16 %v1784
        %v1858 = vunpack.c.l.b16 %v1785
        %v1859 = vunpack.c.l.b16 %v1786
        %v1860 = vunpack.c.l.b16 %v1787
        %v1861 = vunpack.c.l.b16 %v1788
        %v1862 = vunpack.c.l.b16 %v1789
        %v1863 = vunpack.c.l.b16 %v1790
        %v1864 = vunpack.c.l.b16 %v1791
        %v1865 = vunpack.c.l.b16 %v1792
        %v1866 = vunpack.c.l.b16 %v1793
        %v1867 = vunpack.c.l.b16 %v1794
        %v1868 = vunpack.c.l.b16 %v1795
        %v1869 = vunpack.c.l.b16 %v1796
        %v1870 = vunpack.c.l.b16 %v1797
        %v1871 = vunpack.c.l.b16 %v1798
        %v1872 = vunpack.c.l.b16 %v1799
        %v1873 = vunpack.c.l.b16 %v1800
        %v1874 = vunpack.c.l.b16 %v1801
        %v1875 = vunpack.c.l.b16 %v1802
        %v1876 = vunpack.c.l.b16 %v1803
        %v1877 = vunpack.c.l.b16 %v1804
        %v1878 = vunpack.c.l.b16 %v1805
        %v1879 = vunpack.c.l.b16 %v1806
        %v1880 = vunpack.c.l.b16 %v1807
        %v1881 = vunpack.c.l.b16 %v1808
        %v1882 = vunpack.c.l.b16 %v1809
        %v1883 = vunpack.c.l.b16 %v1810
        %v1884 = vunpack.c.l.b16 %v1811
        %v1885 = vunpack.c.l.b16 %v1812
        %v1886 = vunpack.c.l.b16 %v1813
        %v1887 = vunpack.c.l.b16 %v1814
        %v1888 = vunpack.c.l.b16 %v1815
        %v1889 = vpack.c.b16 %v1858, %v1857
        %v1890 = vpack.c.b16 %v1860, %v1859
        %v1891 = vpack.c.b16 %v1862, %v1861
        %v1892 = vpack.c.b16 %v1864, %v1863
        %v1893 = vpack.c.b16 %v1866, %v1865
        %v1894 = vpack.c.b16 %v1868, %v1867
        %v1895 = vpack.c.b16 %v1870, %v1869
        %v1896 = vpack.c.b16 %v1872, %v1871
        %v1897 = vpack.c.b16 %v1874, %v1873
        %v1898 = vpack.c.b16 %v1876, %v1875
        %v1899 = vpack.c.b16 %v1878, %v1877
        %v1900 = vpack.c.b16 %v1880, %v1879
        %v1901 = vpack.c.b16 %v1882, %v1881
        %v1902 = vpack.c.b16 %v1884, %v1883
        %v1903 = vpack.c.b16 %v1886, %v1885
        %v1904 = vpack.c.b16 %v1888, %v1887
        %v1913 = vunpack.c.l.b16 %v1817
        %v1914 = vunpack.c.l.b16 %v1818
        %v1915 = vunpack.c.l.b16 %v1819
        %v1916 = vunpack.c.l.b16 %v1820
        %v1917 = vunpack.c.l.b16 %v1821
        %v1918 = vunpack.c.l.b16 %v1822
        %v1919 = vunpack.c.l.b16 %v1823
        %v1920 = vunpack.c.l.b16 %v1824
        %v1921 = vpack.c.b16 %v1914, %v1913
        %v1922 = vpack.c.b16 %v1916, %v1915
        %v1923 = vpack.c.b16 %v1918, %v1917
        %v1924 = vpack.c.b16 %v1920, %v1919
        %v1930 = vsel %vm775, %v1889, 0
        %v1933 = vsel %vm775, %v1890, 0
        %v1936 = vsel %vm775, %v1891, 0
        %v1939 = vsel %vm775, %v1892, 0
        %v1942 = vsel %vm775, %v1893, 0
        %v1945 = vsel %vm775, %v1894, 0
        %v1948 = vsel %vm775, %v1895, 0
        %v1951 = vsel %vm775, %v1896, 0
        %v1954 = vsel %vm775, %v1897, 0
        %v1957 = vsel %vm775, %v1898, 0
        %v1960 = vsel %vm775, %v1899, 0
        %v1963 = vsel %vm775, %v1900, 0
        %v1966 = vsel %vm775, %v1901, 0
        %v1969 = vsel %vm775, %v1902, 0
        %v1972 = vsel %vm775, %v1903, 0
        %v1975 = vsel %vm775, %v1904, 0
        %1977 = vmatprep.subr.bf16.mxu0 0
        %1978 = vmatpush1.bf16.msra.mxu0 0
        %1979 = vmatprep.subr.bf16.mxu0 0
        %1980 = vmatpush1.bf16.msra.mxu0 0
        %1981 = vmatprep.subr.bf16.mxu0 0
        %1982 = vmatpush1.bf16.msra.mxu0 0
        %1983 = vmatprep.subr.bf16.mxu0 0
        %1984 = vmatpush1.bf16.msra.mxu0 0
        %1985 = vmatprep.subr.bf16.mxu0 0
        %1986 = vmatpush1.bf16.msra.mxu0 %v1924
        %1987 = vmatprep.subr.bf16.mxu0 0
        %1988 = vmatpush1.bf16.msra.mxu0 %v1923
        %1989 = vmatprep.subr.bf16.mxu0 0
        %1990 = vmatpush1.bf16.msra.mxu0 %v1922
        %1991 = vmatprep.subr.bf16.mxu0 0
        %1992 = vmatpush1.bf16.msra.mxu0 %v1921
        %1993 = vmatprep.subr.bf16.mxu0 0
        %1994 = vmatpush2.bf16.msra.mxu0 0
        %1995 = vmatprep.subr.bf16.mxu0 0
        %1996 = vmatpush2.bf16.msra.mxu0 0
        %1997 = vmatprep.subr.bf16.mxu0 0
        %1998 = vmatpush2.bf16.msra.mxu0 0
        %1999 = vmatprep.subr.bf16.mxu0 0
        %2000 = vmatpush2.bf16.msra.mxu0 0
        %2001 = vmatprep.subr.bf16.mxu0 0
        %2002 = vmatpush2.bf16.msra.mxu0 0
        %2003 = vmatprep.subr.bf16.mxu0 0
        %2004 = vmatpush2.bf16.msra.mxu0 0
        %2005 = vmatprep.subr.bf16.mxu0 0
        %2006 = vmatpush2.bf16.msra.mxu0 0
        %2007 = vmatprep.subr.bf16.mxu0 0
        %2008 = vmatpush2.bf16.msra.mxu0 0
        %2009 = vmatprep.mubr.bf16.mxu0 0
        %2010 = vmatmul.mubr.bf16.gmra.mxu0 %v1930
        %v2011 = vpop.f32.mrf.mxu0
        %v2012 = vadd.f32 0.0, %v2011
        %v2013 = vpop.f32.mrf.mxu0
        %v2014 = vpop.f32.mrf.mxu0
        %v2015 = vadd.f32 0.0, %v2014
        %v2016 = vpop.f32.mrf.mxu0
        %2017 = vmatprep.mubr.bf16.mxu0 0
        %2018 = vmatmul.mubr.bf16.gmra.mxu0 %v1933
        %v2019 = vpop.f32.mrf.mxu0
        %v2020 = vadd.f32 0.0, %v2019
        %v2021 = vpop.f32.mrf.mxu0
        %v2022 = vpop.f32.mrf.mxu0
        %v2023 = vadd.f32 0.0, %v2022
        %v2024 = vpop.f32.mrf.mxu0
        %2025 = vmatprep.mubr.bf16.mxu0 0
        %2026 = vmatmul.mubr.bf16.gmra.mxu0 %v1936
        %v2027 = vpop.f32.mrf.mxu0
        %v2028 = vadd.f32 0.0, %v2027
        %v2029 = vpop.f32.mrf.mxu0
        %v2030 = vpop.f32.mrf.mxu0
        %v2031 = vadd.f32 0.0, %v2030
        %v2032 = vpop.f32.mrf.mxu0
        %2033 = vmatprep.mubr.bf16.mxu0 0
        %2034 = vmatmul.mubr.bf16.gmra.mxu0 %v1939
        %v2035 = vpop.f32.mrf.mxu0
        %v2036 = vadd.f32 0.0, %v2035
        %v2037 = vpop.f32.mrf.mxu0
        %v2038 = vpop.f32.mrf.mxu0
        %v2039 = vadd.f32 0.0, %v2038
        %v2040 = vpop.f32.mrf.mxu0
        %2041 = vmatprep.mubr.bf16.mxu0 0
        %2042 = vmatmul.mubr.bf16.gmra.mxu0 %v1942
        %v2043 = vpop.f32.mrf.mxu0
        %v2044 = vadd.f32 0.0, %v2043
        %v2045 = vpop.f32.mrf.mxu0
        %v2046 = vpop.f32.mrf.mxu0
        %v2047 = vadd.f32 0.0, %v2046
        %v2048 = vpop.f32.mrf.mxu0
        %2049 = vmatprep.mubr.bf16.mxu0 0
        %2050 = vmatmul.mubr.bf16.gmra.mxu0 %v1945
        %v2051 = vpop.f32.mrf.mxu0
        %v2052 = vadd.f32 0.0, %v2051
        %v2053 = vpop.f32.mrf.mxu0
        %v2054 = vpop.f32.mrf.mxu0
        %v2055 = vadd.f32 0.0, %v2054
        %v2056 = vpop.f32.mrf.mxu0
        %2057 = vmatprep.mubr.bf16.mxu0 0
        %2058 = vmatmul.mubr.bf16.gmra.mxu0 %v1948
        %v2059 = vpop.f32.mrf.mxu0
        %v2060 = vadd.f32 0.0, %v2059
        %v2061 = vpop.f32.mrf.mxu0
        %v2062 = vpop.f32.mrf.mxu0
        %v2063 = vadd.f32 0.0, %v2062
        %v2064 = vpop.f32.mrf.mxu0
        %2065 = vmatprep.mubr.bf16.mxu0 0
        %2066 = vmatmul.mubr.bf16.gmra.mxu0 %v1951
        %v2067 = vpop.f32.mrf.mxu0
        %v2068 = vadd.f32 0.0, %v2067
        %v2069 = vpop.f32.mrf.mxu0
        %v2070 = vpop.f32.mrf.mxu0
        %v2071 = vadd.f32 0.0, %v2070
        %v2072 = vpop.f32.mrf.mxu0
        %2073 = vmatprep.mubr.bf16.mxu0 0
        %2074 = vmatmul.mubr.bf16.gmra.mxu0 %v1954
        %v2075 = vpop.f32.mrf.mxu0
        %v2076 = vadd.f32 0.0, %v2075
        %v2077 = vpop.f32.mrf.mxu0
        %v2078 = vpop.f32.mrf.mxu0
        %v2079 = vadd.f32 0.0, %v2078
        %v2080 = vpop.f32.mrf.mxu0
        %2081 = vmatprep.mubr.bf16.mxu0 0
        %2082 = vmatmul.mubr.bf16.gmra.mxu0 %v1957
        %v2083 = vpop.f32.mrf.mxu0
        %v2084 = vadd.f32 0.0, %v2083
        %v2085 = vpop.f32.mrf.mxu0
        %v2086 = vpop.f32.mrf.mxu0
        %v2087 = vadd.f32 0.0, %v2086
        %v2088 = vpop.f32.mrf.mxu0
        %2089 = vmatprep.mubr.bf16.mxu0 0
        %2090 = vmatmul.mubr.bf16.gmra.mxu0 %v1960
        %v2091 = vpop.f32.mrf.mxu0
        %v2092 = vadd.f32 0.0, %v2091
        %v2093 = vpop.f32.mrf.mxu0
        %v2094 = vpop.f32.mrf.mxu0
        %v2095 = vadd.f32 0.0, %v2094
        %v2096 = vpop.f32.mrf.mxu0
        %2097 = vmatprep.mubr.bf16.mxu0 0
        %2098 = vmatmul.mubr.bf16.gmra.mxu0 %v1963
        %v2099 = vpop.f32.mrf.mxu0
        %v2100 = vadd.f32 0.0, %v2099
        %v2101 = vpop.f32.mrf.mxu0
        %v2102 = vpop.f32.mrf.mxu0
        %v2103 = vadd.f32 0.0, %v2102
        %v2104 = vpop.f32.mrf.mxu0
        %2105 = vmatprep.mubr.bf16.mxu0 0
        %2106 = vmatmul.mubr.bf16.gmra.mxu0 %v1966
        %v2107 = vpop.f32.mrf.mxu0
        %v2108 = vadd.f32 0.0, %v2107
        %v2109 = vpop.f32.mrf.mxu0
        %v2110 = vpop.f32.mrf.mxu0
        %v2111 = vadd.f32 0.0, %v2110
        %v2112 = vpop.f32.mrf.mxu0
        %2113 = vmatprep.mubr.bf16.mxu0 0
        %2114 = vmatmul.mubr.bf16.gmra.mxu0 %v1969
        %v2115 = vpop.f32.mrf.mxu0
        %v2116 = vadd.f32 0.0, %v2115
        %v2117 = vpop.f32.mrf.mxu0
        %v2118 = vpop.f32.mrf.mxu0
        %v2119 = vadd.f32 0.0, %v2118
        %v2120 = vpop.f32.mrf.mxu0
        %2121 = vmatprep.mubr.bf16.mxu0 0
        %2122 = vmatmul.mubr.bf16.gmra.mxu0 %v1972
        %v2123 = vpop.f32.mrf.mxu0
        %v2124 = vadd.f32 0.0, %v2123
        %v2125 = vpop.f32.mrf.mxu0
        %v2126 = vpop.f32.mrf.mxu0
        %v2127 = vadd.f32 0.0, %v2126
        %v2128 = vpop.f32.mrf.mxu0
        %2129 = vmatprep.mubr.bf16.mxu0 0
        %2130 = vmatmul.mubr.bf16.gmra.mxu0 %v1975
        %v2131 = vpop.f32.mrf.mxu0
        %v2132 = vadd.f32 0.0, %v2131
        %v2133 = vpop.f32.mrf.mxu0
        %v2134 = vpop.f32.mrf.mxu0
        %v2135 = vadd.f32 0.0, %v2134
        %v2136 = vpop.f32.mrf.mxu0
        %2137 = vdwg.mxu0
        %v2138 = vadd.f32 %v1751, %v2012
        %v2139 = vadd.f32 %v1752, %v2015
        %v2140 = vadd.f32 %v1753, %v2020
        %v2141 = vadd.f32 %v1754, %v2023
        %v2142 = vadd.f32 %v1755, %v2028
        %v2143 = vadd.f32 %v1756, %v2031
        %v2144 = vadd.f32 %v1757, %v2036
        %v2145 = vadd.f32 %v1758, %v2039
        %v2146 = vadd.f32 %v1759, %v2044
        %v2147 = vadd.f32 %v1760, %v2047
        %v2148 = vadd.f32 %v1761, %v2052
        %v2149 = vadd.f32 %v1762, %v2055
        %v2150 = vadd.f32 %v1763, %v2060
        %v2151 = vadd.f32 %v1764, %v2063
        %v2152 = vadd.f32 %v1765, %v2068
        %v2153 = vadd.f32 %v1766, %v2071
        %v2154 = vadd.f32 %v1767, %v2076
        %v2155 = vadd.f32 %v1768, %v2079
        %v2156 = vadd.f32 %v1769, %v2084
        %v2157 = vadd.f32 %v1770, %v2087
        %v2158 = vadd.f32 %v1771, %v2092
        %v2159 = vadd.f32 %v1772, %v2095
        %v2160 = vadd.f32 %v1773, %v2100
        %v2161 = vadd.f32 %v1774, %v2103
        %v2162 = vadd.f32 %v1775, %v2108
        %v2163 = vadd.f32 %v1776, %v2111
        %v2164 = vadd.f32 %v1777, %v2116
        %v2165 = vadd.f32 %v1778, %v2119
        %v2166 = vadd.f32 %v1779, %v2124
        %v2167 = vadd.f32 %v1780, %v2127
        %v2168 = vadd.f32 %v1781, %v2132
        %v2169 = vadd.f32 %v1782, %v2135
        %v2170 = vld [vmem:[%s1783] sm:$0xf]
        %v2171 = vld [vmem:[%s1783 + $0x4] sm:$0xf]
        %v2172 = vld [vmem:[%s1783 + $0x8] sm:$0x1]
        %v2173 = vld [vmem:[%s1783 + $0xc] sm:$0xf]
        %v2174 = vld [vmem:[%s1783 + $0x10] sm:$0xf]
        %v2175 = vld [vmem:[%s1783 + $0x14] sm:$0x1]
        %v2176 = vld [vmem:[%s1783 + $0x18] sm:$0xf]
        %v2177 = vld [vmem:[%s1783 + $0x1c] sm:$0xf]
        %v2178 = vld [vmem:[%s1783 + $0x20] sm:$0x1]
        %v2179 = vld [vmem:[%s1783 + $0x24] sm:$0xf]
        %v2180 = vld [vmem:[%s1783 + $0x28] sm:$0xf]
        %v2181 = vld [vmem:[%s1783 + $0x2c] sm:$0x1]
        %v2182 = vld [vmem:[%s1783 + $0x30] sm:$0xf]
        %v2183 = vld [vmem:[%s1783 + $0x34] sm:$0xf]
        %v2184 = vld [vmem:[%s1783 + $0x38] sm:$0x1]
        %v2185 = vld [vmem:[%s1783 + $0x3c] sm:$0xf]
        %v2186 = vld [vmem:[%s1783 + $0x40] sm:$0xf]
        %v2187 = vld [vmem:[%s1783 + $0x44] sm:$0x1]
        %v2188 = vld [vmem:[%s1783 + $0x48] sm:$0xf]
        %v2189 = vld [vmem:[%s1783 + $0x4c] sm:$0xf]
        %v2190 = vld [vmem:[%s1783 + $0x50] sm:$0x1]
        %v2191 = vld [vmem:[%s1783 + $0x54] sm:$0xf]
        %v2192 = vld [vmem:[%s1783 + $0x58] sm:$0xf]
        %v2193 = vld [vmem:[%s1783 + $0x5c] sm:$0x1]
        %v2194 = vld [vmem:[%s1783 + $0x60] sm:$0xf]
        %v2195 = vld [vmem:[%s1783 + $0x64] sm:$0xf]
        %v2196 = vld [vmem:[%s1783 + $0x68] sm:$0x1]
        %v2197 = vld [vmem:[%s1783 + $0x6c] sm:$0xf]
        %v2198 = vld [vmem:[%s1783 + $0x70] sm:$0xf]
        %v2199 = vld [vmem:[%s1783 + $0x74] sm:$0x1]
        %v2200 = vld [vmem:[%s1783 + $0x78] sm:$0xf]
        %v2201 = vld [vmem:[%s1783 + $0x7c] sm:$0xf]
        %v2202 = vld [vmem:[%s1783 + $0x80] sm:$0x1]
        %v2203 = vld [vmem:[%s1783 + $0x84] sm:$0xf]
        %v2204 = vld [vmem:[%s1783 + $0x88] sm:$0xf]
        %v2205 = vld [vmem:[%s1783 + $0x8c] sm:$0x1]
        %v2206 = vld [vmem:[%s1783 + $0x90] sm:$0xf]
        %v2207 = vld [vmem:[%s1783 + $0x94] sm:$0xf]
        %v2208 = vld [vmem:[%s1783 + $0x98] sm:$0x1]
        %v2209 = vld [vmem:[%s1783 + $0x9c] sm:$0xf]
        %v2210 = vld [vmem:[%s1783 + $0xa0] sm:$0xf]
        %v2211 = vld [vmem:[%s1783 + $0xa4] sm:$0x1]
        %v2212 = vld [vmem:[%s1783 + $0xa8] sm:$0xf]
        %v2213 = vld [vmem:[%s1783 + $0xac] sm:$0xf]
        %v2214 = vld [vmem:[%s1783 + $0xb0] sm:$0x1]
        %v2215 = vld [vmem:[%s1783 + $0xb4] sm:$0xf]
        %v2216 = vld [vmem:[%s1783 + $0xb8] sm:$0xf]
        %v2217 = vld [vmem:[%s1783 + $0xbc] sm:$0x1]
        %v2219 = vshrl.u32 %v2170, 16
        %v2221 = vrot.slane %v2219, 4
        %v2222 = vshll.u32 %v2170, 16
        %v2224 = vrot.slane %v2222, 5
        %v2225 = vor.u32 %v2221, %v2224
        %v2226 = vrot.slane %v2225, 4
        %v2228 = vshll.u32 %v2171, 16
        %v2230 = vrot.slane %v2228, 5
        %v2231 = vsel %vm309, %v2226, %v2230
        %v2232 = vshrl.u32 %v2171, 16
        %v2234 = vrot.slane %v2232, 4
        %v2235 = vor.u32 %v2234, %v2230
        %v2236 = vrot.slane %v2235, 4
        %v2238 = vshll.u32 %v2172, 16
        %v2240 = vrot.slane %v2238, 5
        %v2241 = vsel %vm309, %v2236, %v2240
        %v2243 = vshrl.u32 %v2173, 16
        %v2245 = vrot.slane %v2243, 4
        %v2246 = vshll.u32 %v2173, 16
        %v2248 = vrot.slane %v2246, 5
        %v2249 = vor.u32 %v2245, %v2248
        %v2250 = vrot.slane %v2249, 4
        %v2252 = vshll.u32 %v2174, 16
        %v2254 = vrot.slane %v2252, 5
        %v2255 = vsel %vm309, %v2250, %v2254
        %v2256 = vshrl.u32 %v2174, 16
        %v2258 = vrot.slane %v2256, 4
        %v2259 = vor.u32 %v2258, %v2254
        %v2260 = vrot.slane %v2259, 4
        %v2262 = vshll.u32 %v2175, 16
        %v2264 = vrot.slane %v2262, 5
        %v2265 = vsel %vm309, %v2260, %v2264
        %v2267 = vshrl.u32 %v2176, 16
        %v2269 = vrot.slane %v2267, 4
        %v2270 = vshll.u32 %v2176, 16
        %v2272 = vrot.slane %v2270, 5
        %v2273 = vor.u32 %v2269, %v2272
        %v2274 = vrot.slane %v2273, 4
        %v2276 = vshll.u32 %v2177, 16
        %v2278 = vrot.slane %v2276, 5
        %v2279 = vsel %vm309, %v2274, %v2278
        %v2280 = vshrl.u32 %v2177, 16
        %v2282 = vrot.slane %v2280, 4
        %v2283 = vor.u32 %v2282, %v2278
        %v2284 = vrot.slane %v2283, 4
        %v2286 = vshll.u32 %v2178, 16
        %v2288 = vrot.slane %v2286, 5
        %v2289 = vsel %vm309, %v2284, %v2288
        %v2291 = vshrl.u32 %v2179, 16
        %v2293 = vrot.slane %v2291, 4
        %v2294 = vshll.u32 %v2179, 16
        %v2296 = vrot.slane %v2294, 5
        %v2297 = vor.u32 %v2293, %v2296
        %v2298 = vrot.slane %v2297, 4
        %v2300 = vshll.u32 %v2180, 16
        %v2302 = vrot.slane %v2300, 5
        %v2303 = vsel %vm309, %v2298, %v2302
        %v2304 = vshrl.u32 %v2180, 16
        %v2306 = vrot.slane %v2304, 4
        %v2307 = vor.u32 %v2306, %v2302
        %v2308 = vrot.slane %v2307, 4
        %v2310 = vshll.u32 %v2181, 16
        %v2312 = vrot.slane %v2310, 5
        %v2313 = vsel %vm309, %v2308, %v2312
        %v2315 = vshrl.u32 %v2182, 16
        %v2317 = vrot.slane %v2315, 4
        %v2318 = vshll.u32 %v2182, 16
        %v2320 = vrot.slane %v2318, 5
        %v2321 = vor.u32 %v2317, %v2320
        %v2322 = vrot.slane %v2321, 4
        %v2324 = vshll.u32 %v2183, 16
        %v2326 = vrot.slane %v2324, 5
        %v2327 = vsel %vm309, %v2322, %v2326
        %v2328 = vshrl.u32 %v2183, 16
        %v2330 = vrot.slane %v2328, 4
        %v2331 = vor.u32 %v2330, %v2326
        %v2332 = vrot.slane %v2331, 4
        %v2334 = vshll.u32 %v2184, 16
        %v2336 = vrot.slane %v2334, 5
        %v2337 = vsel %vm309, %v2332, %v2336
        %v2339 = vshrl.u32 %v2185, 16
        %v2341 = vrot.slane %v2339, 4
        %v2342 = vshll.u32 %v2185, 16
        %v2344 = vrot.slane %v2342, 5
        %v2345 = vor.u32 %v2341, %v2344
        %v2346 = vrot.slane %v2345, 4
        %v2348 = vshll.u32 %v2186, 16
        %v2350 = vrot.slane %v2348, 5
        %v2351 = vsel %vm309, %v2346, %v2350
        %v2352 = vshrl.u32 %v2186, 16
        %v2354 = vrot.slane %v2352, 4
        %v2355 = vor.u32 %v2354, %v2350
        %v2356 = vrot.slane %v2355, 4
        %v2358 = vshll.u32 %v2187, 16
        %v2360 = vrot.slane %v2358, 5
        %v2361 = vsel %vm309, %v2356, %v2360
        %v2363 = vshrl.u32 %v2188, 16
        %v2365 = vrot.slane %v2363, 4
        %v2366 = vshll.u32 %v2188, 16
        %v2368 = vrot.slane %v2366, 5
        %v2369 = vor.u32 %v2365, %v2368
        %v2370 = vrot.slane %v2369, 4
        %v2372 = vshll.u32 %v2189, 16
        %v2374 = vrot.slane %v2372, 5
        %v2375 = vsel %vm309, %v2370, %v2374
        %v2376 = vshrl.u32 %v2189, 16
        %v2378 = vrot.slane %v2376, 4
        %v2379 = vor.u32 %v2378, %v2374
        %v2380 = vrot.slane %v2379, 4
        %v2382 = vshll.u32 %v2190, 16
        %v2384 = vrot.slane %v2382, 5
        %v2385 = vsel %vm309, %v2380, %v2384
        %v2387 = vshrl.u32 %v2191, 16
        %v2389 = vrot.slane %v2387, 4
        %v2390 = vshll.u32 %v2191, 16
        %v2392 = vrot.slane %v2390, 5
        %v2393 = vor.u32 %v2389, %v2392
        %v2394 = vrot.slane %v2393, 4
        %v2396 = vshll.u32 %v2192, 16
        %v2398 = vrot.slane %v2396, 5
        %v2399 = vsel %vm309, %v2394, %v2398
        %v2400 = vshrl.u32 %v2192, 16
        %v2402 = vrot.slane %v2400, 4
        %v2403 = vor.u32 %v2402, %v2398
        %v2404 = vrot.slane %v2403, 4
        %v2406 = vshll.u32 %v2193, 16
        %v2408 = vrot.slane %v2406, 5
        %v2409 = vsel %vm309, %v2404, %v2408
        %v2411 = vshrl.u32 %v2194, 16
        %v2413 = vrot.slane %v2411, 4
        %v2414 = vshll.u32 %v2194, 16
        %v2416 = vrot.slane %v2414, 5
        %v2417 = vor.u32 %v2413, %v2416
        %v2418 = vrot.slane %v2417, 4
        %v2420 = vshll.u32 %v2195, 16
        %v2422 = vrot.slane %v2420, 5
        %v2423 = vsel %vm309, %v2418, %v2422
        %v2424 = vshrl.u32 %v2195, 16
        %v2426 = vrot.slane %v2424, 4
        %v2427 = vor.u32 %v2426, %v2422
        %v2428 = vrot.slane %v2427, 4
        %v2430 = vshll.u32 %v2196, 16
        %v2432 = vrot.slane %v2430, 5
        %v2433 = vsel %vm309, %v2428, %v2432
        %v2435 = vshrl.u32 %v2197, 16
        %v2437 = vrot.slane %v2435, 4
        %v2438 = vshll.u32 %v2197, 16
        %v2440 = vrot.slane %v2438, 5
        %v2441 = vor.u32 %v2437, %v2440
        %v2442 = vrot.slane %v2441, 4
        %v2444 = vshll.u32 %v2198, 16
        %v2446 = vrot.slane %v2444, 5
        %v2447 = vsel %vm309, %v2442, %v2446
        %v2448 = vshrl.u32 %v2198, 16
        %v2450 = vrot.slane %v2448, 4
        %v2451 = vor.u32 %v2450, %v2446
        %v2452 = vrot.slane %v2451, 4
        %v2454 = vshll.u32 %v2199, 16
        %v2456 = vrot.slane %v2454, 5
        %v2457 = vsel %vm309, %v2452, %v2456
        %v2459 = vshrl.u32 %v2200, 16
        %v2461 = vrot.slane %v2459, 4
        %v2462 = vshll.u32 %v2200, 16
        %v2464 = vrot.slane %v2462, 5
        %v2465 = vor.u32 %v2461, %v2464
        %v2466 = vrot.slane %v2465, 4
        %v2468 = vshll.u32 %v2201, 16
        %v2470 = vrot.slane %v2468, 5
        %v2471 = vsel %vm309, %v2466, %v2470
        %v2472 = vshrl.u32 %v2201, 16
        %v2474 = vrot.slane %v2472, 4
        %v2475 = vor.u32 %v2474, %v2470
        %v2476 = vrot.slane %v2475, 4
        %v2478 = vshll.u32 %v2202, 16
        %v2480 = vrot.slane %v2478, 5
        %v2481 = vsel %vm309, %v2476, %v2480
        %v2483 = vshrl.u32 %v2203, 16
        %v2485 = vrot.slane %v2483, 4
        %v2486 = vshll.u32 %v2203, 16
        %v2488 = vrot.slane %v2486, 5
        %v2489 = vor.u32 %v2485, %v2488
        %v2490 = vrot.slane %v2489, 4
        %v2492 = vshll.u32 %v2204, 16
        %v2494 = vrot.slane %v2492, 5
        %v2495 = vsel %vm309, %v2490, %v2494
        %v2496 = vshrl.u32 %v2204, 16
        %v2498 = vrot.slane %v2496, 4
        %v2499 = vor.u32 %v2498, %v2494
        %v2500 = vrot.slane %v2499, 4
        %v2502 = vshll.u32 %v2205, 16
        %v2504 = vrot.slane %v2502, 5
        %v2505 = vsel %vm309, %v2500, %v2504
        %v2507 = vshrl.u32 %v2206, 16
        %v2509 = vrot.slane %v2507, 4
        %v2510 = vshll.u32 %v2206, 16
        %v2512 = vrot.slane %v2510, 5
        %v2513 = vor.u32 %v2509, %v2512
        %v2514 = vrot.slane %v2513, 4
        %v2516 = vshll.u32 %v2207, 16
        %v2518 = vrot.slane %v2516, 5
        %v2519 = vsel %vm309, %v2514, %v2518
        %v2520 = vshrl.u32 %v2207, 16
        %v2522 = vrot.slane %v2520, 4
        %v2523 = vor.u32 %v2522, %v2518
        %v2524 = vrot.slane %v2523, 4
        %v2526 = vshll.u32 %v2208, 16
        %v2528 = vrot.slane %v2526, 5
        %v2529 = vsel %vm309, %v2524, %v2528
        %v2531 = vshrl.u32 %v2209, 16
        %v2533 = vrot.slane %v2531, 4
        %v2534 = vshll.u32 %v2209, 16
        %v2536 = vrot.slane %v2534, 5
        %v2537 = vor.u32 %v2533, %v2536
        %v2538 = vrot.slane %v2537, 4
        %v2540 = vshll.u32 %v2210, 16
        %v2542 = vrot.slane %v2540, 5
        %v2543 = vsel %vm309, %v2538, %v2542
        %v2544 = vshrl.u32 %v2210, 16
        %v2546 = vrot.slane %v2544, 4
        %v2547 = vor.u32 %v2546, %v2542
        %v2548 = vrot.slane %v2547, 4
        %v2550 = vshll.u32 %v2211, 16
        %v2552 = vrot.slane %v2550, 5
        %v2553 = vsel %vm309, %v2548, %v2552
        %v2555 = vshrl.u32 %v2212, 16
        %v2557 = vrot.slane %v2555, 4
        %v2558 = vshll.u32 %v2212, 16
        %v2560 = vrot.slane %v2558, 5
        %v2561 = vor.u32 %v2557, %v2560
        %v2562 = vrot.slane %v2561, 4
        %v2564 = vshll.u32 %v2213, 16
        %v2566 = vrot.slane %v2564, 5
        %v2567 = vsel %vm309, %v2562, %v2566
        %v2568 = vshrl.u32 %v2213, 16
        %v2570 = vrot.slane %v2568, 4
        %v2571 = vor.u32 %v2570, %v2566
        %v2572 = vrot.slane %v2571, 4
        %v2574 = vshll.u32 %v2214, 16
        %v2576 = vrot.slane %v2574, 5
        %v2577 = vsel %vm309, %v2572, %v2576
        %v2579 = vshrl.u32 %v2215, 16
        %v2581 = vrot.slane %v2579, 4
        %v2582 = vshll.u32 %v2215, 16
        %v2584 = vrot.slane %v2582, 5
        %v2585 = vor.u32 %v2581, %v2584
        %v2586 = vrot.slane %v2585, 4
        %v2588 = vshll.u32 %v2216, 16
        %v2590 = vrot.slane %v2588, 5
        %v2591 = vsel %vm309, %v2586, %v2590
        %v2592 = vshrl.u32 %v2216, 16
        %v2594 = vrot.slane %v2592, 4
        %v2595 = vor.u32 %v2594, %v2590
        %v2596 = vrot.slane %v2595, 4
        %v2598 = vshll.u32 %v2217, 16
        %v2600 = vrot.slane %v2598, 5
        %v2601 = vsel %vm309, %v2596, %v2600
        %s2602 = scalar_lea.vmem %s1, 128
        %v2603 = vld [vmem:[%s2602] sm:$0xf]
        %v2604 = vld [vmem:[%s2602 + $0x4] sm:$0xf]
        %v2605 = vld [vmem:[%s2602 + $0x8] sm:$0xf]
        %v2606 = vld [vmem:[%s2602 + $0xc] sm:$0xf]
        %v2607 = vld [vmem:[%s2602 + $0x10] sm:$0xf]
        %v2608 = vld [vmem:[%s2602 + $0x14] sm:$0xf]
        %v2609 = vld [vmem:[%s2602 + $0x18] sm:$0xf]
        %v2610 = vld [vmem:[%s2602 + $0x1c] sm:$0xf]
        %v2611 = vunpack.c.l.b16 %v2231
        %v2612 = vunpack.c.l.b16 %v2241
        %v2613 = vunpack.c.l.b16 %v2255
        %v2614 = vunpack.c.l.b16 %v2265
        %v2615 = vunpack.c.l.b16 %v2279
        %v2616 = vunpack.c.l.b16 %v2289
        %v2617 = vunpack.c.l.b16 %v2303
        %v2618 = vunpack.c.l.b16 %v2313
        %v2619 = vunpack.c.l.b16 %v2327
        %v2620 = vunpack.c.l.b16 %v2337
        %v2621 = vunpack.c.l.b16 %v2351
        %v2622 = vunpack.c.l.b16 %v2361
        %v2623 = vunpack.c.l.b16 %v2375
        %v2624 = vunpack.c.l.b16 %v2385
        %v2625 = vunpack.c.l.b16 %v2399
        %v2626 = vunpack.c.l.b16 %v2409
        %v2627 = vunpack.c.l.b16 %v2423
        %v2628 = vunpack.c.l.b16 %v2433
        %v2629 = vunpack.c.l.b16 %v2447
        %v2630 = vunpack.c.l.b16 %v2457
        %v2631 = vunpack.c.l.b16 %v2471
        %v2632 = vunpack.c.l.b16 %v2481
        %v2633 = vunpack.c.l.b16 %v2495
        %v2634 = vunpack.c.l.b16 %v2505
        %v2635 = vunpack.c.l.b16 %v2519
        %v2636 = vunpack.c.l.b16 %v2529
        %v2637 = vunpack.c.l.b16 %v2543
        %v2638 = vunpack.c.l.b16 %v2553
        %v2639 = vunpack.c.l.b16 %v2567
        %v2640 = vunpack.c.l.b16 %v2577
        %v2641 = vunpack.c.l.b16 %v2591
        %v2642 = vunpack.c.l.b16 %v2601
        %v2643 = vpack.c.b16 %v2612, %v2611
        %v2644 = vpack.c.b16 %v2614, %v2613
        %v2645 = vpack.c.b16 %v2616, %v2615
        %v2646 = vpack.c.b16 %v2618, %v2617
        %v2647 = vpack.c.b16 %v2620, %v2619
        %v2648 = vpack.c.b16 %v2622, %v2621
        %v2649 = vpack.c.b16 %v2624, %v2623
        %v2650 = vpack.c.b16 %v2626, %v2625
        %v2651 = vpack.c.b16 %v2628, %v2627
        %v2652 = vpack.c.b16 %v2630, %v2629
        %v2653 = vpack.c.b16 %v2632, %v2631
        %v2654 = vpack.c.b16 %v2634, %v2633
        %v2655 = vpack.c.b16 %v2636, %v2635
        %v2656 = vpack.c.b16 %v2638, %v2637
        %v2657 = vpack.c.b16 %v2640, %v2639
        %v2658 = vpack.c.b16 %v2642, %v2641
        %v2667 = vunpack.c.l.b16 %v2603
        %v2668 = vunpack.c.l.b16 %v2604
        %v2669 = vunpack.c.l.b16 %v2605
        %v2670 = vunpack.c.l.b16 %v2606
        %v2671 = vunpack.c.l.b16 %v2607
        %v2672 = vunpack.c.l.b16 %v2608
        %v2673 = vunpack.c.l.b16 %v2609
        %v2674 = vunpack.c.l.b16 %v2610
        %v2675 = vpack.c.b16 %v2668, %v2667
        %v2676 = vpack.c.b16 %v2670, %v2669
        %v2677 = vpack.c.b16 %v2672, %v2671
        %v2678 = vpack.c.b16 %v2674, %v2673
        %v2684 = vsel %vm775, %v2643, 0
        %v2687 = vsel %vm775, %v2644, 0
        %v2690 = vsel %vm775, %v2645, 0
        %v2693 = vsel %vm775, %v2646, 0
        %v2696 = vsel %vm775, %v2647, 0
        %v2699 = vsel %vm775, %v2648, 0
        %v2702 = vsel %vm775, %v2649, 0
        %v2705 = vsel %vm775, %v2650, 0
        %v2708 = vsel %vm775, %v2651, 0
        %v2711 = vsel %vm775, %v2652, 0
        %v2714 = vsel %vm775, %v2653, 0
        %v2717 = vsel %vm775, %v2654, 0
        %v2720 = vsel %vm775, %v2655, 0
        %v2723 = vsel %vm775, %v2656, 0
        %v2726 = vsel %vm775, %v2657, 0
        %v2729 = vsel %vm775, %v2658, 0
        %2731 = vmatprep.subr.bf16.mxu0 0
        %2732 = vmatpush1.bf16.msra.mxu0 0
        %2733 = vmatprep.subr.bf16.mxu0 0
        %2734 = vmatpush1.bf16.msra.mxu0 0
        %2735 = vmatprep.subr.bf16.mxu0 0
        %2736 = vmatpush1.bf16.msra.mxu0 0
        %2737 = vmatprep.subr.bf16.mxu0 0
        %2738 = vmatpush1.bf16.msra.mxu0 0
        %2739 = vmatprep.subr.bf16.mxu0 0
        %2740 = vmatpush1.bf16.msra.mxu0 %v2678
        %2741 = vmatprep.subr.bf16.mxu0 0
        %2742 = vmatpush1.bf16.msra.mxu0 %v2677
        %2743 = vmatprep.subr.bf16.mxu0 0
        %2744 = vmatpush1.bf16.msra.mxu0 %v2676
        %2745 = vmatprep.subr.bf16.mxu0 0
        %2746 = vmatpush1.bf16.msra.mxu0 %v2675
        %2747 = vmatprep.subr.bf16.mxu0 0
        %2748 = vmatpush2.bf16.msra.mxu0 0
        %2749 = vmatprep.subr.bf16.mxu0 0
        %2750 = vmatpush2.bf16.msra.mxu0 0
        %2751 = vmatprep.subr.bf16.mxu0 0
        %2752 = vmatpush2.bf16.msra.mxu0 0
        %2753 = vmatprep.subr.bf16.mxu0 0
        %2754 = vmatpush2.bf16.msra.mxu0 0
        %2755 = vmatprep.subr.bf16.mxu0 0
        %2756 = vmatpush2.bf16.msra.mxu0 0
        %2757 = vmatprep.subr.bf16.mxu0 0
        %2758 = vmatpush2.bf16.msra.mxu0 0
        %2759 = vmatprep.subr.bf16.mxu0 0
        %2760 = vmatpush2.bf16.msra.mxu0 0
        %2761 = vmatprep.subr.bf16.mxu0 0
        %2762 = vmatpush2.bf16.msra.mxu0 0
        %2763 = vmatprep.mubr.bf16.mxu0 0
        %2764 = vmatmul.mubr.bf16.gmra.mxu0 %v2684
        %v2765 = vpop.f32.mrf.mxu0
        %v2766 = vadd.f32 0.0, %v2765
        %v2767 = vpop.f32.mrf.mxu0
        %v2768 = vpop.f32.mrf.mxu0
        %v2769 = vadd.f32 0.0, %v2768
        %v2770 = vpop.f32.mrf.mxu0
        %2771 = vmatprep.mubr.bf16.mxu0 0
        %2772 = vmatmul.mubr.bf16.gmra.mxu0 %v2687
        %v2773 = vpop.f32.mrf.mxu0
        %v2774 = vadd.f32 0.0, %v2773
        %v2775 = vpop.f32.mrf.mxu0
        %v2776 = vpop.f32.mrf.mxu0
        %v2777 = vadd.f32 0.0, %v2776
        %v2778 = vpop.f32.mrf.mxu0
        %2779 = vmatprep.mubr.bf16.mxu0 0
        %2780 = vmatmul.mubr.bf16.gmra.mxu0 %v2690
        %v2781 = vpop.f32.mrf.mxu0
        %v2782 = vadd.f32 0.0, %v2781
        %v2783 = vpop.f32.mrf.mxu0
        %v2784 = vpop.f32.mrf.mxu0
        %v2785 = vadd.f32 0.0, %v2784
        %v2786 = vpop.f32.mrf.mxu0
        %2787 = vmatprep.mubr.bf16.mxu0 0
        %2788 = vmatmul.mubr.bf16.gmra.mxu0 %v2693
        %v2789 = vpop.f32.mrf.mxu0
        %v2790 = vadd.f32 0.0, %v2789
        %v2791 = vpop.f32.mrf.mxu0
        %v2792 = vpop.f32.mrf.mxu0
        %v2793 = vadd.f32 0.0, %v2792
        %v2794 = vpop.f32.mrf.mxu0
        %2795 = vmatprep.mubr.bf16.mxu0 0
        %2796 = vmatmul.mubr.bf16.gmra.mxu0 %v2696
        %v2797 = vpop.f32.mrf.mxu0
        %v2798 = vadd.f32 0.0, %v2797
        %v2799 = vpop.f32.mrf.mxu0
        %v2800 = vpop.f32.mrf.mxu0
        %v2801 = vadd.f32 0.0, %v2800
        %v2802 = vpop.f32.mrf.mxu0
        %2803 = vmatprep.mubr.bf16.mxu0 0
        %2804 = vmatmul.mubr.bf16.gmra.mxu0 %v2699
        %v2805 = vpop.f32.mrf.mxu0
        %v2806 = vadd.f32 0.0, %v2805
        %v2807 = vpop.f32.mrf.mxu0
        %v2808 = vpop.f32.mrf.mxu0
        %v2809 = vadd.f32 0.0, %v2808
        %v2810 = vpop.f32.mrf.mxu0
        %2811 = vmatprep.mubr.bf16.mxu0 0
        %2812 = vmatmul.mubr.bf16.gmra.mxu0 %v2702
        %v2813 = vpop.f32.mrf.mxu0
        %v2814 = vadd.f32 0.0, %v2813
        %v2815 = vpop.f32.mrf.mxu0
        %v2816 = vpop.f32.mrf.mxu0
        %v2817 = vadd.f32 0.0, %v2816
        %v2818 = vpop.f32.mrf.mxu0
        %2819 = vmatprep.mubr.bf16.mxu0 0
        %2820 = vmatmul.mubr.bf16.gmra.mxu0 %v2705
        %v2821 = vpop.f32.mrf.mxu0
        %v2822 = vadd.f32 0.0, %v2821
        %v2823 = vpop.f32.mrf.mxu0
        %v2824 = vpop.f32.mrf.mxu0
        %v2825 = vadd.f32 0.0, %v2824
        %v2826 = vpop.f32.mrf.mxu0
        %2827 = vmatprep.mubr.bf16.mxu0 0
        %2828 = vmatmul.mubr.bf16.gmra.mxu0 %v2708
        %v2829 = vpop.f32.mrf.mxu0
        %v2830 = vadd.f32 0.0, %v2829
        %v2831 = vpop.f32.mrf.mxu0
        %v2832 = vpop.f32.mrf.mxu0
        %v2833 = vadd.f32 0.0, %v2832
        %v2834 = vpop.f32.mrf.mxu0
        %2835 = vmatprep.mubr.bf16.mxu0 0
        %2836 = vmatmul.mubr.bf16.gmra.mxu0 %v2711
        %v2837 = vpop.f32.mrf.mxu0
        %v2838 = vadd.f32 0.0, %v2837
        %v2839 = vpop.f32.mrf.mxu0
        %v2840 = vpop.f32.mrf.mxu0
        %v2841 = vadd.f32 0.0, %v2840
        %v2842 = vpop.f32.mrf.mxu0
        %2843 = vmatprep.mubr.bf16.mxu0 0
        %2844 = vmatmul.mubr.bf16.gmra.mxu0 %v2714
        %v2845 = vpop.f32.mrf.mxu0
        %v2846 = vadd.f32 0.0, %v2845
        %v2847 = vpop.f32.mrf.mxu0
        %v2848 = vpop.f32.mrf.mxu0
        %v2849 = vadd.f32 0.0, %v2848
        %v2850 = vpop.f32.mrf.mxu0
        %2851 = vmatprep.mubr.bf16.mxu0 0
        %2852 = vmatmul.mubr.bf16.gmra.mxu0 %v2717
        %v2853 = vpop.f32.mrf.mxu0
        %v2854 = vadd.f32 0.0, %v2853
        %v2855 = vpop.f32.mrf.mxu0
        %v2856 = vpop.f32.mrf.mxu0
        %v2857 = vadd.f32 0.0, %v2856
        %v2858 = vpop.f32.mrf.mxu0
        %2859 = vmatprep.mubr.bf16.mxu0 0
        %2860 = vmatmul.mubr.bf16.gmra.mxu0 %v2720
        %v2861 = vpop.f32.mrf.mxu0
        %v2862 = vadd.f32 0.0, %v2861
        %v2863 = vpop.f32.mrf.mxu0
        %v2864 = vpop.f32.mrf.mxu0
        %v2865 = vadd.f32 0.0, %v2864
        %v2866 = vpop.f32.mrf.mxu0
        %2867 = vmatprep.mubr.bf16.mxu0 0
        %2868 = vmatmul.mubr.bf16.gmra.mxu0 %v2723
        %v2869 = vpop.f32.mrf.mxu0
        %v2870 = vadd.f32 0.0, %v2869
        %v2871 = vpop.f32.mrf.mxu0
        %v2872 = vpop.f32.mrf.mxu0
        %v2873 = vadd.f32 0.0, %v2872
        %v2874 = vpop.f32.mrf.mxu0
        %2875 = vmatprep.mubr.bf16.mxu0 0
        %2876 = vmatmul.mubr.bf16.gmra.mxu0 %v2726
        %v2877 = vpop.f32.mrf.mxu0
        %v2878 = vadd.f32 0.0, %v2877
        %v2879 = vpop.f32.mrf.mxu0
        %v2880 = vpop.f32.mrf.mxu0
        %v2881 = vadd.f32 0.0, %v2880
        %v2882 = vpop.f32.mrf.mxu0
        %2883 = vmatprep.mubr.bf16.mxu0 0
        %2884 = vmatmul.mubr.bf16.gmra.mxu0 %v2729
        %v2885 = vpop.f32.mrf.mxu0
        %v2886 = vadd.f32 0.0, %v2885
        %v2887 = vpop.f32.mrf.mxu0
        %v2888 = vpop.f32.mrf.mxu0
        %v2889 = vadd.f32 0.0, %v2888
        %v2890 = vpop.f32.mrf.mxu0
        %2891 = vdwg.mxu0
        %v2892 = vadd.f32 %v2138, %v2766
        %v2893 = vadd.f32 %v2139, %v2769
        %v2894 = vadd.f32 %v2140, %v2774
        %v2895 = vadd.f32 %v2141, %v2777
        %v2896 = vadd.f32 %v2142, %v2782
        %v2897 = vadd.f32 %v2143, %v2785
        %v2898 = vadd.f32 %v2144, %v2790
        %v2899 = vadd.f32 %v2145, %v2793
        %v2900 = vadd.f32 %v2146, %v2798
        %v2901 = vadd.f32 %v2147, %v2801
        %v2902 = vadd.f32 %v2148, %v2806
        %v2903 = vadd.f32 %v2149, %v2809
        %v2904 = vadd.f32 %v2150, %v2814
        %v2905 = vadd.f32 %v2151, %v2817
        %v2906 = vadd.f32 %v2152, %v2822
        %v2907 = vadd.f32 %v2153, %v2825
        %v2908 = vadd.f32 %v2154, %v2830
        %v2909 = vadd.f32 %v2155, %v2833
        %v2910 = vadd.f32 %v2156, %v2838
        %v2911 = vadd.f32 %v2157, %v2841
        %v2912 = vadd.f32 %v2158, %v2846
        %v2913 = vadd.f32 %v2159, %v2849
        %v2914 = vadd.f32 %v2160, %v2854
        %v2915 = vadd.f32 %v2161, %v2857
        %v2916 = vadd.f32 %v2162, %v2862
        %v2917 = vadd.f32 %v2163, %v2865
        %v2918 = vadd.f32 %v2164, %v2870
        %v2919 = vadd.f32 %v2165, %v2873
        %v2920 = vadd.f32 %v2166, %v2878
        %v2921 = vadd.f32 %v2167, %v2881
        %v2922 = vadd.f32 %v2168, %v2886
        %v2923 = vadd.f32 %v2169, %v2889
        %v2924 = vld [vmem:[%s1783] sm:$0xe]
        %v2925 = vld [vmem:[%s1783 + $0xc] sm:$0xe]
        %v2926 = vld [vmem:[%s1783 + $0x18] sm:$0xe]
        %v2927 = vld [vmem:[%s1783 + $0x24] sm:$0xe]
        %v2928 = vld [vmem:[%s1783 + $0x30] sm:$0xe]
        %v2929 = vld [vmem:[%s1783 + $0x3c] sm:$0xe]
        %v2930 = vld [vmem:[%s1783 + $0x48] sm:$0xe]
        %v2931 = vld [vmem:[%s1783 + $0x54] sm:$0xe]
        %v2932 = vld [vmem:[%s1783 + $0x60] sm:$0xe]
        %v2933 = vld [vmem:[%s1783 + $0x6c] sm:$0xe]
        %v2934 = vld [vmem:[%s1783 + $0x78] sm:$0xe]
        %v2935 = vld [vmem:[%s1783 + $0x84] sm:$0xe]
        %v2936 = vld [vmem:[%s1783 + $0x90] sm:$0xe]
        %v2937 = vld [vmem:[%s1783 + $0x9c] sm:$0xe]
        %v2938 = vld [vmem:[%s1783 + $0xa8] sm:$0xe]
        %v2939 = vld [vmem:[%s1783 + $0xb4] sm:$0xe]
        %v2988 = vrot.slane %v2924, 5
        %v2989 = vrot.slane %v2988, 4
        %v2990 = vrot.slane %v2171, 5
        %v2991 = vsel %vm1348, %v2989, %v2990
        %v2992 = vrot.slane %v2990, 4
        %v2993 = vrot.slane %v2172, 5
        %v2994 = vsel %vm1348, %v2992, %v2993
        %v2995 = vrot.slane %v2925, 5
        %v2996 = vrot.slane %v2995, 4
        %v2997 = vrot.slane %v2174, 5
        %v2998 = vsel %vm1348, %v2996, %v2997
        %v2999 = vrot.slane %v2997, 4
        %v3000 = vrot.slane %v2175, 5
        %v3001 = vsel %vm1348, %v2999, %v3000
        %v3002 = vrot.slane %v2926, 5
        %v3003 = vrot.slane %v3002, 4
        %v3004 = vrot.slane %v2177, 5
        %v3005 = vsel %vm1348, %v3003, %v3004
        %v3006 = vrot.slane %v3004, 4
        %v3007 = vrot.slane %v2178, 5
        %v3008 = vsel %vm1348, %v3006, %v3007
        %v3009 = vrot.slane %v2927, 5
        %v3010 = vrot.slane %v3009, 4
        %v3011 = vrot.slane %v2180, 5
        %v3012 = vsel %vm1348, %v3010, %v3011
        %v3013 = vrot.slane %v3011, 4
        %v3014 = vrot.slane %v2181, 5
        %v3015 = vsel %vm1348, %v3013, %v3014
        %v3016 = vrot.slane %v2928, 5
        %v3017 = vrot.slane %v3016, 4
        %v3018 = vrot.slane %v2183, 5
        %v3019 = vsel %vm1348, %v3017, %v3018
        %v3020 = vrot.slane %v3018, 4
        %v3021 = vrot.slane %v2184, 5
        %v3022 = vsel %vm1348, %v3020, %v3021
        %v3023 = vrot.slane %v2929, 5
        %v3024 = vrot.slane %v3023, 4
        %v3025 = vrot.slane %v2186, 5
        %v3026 = vsel %vm1348, %v3024, %v3025
        %v3027 = vrot.slane %v3025, 4
        %v3028 = vrot.slane %v2187, 5
        %v3029 = vsel %vm1348, %v3027, %v3028
        %v3030 = vrot.slane %v2930, 5
        %v3031 = vrot.slane %v3030, 4
        %v3032 = vrot.slane %v2189, 5
        %v3033 = vsel %vm1348, %v3031, %v3032
        %v3034 = vrot.slane %v3032, 4
        %v3035 = vrot.slane %v2190, 5
        %v3036 = vsel %vm1348, %v3034, %v3035
        %v3037 = vrot.slane %v2931, 5
        %v3038 = vrot.slane %v3037, 4
        %v3039 = vrot.slane %v2192, 5
        %v3040 = vsel %vm1348, %v3038, %v3039
        %v3041 = vrot.slane %v3039, 4
        %v3042 = vrot.slane %v2193, 5
        %v3043 = vsel %vm1348, %v3041, %v3042
        %v3044 = vrot.slane %v2932, 5
        %v3045 = vrot.slane %v3044, 4
        %v3046 = vrot.slane %v2195, 5
        %v3047 = vsel %vm1348, %v3045, %v3046
        %v3048 = vrot.slane %v3046, 4
        %v3049 = vrot.slane %v2196, 5
        %v3050 = vsel %vm1348, %v3048, %v3049
        %v3051 = vrot.slane %v2933, 5
        %v3052 = vrot.slane %v3051, 4
        %v3053 = vrot.slane %v2198, 5
        %v3054 = vsel %vm1348, %v3052, %v3053
        %v3055 = vrot.slane %v3053, 4
        %v3056 = vrot.slane %v2199, 5
        %v3057 = vsel %vm1348, %v3055, %v3056
        %v3058 = vrot.slane %v2934, 5
        %v3059 = vrot.slane %v3058, 4
        %v3060 = vrot.slane %v2201, 5
        %v3061 = vsel %vm1348, %v3059, %v3060
        %v3062 = vrot.slane %v3060, 4
        %v3063 = vrot.slane %v2202, 5
        %v3064 = vsel %vm1348, %v3062, %v3063
        %v3065 = vrot.slane %v2935, 5
        %v3066 = vrot.slane %v3065, 4
        %v3067 = vrot.slane %v2204, 5
        %v3068 = vsel %vm1348, %v3066, %v3067
        %v3069 = vrot.slane %v3067, 4
        %v3070 = vrot.slane %v2205, 5
        %v3071 = vsel %vm1348, %v3069, %v3070
        %v3072 = vrot.slane %v2936, 5
        %v3073 = vrot.slane %v3072, 4
        %v3074 = vrot.slane %v2207, 5
        %v3075 = vsel %vm1348, %v3073, %v3074
        %v3076 = vrot.slane %v3074, 4
        %v3077 = vrot.slane %v2208, 5
        %v3078 = vsel %vm1348, %v3076, %v3077
        %v3079 = vrot.slane %v2937, 5
        %v3080 = vrot.slane %v3079, 4
        %v3081 = vrot.slane %v2210, 5
        %v3082 = vsel %vm1348, %v3080, %v3081
        %v3083 = vrot.slane %v3081, 4
        %v3084 = vrot.slane %v2211, 5
        %v3085 = vsel %vm1348, %v3083, %v3084
        %v3086 = vrot.slane %v2938, 5
        %v3087 = vrot.slane %v3086, 4
        %v3088 = vrot.slane %v2213, 5
        %v3089 = vsel %vm1348, %v3087, %v3088
        %v3090 = vrot.slane %v3088, 4
        %v3091 = vrot.slane %v2214, 5
        %v3092 = vsel %vm1348, %v3090, %v3091
        %v3093 = vrot.slane %v2939, 5
        %v3094 = vrot.slane %v3093, 4
        %v3095 = vrot.slane %v2216, 5
        %v3096 = vsel %vm1348, %v3094, %v3095
        %v3097 = vrot.slane %v3095, 4
        %v3098 = vrot.slane %v2217, 5
        %v3099 = vsel %vm1348, %v3097, %v3098
        %s3100 = scalar_lea.vmem %s1, 160
        %v3101 = vld [vmem:[%s3100] sm:$0xf]
        %v3102 = vld [vmem:[%s3100 + $0x4] sm:$0xf]
        %v3103 = vld [vmem:[%s3100 + $0x8] sm:$0xf]
        %v3104 = vld [vmem:[%s3100 + $0xc] sm:$0xf]
        %v3105 = vld [vmem:[%s3100 + $0x10] sm:$0xf]
        %v3106 = vld [vmem:[%s3100 + $0x14] sm:$0xf]
        %v3107 = vld [vmem:[%s3100 + $0x18] sm:$0xf]
        %v3108 = vld [vmem:[%s3100 + $0x1c] sm:$0xf]
        %v3109 = vunpack.c.l.b16 %v2991
        %v3110 = vunpack.c.l.b16 %v2994
        %v3111 = vunpack.c.l.b16 %v2998
        %v3112 = vunpack.c.l.b16 %v3001
        %v3113 = vunpack.c.l.b16 %v3005
        %v3114 = vunpack.c.l.b16 %v3008
        %v3115 = vunpack.c.l.b16 %v3012
        %v3116 = vunpack.c.l.b16 %v3015
        %v3117 = vunpack.c.l.b16 %v3019
        %v3118 = vunpack.c.l.b16 %v3022
        %v3119 = vunpack.c.l.b16 %v3026
        %v3120 = vunpack.c.l.b16 %v3029
        %v3121 = vunpack.c.l.b16 %v3033
        %v3122 = vunpack.c.l.b16 %v3036
        %v3123 = vunpack.c.l.b16 %v3040
        %v3124 = vunpack.c.l.b16 %v3043
        %v3125 = vunpack.c.l.b16 %v3047
        %v3126 = vunpack.c.l.b16 %v3050
        %v3127 = vunpack.c.l.b16 %v3054
        %v3128 = vunpack.c.l.b16 %v3057
        %v3129 = vunpack.c.l.b16 %v3061
        %v3130 = vunpack.c.l.b16 %v3064
        %v3131 = vunpack.c.l.b16 %v3068
        %v3132 = vunpack.c.l.b16 %v3071
        %v3133 = vunpack.c.l.b16 %v3075
        %v3134 = vunpack.c.l.b16 %v3078
        %v3135 = vunpack.c.l.b16 %v3082
        %v3136 = vunpack.c.l.b16 %v3085
        %v3137 = vunpack.c.l.b16 %v3089
        %v3138 = vunpack.c.l.b16 %v3092
        %v3139 = vunpack.c.l.b16 %v3096
        %v3140 = vunpack.c.l.b16 %v3099
        %v3141 = vpack.c.b16 %v3110, %v3109
        %v3142 = vpack.c.b16 %v3112, %v3111
        %v3143 = vpack.c.b16 %v3114, %v3113
        %v3144 = vpack.c.b16 %v3116, %v3115
        %v3145 = vpack.c.b16 %v3118, %v3117
        %v3146 = vpack.c.b16 %v3120, %v3119
        %v3147 = vpack.c.b16 %v3122, %v3121
        %v3148 = vpack.c.b16 %v3124, %v3123
        %v3149 = vpack.c.b16 %v3126, %v3125
        %v3150 = vpack.c.b16 %v3128, %v3127
        %v3151 = vpack.c.b16 %v3130, %v3129
        %v3152 = vpack.c.b16 %v3132, %v3131
        %v3153 = vpack.c.b16 %v3134, %v3133
        %v3154 = vpack.c.b16 %v3136, %v3135
        %v3155 = vpack.c.b16 %v3138, %v3137
        %v3156 = vpack.c.b16 %v3140, %v3139
        %v3165 = vunpack.c.l.b16 %v3101
        %v3166 = vunpack.c.l.b16 %v3102
        %v3167 = vunpack.c.l.b16 %v3103
        %v3168 = vunpack.c.l.b16 %v3104
        %v3169 = vunpack.c.l.b16 %v3105
        %v3170 = vunpack.c.l.b16 %v3106
        %v3171 = vunpack.c.l.b16 %v3107
        %v3172 = vunpack.c.l.b16 %v3108
        %v3173 = vpack.c.b16 %v3166, %v3165
        %v3174 = vpack.c.b16 %v3168, %v3167
        %v3175 = vpack.c.b16 %v3170, %v3169
        %v3176 = vpack.c.b16 %v3172, %v3171
        %v3182 = vsel %vm775, %v3141, 0
        %v3185 = vsel %vm775, %v3142, 0
        %v3188 = vsel %vm775, %v3143, 0
        %v3191 = vsel %vm775, %v3144, 0
        %v3194 = vsel %vm775, %v3145, 0
        %v3197 = vsel %vm775, %v3146, 0
        %v3200 = vsel %vm775, %v3147, 0
        %v3203 = vsel %vm775, %v3148, 0
        %v3206 = vsel %vm775, %v3149, 0
        %v3209 = vsel %vm775, %v3150, 0
        %v3212 = vsel %vm775, %v3151, 0
        %v3215 = vsel %vm775, %v3152, 0
        %v3218 = vsel %vm775, %v3153, 0
        %v3221 = vsel %vm775, %v3154, 0
        %v3224 = vsel %vm775, %v3155, 0
        %v3227 = vsel %vm775, %v3156, 0
        %3229 = vmatprep.subr.bf16.mxu0 0
        %3230 = vmatpush1.bf16.msra.mxu0 0
        %3231 = vmatprep.subr.bf16.mxu0 0
        %3232 = vmatpush1.bf16.msra.mxu0 0
        %3233 = vmatprep.subr.bf16.mxu0 0
        %3234 = vmatpush1.bf16.msra.mxu0 0
        %3235 = vmatprep.subr.bf16.mxu0 0
        %3236 = vmatpush1.bf16.msra.mxu0 0
        %3237 = vmatprep.subr.bf16.mxu0 0
        %3238 = vmatpush1.bf16.msra.mxu0 %v3176
        %3239 = vmatprep.subr.bf16.mxu0 0
        %3240 = vmatpush1.bf16.msra.mxu0 %v3175
        %3241 = vmatprep.subr.bf16.mxu0 0
        %3242 = vmatpush1.bf16.msra.mxu0 %v3174
        %3243 = vmatprep.subr.bf16.mxu0 0
        %3244 = vmatpush1.bf16.msra.mxu0 %v3173
        %3245 = vmatprep.subr.bf16.mxu0 0
        %3246 = vmatpush2.bf16.msra.mxu0 0
        %3247 = vmatprep.subr.bf16.mxu0 0
        %3248 = vmatpush2.bf16.msra.mxu0 0
        %3249 = vmatprep.subr.bf16.mxu0 0
        %3250 = vmatpush2.bf16.msra.mxu0 0
        %3251 = vmatprep.subr.bf16.mxu0 0
        %3252 = vmatpush2.bf16.msra.mxu0 0
        %3253 = vmatprep.subr.bf16.mxu0 0
        %3254 = vmatpush2.bf16.msra.mxu0 0
        %3255 = vmatprep.subr.bf16.mxu0 0
        %3256 = vmatpush2.bf16.msra.mxu0 0
        %3257 = vmatprep.subr.bf16.mxu0 0
        %3258 = vmatpush2.bf16.msra.mxu0 0
        %3259 = vmatprep.subr.bf16.mxu0 0
        %3260 = vmatpush2.bf16.msra.mxu0 0
        %3261 = vmatprep.mubr.bf16.mxu0 0
        %3262 = vmatmul.mubr.bf16.gmra.mxu0 %v3182
        %v3263 = vpop.f32.mrf.mxu0
        %v3264 = vadd.f32 0.0, %v3263
        %v3265 = vpop.f32.mrf.mxu0
        %v3266 = vpop.f32.mrf.mxu0
        %v3267 = vadd.f32 0.0, %v3266
        %v3268 = vpop.f32.mrf.mxu0
        %3269 = vmatprep.mubr.bf16.mxu0 0
        %3270 = vmatmul.mubr.bf16.gmra.mxu0 %v3185
        %v3271 = vpop.f32.mrf.mxu0
        %v3272 = vadd.f32 0.0, %v3271
        %v3273 = vpop.f32.mrf.mxu0
        %v3274 = vpop.f32.mrf.mxu0
        %v3275 = vadd.f32 0.0, %v3274
        %v3276 = vpop.f32.mrf.mxu0
        %3277 = vmatprep.mubr.bf16.mxu0 0
        %3278 = vmatmul.mubr.bf16.gmra.mxu0 %v3188
        %v3279 = vpop.f32.mrf.mxu0
        %v3280 = vadd.f32 0.0, %v3279
        %v3281 = vpop.f32.mrf.mxu0
        %v3282 = vpop.f32.mrf.mxu0
        %v3283 = vadd.f32 0.0, %v3282
        %v3284 = vpop.f32.mrf.mxu0
        %3285 = vmatprep.mubr.bf16.mxu0 0
        %3286 = vmatmul.mubr.bf16.gmra.mxu0 %v3191
        %v3287 = vpop.f32.mrf.mxu0
        %v3288 = vadd.f32 0.0, %v3287
        %v3289 = vpop.f32.mrf.mxu0
        %v3290 = vpop.f32.mrf.mxu0
        %v3291 = vadd.f32 0.0, %v3290
        %v3292 = vpop.f32.mrf.mxu0
        %3293 = vmatprep.mubr.bf16.mxu0 0
        %3294 = vmatmul.mubr.bf16.gmra.mxu0 %v3194
        %v3295 = vpop.f32.mrf.mxu0
        %v3296 = vadd.f32 0.0, %v3295
        %v3297 = vpop.f32.mrf.mxu0
        %v3298 = vpop.f32.mrf.mxu0
        %v3299 = vadd.f32 0.0, %v3298
        %v3300 = vpop.f32.mrf.mxu0
        %3301 = vmatprep.mubr.bf16.mxu0 0
        %3302 = vmatmul.mubr.bf16.gmra.mxu0 %v3197
        %v3303 = vpop.f32.mrf.mxu0
        %v3304 = vadd.f32 0.0, %v3303
        %v3305 = vpop.f32.mrf.mxu0
        %v3306 = vpop.f32.mrf.mxu0
        %v3307 = vadd.f32 0.0, %v3306
        %v3308 = vpop.f32.mrf.mxu0
        %3309 = vmatprep.mubr.bf16.mxu0 0
        %3310 = vmatmul.mubr.bf16.gmra.mxu0 %v3200
        %v3311 = vpop.f32.mrf.mxu0
        %v3312 = vadd.f32 0.0, %v3311
        %v3313 = vpop.f32.mrf.mxu0
        %v3314 = vpop.f32.mrf.mxu0
        %v3315 = vadd.f32 0.0, %v3314
        %v3316 = vpop.f32.mrf.mxu0
        %3317 = vmatprep.mubr.bf16.mxu0 0
        %3318 = vmatmul.mubr.bf16.gmra.mxu0 %v3203
        %v3319 = vpop.f32.mrf.mxu0
        %v3320 = vadd.f32 0.0, %v3319
        %v3321 = vpop.f32.mrf.mxu0
        %v3322 = vpop.f32.mrf.mxu0
        %v3323 = vadd.f32 0.0, %v3322
        %v3324 = vpop.f32.mrf.mxu0
        %3325 = vmatprep.mubr.bf16.mxu0 0
        %3326 = vmatmul.mubr.bf16.gmra.mxu0 %v3206
        %v3327 = vpop.f32.mrf.mxu0
        %v3328 = vadd.f32 0.0, %v3327
        %v3329 = vpop.f32.mrf.mxu0
        %v3330 = vpop.f32.mrf.mxu0
        %v3331 = vadd.f32 0.0, %v3330
        %v3332 = vpop.f32.mrf.mxu0
        %3333 = vmatprep.mubr.bf16.mxu0 0
        %3334 = vmatmul.mubr.bf16.gmra.mxu0 %v3209
        %v3335 = vpop.f32.mrf.mxu0
        %v3336 = vadd.f32 0.0, %v3335
        %v3337 = vpop.f32.mrf.mxu0
        %v3338 = vpop.f32.mrf.mxu0
        %v3339 = vadd.f32 0.0, %v3338
        %v3340 = vpop.f32.mrf.mxu0
        %3341 = vmatprep.mubr.bf16.mxu0 0
        %3342 = vmatmul.mubr.bf16.gmra.mxu0 %v3212
        %v3343 = vpop.f32.mrf.mxu0
        %v3344 = vadd.f32 0.0, %v3343
        %v3345 = vpop.f32.mrf.mxu0
        %v3346 = vpop.f32.mrf.mxu0
        %v3347 = vadd.f32 0.0, %v3346
        %v3348 = vpop.f32.mrf.mxu0
        %3349 = vmatprep.mubr.bf16.mxu0 0
        %3350 = vmatmul.mubr.bf16.gmra.mxu0 %v3215
        %v3351 = vpop.f32.mrf.mxu0
        %v3352 = vadd.f32 0.0, %v3351
        %v3353 = vpop.f32.mrf.mxu0
        %v3354 = vpop.f32.mrf.mxu0
        %v3355 = vadd.f32 0.0, %v3354
        %v3356 = vpop.f32.mrf.mxu0
        %3357 = vmatprep.mubr.bf16.mxu0 0
        %3358 = vmatmul.mubr.bf16.gmra.mxu0 %v3218
        %v3359 = vpop.f32.mrf.mxu0
        %v3360 = vadd.f32 0.0, %v3359
        %v3361 = vpop.f32.mrf.mxu0
        %v3362 = vpop.f32.mrf.mxu0
        %v3363 = vadd.f32 0.0, %v3362
        %v3364 = vpop.f32.mrf.mxu0
        %3365 = vmatprep.mubr.bf16.mxu0 0
        %3366 = vmatmul.mubr.bf16.gmra.mxu0 %v3221
        %v3367 = vpop.f32.mrf.mxu0
        %v3368 = vadd.f32 0.0, %v3367
        %v3369 = vpop.f32.mrf.mxu0
        %v3370 = vpop.f32.mrf.mxu0
        %v3371 = vadd.f32 0.0, %v3370
        %v3372 = vpop.f32.mrf.mxu0
        %3373 = vmatprep.mubr.bf16.mxu0 0
        %3374 = vmatmul.mubr.bf16.gmra.mxu0 %v3224
        %v3375 = vpop.f32.mrf.mxu0
        %v3376 = vadd.f32 0.0, %v3375
        %v3377 = vpop.f32.mrf.mxu0
        %v3378 = vpop.f32.mrf.mxu0
        %v3379 = vadd.f32 0.0, %v3378
        %v3380 = vpop.f32.mrf.mxu0
        %3381 = vmatprep.mubr.bf16.mxu0 0
        %3382 = vmatmul.mubr.bf16.gmra.mxu0 %v3227
        %v3383 = vpop.f32.mrf.mxu0
        %v3384 = vadd.f32 0.0, %v3383
        %v3385 = vpop.f32.mrf.mxu0
        %v3386 = vpop.f32.mrf.mxu0
        %v3387 = vadd.f32 0.0, %v3386
        %v3388 = vpop.f32.mrf.mxu0
        %3389 = vdwg.mxu0
        %v3390 = vadd.f32 %v2892, %v3264
        %v3391 = vadd.f32 %v2893, %v3267
        %v3392 = vadd.f32 %v2894, %v3272
        %v3393 = vadd.f32 %v2895, %v3275
        %v3394 = vadd.f32 %v2896, %v3280
        %v3395 = vadd.f32 %v2897, %v3283
        %v3396 = vadd.f32 %v2898, %v3288
        %v3397 = vadd.f32 %v2899, %v3291
        %v3398 = vadd.f32 %v2900, %v3296
        %v3399 = vadd.f32 %v2901, %v3299
        %v3400 = vadd.f32 %v2902, %v3304
        %v3401 = vadd.f32 %v2903, %v3307
        %v3402 = vadd.f32 %v2904, %v3312
        %v3403 = vadd.f32 %v2905, %v3315
        %v3404 = vadd.f32 %v2906, %v3320
        %v3405 = vadd.f32 %v2907, %v3323
        %v3406 = vadd.f32 %v2908, %v3328
        %v3407 = vadd.f32 %v2909, %v3331
        %v3408 = vadd.f32 %v2910, %v3336
        %v3409 = vadd.f32 %v2911, %v3339
        %v3410 = vadd.f32 %v2912, %v3344
        %v3411 = vadd.f32 %v2913, %v3347
        %v3412 = vadd.f32 %v2914, %v3352
        %v3413 = vadd.f32 %v2915, %v3355
        %v3414 = vadd.f32 %v2916, %v3360
        %v3415 = vadd.f32 %v2917, %v3363
        %v3416 = vadd.f32 %v2918, %v3368
        %v3417 = vadd.f32 %v2919, %v3371
        %v3418 = vadd.f32 %v2920, %v3376
        %v3419 = vadd.f32 %v2921, %v3379
        %v3420 = vadd.f32 %v2922, %v3384
        %v3421 = vadd.f32 %v2923, %v3387
        %s3422 = scalar_lea.vmem %s249, 24
        %v3423 = vld [vmem:[%s3422] sm:$0xf]
        %v3424 = vld [vmem:[%s3422 + $0x4] sm:$0xf]
        %v3425 = vld [vmem:[%s3422 + $0xc] sm:$0xf]
        %v3426 = vld [vmem:[%s3422 + $0x10] sm:$0xf]
        %v3427 = vld [vmem:[%s3422 + $0x18] sm:$0xf]
        %v3428 = vld [vmem:[%s3422 + $0x1c] sm:$0xf]
        %v3429 = vld [vmem:[%s3422 + $0x24] sm:$0xf]
        %v3430 = vld [vmem:[%s3422 + $0x28] sm:$0xf]
        %v3431 = vld [vmem:[%s3422 + $0x30] sm:$0xf]
        %v3432 = vld [vmem:[%s3422 + $0x34] sm:$0xf]
        %v3433 = vld [vmem:[%s3422 + $0x3c] sm:$0xf]
        %v3434 = vld [vmem:[%s3422 + $0x40] sm:$0xf]
        %v3435 = vld [vmem:[%s3422 + $0x48] sm:$0xf]
        %v3436 = vld [vmem:[%s3422 + $0x4c] sm:$0xf]
        %v3437 = vld [vmem:[%s3422 + $0x54] sm:$0xf]
        %v3438 = vld [vmem:[%s3422 + $0x58] sm:$0xf]
        %v3439 = vld [vmem:[%s3422 + $0x60] sm:$0xf]
        %v3440 = vld [vmem:[%s3422 + $0x64] sm:$0xf]
        %v3441 = vld [vmem:[%s3422 + $0x6c] sm:$0xf]
        %v3442 = vld [vmem:[%s3422 + $0x70] sm:$0xf]
        %v3443 = vld [vmem:[%s3422 + $0x78] sm:$0xf]
        %v3444 = vld [vmem:[%s3422 + $0x7c] sm:$0xf]
        %v3445 = vld [vmem:[%s3422 + $0x84] sm:$0xf]
        %v3446 = vld [vmem:[%s3422 + $0x88] sm:$0xf]
        %v3447 = vld [vmem:[%s3422 + $0x90] sm:$0xf]
        %v3448 = vld [vmem:[%s3422 + $0x94] sm:$0xf]
        %v3449 = vld [vmem:[%s3422 + $0x9c] sm:$0xf]
        %v3450 = vld [vmem:[%s3422 + $0xa0] sm:$0xf]
        %v3451 = vld [vmem:[%s3422 + $0xa8] sm:$0xf]
        %v3452 = vld [vmem:[%s3422 + $0xac] sm:$0xf]
        %v3453 = vld [vmem:[%s3422 + $0xb4] sm:$0xf]
        %v3454 = vld [vmem:[%s3422 + $0xb8] sm:$0xf]
        %s3455 = scalar_lea.vmem %s1, 192
        %v3456 = vld [vmem:[%s3455] sm:$0xf]
        %v3457 = vld [vmem:[%s3455 + $0x4] sm:$0xf]
        %v3458 = vld [vmem:[%s3455 + $0x8] sm:$0xf]
        %v3459 = vld [vmem:[%s3455 + $0xc] sm:$0xf]
        %v3460 = vld [vmem:[%s3455 + $0x10] sm:$0xf]
        %v3461 = vld [vmem:[%s3455 + $0x14] sm:$0xf]
        %v3462 = vld [vmem:[%s3455 + $0x18] sm:$0xf]
        %v3463 = vld [vmem:[%s3455 + $0x1c] sm:$0xf]
        %v3496 = vunpack.c.l.b16 %v3423
        %v3497 = vunpack.c.l.b16 %v3424
        %v3498 = vunpack.c.l.b16 %v3425
        %v3499 = vunpack.c.l.b16 %v3426
        %v3500 = vunpack.c.l.b16 %v3427
        %v3501 = vunpack.c.l.b16 %v3428
        %v3502 = vunpack.c.l.b16 %v3429
        %v3503 = vunpack.c.l.b16 %v3430
        %v3504 = vunpack.c.l.b16 %v3431
        %v3505 = vunpack.c.l.b16 %v3432
        %v3506 = vunpack.c.l.b16 %v3433
        %v3507 = vunpack.c.l.b16 %v3434
        %v3508 = vunpack.c.l.b16 %v3435
        %v3509 = vunpack.c.l.b16 %v3436
        %v3510 = vunpack.c.l.b16 %v3437
        %v3511 = vunpack.c.l.b16 %v3438
        %v3512 = vunpack.c.l.b16 %v3439
        %v3513 = vunpack.c.l.b16 %v3440
        %v3514 = vunpack.c.l.b16 %v3441
        %v3515 = vunpack.c.l.b16 %v3442
        %v3516 = vunpack.c.l.b16 %v3443
        %v3517 = vunpack.c.l.b16 %v3444
        %v3518 = vunpack.c.l.b16 %v3445
        %v3519 = vunpack.c.l.b16 %v3446
        %v3520 = vunpack.c.l.b16 %v3447
        %v3521 = vunpack.c.l.b16 %v3448
        %v3522 = vunpack.c.l.b16 %v3449
        %v3523 = vunpack.c.l.b16 %v3450
        %v3524 = vunpack.c.l.b16 %v3451
        %v3525 = vunpack.c.l.b16 %v3452
        %v3526 = vunpack.c.l.b16 %v3453
        %v3527 = vunpack.c.l.b16 %v3454
        %v3528 = vpack.c.b16 %v3497, %v3496
        %v3529 = vpack.c.b16 %v3499, %v3498
        %v3530 = vpack.c.b16 %v3501, %v3500
        %v3531 = vpack.c.b16 %v3503, %v3502
        %v3532 = vpack.c.b16 %v3505, %v3504
        %v3533 = vpack.c.b16 %v3507, %v3506
        %v3534 = vpack.c.b16 %v3509, %v3508
        %v3535 = vpack.c.b16 %v3511, %v3510
        %v3536 = vpack.c.b16 %v3513, %v3512
        %v3537 = vpack.c.b16 %v3515, %v3514
        %v3538 = vpack.c.b16 %v3517, %v3516
        %v3539 = vpack.c.b16 %v3519, %v3518
        %v3540 = vpack.c.b16 %v3521, %v3520
        %v3541 = vpack.c.b16 %v3523, %v3522
        %v3542 = vpack.c.b16 %v3525, %v3524
        %v3543 = vpack.c.b16 %v3527, %v3526
        %v3552 = vunpack.c.l.b16 %v3456
        %v3553 = vunpack.c.l.b16 %v3457
        %v3554 = vunpack.c.l.b16 %v3458
        %v3555 = vunpack.c.l.b16 %v3459
        %v3556 = vunpack.c.l.b16 %v3460
        %v3557 = vunpack.c.l.b16 %v3461
        %v3558 = vunpack.c.l.b16 %v3462
        %v3559 = vunpack.c.l.b16 %v3463
        %v3560 = vpack.c.b16 %v3553, %v3552
        %v3561 = vpack.c.b16 %v3555, %v3554
        %v3562 = vpack.c.b16 %v3557, %v3556
        %v3563 = vpack.c.b16 %v3559, %v3558
        %v3569 = vsel %vm775, %v3528, 0
        %v3572 = vsel %vm775, %v3529, 0
        %v3575 = vsel %vm775, %v3530, 0
        %v3578 = vsel %vm775, %v3531, 0
        %v3581 = vsel %vm775, %v3532, 0
        %v3584 = vsel %vm775, %v3533, 0
        %v3587 = vsel %vm775, %v3534, 0
        %v3590 = vsel %vm775, %v3535, 0
        %v3593 = vsel %vm775, %v3536, 0
        %v3596 = vsel %vm775, %v3537, 0
        %v3599 = vsel %vm775, %v3538, 0
        %v3602 = vsel %vm775, %v3539, 0
        %v3605 = vsel %vm775, %v3540, 0
        %v3608 = vsel %vm775, %v3541, 0
        %v3611 = vsel %vm775, %v3542, 0
        %v3614 = vsel %vm775, %v3543, 0
        %3616 = vmatprep.subr.bf16.mxu0 0
        %3617 = vmatpush1.bf16.msra.mxu0 0
        %3618 = vmatprep.subr.bf16.mxu0 0
        %3619 = vmatpush1.bf16.msra.mxu0 0
        %3620 = vmatprep.subr.bf16.mxu0 0
        %3621 = vmatpush1.bf16.msra.mxu0 0
        %3622 = vmatprep.subr.bf16.mxu0 0
        %3623 = vmatpush1.bf16.msra.mxu0 0
        %3624 = vmatprep.subr.bf16.mxu0 0
        %3625 = vmatpush1.bf16.msra.mxu0 %v3563
        %3626 = vmatprep.subr.bf16.mxu0 0
        %3627 = vmatpush1.bf16.msra.mxu0 %v3562
        %3628 = vmatprep.subr.bf16.mxu0 0
        %3629 = vmatpush1.bf16.msra.mxu0 %v3561
        %3630 = vmatprep.subr.bf16.mxu0 0
        %3631 = vmatpush1.bf16.msra.mxu0 %v3560
        %3632 = vmatprep.subr.bf16.mxu0 0
        %3633 = vmatpush2.bf16.msra.mxu0 0
        %3634 = vmatprep.subr.bf16.mxu0 0
        %3635 = vmatpush2.bf16.msra.mxu0 0
        %3636 = vmatprep.subr.bf16.mxu0 0
        %3637 = vmatpush2.bf16.msra.mxu0 0
        %3638 = vmatprep.subr.bf16.mxu0 0
        %3639 = vmatpush2.bf16.msra.mxu0 0
        %3640 = vmatprep.subr.bf16.mxu0 0
        %3641 = vmatpush2.bf16.msra.mxu0 0
        %3642 = vmatprep.subr.bf16.mxu0 0
        %3643 = vmatpush2.bf16.msra.mxu0 0
        %3644 = vmatprep.subr.bf16.mxu0 0
        %3645 = vmatpush2.bf16.msra.mxu0 0
        %3646 = vmatprep.subr.bf16.mxu0 0
        %3647 = vmatpush2.bf16.msra.mxu0 0
        %3648 = vmatprep.mubr.bf16.mxu0 0
        %3649 = vmatmul.mubr.bf16.gmra.mxu0 %v3569
        %v3650 = vpop.f32.mrf.mxu0
        %v3651 = vadd.f32 0.0, %v3650
        %v3652 = vpop.f32.mrf.mxu0
        %v3653 = vpop.f32.mrf.mxu0
        %v3654 = vadd.f32 0.0, %v3653
        %v3655 = vpop.f32.mrf.mxu0
        %3656 = vmatprep.mubr.bf16.mxu0 0
        %3657 = vmatmul.mubr.bf16.gmra.mxu0 %v3572
        %v3658 = vpop.f32.mrf.mxu0
        %v3659 = vadd.f32 0.0, %v3658
        %v3660 = vpop.f32.mrf.mxu0
        %v3661 = vpop.f32.mrf.mxu0
        %v3662 = vadd.f32 0.0, %v3661
        %v3663 = vpop.f32.mrf.mxu0
        %3664 = vmatprep.mubr.bf16.mxu0 0
        %3665 = vmatmul.mubr.bf16.gmra.mxu0 %v3575
        %v3666 = vpop.f32.mrf.mxu0
        %v3667 = vadd.f32 0.0, %v3666
        %v3668 = vpop.f32.mrf.mxu0
        %v3669 = vpop.f32.mrf.mxu0
        %v3670 = vadd.f32 0.0, %v3669
        %v3671 = vpop.f32.mrf.mxu0
        %3672 = vmatprep.mubr.bf16.mxu0 0
        %3673 = vmatmul.mubr.bf16.gmra.mxu0 %v3578
        %v3674 = vpop.f32.mrf.mxu0
        %v3675 = vadd.f32 0.0, %v3674
        %v3676 = vpop.f32.mrf.mxu0
        %v3677 = vpop.f32.mrf.mxu0
        %v3678 = vadd.f32 0.0, %v3677
        %v3679 = vpop.f32.mrf.mxu0
        %3680 = vmatprep.mubr.bf16.mxu0 0
        %3681 = vmatmul.mubr.bf16.gmra.mxu0 %v3581
        %v3682 = vpop.f32.mrf.mxu0
        %v3683 = vadd.f32 0.0, %v3682
        %v3684 = vpop.f32.mrf.mxu0
        %v3685 = vpop.f32.mrf.mxu0
        %v3686 = vadd.f32 0.0, %v3685
        %v3687 = vpop.f32.mrf.mxu0
        %3688 = vmatprep.mubr.bf16.mxu0 0
        %3689 = vmatmul.mubr.bf16.gmra.mxu0 %v3584
        %v3690 = vpop.f32.mrf.mxu0
        %v3691 = vadd.f32 0.0, %v3690
        %v3692 = vpop.f32.mrf.mxu0
        %v3693 = vpop.f32.mrf.mxu0
        %v3694 = vadd.f32 0.0, %v3693
        %v3695 = vpop.f32.mrf.mxu0
        %3696 = vmatprep.mubr.bf16.mxu0 0
        %3697 = vmatmul.mubr.bf16.gmra.mxu0 %v3587
        %v3698 = vpop.f32.mrf.mxu0
        %v3699 = vadd.f32 0.0, %v3698
        %v3700 = vpop.f32.mrf.mxu0
        %v3701 = vpop.f32.mrf.mxu0
        %v3702 = vadd.f32 0.0, %v3701
        %v3703 = vpop.f32.mrf.mxu0
        %3704 = vmatprep.mubr.bf16.mxu0 0
        %3705 = vmatmul.mubr.bf16.gmra.mxu0 %v3590
        %v3706 = vpop.f32.mrf.mxu0
        %v3707 = vadd.f32 0.0, %v3706
        %v3708 = vpop.f32.mrf.mxu0
        %v3709 = vpop.f32.mrf.mxu0
        %v3710 = vadd.f32 0.0, %v3709
        %v3711 = vpop.f32.mrf.mxu0
        %3712 = vmatprep.mubr.bf16.mxu0 0
        %3713 = vmatmul.mubr.bf16.gmra.mxu0 %v3593
        %v3714 = vpop.f32.mrf.mxu0
        %v3715 = vadd.f32 0.0, %v3714
        %v3716 = vpop.f32.mrf.mxu0
        %v3717 = vpop.f32.mrf.mxu0
        %v3718 = vadd.f32 0.0, %v3717
        %v3719 = vpop.f32.mrf.mxu0
        %3720 = vmatprep.mubr.bf16.mxu0 0
        %3721 = vmatmul.mubr.bf16.gmra.mxu0 %v3596
        %v3722 = vpop.f32.mrf.mxu0
        %v3723 = vadd.f32 0.0, %v3722
        %v3724 = vpop.f32.mrf.mxu0
        %v3725 = vpop.f32.mrf.mxu0
        %v3726 = vadd.f32 0.0, %v3725
        %v3727 = vpop.f32.mrf.mxu0
        %3728 = vmatprep.mubr.bf16.mxu0 0
        %3729 = vmatmul.mubr.bf16.gmra.mxu0 %v3599
        %v3730 = vpop.f32.mrf.mxu0
        %v3731 = vadd.f32 0.0, %v3730
        %v3732 = vpop.f32.mrf.mxu0
        %v3733 = vpop.f32.mrf.mxu0
        %v3734 = vadd.f32 0.0, %v3733
        %v3735 = vpop.f32.mrf.mxu0
        %3736 = vmatprep.mubr.bf16.mxu0 0
        %3737 = vmatmul.mubr.bf16.gmra.mxu0 %v3602
        %v3738 = vpop.f32.mrf.mxu0
        %v3739 = vadd.f32 0.0, %v3738
        %v3740 = vpop.f32.mrf.mxu0
        %v3741 = vpop.f32.mrf.mxu0
        %v3742 = vadd.f32 0.0, %v3741
        %v3743 = vpop.f32.mrf.mxu0
        %3744 = vmatprep.mubr.bf16.mxu0 0
        %3745 = vmatmul.mubr.bf16.gmra.mxu0 %v3605
        %v3746 = vpop.f32.mrf.mxu0
        %v3747 = vadd.f32 0.0, %v3746
        %v3748 = vpop.f32.mrf.mxu0
        %v3749 = vpop.f32.mrf.mxu0
        %v3750 = vadd.f32 0.0, %v3749
        %v3751 = vpop.f32.mrf.mxu0
        %3752 = vmatprep.mubr.bf16.mxu0 0
        %3753 = vmatmul.mubr.bf16.gmra.mxu0 %v3608
        %v3754 = vpop.f32.mrf.mxu0
        %v3755 = vadd.f32 0.0, %v3754
        %v3756 = vpop.f32.mrf.mxu0
        %v3757 = vpop.f32.mrf.mxu0
        %v3758 = vadd.f32 0.0, %v3757
        %v3759 = vpop.f32.mrf.mxu0
        %3760 = vmatprep.mubr.bf16.mxu0 0
        %3761 = vmatmul.mubr.bf16.gmra.mxu0 %v3611
        %v3762 = vpop.f32.mrf.mxu0
        %v3763 = vadd.f32 0.0, %v3762
        %v3764 = vpop.f32.mrf.mxu0
        %v3765 = vpop.f32.mrf.mxu0
        %v3766 = vadd.f32 0.0, %v3765
        %v3767 = vpop.f32.mrf.mxu0
        %3768 = vmatprep.mubr.bf16.mxu0 0
        %3769 = vmatmul.mubr.bf16.gmra.mxu0 %v3614
        %v3770 = vpop.f32.mrf.mxu0
        %v3771 = vadd.f32 0.0, %v3770
        %v3772 = vpop.f32.mrf.mxu0
        %v3773 = vpop.f32.mrf.mxu0
        %v3774 = vadd.f32 0.0, %v3773
        %v3775 = vpop.f32.mrf.mxu0
        %3776 = vdwg.mxu0
        %v3777 = vadd.f32 %v3390, %v3651
        %v3778 = vadd.f32 %v3391, %v3654
        %v3779 = vadd.f32 %v3392, %v3659
        %v3780 = vadd.f32 %v3393, %v3662
        %v3781 = vadd.f32 %v3394, %v3667
        %v3782 = vadd.f32 %v3395, %v3670
        %v3783 = vadd.f32 %v3396, %v3675
        %v3784 = vadd.f32 %v3397, %v3678
        %v3785 = vadd.f32 %v3398, %v3683
        %v3786 = vadd.f32 %v3399, %v3686
        %v3787 = vadd.f32 %v3400, %v3691
        %v3788 = vadd.f32 %v3401, %v3694
        %v3789 = vadd.f32 %v3402, %v3699
        %v3790 = vadd.f32 %v3403, %v3702
        %v3791 = vadd.f32 %v3404, %v3707
        %v3792 = vadd.f32 %v3405, %v3710
        %v3793 = vadd.f32 %v3406, %v3715
        %v3794 = vadd.f32 %v3407, %v3718
        %v3795 = vadd.f32 %v3408, %v3723
        %v3796 = vadd.f32 %v3409, %v3726
        %v3797 = vadd.f32 %v3410, %v3731
        %v3798 = vadd.f32 %v3411, %v3734
        %v3799 = vadd.f32 %v3412, %v3739
        %v3800 = vadd.f32 %v3413, %v3742
        %v3801 = vadd.f32 %v3414, %v3747
        %v3802 = vadd.f32 %v3415, %v3750
        %v3803 = vadd.f32 %v3416, %v3755
        %v3804 = vadd.f32 %v3417, %v3758
        %v3805 = vadd.f32 %v3418, %v3763
        %v3806 = vadd.f32 %v3419, %v3766
        %v3807 = vadd.f32 %v3420, %v3771
        %v3808 = vadd.f32 %v3421, %v3774
        %v3809 = vld [vmem:[%s3422] sm:$0xf]
        %v3810 = vld [vmem:[%s3422 + $0x4] sm:$0xf]
        %v3811 = vld [vmem:[%s3422 + $0x8] sm:$0x1]
        %v3812 = vld [vmem:[%s3422 + $0xc] sm:$0xf]
        %v3813 = vld [vmem:[%s3422 + $0x10] sm:$0xf]
        %v3814 = vld [vmem:[%s3422 + $0x14] sm:$0x1]
        %v3815 = vld [vmem:[%s3422 + $0x18] sm:$0xf]
        %v3816 = vld [vmem:[%s3422 + $0x1c] sm:$0xf]
        %v3817 = vld [vmem:[%s3422 + $0x20] sm:$0x1]
        %v3818 = vld [vmem:[%s3422 + $0x24] sm:$0xf]
        %v3819 = vld [vmem:[%s3422 + $0x28] sm:$0xf]
        %v3820 = vld [vmem:[%s3422 + $0x2c] sm:$0x1]
        %v3821 = vld [vmem:[%s3422 + $0x30] sm:$0xf]
        %v3822 = vld [vmem:[%s3422 + $0x34] sm:$0xf]
        %v3823 = vld [vmem:[%s3422 + $0x38] sm:$0x1]
        %v3824 = vld [vmem:[%s3422 + $0x3c] sm:$0xf]
        %v3825 = vld [vmem:[%s3422 + $0x40] sm:$0xf]
        %v3826 = vld [vmem:[%s3422 + $0x44] sm:$0x1]
        %v3827 = vld [vmem:[%s3422 + $0x48] sm:$0xf]
        %v3828 = vld [vmem:[%s3422 + $0x4c] sm:$0xf]
        %v3829 = vld [vmem:[%s3422 + $0x50] sm:$0x1]
        %v3830 = vld [vmem:[%s3422 + $0x54] sm:$0xf]
        %v3831 = vld [vmem:[%s3422 + $0x58] sm:$0xf]
        %v3832 = vld [vmem:[%s3422 + $0x5c] sm:$0x1]
        %v3833 = vld [vmem:[%s3422 + $0x60] sm:$0xf]
        %v3834 = vld [vmem:[%s3422 + $0x64] sm:$0xf]
        %v3835 = vld [vmem:[%s3422 + $0x68] sm:$0x1]
        %v3836 = vld [vmem:[%s3422 + $0x6c] sm:$0xf]
        %v3837 = vld [vmem:[%s3422 + $0x70] sm:$0xf]
        %v3838 = vld [vmem:[%s3422 + $0x74] sm:$0x1]
        %v3839 = vld [vmem:[%s3422 + $0x78] sm:$0xf]
        %v3840 = vld [vmem:[%s3422 + $0x7c] sm:$0xf]
        %v3841 = vld [vmem:[%s3422 + $0x80] sm:$0x1]
        %v3842 = vld [vmem:[%s3422 + $0x84] sm:$0xf]
        %v3843 = vld [vmem:[%s3422 + $0x88] sm:$0xf]
        %v3844 = vld [vmem:[%s3422 + $0x8c] sm:$0x1]
        %v3845 = vld [vmem:[%s3422 + $0x90] sm:$0xf]
        %v3846 = vld [vmem:[%s3422 + $0x94] sm:$0xf]
        %v3847 = vld [vmem:[%s3422 + $0x98] sm:$0x1]
        %v3848 = vld [vmem:[%s3422 + $0x9c] sm:$0xf]
        %v3849 = vld [vmem:[%s3422 + $0xa0] sm:$0xf]
        %v3850 = vld [vmem:[%s3422 + $0xa4] sm:$0x1]
        %v3851 = vld [vmem:[%s3422 + $0xa8] sm:$0xf]
        %v3852 = vld [vmem:[%s3422 + $0xac] sm:$0xf]
        %v3853 = vld [vmem:[%s3422 + $0xb0] sm:$0x1]
        %v3854 = vld [vmem:[%s3422 + $0xb4] sm:$0xf]
        %v3855 = vld [vmem:[%s3422 + $0xb8] sm:$0xf]
        %v3856 = vld [vmem:[%s3422 + $0xbc] sm:$0x1]
        %v3858 = vshrl.u32 %v3809, 16
        %v3860 = vrot.slane %v3858, 4
        %v3861 = vshll.u32 %v3809, 16
        %v3863 = vrot.slane %v3861, 5
        %v3864 = vor.u32 %v3860, %v3863
        %v3865 = vrot.slane %v3864, 4
        %v3867 = vshll.u32 %v3810, 16
        %v3869 = vrot.slane %v3867, 5
        %v3870 = vsel %vm309, %v3865, %v3869
        %v3871 = vshrl.u32 %v3810, 16
        %v3873 = vrot.slane %v3871, 4
        %v3874 = vor.u32 %v3873, %v3869
        %v3875 = vrot.slane %v3874, 4
        %v3877 = vshll.u32 %v3811, 16
        %v3879 = vrot.slane %v3877, 5
        %v3880 = vsel %vm309, %v3875, %v3879
        %v3882 = vshrl.u32 %v3812, 16
        %v3884 = vrot.slane %v3882, 4
        %v3885 = vshll.u32 %v3812, 16
        %v3887 = vrot.slane %v3885, 5
        %v3888 = vor.u32 %v3884, %v3887
        %v3889 = vrot.slane %v3888, 4
        %v3891 = vshll.u32 %v3813, 16
        %v3893 = vrot.slane %v3891, 5
        %v3894 = vsel %vm309, %v3889, %v3893
        %v3895 = vshrl.u32 %v3813, 16
        %v3897 = vrot.slane %v3895, 4
        %v3898 = vor.u32 %v3897, %v3893
        %v3899 = vrot.slane %v3898, 4
        %v3901 = vshll.u32 %v3814, 16
        %v3903 = vrot.slane %v3901, 5
        %v3904 = vsel %vm309, %v3899, %v3903
        %v3906 = vshrl.u32 %v3815, 16
        %v3908 = vrot.slane %v3906, 4
        %v3909 = vshll.u32 %v3815, 16
        %v3911 = vrot.slane %v3909, 5
        %v3912 = vor.u32 %v3908, %v3911
        %v3913 = vrot.slane %v3912, 4
        %v3915 = vshll.u32 %v3816, 16
        %v3917 = vrot.slane %v3915, 5
        %v3918 = vsel %vm309, %v3913, %v3917
        %v3919 = vshrl.u32 %v3816, 16
        %v3921 = vrot.slane %v3919, 4
        %v3922 = vor.u32 %v3921, %v3917
        %v3923 = vrot.slane %v3922, 4
        %v3925 = vshll.u32 %v3817, 16
        %v3927 = vrot.slane %v3925, 5
        %v3928 = vsel %vm309, %v3923, %v3927
        %v3930 = vshrl.u32 %v3818, 16
        %v3932 = vrot.slane %v3930, 4
        %v3933 = vshll.u32 %v3818, 16
        %v3935 = vrot.slane %v3933, 5
        %v3936 = vor.u32 %v3932, %v3935
        %v3937 = vrot.slane %v3936, 4
        %v3939 = vshll.u32 %v3819, 16
        %v3941 = vrot.slane %v3939, 5
        %v3942 = vsel %vm309, %v3937, %v3941
        %v3943 = vshrl.u32 %v3819, 16
        %v3945 = vrot.slane %v3943, 4
        %v3946 = vor.u32 %v3945, %v3941
        %v3947 = vrot.slane %v3946, 4
        %v3949 = vshll.u32 %v3820, 16
        %v3951 = vrot.slane %v3949, 5
        %v3952 = vsel %vm309, %v3947, %v3951
        %v3954 = vshrl.u32 %v3821, 16
        %v3956 = vrot.slane %v3954, 4
        %v3957 = vshll.u32 %v3821, 16
        %v3959 = vrot.slane %v3957, 5
        %v3960 = vor.u32 %v3956, %v3959
        %v3961 = vrot.slane %v3960, 4
        %v3963 = vshll.u32 %v3822, 16
        %v3965 = vrot.slane %v3963, 5
        %v3966 = vsel %vm309, %v3961, %v3965
        %v3967 = vshrl.u32 %v3822, 16
        %v3969 = vrot.slane %v3967, 4
        %v3970 = vor.u32 %v3969, %v3965
        %v3971 = vrot.slane %v3970, 4
        %v3973 = vshll.u32 %v3823, 16
        %v3975 = vrot.slane %v3973, 5
        %v3976 = vsel %vm309, %v3971, %v3975
        %v3978 = vshrl.u32 %v3824, 16
        %v3980 = vrot.slane %v3978, 4
        %v3981 = vshll.u32 %v3824, 16
        %v3983 = vrot.slane %v3981, 5
        %v3984 = vor.u32 %v3980, %v3983
        %v3985 = vrot.slane %v3984, 4
        %v3987 = vshll.u32 %v3825, 16
        %v3989 = vrot.slane %v3987, 5
        %v3990 = vsel %vm309, %v3985, %v3989
        %v3991 = vshrl.u32 %v3825, 16
        %v3993 = vrot.slane %v3991, 4
        %v3994 = vor.u32 %v3993, %v3989
        %v3995 = vrot.slane %v3994, 4
        %v3997 = vshll.u32 %v3826, 16
        %v3999 = vrot.slane %v3997, 5
        %v4000 = vsel %vm309, %v3995, %v3999
        %v4002 = vshrl.u32 %v3827, 16
        %v4004 = vrot.slane %v4002, 4
        %v4005 = vshll.u32 %v3827, 16
        %v4007 = vrot.slane %v4005, 5
        %v4008 = vor.u32 %v4004, %v4007
        %v4009 = vrot.slane %v4008, 4
        %v4011 = vshll.u32 %v3828, 16
        %v4013 = vrot.slane %v4011, 5
        %v4014 = vsel %vm309, %v4009, %v4013
        %v4015 = vshrl.u32 %v3828, 16
        %v4017 = vrot.slane %v4015, 4
        %v4018 = vor.u32 %v4017, %v4013
        %v4019 = vrot.slane %v4018, 4
        %v4021 = vshll.u32 %v3829, 16
        %v4023 = vrot.slane %v4021, 5
        %v4024 = vsel %vm309, %v4019, %v4023
        %v4026 = vshrl.u32 %v3830, 16
        %v4028 = vrot.slane %v4026, 4
        %v4029 = vshll.u32 %v3830, 16
        %v4031 = vrot.slane %v4029, 5
        %v4032 = vor.u32 %v4028, %v4031
        %v4033 = vrot.slane %v4032, 4
        %v4035 = vshll.u32 %v3831, 16
        %v4037 = vrot.slane %v4035, 5
        %v4038 = vsel %vm309, %v4033, %v4037
        %v4039 = vshrl.u32 %v3831, 16
        %v4041 = vrot.slane %v4039, 4
        %v4042 = vor.u32 %v4041, %v4037
        %v4043 = vrot.slane %v4042, 4
        %v4045 = vshll.u32 %v3832, 16
        %v4047 = vrot.slane %v4045, 5
        %v4048 = vsel %vm309, %v4043, %v4047
        %v4050 = vshrl.u32 %v3833, 16
        %v4052 = vrot.slane %v4050, 4
        %v4053 = vshll.u32 %v3833, 16
        %v4055 = vrot.slane %v4053, 5
        %v4056 = vor.u32 %v4052, %v4055
        %v4057 = vrot.slane %v4056, 4
        %v4059 = vshll.u32 %v3834, 16
        %v4061 = vrot.slane %v4059, 5
        %v4062 = vsel %vm309, %v4057, %v4061
        %v4063 = vshrl.u32 %v3834, 16
        %v4065 = vrot.slane %v4063, 4
        %v4066 = vor.u32 %v4065, %v4061
        %v4067 = vrot.slane %v4066, 4
        %v4069 = vshll.u32 %v3835, 16
        %v4071 = vrot.slane %v4069, 5
        %v4072 = vsel %vm309, %v4067, %v4071
        %v4074 = vshrl.u32 %v3836, 16
        %v4076 = vrot.slane %v4074, 4
        %v4077 = vshll.u32 %v3836, 16
        %v4079 = vrot.slane %v4077, 5
        %v4080 = vor.u32 %v4076, %v4079
        %v4081 = vrot.slane %v4080, 4
        %v4083 = vshll.u32 %v3837, 16
        %v4085 = vrot.slane %v4083, 5
        %v4086 = vsel %vm309, %v4081, %v4085
        %v4087 = vshrl.u32 %v3837, 16
        %v4089 = vrot.slane %v4087, 4
        %v4090 = vor.u32 %v4089, %v4085
        %v4091 = vrot.slane %v4090, 4
        %v4093 = vshll.u32 %v3838, 16
        %v4095 = vrot.slane %v4093, 5
        %v4096 = vsel %vm309, %v4091, %v4095
        %v4098 = vshrl.u32 %v3839, 16
        %v4100 = vrot.slane %v4098, 4
        %v4101 = vshll.u32 %v3839, 16
        %v4103 = vrot.slane %v4101, 5
        %v4104 = vor.u32 %v4100, %v4103
        %v4105 = vrot.slane %v4104, 4
        %v4107 = vshll.u32 %v3840, 16
        %v4109 = vrot.slane %v4107, 5
        %v4110 = vsel %vm309, %v4105, %v4109
        %v4111 = vshrl.u32 %v3840, 16
        %v4113 = vrot.slane %v4111, 4
        %v4114 = vor.u32 %v4113, %v4109
        %v4115 = vrot.slane %v4114, 4
        %v4117 = vshll.u32 %v3841, 16
        %v4119 = vrot.slane %v4117, 5
        %v4120 = vsel %vm309, %v4115, %v4119
        %v4122 = vshrl.u32 %v3842, 16
        %v4124 = vrot.slane %v4122, 4
        %v4125 = vshll.u32 %v3842, 16
        %v4127 = vrot.slane %v4125, 5
        %v4128 = vor.u32 %v4124, %v4127
        %v4129 = vrot.slane %v4128, 4
        %v4131 = vshll.u32 %v3843, 16
        %v4133 = vrot.slane %v4131, 5
        %v4134 = vsel %vm309, %v4129, %v4133
        %v4135 = vshrl.u32 %v3843, 16
        %v4137 = vrot.slane %v4135, 4
        %v4138 = vor.u32 %v4137, %v4133
        %v4139 = vrot.slane %v4138, 4
        %v4141 = vshll.u32 %v3844, 16
        %v4143 = vrot.slane %v4141, 5
        %v4144 = vsel %vm309, %v4139, %v4143
        %v4146 = vshrl.u32 %v3845, 16
        %v4148 = vrot.slane %v4146, 4
        %v4149 = vshll.u32 %v3845, 16
        %v4151 = vrot.slane %v4149, 5
        %v4152 = vor.u32 %v4148, %v4151
        %v4153 = vrot.slane %v4152, 4
        %v4155 = vshll.u32 %v3846, 16
        %v4157 = vrot.slane %v4155, 5
        %v4158 = vsel %vm309, %v4153, %v4157
        %v4159 = vshrl.u32 %v3846, 16
        %v4161 = vrot.slane %v4159, 4
        %v4162 = vor.u32 %v4161, %v4157
        %v4163 = vrot.slane %v4162, 4
        %v4165 = vshll.u32 %v3847, 16
        %v4167 = vrot.slane %v4165, 5
        %v4168 = vsel %vm309, %v4163, %v4167
        %v4170 = vshrl.u32 %v3848, 16
        %v4172 = vrot.slane %v4170, 4
        %v4173 = vshll.u32 %v3848, 16
        %v4175 = vrot.slane %v4173, 5
        %v4176 = vor.u32 %v4172, %v4175
        %v4177 = vrot.slane %v4176, 4
        %v4179 = vshll.u32 %v3849, 16
        %v4181 = vrot.slane %v4179, 5
        %v4182 = vsel %vm309, %v4177, %v4181
        %v4183 = vshrl.u32 %v3849, 16
        %v4185 = vrot.slane %v4183, 4
        %v4186 = vor.u32 %v4185, %v4181
        %v4187 = vrot.slane %v4186, 4
        %v4189 = vshll.u32 %v3850, 16
        %v4191 = vrot.slane %v4189, 5
        %v4192 = vsel %vm309, %v4187, %v4191
        %v4194 = vshrl.u32 %v3851, 16
        %v4196 = vrot.slane %v4194, 4
        %v4197 = vshll.u32 %v3851, 16
        %v4199 = vrot.slane %v4197, 5
        %v4200 = vor.u32 %v4196, %v4199
        %v4201 = vrot.slane %v4200, 4
        %v4203 = vshll.u32 %v3852, 16
        %v4205 = vrot.slane %v4203, 5
        %v4206 = vsel %vm309, %v4201, %v4205
        %v4207 = vshrl.u32 %v3852, 16
        %v4209 = vrot.slane %v4207, 4
        %v4210 = vor.u32 %v4209, %v4205
        %v4211 = vrot.slane %v4210, 4
        %v4213 = vshll.u32 %v3853, 16
        %v4215 = vrot.slane %v4213, 5
        %v4216 = vsel %vm309, %v4211, %v4215
        %v4218 = vshrl.u32 %v3854, 16
        %v4220 = vrot.slane %v4218, 4
        %v4221 = vshll.u32 %v3854, 16
        %v4223 = vrot.slane %v4221, 5
        %v4224 = vor.u32 %v4220, %v4223
        %v4225 = vrot.slane %v4224, 4
        %v4227 = vshll.u32 %v3855, 16
        %v4229 = vrot.slane %v4227, 5
        %v4230 = vsel %vm309, %v4225, %v4229
        %v4231 = vshrl.u32 %v3855, 16
        %v4233 = vrot.slane %v4231, 4
        %v4234 = vor.u32 %v4233, %v4229
        %v4235 = vrot.slane %v4234, 4
        %v4237 = vshll.u32 %v3856, 16
        %v4239 = vrot.slane %v4237, 5
        %v4240 = vsel %vm309, %v4235, %v4239
        %s4241 = scalar_lea.vmem %s1, 224
        %v4242 = vld [vmem:[%s4241] sm:$0xf]
        %v4243 = vld [vmem:[%s4241 + $0x4] sm:$0xf]
        %v4244 = vld [vmem:[%s4241 + $0x8] sm:$0xf]
        %v4245 = vld [vmem:[%s4241 + $0xc] sm:$0xf]
        %v4246 = vld [vmem:[%s4241 + $0x10] sm:$0xf]
        %v4247 = vld [vmem:[%s4241 + $0x14] sm:$0xf]
        %v4248 = vld [vmem:[%s4241 + $0x18] sm:$0xf]
        %v4249 = vld [vmem:[%s4241 + $0x1c] sm:$0xf]
        %v4250 = vunpack.c.l.b16 %v3870
        %v4251 = vunpack.c.l.b16 %v3880
        %v4252 = vunpack.c.l.b16 %v3894
        %v4253 = vunpack.c.l.b16 %v3904
        %v4254 = vunpack.c.l.b16 %v3918
        %v4255 = vunpack.c.l.b16 %v3928
        %v4256 = vunpack.c.l.b16 %v3942
        %v4257 = vunpack.c.l.b16 %v3952
        %v4258 = vunpack.c.l.b16 %v3966
        %v4259 = vunpack.c.l.b16 %v3976
        %v4260 = vunpack.c.l.b16 %v3990
        %v4261 = vunpack.c.l.b16 %v4000
        %v4262 = vunpack.c.l.b16 %v4014
        %v4263 = vunpack.c.l.b16 %v4024
        %v4264 = vunpack.c.l.b16 %v4038
        %v4265 = vunpack.c.l.b16 %v4048
        %v4266 = vunpack.c.l.b16 %v4062
        %v4267 = vunpack.c.l.b16 %v4072
        %v4268 = vunpack.c.l.b16 %v4086
        %v4269 = vunpack.c.l.b16 %v4096
        %v4270 = vunpack.c.l.b16 %v4110
        %v4271 = vunpack.c.l.b16 %v4120
        %v4272 = vunpack.c.l.b16 %v4134
        %v4273 = vunpack.c.l.b16 %v4144
        %v4274 = vunpack.c.l.b16 %v4158
        %v4275 = vunpack.c.l.b16 %v4168
        %v4276 = vunpack.c.l.b16 %v4182
        %v4277 = vunpack.c.l.b16 %v4192
        %v4278 = vunpack.c.l.b16 %v4206
        %v4279 = vunpack.c.l.b16 %v4216
        %v4280 = vunpack.c.l.b16 %v4230
        %v4281 = vunpack.c.l.b16 %v4240
        %v4282 = vpack.c.b16 %v4251, %v4250
        %v4283 = vpack.c.b16 %v4253, %v4252
        %v4284 = vpack.c.b16 %v4255, %v4254
        %v4285 = vpack.c.b16 %v4257, %v4256
        %v4286 = vpack.c.b16 %v4259, %v4258
        %v4287 = vpack.c.b16 %v4261, %v4260
        %v4288 = vpack.c.b16 %v4263, %v4262
        %v4289 = vpack.c.b16 %v4265, %v4264
        %v4290 = vpack.c.b16 %v4267, %v4266
        %v4291 = vpack.c.b16 %v4269, %v4268
        %v4292 = vpack.c.b16 %v4271, %v4270
        %v4293 = vpack.c.b16 %v4273, %v4272
        %v4294 = vpack.c.b16 %v4275, %v4274
        %v4295 = vpack.c.b16 %v4277, %v4276
        %v4296 = vpack.c.b16 %v4279, %v4278
        %v4297 = vpack.c.b16 %v4281, %v4280
        %v4306 = vunpack.c.l.b16 %v4242
        %v4307 = vunpack.c.l.b16 %v4243
        %v4308 = vunpack.c.l.b16 %v4244
        %v4309 = vunpack.c.l.b16 %v4245
        %v4310 = vunpack.c.l.b16 %v4246
        %v4311 = vunpack.c.l.b16 %v4247
        %v4312 = vunpack.c.l.b16 %v4248
        %v4313 = vunpack.c.l.b16 %v4249
        %v4314 = vpack.c.b16 %v4307, %v4306
        %v4315 = vpack.c.b16 %v4309, %v4308
        %v4316 = vpack.c.b16 %v4311, %v4310
        %v4317 = vpack.c.b16 %v4313, %v4312
        %v4323 = vsel %vm775, %v4282, 0
        %v4326 = vsel %vm775, %v4283, 0
        %v4329 = vsel %vm775, %v4284, 0
        %v4332 = vsel %vm775, %v4285, 0
        %v4335 = vsel %vm775, %v4286, 0
        %v4338 = vsel %vm775, %v4287, 0
        %v4341 = vsel %vm775, %v4288, 0
        %v4344 = vsel %vm775, %v4289, 0
        %v4347 = vsel %vm775, %v4290, 0
        %v4350 = vsel %vm775, %v4291, 0
        %v4353 = vsel %vm775, %v4292, 0
        %v4356 = vsel %vm775, %v4293, 0
        %v4359 = vsel %vm775, %v4294, 0
        %v4362 = vsel %vm775, %v4295, 0
        %v4365 = vsel %vm775, %v4296, 0
        %v4368 = vsel %vm775, %v4297, 0
        %4370 = vmatprep.subr.bf16.mxu0 0
        %4371 = vmatpush1.bf16.msra.mxu0 0
        %4372 = vmatprep.subr.bf16.mxu0 0
        %4373 = vmatpush1.bf16.msra.mxu0 0
        %4374 = vmatprep.subr.bf16.mxu0 0
        %4375 = vmatpush1.bf16.msra.mxu0 0
        %4376 = vmatprep.subr.bf16.mxu0 0
        %4377 = vmatpush1.bf16.msra.mxu0 0
        %4378 = vmatprep.subr.bf16.mxu0 0
        %4379 = vmatpush1.bf16.msra.mxu0 %v4317
        %4380 = vmatprep.subr.bf16.mxu0 0
        %4381 = vmatpush1.bf16.msra.mxu0 %v4316
        %4382 = vmatprep.subr.bf16.mxu0 0
        %4383 = vmatpush1.bf16.msra.mxu0 %v4315
        %4384 = vmatprep.subr.bf16.mxu0 0
        %4385 = vmatpush1.bf16.msra.mxu0 %v4314
        %4386 = vmatprep.subr.bf16.mxu0 0
        %4387 = vmatpush2.bf16.msra.mxu0 0
        %4388 = vmatprep.subr.bf16.mxu0 0
        %4389 = vmatpush2.bf16.msra.mxu0 0
        %4390 = vmatprep.subr.bf16.mxu0 0
        %4391 = vmatpush2.bf16.msra.mxu0 0
        %4392 = vmatprep.subr.bf16.mxu0 0
        %4393 = vmatpush2.bf16.msra.mxu0 0
        %4394 = vmatprep.subr.bf16.mxu0 0
        %4395 = vmatpush2.bf16.msra.mxu0 0
        %4396 = vmatprep.subr.bf16.mxu0 0
        %4397 = vmatpush2.bf16.msra.mxu0 0
        %4398 = vmatprep.subr.bf16.mxu0 0
        %4399 = vmatpush2.bf16.msra.mxu0 0
        %4400 = vmatprep.subr.bf16.mxu0 0
        %4401 = vmatpush2.bf16.msra.mxu0 0
        %4402 = vmatprep.mubr.bf16.mxu0 0
        %4403 = vmatmul.mubr.bf16.gmra.mxu0 %v4323
        %v4404 = vpop.f32.mrf.mxu0
        %v4405 = vadd.f32 0.0, %v4404
        %v4406 = vpop.f32.mrf.mxu0
        %v4407 = vpop.f32.mrf.mxu0
        %v4408 = vadd.f32 0.0, %v4407
        %v4409 = vpop.f32.mrf.mxu0
        %4410 = vmatprep.mubr.bf16.mxu0 0
        %4411 = vmatmul.mubr.bf16.gmra.mxu0 %v4326
        %v4412 = vpop.f32.mrf.mxu0
        %v4413 = vadd.f32 0.0, %v4412
        %v4414 = vpop.f32.mrf.mxu0
        %v4415 = vpop.f32.mrf.mxu0
        %v4416 = vadd.f32 0.0, %v4415
        %v4417 = vpop.f32.mrf.mxu0
        %4418 = vmatprep.mubr.bf16.mxu0 0
        %4419 = vmatmul.mubr.bf16.gmra.mxu0 %v4329
        %v4420 = vpop.f32.mrf.mxu0
        %v4421 = vadd.f32 0.0, %v4420
        %v4422 = vpop.f32.mrf.mxu0
        %v4423 = vpop.f32.mrf.mxu0
        %v4424 = vadd.f32 0.0, %v4423
        %v4425 = vpop.f32.mrf.mxu0
        %4426 = vmatprep.mubr.bf16.mxu0 0
        %4427 = vmatmul.mubr.bf16.gmra.mxu0 %v4332
        %v4428 = vpop.f32.mrf.mxu0
        %v4429 = vadd.f32 0.0, %v4428
        %v4430 = vpop.f32.mrf.mxu0
        %v4431 = vpop.f32.mrf.mxu0
        %v4432 = vadd.f32 0.0, %v4431
        %v4433 = vpop.f32.mrf.mxu0
        %4434 = vmatprep.mubr.bf16.mxu0 0
        %4435 = vmatmul.mubr.bf16.gmra.mxu0 %v4335
        %v4436 = vpop.f32.mrf.mxu0
        %v4437 = vadd.f32 0.0, %v4436
        %v4438 = vpop.f32.mrf.mxu0
        %v4439 = vpop.f32.mrf.mxu0
        %v4440 = vadd.f32 0.0, %v4439
        %v4441 = vpop.f32.mrf.mxu0
        %4442 = vmatprep.mubr.bf16.mxu0 0
        %4443 = vmatmul.mubr.bf16.gmra.mxu0 %v4338
        %v4444 = vpop.f32.mrf.mxu0
        %v4445 = vadd.f32 0.0, %v4444
        %v4446 = vpop.f32.mrf.mxu0
        %v4447 = vpop.f32.mrf.mxu0
        %v4448 = vadd.f32 0.0, %v4447
        %v4449 = vpop.f32.mrf.mxu0
        %4450 = vmatprep.mubr.bf16.mxu0 0
        %4451 = vmatmul.mubr.bf16.gmra.mxu0 %v4341
        %v4452 = vpop.f32.mrf.mxu0
        %v4453 = vadd.f32 0.0, %v4452
        %v4454 = vpop.f32.mrf.mxu0
        %v4455 = vpop.f32.mrf.mxu0
        %v4456 = vadd.f32 0.0, %v4455
        %v4457 = vpop.f32.mrf.mxu0
        %4458 = vmatprep.mubr.bf16.mxu0 0
        %4459 = vmatmul.mubr.bf16.gmra.mxu0 %v4344
        %v4460 = vpop.f32.mrf.mxu0
        %v4461 = vadd.f32 0.0, %v4460
        %v4462 = vpop.f32.mrf.mxu0
        %v4463 = vpop.f32.mrf.mxu0
        %v4464 = vadd.f32 0.0, %v4463
        %v4465 = vpop.f32.mrf.mxu0
        %4466 = vmatprep.mubr.bf16.mxu0 0
        %4467 = vmatmul.mubr.bf16.gmra.mxu0 %v4347
        %v4468 = vpop.f32.mrf.mxu0
        %v4469 = vadd.f32 0.0, %v4468
        %v4470 = vpop.f32.mrf.mxu0
        %v4471 = vpop.f32.mrf.mxu0
        %v4472 = vadd.f32 0.0, %v4471
        %v4473 = vpop.f32.mrf.mxu0
        %4474 = vmatprep.mubr.bf16.mxu0 0
        %4475 = vmatmul.mubr.bf16.gmra.mxu0 %v4350
        %v4476 = vpop.f32.mrf.mxu0
        %v4477 = vadd.f32 0.0, %v4476
        %v4478 = vpop.f32.mrf.mxu0
        %v4479 = vpop.f32.mrf.mxu0
        %v4480 = vadd.f32 0.0, %v4479
        %v4481 = vpop.f32.mrf.mxu0
        %4482 = vmatprep.mubr.bf16.mxu0 0
        %4483 = vmatmul.mubr.bf16.gmra.mxu0 %v4353
        %v4484 = vpop.f32.mrf.mxu0
        %v4485 = vadd.f32 0.0, %v4484
        %v4486 = vpop.f32.mrf.mxu0
        %v4487 = vpop.f32.mrf.mxu0
        %v4488 = vadd.f32 0.0, %v4487
        %v4489 = vpop.f32.mrf.mxu0
        %4490 = vmatprep.mubr.bf16.mxu0 0
        %4491 = vmatmul.mubr.bf16.gmra.mxu0 %v4356
        %v4492 = vpop.f32.mrf.mxu0
        %v4493 = vadd.f32 0.0, %v4492
        %v4494 = vpop.f32.mrf.mxu0
        %v4495 = vpop.f32.mrf.mxu0
        %v4496 = vadd.f32 0.0, %v4495
        %v4497 = vpop.f32.mrf.mxu0
        %4498 = vmatprep.mubr.bf16.mxu0 0
        %4499 = vmatmul.mubr.bf16.gmra.mxu0 %v4359
        %v4500 = vpop.f32.mrf.mxu0
        %v4501 = vadd.f32 0.0, %v4500
        %v4502 = vpop.f32.mrf.mxu0
        %v4503 = vpop.f32.mrf.mxu0
        %v4504 = vadd.f32 0.0, %v4503
        %v4505 = vpop.f32.mrf.mxu0
        %4506 = vmatprep.mubr.bf16.mxu0 0
        %4507 = vmatmul.mubr.bf16.gmra.mxu0 %v4362
        %v4508 = vpop.f32.mrf.mxu0
        %v4509 = vadd.f32 0.0, %v4508
        %v4510 = vpop.f32.mrf.mxu0
        %v4511 = vpop.f32.mrf.mxu0
        %v4512 = vadd.f32 0.0, %v4511
        %v4513 = vpop.f32.mrf.mxu0
        %4514 = vmatprep.mubr.bf16.mxu0 0
        %4515 = vmatmul.mubr.bf16.gmra.mxu0 %v4365
        %v4516 = vpop.f32.mrf.mxu0
        %v4517 = vadd.f32 0.0, %v4516
        %v4518 = vpop.f32.mrf.mxu0
        %v4519 = vpop.f32.mrf.mxu0
        %v4520 = vadd.f32 0.0, %v4519
        %v4521 = vpop.f32.mrf.mxu0
        %4522 = vmatprep.mubr.bf16.mxu0 0
        %4523 = vmatmul.mubr.bf16.gmra.mxu0 %v4368
        %v4524 = vpop.f32.mrf.mxu0
        %v4525 = vadd.f32 0.0, %v4524
        %v4526 = vpop.f32.mrf.mxu0
        %v4527 = vpop.f32.mrf.mxu0
        %v4528 = vadd.f32 0.0, %v4527
        %v4529 = vpop.f32.mrf.mxu0
        %4530 = vdwg.mxu0
        %v4531 = vadd.f32 %v3777, %v4405
        %v4532 = vadd.f32 %v3778, %v4408
        %v4533 = vadd.f32 %v3779, %v4413
        %v4534 = vadd.f32 %v3780, %v4416
        %v4535 = vadd.f32 %v3781, %v4421
        %v4536 = vadd.f32 %v3782, %v4424
        %v4537 = vadd.f32 %v3783, %v4429
        %v4538 = vadd.f32 %v3784, %v4432
        %v4539 = vadd.f32 %v3785, %v4437
        %v4540 = vadd.f32 %v3786, %v4440
        %v4541 = vadd.f32 %v3787, %v4445
        %v4542 = vadd.f32 %v3788, %v4448
        %v4543 = vadd.f32 %v3789, %v4453
        %v4544 = vadd.f32 %v3790, %v4456
        %v4545 = vadd.f32 %v3791, %v4461
        %v4546 = vadd.f32 %v3792, %v4464
        %v4547 = vadd.f32 %v3793, %v4469
        %v4548 = vadd.f32 %v3794, %v4472
        %v4549 = vadd.f32 %v3795, %v4477
        %v4550 = vadd.f32 %v3796, %v4480
        %v4551 = vadd.f32 %v3797, %v4485
        %v4552 = vadd.f32 %v3798, %v4488
        %v4553 = vadd.f32 %v3799, %v4493
        %v4554 = vadd.f32 %v3800, %v4496
        %v4555 = vadd.f32 %v3801, %v4501
        %v4556 = vadd.f32 %v3802, %v4504
        %v4557 = vadd.f32 %v3803, %v4509
        %v4558 = vadd.f32 %v3804, %v4512
        %v4559 = vadd.f32 %v3805, %v4517
        %v4560 = vadd.f32 %v3806, %v4520
        %v4561 = vadd.f32 %v3807, %v4525
        %v4562 = vadd.f32 %v3808, %v4528
        %v4563 = vld [vmem:[%s3422] sm:$0xe]
        %v4564 = vld [vmem:[%s3422 + $0xc] sm:$0xe]
        %v4565 = vld [vmem:[%s3422 + $0x18] sm:$0xe]
        %v4566 = vld [vmem:[%s3422 + $0x24] sm:$0xe]
        %v4567 = vld [vmem:[%s3422 + $0x30] sm:$0xe]
        %v4568 = vld [vmem:[%s3422 + $0x3c] sm:$0xe]
        %v4569 = vld [vmem:[%s3422 + $0x48] sm:$0xe]
        %v4570 = vld [vmem:[%s3422 + $0x54] sm:$0xe]
        %v4571 = vld [vmem:[%s3422 + $0x60] sm:$0xe]
        %v4572 = vld [vmem:[%s3422 + $0x6c] sm:$0xe]
        %v4573 = vld [vmem:[%s3422 + $0x78] sm:$0xe]
        %v4574 = vld [vmem:[%s3422 + $0x84] sm:$0xe]
        %v4575 = vld [vmem:[%s3422 + $0x90] sm:$0xe]
        %v4576 = vld [vmem:[%s3422 + $0x9c] sm:$0xe]
        %v4577 = vld [vmem:[%s3422 + $0xa8] sm:$0xe]
        %v4578 = vld [vmem:[%s3422 + $0xb4] sm:$0xe]
        %v4627 = vrot.slane %v4563, 5
        %v4628 = vrot.slane %v4627, 4
        %v4629 = vrot.slane %v3810, 5
        %v4630 = vsel %vm1348, %v4628, %v4629
        %v4631 = vrot.slane %v4629, 4
        %v4632 = vrot.slane %v3811, 5
        %v4633 = vsel %vm1348, %v4631, %v4632
        %v4634 = vrot.slane %v4564, 5
        %v4635 = vrot.slane %v4634, 4
        %v4636 = vrot.slane %v3813, 5
        %v4637 = vsel %vm1348, %v4635, %v4636
        %v4638 = vrot.slane %v4636, 4
        %v4639 = vrot.slane %v3814, 5
        %v4640 = vsel %vm1348, %v4638, %v4639
        %v4641 = vrot.slane %v4565, 5
        %v4642 = vrot.slane %v4641, 4
        %v4643 = vrot.slane %v3816, 5
        %v4644 = vsel %vm1348, %v4642, %v4643
        %v4645 = vrot.slane %v4643, 4
        %v4646 = vrot.slane %v3817, 5
        %v4647 = vsel %vm1348, %v4645, %v4646
        %v4648 = vrot.slane %v4566, 5
        %v4649 = vrot.slane %v4648, 4
        %v4650 = vrot.slane %v3819, 5
        %v4651 = vsel %vm1348, %v4649, %v4650
        %v4652 = vrot.slane %v4650, 4
        %v4653 = vrot.slane %v3820, 5
        %v4654 = vsel %vm1348, %v4652, %v4653
        %v4655 = vrot.slane %v4567, 5
        %v4656 = vrot.slane %v4655, 4
        %v4657 = vrot.slane %v3822, 5
        %v4658 = vsel %vm1348, %v4656, %v4657
        %v4659 = vrot.slane %v4657, 4
        %v4660 = vrot.slane %v3823, 5
        %v4661 = vsel %vm1348, %v4659, %v4660
        %v4662 = vrot.slane %v4568, 5
        %v4663 = vrot.slane %v4662, 4
        %v4664 = vrot.slane %v3825, 5
        %v4665 = vsel %vm1348, %v4663, %v4664
        %v4666 = vrot.slane %v4664, 4
        %v4667 = vrot.slane %v3826, 5
        %v4668 = vsel %vm1348, %v4666, %v4667
        %v4669 = vrot.slane %v4569, 5
        %v4670 = vrot.slane %v4669, 4
        %v4671 = vrot.slane %v3828, 5
        %v4672 = vsel %vm1348, %v4670, %v4671
        %v4673 = vrot.slane %v4671, 4
        %v4674 = vrot.slane %v3829, 5
        %v4675 = vsel %vm1348, %v4673, %v4674
        %v4676 = vrot.slane %v4570, 5
        %v4677 = vrot.slane %v4676, 4
        %v4678 = vrot.slane %v3831, 5
        %v4679 = vsel %vm1348, %v4677, %v4678
        %v4680 = vrot.slane %v4678, 4
        %v4681 = vrot.slane %v3832, 5
        %v4682 = vsel %vm1348, %v4680, %v4681
        %v4683 = vrot.slane %v4571, 5
        %v4684 = vrot.slane %v4683, 4
        %v4685 = vrot.slane %v3834, 5
        %v4686 = vsel %vm1348, %v4684, %v4685
        %v4687 = vrot.slane %v4685, 4
        %v4688 = vrot.slane %v3835, 5
        %v4689 = vsel %vm1348, %v4687, %v4688
        %v4690 = vrot.slane %v4572, 5
        %v4691 = vrot.slane %v4690, 4
        %v4692 = vrot.slane %v3837, 5
        %v4693 = vsel %vm1348, %v4691, %v4692
        %v4694 = vrot.slane %v4692, 4
        %v4695 = vrot.slane %v3838, 5
        %v4696 = vsel %vm1348, %v4694, %v4695
        %v4697 = vrot.slane %v4573, 5
        %v4698 = vrot.slane %v4697, 4
        %v4699 = vrot.slane %v3840, 5
        %v4700 = vsel %vm1348, %v4698, %v4699
        %v4701 = vrot.slane %v4699, 4
        %v4702 = vrot.slane %v3841, 5
        %v4703 = vsel %vm1348, %v4701, %v4702
        %v4704 = vrot.slane %v4574, 5
        %v4705 = vrot.slane %v4704, 4
        %v4706 = vrot.slane %v3843, 5
        %v4707 = vsel %vm1348, %v4705, %v4706
        %v4708 = vrot.slane %v4706, 4
        %v4709 = vrot.slane %v3844, 5
        %v4710 = vsel %vm1348, %v4708, %v4709
        %v4711 = vrot.slane %v4575, 5
        %v4712 = vrot.slane %v4711, 4
        %v4713 = vrot.slane %v3846, 5
        %v4714 = vsel %vm1348, %v4712, %v4713
        %v4715 = vrot.slane %v4713, 4
        %v4716 = vrot.slane %v3847, 5
        %v4717 = vsel %vm1348, %v4715, %v4716
        %v4718 = vrot.slane %v4576, 5
        %v4719 = vrot.slane %v4718, 4
        %v4720 = vrot.slane %v3849, 5
        %v4721 = vsel %vm1348, %v4719, %v4720
        %v4722 = vrot.slane %v4720, 4
        %v4723 = vrot.slane %v3850, 5
        %v4724 = vsel %vm1348, %v4722, %v4723
        %v4725 = vrot.slane %v4577, 5
        %v4726 = vrot.slane %v4725, 4
        %v4727 = vrot.slane %v3852, 5
        %v4728 = vsel %vm1348, %v4726, %v4727
        %v4729 = vrot.slane %v4727, 4
        %v4730 = vrot.slane %v3853, 5
        %v4731 = vsel %vm1348, %v4729, %v4730
        %v4732 = vrot.slane %v4578, 5
        %v4733 = vrot.slane %v4732, 4
        %v4734 = vrot.slane %v3855, 5
        %v4735 = vsel %vm1348, %v4733, %v4734
        %v4736 = vrot.slane %v4734, 4
        %v4737 = vrot.slane %v3856, 5
        %v4738 = vsel %vm1348, %v4736, %v4737
        %s4739 = scalar_lea.vmem %s1, 256
        %v4740 = vld [vmem:[%s4739] sm:$0xf]
        %v4741 = vld [vmem:[%s4739 + $0x4] sm:$0xf]
        %v4742 = vld [vmem:[%s4739 + $0x8] sm:$0xf]
        %v4743 = vld [vmem:[%s4739 + $0xc] sm:$0xf]
        %v4744 = vld [vmem:[%s4739 + $0x10] sm:$0xf]
        %v4745 = vld [vmem:[%s4739 + $0x14] sm:$0xf]
        %v4746 = vld [vmem:[%s4739 + $0x18] sm:$0xf]
        %v4747 = vld [vmem:[%s4739 + $0x1c] sm:$0xf]
        %v4748 = vunpack.c.l.b16 %v4630
        %v4749 = vunpack.c.l.b16 %v4633
        %v4750 = vunpack.c.l.b16 %v4637
        %v4751 = vunpack.c.l.b16 %v4640
        %v4752 = vunpack.c.l.b16 %v4644
        %v4753 = vunpack.c.l.b16 %v4647
        %v4754 = vunpack.c.l.b16 %v4651
        %v4755 = vunpack.c.l.b16 %v4654
        %v4756 = vunpack.c.l.b16 %v4658
        %v4757 = vunpack.c.l.b16 %v4661
        %v4758 = vunpack.c.l.b16 %v4665
        %v4759 = vunpack.c.l.b16 %v4668
        %v4760 = vunpack.c.l.b16 %v4672
        %v4761 = vunpack.c.l.b16 %v4675
        %v4762 = vunpack.c.l.b16 %v4679
        %v4763 = vunpack.c.l.b16 %v4682
        %v4764 = vunpack.c.l.b16 %v4686
        %v4765 = vunpack.c.l.b16 %v4689
        %v4766 = vunpack.c.l.b16 %v4693
        %v4767 = vunpack.c.l.b16 %v4696
        %v4768 = vunpack.c.l.b16 %v4700
        %v4769 = vunpack.c.l.b16 %v4703
        %v4770 = vunpack.c.l.b16 %v4707
        %v4771 = vunpack.c.l.b16 %v4710
        %v4772 = vunpack.c.l.b16 %v4714
        %v4773 = vunpack.c.l.b16 %v4717
        %v4774 = vunpack.c.l.b16 %v4721
        %v4775 = vunpack.c.l.b16 %v4724
        %v4776 = vunpack.c.l.b16 %v4728
        %v4777 = vunpack.c.l.b16 %v4731
        %v4778 = vunpack.c.l.b16 %v4735
        %v4779 = vunpack.c.l.b16 %v4738
        %v4780 = vpack.c.b16 %v4749, %v4748
        %v4781 = vpack.c.b16 %v4751, %v4750
        %v4782 = vpack.c.b16 %v4753, %v4752
        %v4783 = vpack.c.b16 %v4755, %v4754
        %v4784 = vpack.c.b16 %v4757, %v4756
        %v4785 = vpack.c.b16 %v4759, %v4758
        %v4786 = vpack.c.b16 %v4761, %v4760
        %v4787 = vpack.c.b16 %v4763, %v4762
        %v4788 = vpack.c.b16 %v4765, %v4764
        %v4789 = vpack.c.b16 %v4767, %v4766
        %v4790 = vpack.c.b16 %v4769, %v4768
        %v4791 = vpack.c.b16 %v4771, %v4770
        %v4792 = vpack.c.b16 %v4773, %v4772
        %v4793 = vpack.c.b16 %v4775, %v4774
        %v4794 = vpack.c.b16 %v4777, %v4776
        %v4795 = vpack.c.b16 %v4779, %v4778
        %v4804 = vunpack.c.l.b16 %v4740
        %v4805 = vunpack.c.l.b16 %v4741
        %v4806 = vunpack.c.l.b16 %v4742
        %v4807 = vunpack.c.l.b16 %v4743
        %v4808 = vunpack.c.l.b16 %v4744
        %v4809 = vunpack.c.l.b16 %v4745
        %v4810 = vunpack.c.l.b16 %v4746
        %v4811 = vunpack.c.l.b16 %v4747
        %v4812 = vpack.c.b16 %v4805, %v4804
        %v4813 = vpack.c.b16 %v4807, %v4806
        %v4814 = vpack.c.b16 %v4809, %v4808
        %v4815 = vpack.c.b16 %v4811, %v4810
        %v4821 = vsel %vm775, %v4780, 0
        %v4824 = vsel %vm775, %v4781, 0
        %v4827 = vsel %vm775, %v4782, 0
        %v4830 = vsel %vm775, %v4783, 0
        %v4833 = vsel %vm775, %v4784, 0
        %v4836 = vsel %vm775, %v4785, 0
        %v4839 = vsel %vm775, %v4786, 0
        %v4842 = vsel %vm775, %v4787, 0
        %v4845 = vsel %vm775, %v4788, 0
        %v4848 = vsel %vm775, %v4789, 0
        %v4851 = vsel %vm775, %v4790, 0
        %v4854 = vsel %vm775, %v4791, 0
        %v4857 = vsel %vm775, %v4792, 0
        %v4860 = vsel %vm775, %v4793, 0
        %v4863 = vsel %vm775, %v4794, 0
        %v4866 = vsel %vm775, %v4795, 0
        %4868 = vmatprep.subr.bf16.mxu0 0
        %4869 = vmatpush1.bf16.msra.mxu0 0
        %4870 = vmatprep.subr.bf16.mxu0 0
        %4871 = vmatpush1.bf16.msra.mxu0 0
        %4872 = vmatprep.subr.bf16.mxu0 0
        %4873 = vmatpush1.bf16.msra.mxu0 0
        %4874 = vmatprep.subr.bf16.mxu0 0
        %4875 = vmatpush1.bf16.msra.mxu0 0
        %4876 = vmatprep.subr.bf16.mxu0 0
        %4877 = vmatpush1.bf16.msra.mxu0 %v4815
        %4878 = vmatprep.subr.bf16.mxu0 0
        %4879 = vmatpush1.bf16.msra.mxu0 %v4814
        %4880 = vmatprep.subr.bf16.mxu0 0
        %4881 = vmatpush1.bf16.msra.mxu0 %v4813
        %4882 = vmatprep.subr.bf16.mxu0 0
        %4883 = vmatpush1.bf16.msra.mxu0 %v4812
        %4884 = vmatprep.subr.bf16.mxu0 0
        %4885 = vmatpush2.bf16.msra.mxu0 0
        %4886 = vmatprep.subr.bf16.mxu0 0
        %4887 = vmatpush2.bf16.msra.mxu0 0
        %4888 = vmatprep.subr.bf16.mxu0 0
        %4889 = vmatpush2.bf16.msra.mxu0 0
        %4890 = vmatprep.subr.bf16.mxu0 0
        %4891 = vmatpush2.bf16.msra.mxu0 0
        %4892 = vmatprep.subr.bf16.mxu0 0
        %4893 = vmatpush2.bf16.msra.mxu0 0
        %4894 = vmatprep.subr.bf16.mxu0 0
        %4895 = vmatpush2.bf16.msra.mxu0 0
        %4896 = vmatprep.subr.bf16.mxu0 0
        %4897 = vmatpush2.bf16.msra.mxu0 0
        %4898 = vmatprep.subr.bf16.mxu0 0
        %4899 = vmatpush2.bf16.msra.mxu0 0
        %4900 = vmatprep.mubr.bf16.mxu0 0
        %4901 = vmatmul.mubr.bf16.gmra.mxu0 %v4821
        %v4902 = vpop.f32.mrf.mxu0
        %v4903 = vadd.f32 0.0, %v4902
        %v4904 = vpop.f32.mrf.mxu0
        %v4905 = vpop.f32.mrf.mxu0
        %v4906 = vadd.f32 0.0, %v4905
        %v4907 = vpop.f32.mrf.mxu0
        %4908 = vmatprep.mubr.bf16.mxu0 0
        %4909 = vmatmul.mubr.bf16.gmra.mxu0 %v4824
        %v4910 = vpop.f32.mrf.mxu0
        %v4911 = vadd.f32 0.0, %v4910
        %v4912 = vpop.f32.mrf.mxu0
        %v4913 = vpop.f32.mrf.mxu0
        %v4914 = vadd.f32 0.0, %v4913
        %v4915 = vpop.f32.mrf.mxu0
        %4916 = vmatprep.mubr.bf16.mxu0 0
        %4917 = vmatmul.mubr.bf16.gmra.mxu0 %v4827
        %v4918 = vpop.f32.mrf.mxu0
        %v4919 = vadd.f32 0.0, %v4918
        %v4920 = vpop.f32.mrf.mxu0
        %v4921 = vpop.f32.mrf.mxu0
        %v4922 = vadd.f32 0.0, %v4921
        %v4923 = vpop.f32.mrf.mxu0
        %4924 = vmatprep.mubr.bf16.mxu0 0
        %4925 = vmatmul.mubr.bf16.gmra.mxu0 %v4830
        %v4926 = vpop.f32.mrf.mxu0
        %v4927 = vadd.f32 0.0, %v4926
        %v4928 = vpop.f32.mrf.mxu0
        %v4929 = vpop.f32.mrf.mxu0
        %v4930 = vadd.f32 0.0, %v4929
        %v4931 = vpop.f32.mrf.mxu0
        %4932 = vmatprep.mubr.bf16.mxu0 0
        %4933 = vmatmul.mubr.bf16.gmra.mxu0 %v4833
        %v4934 = vpop.f32.mrf.mxu0
        %v4935 = vadd.f32 0.0, %v4934
        %v4936 = vpop.f32.mrf.mxu0
        %v4937 = vpop.f32.mrf.mxu0
        %v4938 = vadd.f32 0.0, %v4937
        %v4939 = vpop.f32.mrf.mxu0
        %4940 = vmatprep.mubr.bf16.mxu0 0
        %4941 = vmatmul.mubr.bf16.gmra.mxu0 %v4836
        %v4942 = vpop.f32.mrf.mxu0
        %v4943 = vadd.f32 0.0, %v4942
        %v4944 = vpop.f32.mrf.mxu0
        %v4945 = vpop.f32.mrf.mxu0
        %v4946 = vadd.f32 0.0, %v4945
        %v4947 = vpop.f32.mrf.mxu0
        %4948 = vmatprep.mubr.bf16.mxu0 0
        %4949 = vmatmul.mubr.bf16.gmra.mxu0 %v4839
        %v4950 = vpop.f32.mrf.mxu0
        %v4951 = vadd.f32 0.0, %v4950
        %v4952 = vpop.f32.mrf.mxu0
        %v4953 = vpop.f32.mrf.mxu0
        %v4954 = vadd.f32 0.0, %v4953
        %v4955 = vpop.f32.mrf.mxu0
        %4956 = vmatprep.mubr.bf16.mxu0 0
        %4957 = vmatmul.mubr.bf16.gmra.mxu0 %v4842
        %v4958 = vpop.f32.mrf.mxu0
        %v4959 = vadd.f32 0.0, %v4958
        %v4960 = vpop.f32.mrf.mxu0
        %v4961 = vpop.f32.mrf.mxu0
        %v4962 = vadd.f32 0.0, %v4961
        %v4963 = vpop.f32.mrf.mxu0
        %4964 = vmatprep.mubr.bf16.mxu0 0
        %4965 = vmatmul.mubr.bf16.gmra.mxu0 %v4845
        %v4966 = vpop.f32.mrf.mxu0
        %v4967 = vadd.f32 0.0, %v4966
        %v4968 = vpop.f32.mrf.mxu0
        %v4969 = vpop.f32.mrf.mxu0
        %v4970 = vadd.f32 0.0, %v4969
        %v4971 = vpop.f32.mrf.mxu0
        %4972 = vmatprep.mubr.bf16.mxu0 0
        %4973 = vmatmul.mubr.bf16.gmra.mxu0 %v4848
        %v4974 = vpop.f32.mrf.mxu0
        %v4975 = vadd.f32 0.0, %v4974
        %v4976 = vpop.f32.mrf.mxu0
        %v4977 = vpop.f32.mrf.mxu0
        %v4978 = vadd.f32 0.0, %v4977
        %v4979 = vpop.f32.mrf.mxu0
        %4980 = vmatprep.mubr.bf16.mxu0 0
        %4981 = vmatmul.mubr.bf16.gmra.mxu0 %v4851
        %v4982 = vpop.f32.mrf.mxu0
        %v4983 = vadd.f32 0.0, %v4982
        %v4984 = vpop.f32.mrf.mxu0
        %v4985 = vpop.f32.mrf.mxu0
        %v4986 = vadd.f32 0.0, %v4985
        %v4987 = vpop.f32.mrf.mxu0
        %4988 = vmatprep.mubr.bf16.mxu0 0
        %4989 = vmatmul.mubr.bf16.gmra.mxu0 %v4854
        %v4990 = vpop.f32.mrf.mxu0
        %v4991 = vadd.f32 0.0, %v4990
        %v4992 = vpop.f32.mrf.mxu0
        %v4993 = vpop.f32.mrf.mxu0
        %v4994 = vadd.f32 0.0, %v4993
        %v4995 = vpop.f32.mrf.mxu0
        %4996 = vmatprep.mubr.bf16.mxu0 0
        %4997 = vmatmul.mubr.bf16.gmra.mxu0 %v4857
        %v4998 = vpop.f32.mrf.mxu0
        %v4999 = vadd.f32 0.0, %v4998
        %v5000 = vpop.f32.mrf.mxu0
        %v5001 = vpop.f32.mrf.mxu0
        %v5002 = vadd.f32 0.0, %v5001
        %v5003 = vpop.f32.mrf.mxu0
        %5004 = vmatprep.mubr.bf16.mxu0 0
        %5005 = vmatmul.mubr.bf16.gmra.mxu0 %v4860
        %v5006 = vpop.f32.mrf.mxu0
        %v5007 = vadd.f32 0.0, %v5006
        %v5008 = vpop.f32.mrf.mxu0
        %v5009 = vpop.f32.mrf.mxu0
        %v5010 = vadd.f32 0.0, %v5009
        %v5011 = vpop.f32.mrf.mxu0
        %5012 = vmatprep.mubr.bf16.mxu0 0
        %5013 = vmatmul.mubr.bf16.gmra.mxu0 %v4863
        %v5014 = vpop.f32.mrf.mxu0
        %v5015 = vadd.f32 0.0, %v5014
        %v5016 = vpop.f32.mrf.mxu0
        %v5017 = vpop.f32.mrf.mxu0
        %v5018 = vadd.f32 0.0, %v5017
        %v5019 = vpop.f32.mrf.mxu0
        %5020 = vmatprep.mubr.bf16.mxu0 0
        %5021 = vmatmul.mubr.bf16.gmra.mxu0 %v4866
        %v5022 = vpop.f32.mrf.mxu0
        %v5023 = vadd.f32 0.0, %v5022
        %v5024 = vpop.f32.mrf.mxu0
        %v5025 = vpop.f32.mrf.mxu0
        %v5026 = vadd.f32 0.0, %v5025
        %v5027 = vpop.f32.mrf.mxu0
        %5028 = vdwg.mxu0
        %v5029 = vadd.f32 %v4531, %v4903
        %v5030 = vadd.f32 %v4532, %v4906
        %v5031 = vadd.f32 %v4533, %v4911
        %v5032 = vadd.f32 %v4534, %v4914
        %v5033 = vadd.f32 %v4535, %v4919
        %v5034 = vadd.f32 %v4536, %v4922
        %v5035 = vadd.f32 %v4537, %v4927
        %v5036 = vadd.f32 %v4538, %v4930
        %v5037 = vadd.f32 %v4539, %v4935
        %v5038 = vadd.f32 %v4540, %v4938
        %v5039 = vadd.f32 %v4541, %v4943
        %v5040 = vadd.f32 %v4542, %v4946
        %v5041 = vadd.f32 %v4543, %v4951
        %v5042 = vadd.f32 %v4544, %v4954
        %v5043 = vadd.f32 %v4545, %v4959
        %v5044 = vadd.f32 %v4546, %v4962
        %v5045 = vadd.f32 %v4547, %v4967
        %v5046 = vadd.f32 %v4548, %v4970
        %v5047 = vadd.f32 %v4549, %v4975
        %v5048 = vadd.f32 %v4550, %v4978
        %v5049 = vadd.f32 %v4551, %v4983
        %v5050 = vadd.f32 %v4552, %v4986
        %v5051 = vadd.f32 %v4553, %v4991
        %v5052 = vadd.f32 %v4554, %v4994
        %v5053 = vadd.f32 %v4555, %v4999
        %v5054 = vadd.f32 %v4556, %v5002
        %v5055 = vadd.f32 %v4557, %v5007
        %v5056 = vadd.f32 %v4558, %v5010
        %v5057 = vadd.f32 %v4559, %v5015
        %v5058 = vadd.f32 %v4560, %v5018
        %v5059 = vadd.f32 %v4561, %v5023
        %v5060 = vadd.f32 %v4562, %v5026
        %v5061 = vld [vmem:[%s2] sm:$0x1]
        %v5063 = vlaneseq
        %v5064 = vshrl.u32 %v5063, 7
        %v5065 = vsub.s32 0, %v5064
        %v5066 = vrot.slane %v5061, %v5065
        %v5068 = vadd.f32 %v5029, %v5066
        %v5069 = vadd.f32 %v5030, %v5066
        %v5070 = vadd.f32 %v5031, %v5066
        %v5071 = vadd.f32 %v5032, %v5066
        %v5072 = vadd.f32 %v5033, %v5066
        %v5073 = vadd.f32 %v5034, %v5066
        %v5074 = vadd.f32 %v5035, %v5066
        %v5075 = vadd.f32 %v5036, %v5066
        %v5076 = vadd.f32 %v5037, %v5066
        %v5077 = vadd.f32 %v5038, %v5066
        %v5078 = vadd.f32 %v5039, %v5066
        %v5079 = vadd.f32 %v5040, %v5066
        %v5080 = vadd.f32 %v5041, %v5066
        %v5081 = vadd.f32 %v5042, %v5066
        %v5082 = vadd.f32 %v5043, %v5066
        %v5083 = vadd.f32 %v5044, %v5066
        %v5084 = vadd.f32 %v5045, %v5066
        %v5085 = vadd.f32 %v5046, %v5066
        %v5086 = vadd.f32 %v5047, %v5066
        %v5087 = vadd.f32 %v5048, %v5066
        %v5088 = vadd.f32 %v5049, %v5066
        %v5089 = vadd.f32 %v5050, %v5066
        %v5090 = vadd.f32 %v5051, %v5066
        %v5091 = vadd.f32 %v5052, %v5066
        %v5092 = vadd.f32 %v5053, %v5066
        %v5093 = vadd.f32 %v5054, %v5066
        %v5094 = vadd.f32 %v5055, %v5066
        %v5095 = vadd.f32 %v5056, %v5066
        %v5096 = vadd.f32 %v5057, %v5066
        %v5097 = vadd.f32 %v5058, %v5066
        %v5098 = vadd.f32 %v5059, %v5066
        %v5099 = vadd.f32 %v5060, %v5066
        %v5100 = vmul.f32 %v5068, 0.2
        %v5101 = vmul.f32 %v5069, 0.2
        %v5102 = vmul.f32 %v5070, 0.2
        %v5103 = vmul.f32 %v5071, 0.2
        %v5104 = vmul.f32 %v5072, 0.2
        %v5105 = vmul.f32 %v5073, 0.2
        %v5106 = vmul.f32 %v5074, 0.2
        %v5107 = vmul.f32 %v5075, 0.2
        %v5108 = vmul.f32 %v5076, 0.2
        %v5109 = vmul.f32 %v5077, 0.2
        %v5110 = vmul.f32 %v5078, 0.2
        %v5111 = vmul.f32 %v5079, 0.2
        %v5112 = vmul.f32 %v5080, 0.2
        %v5113 = vmul.f32 %v5081, 0.2
        %v5114 = vmul.f32 %v5082, 0.2
        %v5115 = vmul.f32 %v5083, 0.2
        %v5116 = vmul.f32 %v5084, 0.2
        %v5117 = vmul.f32 %v5085, 0.2
        %v5118 = vmul.f32 %v5086, 0.2
        %v5119 = vmul.f32 %v5087, 0.2
        %v5120 = vmul.f32 %v5088, 0.2
        %v5121 = vmul.f32 %v5089, 0.2
        %v5122 = vmul.f32 %v5090, 0.2
        %v5123 = vmul.f32 %v5091, 0.2
        %v5124 = vmul.f32 %v5092, 0.2
        %v5125 = vmul.f32 %v5093, 0.2
        %v5126 = vmul.f32 %v5094, 0.2
        %v5127 = vmul.f32 %v5095, 0.2
        %v5128 = vmul.f32 %v5096, 0.2
        %v5129 = vmul.f32 %v5097, 0.2
        %v5130 = vmul.f32 %v5098, 0.2
        %v5131 = vmul.f32 %v5099, 0.2
        %v5132 = vmax.f32 %v5068, %v5100
        %v5133 = vmax.f32 %v5069, %v5101
        %v5134 = vmax.f32 %v5070, %v5102
        %v5135 = vmax.f32 %v5071, %v5103
        %v5136 = vmax.f32 %v5072, %v5104
        %v5137 = vmax.f32 %v5073, %v5105
        %v5138 = vmax.f32 %v5074, %v5106
        %v5139 = vmax.f32 %v5075, %v5107
        %v5140 = vmax.f32 %v5076, %v5108
        %v5141 = vmax.f32 %v5077, %v5109
        %v5142 = vmax.f32 %v5078, %v5110
        %v5143 = vmax.f32 %v5079, %v5111
        %v5144 = vmax.f32 %v5080, %v5112
        %v5145 = vmax.f32 %v5081, %v5113
        %v5146 = vmax.f32 %v5082, %v5114
        %v5147 = vmax.f32 %v5083, %v5115
        %v5148 = vmax.f32 %v5084, %v5116
        %v5149 = vmax.f32 %v5085, %v5117
        %v5150 = vmax.f32 %v5086, %v5118
        %v5151 = vmax.f32 %v5087, %v5119
        %v5152 = vmax.f32 %v5088, %v5120
        %v5153 = vmax.f32 %v5089, %v5121
        %v5154 = vmax.f32 %v5090, %v5122
        %v5155 = vmax.f32 %v5091, %v5123
        %v5156 = vmax.f32 %v5092, %v5124
        %v5157 = vmax.f32 %v5093, %v5125
        %v5158 = vmax.f32 %v5094, %v5126
        %v5159 = vmax.f32 %v5095, %v5127
        %v5160 = vmax.f32 %v5096, %v5128
        %v5161 = vmax.f32 %v5097, %v5129
        %v5162 = vmax.f32 %v5098, %v5130
        %v5163 = vmax.f32 %v5099, %v5131
        %v5164 = vpack.c.bf16 %v5133, %v5132
        %v5165 = vpack.c.bf16 %v5135, %v5134
        %v5166 = vpack.c.bf16 %v5137, %v5136
        %v5167 = vpack.c.bf16 %v5139, %v5138
        %v5168 = vpack.c.bf16 %v5141, %v5140
        %v5169 = vpack.c.bf16 %v5143, %v5142
        %v5170 = vpack.c.bf16 %v5145, %v5144
        %v5171 = vpack.c.bf16 %v5147, %v5146
        %v5172 = vpack.c.bf16 %v5149, %v5148
        %v5173 = vpack.c.bf16 %v5151, %v5150
        %v5174 = vpack.c.bf16 %v5153, %v5152
        %v5175 = vpack.c.bf16 %v5155, %v5154
        %v5176 = vpack.c.bf16 %v5157, %v5156
        %v5177 = vpack.c.bf16 %v5159, %v5158
        %v5178 = vpack.c.bf16 %v5161, %v5160
        %v5179 = vpack.c.bf16 %v5163, %v5162
        %vm5180 = vcmask 519168
        %5181 = vst.msk [vmem:[#allocation2] sm:$0xf] %vm5180, 0
        %5182 = vst.msk [vmem:[#allocation2 + $0x4] sm:$0xf] %vm5180, 0
        %vm5183 = vcmask 516096
        %5184 = vst.msk [vmem:[#allocation2 + $0x8] sm:$0x1] %vm5183, 0
        %s5185 = scalar_lea.vmem [#allocation2], 204
        %5186 = vst.msk [vmem:[%s5185] sm:$0xf] %vm5180, 0
        %5187 = vst.msk [vmem:[%s5185 + $0x4] sm:$0xf] %vm5180, 0
        %5188 = vst.msk [vmem:[%s5185 + $0x8] sm:$0x1] %vm5183, 0
        %vm5189 = vcmask 516096
        %vm5190 = vsmask.f32 256
        %vm5191 = vmand %vm5189, %vm5190
        %v5192 = vld [vmem:[#allocation2] sm:$0x1]
        %v5193 = vsel %vm5191, 0, %v5192
        %5194 = vst [vmem:[#allocation2] sm:$0x1] %v5193
        %v5195 = vld [vmem:[#allocation2 + $0xc] sm:$0x1]
        %v5196 = vsel %vm5191, 0, %v5195
        %5197 = vst [vmem:[#allocation2 + $0xc] sm:$0x1] %v5196
        %v5198 = vld [vmem:[#allocation2 + $0x18] sm:$0x1]
        %v5199 = vsel %vm5191, 0, %v5198
        %5200 = vst [vmem:[#allocation2 + $0x18] sm:$0x1] %v5199
        %v5201 = vld [vmem:[#allocation2 + $0x24] sm:$0x1]
        %v5202 = vsel %vm5191, 0, %v5201
        %5203 = vst [vmem:[#allocation2 + $0x24] sm:$0x1] %v5202
        %v5204 = vld [vmem:[#allocation2 + $0x30] sm:$0x1]
        %v5205 = vsel %vm5191, 0, %v5204
        %5206 = vst [vmem:[#allocation2 + $0x30] sm:$0x1] %v5205
        %v5207 = vld [vmem:[#allocation2 + $0x3c] sm:$0x1]
        %v5208 = vsel %vm5191, 0, %v5207
        %5209 = vst [vmem:[#allocation2 + $0x3c] sm:$0x1] %v5208
        %v5210 = vld [vmem:[#allocation2 + $0x48] sm:$0x1]
        %v5211 = vsel %vm5191, 0, %v5210
        %5212 = vst [vmem:[#allocation2 + $0x48] sm:$0x1] %v5211
        %v5213 = vld [vmem:[#allocation2 + $0x54] sm:$0x1]
        %v5214 = vsel %vm5191, 0, %v5213
        %5215 = vst [vmem:[#allocation2 + $0x54] sm:$0x1] %v5214
        %v5216 = vld [vmem:[#allocation2 + $0x60] sm:$0x1]
        %v5217 = vsel %vm5191, 0, %v5216
        %5218 = vst [vmem:[#allocation2 + $0x60] sm:$0x1] %v5217
        %v5219 = vld [vmem:[#allocation2 + $0x6c] sm:$0x1]
        %v5220 = vsel %vm5191, 0, %v5219
        %5221 = vst [vmem:[#allocation2 + $0x6c] sm:$0x1] %v5220
        %v5222 = vld [vmem:[#allocation2 + $0x78] sm:$0x1]
        %v5223 = vsel %vm5191, 0, %v5222
        %5224 = vst [vmem:[#allocation2 + $0x78] sm:$0x1] %v5223
        %v5225 = vld [vmem:[#allocation2 + $0x84] sm:$0x1]
        %v5226 = vsel %vm5191, 0, %v5225
        %5227 = vst [vmem:[#allocation2 + $0x84] sm:$0x1] %v5226
        %v5228 = vld [vmem:[#allocation2 + $0x90] sm:$0x1]
        %v5229 = vsel %vm5191, 0, %v5228
        %5230 = vst [vmem:[#allocation2 + $0x90] sm:$0x1] %v5229
        %v5231 = vld [vmem:[#allocation2 + $0x9c] sm:$0x1]
        %v5232 = vsel %vm5191, 0, %v5231
        %5233 = vst [vmem:[#allocation2 + $0x9c] sm:$0x1] %v5232
        %v5234 = vld [vmem:[#allocation2 + $0xa8] sm:$0x1]
        %v5235 = vsel %vm5191, 0, %v5234
        %5236 = vst [vmem:[#allocation2 + $0xa8] sm:$0x1] %v5235
        %v5237 = vld [vmem:[#allocation2 + $0xb4] sm:$0x1]
        %v5238 = vsel %vm5191, 0, %v5237
        %5239 = vst [vmem:[#allocation2 + $0xb4] sm:$0x1] %v5238
        %v5240 = vld [vmem:[#allocation2 + $0xc0] sm:$0x1]
        %v5241 = vsel %vm5191, 0, %v5240
        %5242 = vst [vmem:[#allocation2 + $0xc0] sm:$0x1] %v5241
        %v5243 = vld [vmem:[#allocation2 + $0xcc] sm:$0x1]
        %v5244 = vsel %vm5191, 0, %v5243
        %5245 = vst [vmem:[#allocation2 + $0xcc] sm:$0x1] %v5244
        %vm5246 = vsmask.f32 7938
        %vm5247 = vmand %vm5189, %vm5246
        %v5248 = vld [vmem:[#allocation2 + $0x8] sm:$0x1]
        %v5249 = vsel %vm5247, 0, %v5248
        %5250 = vst [vmem:[#allocation2 + $0x8] sm:$0x1] %v5249
        %v5251 = vld [vmem:[#allocation2 + $0x14] sm:$0x1]
        %v5252 = vsel %vm5247, 0, %v5251
        %5253 = vst [vmem:[#allocation2 + $0x14] sm:$0x1] %v5252
        %v5254 = vld [vmem:[#allocation2 + $0x20] sm:$0x1]
        %v5255 = vsel %vm5247, 0, %v5254
        %5256 = vst [vmem:[#allocation2 + $0x20] sm:$0x1] %v5255
        %v5257 = vld [vmem:[#allocation2 + $0x2c] sm:$0x1]
        %v5258 = vsel %vm5247, 0, %v5257
        %5259 = vst [vmem:[#allocation2 + $0x2c] sm:$0x1] %v5258
        %v5260 = vld [vmem:[#allocation2 + $0x38] sm:$0x1]
        %v5261 = vsel %vm5247, 0, %v5260
        %5262 = vst [vmem:[#allocation2 + $0x38] sm:$0x1] %v5261
        %v5263 = vld [vmem:[#allocation2 + $0x44] sm:$0x1]
        %v5264 = vsel %vm5247, 0, %v5263
        %5265 = vst [vmem:[#allocation2 + $0x44] sm:$0x1] %v5264
        %v5266 = vld [vmem:[#allocation2 + $0x50] sm:$0x1]
        %v5267 = vsel %vm5247, 0, %v5266
        %5268 = vst [vmem:[#allocation2 + $0x50] sm:$0x1] %v5267
        %v5269 = vld [vmem:[#allocation2 + $0x5c] sm:$0x1]
        %v5270 = vsel %vm5247, 0, %v5269
        %5271 = vst [vmem:[#allocation2 + $0x5c] sm:$0x1] %v5270
        %v5272 = vld [vmem:[#allocation2 + $0x68] sm:$0x1]
        %v5273 = vsel %vm5247, 0, %v5272
        %5274 = vst [vmem:[#allocation2 + $0x68] sm:$0x1] %v5273
        %v5275 = vld [vmem:[#allocation2 + $0x74] sm:$0x1]
        %v5276 = vsel %vm5247, 0, %v5275
        %5277 = vst [vmem:[#allocation2 + $0x74] sm:$0x1] %v5276
        %v5278 = vld [vmem:[#allocation2 + $0x80] sm:$0x1]
        %v5279 = vsel %vm5247, 0, %v5278
        %5280 = vst [vmem:[#allocation2 + $0x80] sm:$0x1] %v5279
        %v5281 = vld [vmem:[#allocation2 + $0x8c] sm:$0x1]
        %v5282 = vsel %vm5247, 0, %v5281
        %5283 = vst [vmem:[#allocation2 + $0x8c] sm:$0x1] %v5282
        %v5284 = vld [vmem:[#allocation2 + $0x98] sm:$0x1]
        %v5285 = vsel %vm5247, 0, %v5284
        %5286 = vst [vmem:[#allocation2 + $0x98] sm:$0x1] %v5285
        %v5287 = vld [vmem:[#allocation2 + $0xa4] sm:$0x1]
        %v5288 = vsel %vm5247, 0, %v5287
        %5289 = vst [vmem:[#allocation2 + $0xa4] sm:$0x1] %v5288
        %v5290 = vld [vmem:[#allocation2 + $0xb0] sm:$0x1]
        %v5291 = vsel %vm5247, 0, %v5290
        %5292 = vst [vmem:[#allocation2 + $0xb0] sm:$0x1] %v5291
        %v5293 = vld [vmem:[#allocation2 + $0xbc] sm:$0x1]
        %v5294 = vsel %vm5247, 0, %v5293
        %5295 = vst [vmem:[#allocation2 + $0xbc] sm:$0x1] %v5294
        %v5296 = vld [vmem:[#allocation2 + $0xc8] sm:$0x1]
        %v5297 = vsel %vm5247, 0, %v5296
        %5298 = vst [vmem:[#allocation2 + $0xc8] sm:$0x1] %v5297
        %v5299 = vld [vmem:[#allocation2 + $0xd4] sm:$0x1]
        %v5300 = vsel %vm5247, 0, %v5299
        %5301 = vst [vmem:[#allocation2 + $0xd4] sm:$0x1] %v5300
        %v5318 = vunpack.c.l.b16 %v5164
        %v5319 = vunpack.c.h.b16 %v5164
        %v5320 = vunpack.c.l.b16 %v5165
        %v5321 = vunpack.c.h.b16 %v5165
        %v5322 = vunpack.c.l.b16 %v5166
        %v5323 = vunpack.c.h.b16 %v5166
        %v5324 = vunpack.c.l.b16 %v5167
        %v5325 = vunpack.c.h.b16 %v5167
        %v5326 = vunpack.c.l.b16 %v5168
        %v5327 = vunpack.c.h.b16 %v5168
        %v5328 = vunpack.c.l.b16 %v5169
        %v5329 = vunpack.c.h.b16 %v5169
        %v5330 = vunpack.c.l.b16 %v5170
        %v5331 = vunpack.c.h.b16 %v5170
        %v5332 = vunpack.c.l.b16 %v5171
        %v5333 = vunpack.c.h.b16 %v5171
        %v5334 = vunpack.c.l.b16 %v5172
        %v5335 = vunpack.c.h.b16 %v5172
        %v5336 = vunpack.c.l.b16 %v5173
        %v5337 = vunpack.c.h.b16 %v5173
        %v5338 = vunpack.c.l.b16 %v5174
        %v5339 = vunpack.c.h.b16 %v5174
        %v5340 = vunpack.c.l.b16 %v5175
        %v5341 = vunpack.c.h.b16 %v5175
        %v5342 = vunpack.c.l.b16 %v5176
        %v5343 = vunpack.c.h.b16 %v5176
        %v5344 = vunpack.c.l.b16 %v5177
        %v5345 = vunpack.c.h.b16 %v5177
        %v5346 = vunpack.c.l.b16 %v5178
        %v5347 = vunpack.c.h.b16 %v5178
        %v5348 = vunpack.c.l.b16 %v5179
        %v5349 = vunpack.c.h.b16 %v5179
        %v5350 = vpack.c.b16 %v5318, %v5318
        %v5351 = vpack.c.b16 %v5319, %v5319
        %v5352 = vpack.c.b16 %v5320, %v5320
        %v5353 = vpack.c.b16 %v5321, %v5321
        %v5354 = vpack.c.b16 %v5322, %v5322
        %v5355 = vpack.c.b16 %v5323, %v5323
        %v5356 = vpack.c.b16 %v5324, %v5324
        %v5357 = vpack.c.b16 %v5325, %v5325
        %v5358 = vpack.c.b16 %v5326, %v5326
        %v5359 = vpack.c.b16 %v5327, %v5327
        %v5360 = vpack.c.b16 %v5328, %v5328
        %v5361 = vpack.c.b16 %v5329, %v5329
        %v5362 = vpack.c.b16 %v5330, %v5330
        %v5363 = vpack.c.b16 %v5331, %v5331
        %v5364 = vpack.c.b16 %v5332, %v5332
        %v5365 = vpack.c.b16 %v5333, %v5333
        %v5366 = vpack.c.b16 %v5334, %v5334
        %v5367 = vpack.c.b16 %v5335, %v5335
        %v5368 = vpack.c.b16 %v5336, %v5336
        %v5369 = vpack.c.b16 %v5337, %v5337
        %v5370 = vpack.c.b16 %v5338, %v5338
        %v5371 = vpack.c.b16 %v5339, %v5339
        %v5372 = vpack.c.b16 %v5340, %v5340
        %v5373 = vpack.c.b16 %v5341, %v5341
        %v5374 = vpack.c.b16 %v5342, %v5342
        %v5375 = vpack.c.b16 %v5343, %v5343
        %v5376 = vpack.c.b16 %v5344, %v5344
        %v5377 = vpack.c.b16 %v5345, %v5345
        %v5378 = vpack.c.b16 %v5346, %v5346
        %v5379 = vpack.c.b16 %v5347, %v5347
        %v5380 = vpack.c.b16 %v5348, %v5348
        %v5381 = vpack.c.b16 %v5349, %v5349
        %vm5382 = vsmask.f32 4368
        %vm5383 = vmor %vm5190, %vm5382
        %v5385 = vshrl.u32 %v5350, 16
        %v5387 = vrot.slane %v5385, 7
        %v5388 = vshll.u32 %v5350, 16
        %v5390 = vor.u32 %v5387, %v5388
        %v5391 = vrot.slane %v5387, 4
        %v5393 = vshrl.u32 %v5351, 16
        %v5395 = vrot.slane %v5393, 7
        %v5396 = vshll.u32 %v5351, 16
        %v5398 = vor.u32 %v5395, %v5396
        %v5399 = vsel %vm5383, %v5391, %v5398
        %v5400 = vrot.slane %v5395, 4
        %v5402 = vshrl.u32 %v5352, 16
        %v5404 = vrot.slane %v5402, 7
        %v5405 = vshll.u32 %v5352, 16
        %v5407 = vor.u32 %v5404, %v5405
        %v5408 = vrot.slane %v5404, 4
        %v5410 = vshrl.u32 %v5353, 16
        %v5412 = vrot.slane %v5410, 7
        %v5413 = vshll.u32 %v5353, 16
        %v5415 = vor.u32 %v5412, %v5413
        %v5416 = vsel %vm5383, %v5408, %v5415
        %v5417 = vrot.slane %v5412, 4
        %v5419 = vshrl.u32 %v5354, 16
        %v5421 = vrot.slane %v5419, 7
        %v5422 = vshll.u32 %v5354, 16
        %v5424 = vor.u32 %v5421, %v5422
        %v5425 = vrot.slane %v5421, 4
        %v5427 = vshrl.u32 %v5355, 16
        %v5429 = vrot.slane %v5427, 7
        %v5430 = vshll.u32 %v5355, 16
        %v5432 = vor.u32 %v5429, %v5430
        %v5433 = vsel %vm5383, %v5425, %v5432
        %v5434 = vrot.slane %v5429, 4
        %v5436 = vshrl.u32 %v5356, 16
        %v5438 = vrot.slane %v5436, 7
        %v5439 = vshll.u32 %v5356, 16
        %v5441 = vor.u32 %v5438, %v5439
        %v5442 = vrot.slane %v5438, 4
        %v5444 = vshrl.u32 %v5357, 16
        %v5446 = vrot.slane %v5444, 7
        %v5447 = vshll.u32 %v5357, 16
        %v5449 = vor.u32 %v5446, %v5447
        %v5450 = vsel %vm5383, %v5442, %v5449
        %v5451 = vrot.slane %v5446, 4
        %v5453 = vshrl.u32 %v5358, 16
        %v5455 = vrot.slane %v5453, 7
        %v5456 = vshll.u32 %v5358, 16
        %v5458 = vor.u32 %v5455, %v5456
        %v5459 = vrot.slane %v5455, 4
        %v5461 = vshrl.u32 %v5359, 16
        %v5463 = vrot.slane %v5461, 7
        %v5464 = vshll.u32 %v5359, 16
        %v5466 = vor.u32 %v5463, %v5464
        %v5467 = vsel %vm5383, %v5459, %v5466
        %v5468 = vrot.slane %v5463, 4
        %v5470 = vshrl.u32 %v5360, 16
        %v5472 = vrot.slane %v5470, 7
        %v5473 = vshll.u32 %v5360, 16
        %v5475 = vor.u32 %v5472, %v5473
        %v5476 = vrot.slane %v5472, 4
        %v5478 = vshrl.u32 %v5361, 16
        %v5480 = vrot.slane %v5478, 7
        %v5481 = vshll.u32 %v5361, 16
        %v5483 = vor.u32 %v5480, %v5481
        %v5484 = vsel %vm5383, %v5476, %v5483
        %v5485 = vrot.slane %v5480, 4
        %v5487 = vshrl.u32 %v5362, 16
        %v5489 = vrot.slane %v5487, 7
        %v5490 = vshll.u32 %v5362, 16
        %v5492 = vor.u32 %v5489, %v5490
        %v5493 = vrot.slane %v5489, 4
        %v5495 = vshrl.u32 %v5363, 16
        %v5497 = vrot.slane %v5495, 7
        %v5498 = vshll.u32 %v5363, 16
        %v5500 = vor.u32 %v5497, %v5498
        %v5501 = vsel %vm5383, %v5493, %v5500
        %v5502 = vrot.slane %v5497, 4
        %v5504 = vshrl.u32 %v5364, 16
        %v5506 = vrot.slane %v5504, 7
        %v5507 = vshll.u32 %v5364, 16
        %v5509 = vor.u32 %v5506, %v5507
        %v5510 = vrot.slane %v5506, 4
        %v5512 = vshrl.u32 %v5365, 16
        %v5514 = vrot.slane %v5512, 7
        %v5515 = vshll.u32 %v5365, 16
        %v5517 = vor.u32 %v5514, %v5515
        %v5518 = vsel %vm5383, %v5510, %v5517
        %v5519 = vrot.slane %v5514, 4
        %v5521 = vshrl.u32 %v5366, 16
        %v5523 = vrot.slane %v5521, 7
        %v5524 = vshll.u32 %v5366, 16
        %v5526 = vor.u32 %v5523, %v5524
        %v5527 = vrot.slane %v5523, 4
        %v5529 = vshrl.u32 %v5367, 16
        %v5531 = vrot.slane %v5529, 7
        %v5532 = vshll.u32 %v5367, 16
        %v5534 = vor.u32 %v5531, %v5532
        %v5535 = vsel %vm5383, %v5527, %v5534
        %v5536 = vrot.slane %v5531, 4
        %v5538 = vshrl.u32 %v5368, 16
        %v5540 = vrot.slane %v5538, 7
        %v5541 = vshll.u32 %v5368, 16
        %v5543 = vor.u32 %v5540, %v5541
        %v5544 = vrot.slane %v5540, 4
        %v5546 = vshrl.u32 %v5369, 16
        %v5548 = vrot.slane %v5546, 7
        %v5549 = vshll.u32 %v5369, 16
        %v5551 = vor.u32 %v5548, %v5549
        %v5552 = vsel %vm5383, %v5544, %v5551
        %v5553 = vrot.slane %v5548, 4
        %v5555 = vshrl.u32 %v5370, 16
        %v5557 = vrot.slane %v5555, 7
        %v5558 = vshll.u32 %v5370, 16
        %v5560 = vor.u32 %v5557, %v5558
        %v5561 = vrot.slane %v5557, 4
        %v5563 = vshrl.u32 %v5371, 16
        %v5565 = vrot.slane %v5563, 7
        %v5566 = vshll.u32 %v5371, 16
        %v5568 = vor.u32 %v5565, %v5566
        %v5569 = vsel %vm5383, %v5561, %v5568
        %v5570 = vrot.slane %v5565, 4
        %v5572 = vshrl.u32 %v5372, 16
        %v5574 = vrot.slane %v5572, 7
        %v5575 = vshll.u32 %v5372, 16
        %v5577 = vor.u32 %v5574, %v5575
        %v5578 = vrot.slane %v5574, 4
        %v5580 = vshrl.u32 %v5373, 16
        %v5582 = vrot.slane %v5580, 7
        %v5583 = vshll.u32 %v5373, 16
        %v5585 = vor.u32 %v5582, %v5583
        %v5586 = vsel %vm5383, %v5578, %v5585
        %v5587 = vrot.slane %v5582, 4
        %v5589 = vshrl.u32 %v5374, 16
        %v5591 = vrot.slane %v5589, 7
        %v5592 = vshll.u32 %v5374, 16
        %v5594 = vor.u32 %v5591, %v5592
        %v5595 = vrot.slane %v5591, 4
        %v5597 = vshrl.u32 %v5375, 16
        %v5599 = vrot.slane %v5597, 7
        %v5600 = vshll.u32 %v5375, 16
        %v5602 = vor.u32 %v5599, %v5600
        %v5603 = vsel %vm5383, %v5595, %v5602
        %v5604 = vrot.slane %v5599, 4
        %v5606 = vshrl.u32 %v5376, 16
        %v5608 = vrot.slane %v5606, 7
        %v5609 = vshll.u32 %v5376, 16
        %v5611 = vor.u32 %v5608, %v5609
        %v5612 = vrot.slane %v5608, 4
        %v5614 = vshrl.u32 %v5377, 16
        %v5616 = vrot.slane %v5614, 7
        %v5617 = vshll.u32 %v5377, 16
        %v5619 = vor.u32 %v5616, %v5617
        %v5620 = vsel %vm5383, %v5612, %v5619
        %v5621 = vrot.slane %v5616, 4
        %v5623 = vshrl.u32 %v5378, 16
        %v5625 = vrot.slane %v5623, 7
        %v5626 = vshll.u32 %v5378, 16
        %v5628 = vor.u32 %v5625, %v5626
        %v5629 = vrot.slane %v5625, 4
        %v5631 = vshrl.u32 %v5379, 16
        %v5633 = vrot.slane %v5631, 7
        %v5634 = vshll.u32 %v5379, 16
        %v5636 = vor.u32 %v5633, %v5634
        %v5637 = vsel %vm5383, %v5629, %v5636
        %v5638 = vrot.slane %v5633, 4
        %v5640 = vshrl.u32 %v5380, 16
        %v5642 = vrot.slane %v5640, 7
        %v5643 = vshll.u32 %v5380, 16
        %v5645 = vor.u32 %v5642, %v5643
        %v5646 = vrot.slane %v5642, 4
        %v5648 = vshrl.u32 %v5381, 16
        %v5650 = vrot.slane %v5648, 7
        %v5651 = vshll.u32 %v5381, 16
        %v5653 = vor.u32 %v5650, %v5651
        %v5654 = vsel %vm5383, %v5646, %v5653
        %v5655 = vrot.slane %v5650, 4
        %s5704 = scalar_lea.vmem [#allocation2], 12
        %vm5705 = vcmask 519168
        %vm5706 = vmand %vm5705, %vm5246
        %v5707 = vld [vmem:[%s5704] sm:$0xf]
        %v5708 = vsel %vm5706, %v5390, %v5707
        %5709 = vst [vmem:[%s5704] sm:$0xf] %v5708
        %5710 = vst.msk [vmem:[%s5704 + $0x4] sm:$0xf] %vm5180, %v5399
        %v5711 = vld [vmem:[%s5704 + $0x8] sm:$0x1]
        %v5712 = vsel %vm5191, %v5400, %v5711
        %5713 = vst [vmem:[%s5704 + $0x8] sm:$0x1] %v5712
        %v5714 = vld [vmem:[%s5704 + $0xc] sm:$0xf]
        %v5715 = vsel %vm5706, %v5407, %v5714
        %5716 = vst [vmem:[%s5704 + $0xc] sm:$0xf] %v5715
        %5717 = vst.msk [vmem:[%s5704 + $0x10] sm:$0xf] %vm5180, %v5416
        %v5718 = vld [vmem:[%s5704 + $0x14] sm:$0x1]
        %v5719 = vsel %vm5191, %v5417, %v5718
        %5720 = vst [vmem:[%s5704 + $0x14] sm:$0x1] %v5719
        %v5721 = vld [vmem:[%s5704 + $0x18] sm:$0xf]
        %v5722 = vsel %vm5706, %v5424, %v5721
        %5723 = vst [vmem:[%s5704 + $0x18] sm:$0xf] %v5722
        %5724 = vst.msk [vmem:[%s5704 + $0x1c] sm:$0xf] %vm5180, %v5433
        %v5725 = vld [vmem:[%s5704 + $0x20] sm:$0x1]
        %v5726 = vsel %vm5191, %v5434, %v5725
        %5727 = vst [vmem:[%s5704 + $0x20] sm:$0x1] %v5726
        %v5728 = vld [vmem:[%s5704 + $0x24] sm:$0xf]
        %v5729 = vsel %vm5706, %v5441, %v5728
        %5730 = vst [vmem:[%s5704 + $0x24] sm:$0xf] %v5729
        %5731 = vst.msk [vmem:[%s5704 + $0x28] sm:$0xf] %vm5180, %v5450
        %v5732 = vld [vmem:[%s5704 + $0x2c] sm:$0x1]
        %v5733 = vsel %vm5191, %v5451, %v5732
        %5734 = vst [vmem:[%s5704 + $0x2c] sm:$0x1] %v5733
        %v5735 = vld [vmem:[%s5704 + $0x30] sm:$0xf]
        %v5736 = vsel %vm5706, %v5458, %v5735
        %5737 = vst [vmem:[%s5704 + $0x30] sm:$0xf] %v5736
        %5738 = vst.msk [vmem:[%s5704 + $0x34] sm:$0xf] %vm5180, %v5467
        %v5739 = vld [vmem:[%s5704 + $0x38] sm:$0x1]
        %v5740 = vsel %vm5191, %v5468, %v5739
        %5741 = vst [vmem:[%s5704 + $0x38] sm:$0x1] %v5740
        %v5742 = vld [vmem:[%s5704 + $0x3c] sm:$0xf]
        %v5743 = vsel %vm5706, %v5475, %v5742
        %5744 = vst [vmem:[%s5704 + $0x3c] sm:$0xf] %v5743
        %5745 = vst.msk [vmem:[%s5704 + $0x40] sm:$0xf] %vm5180, %v5484
        %v5746 = vld [vmem:[%s5704 + $0x44] sm:$0x1]
        %v5747 = vsel %vm5191, %v5485, %v5746
        %5748 = vst [vmem:[%s5704 + $0x44] sm:$0x1] %v5747
        %v5749 = vld [vmem:[%s5704 + $0x48] sm:$0xf]
        %v5750 = vsel %vm5706, %v5492, %v5749
        %5751 = vst [vmem:[%s5704 + $0x48] sm:$0xf] %v5750
        %5752 = vst.msk [vmem:[%s5704 + $0x4c] sm:$0xf] %vm5180, %v5501
        %v5753 = vld [vmem:[%s5704 + $0x50] sm:$0x1]
        %v5754 = vsel %vm5191, %v5502, %v5753
        %5755 = vst [vmem:[%s5704 + $0x50] sm:$0x1] %v5754
        %v5756 = vld [vmem:[%s5704 + $0x54] sm:$0xf]
        %v5757 = vsel %vm5706, %v5509, %v5756
        %5758 = vst [vmem:[%s5704 + $0x54] sm:$0xf] %v5757
        %5759 = vst.msk [vmem:[%s5704 + $0x58] sm:$0xf] %vm5180, %v5518
        %v5760 = vld [vmem:[%s5704 + $0x5c] sm:$0x1]
        %v5761 = vsel %vm5191, %v5519, %v5760
        %5762 = vst [vmem:[%s5704 + $0x5c] sm:$0x1] %v5761
        %v5763 = vld [vmem:[%s5704 + $0x60] sm:$0xf]
        %v5764 = vsel %vm5706, %v5526, %v5763
        %5765 = vst [vmem:[%s5704 + $0x60] sm:$0xf] %v5764
        %5766 = vst.msk [vmem:[%s5704 + $0x64] sm:$0xf] %vm5180, %v5535
        %v5767 = vld [vmem:[%s5704 + $0x68] sm:$0x1]
        %v5768 = vsel %vm5191, %v5536, %v5767
        %5769 = vst [vmem:[%s5704 + $0x68] sm:$0x1] %v5768
        %v5770 = vld [vmem:[%s5704 + $0x6c] sm:$0xf]
        %v5771 = vsel %vm5706, %v5543, %v5770
        %5772 = vst [vmem:[%s5704 + $0x6c] sm:$0xf] %v5771
        %5773 = vst.msk [vmem:[%s5704 + $0x70] sm:$0xf] %vm5180, %v5552
        %v5774 = vld [vmem:[%s5704 + $0x74] sm:$0x1]
        %v5775 = vsel %vm5191, %v5553, %v5774
        %5776 = vst [vmem:[%s5704 + $0x74] sm:$0x1] %v5775
        %v5777 = vld [vmem:[%s5704 + $0x78] sm:$0xf]
        %v5778 = vsel %vm5706, %v5560, %v5777
        %5779 = vst [vmem:[%s5704 + $0x78] sm:$0xf] %v5778
        %5780 = vst.msk [vmem:[%s5704 + $0x7c] sm:$0xf] %vm5180, %v5569
        %v5781 = vld [vmem:[%s5704 + $0x80] sm:$0x1]
        %v5782 = vsel %vm5191, %v5570, %v5781
        %5783 = vst [vmem:[%s5704 + $0x80] sm:$0x1] %v5782
        %v5784 = vld [vmem:[%s5704 + $0x84] sm:$0xf]
        %v5785 = vsel %vm5706, %v5577, %v5784
        %5786 = vst [vmem:[%s5704 + $0x84] sm:$0xf] %v5785
        %5787 = vst.msk [vmem:[%s5704 + $0x88] sm:$0xf] %vm5180, %v5586
        %v5788 = vld [vmem:[%s5704 + $0x8c] sm:$0x1]
        %v5789 = vsel %vm5191, %v5587, %v5788
        %5790 = vst [vmem:[%s5704 + $0x8c] sm:$0x1] %v5789
        %v5791 = vld [vmem:[%s5704 + $0x90] sm:$0xf]
        %v5792 = vsel %vm5706, %v5594, %v5791
        %5793 = vst [vmem:[%s5704 + $0x90] sm:$0xf] %v5792
        %5794 = vst.msk [vmem:[%s5704 + $0x94] sm:$0xf] %vm5180, %v5603
        %v5795 = vld [vmem:[%s5704 + $0x98] sm:$0x1]
        %v5796 = vsel %vm5191, %v5604, %v5795
        %5797 = vst [vmem:[%s5704 + $0x98] sm:$0x1] %v5796
        %v5798 = vld [vmem:[%s5704 + $0x9c] sm:$0xf]
        %v5799 = vsel %vm5706, %v5611, %v5798
        %5800 = vst [vmem:[%s5704 + $0x9c] sm:$0xf] %v5799
        %5801 = vst.msk [vmem:[%s5704 + $0xa0] sm:$0xf] %vm5180, %v5620
        %v5802 = vld [vmem:[%s5704 + $0xa4] sm:$0x1]
        %v5803 = vsel %vm5191, %v5621, %v5802
        %5804 = vst [vmem:[%s5704 + $0xa4] sm:$0x1] %v5803
        %v5805 = vld [vmem:[%s5704 + $0xa8] sm:$0xf]
        %v5806 = vsel %vm5706, %v5628, %v5805
        %5807 = vst [vmem:[%s5704 + $0xa8] sm:$0xf] %v5806
        %5808 = vst.msk [vmem:[%s5704 + $0xac] sm:$0xf] %vm5180, %v5637
        %v5809 = vld [vmem:[%s5704 + $0xb0] sm:$0x1]
        %v5810 = vsel %vm5191, %v5638, %v5809
        %5811 = vst [vmem:[%s5704 + $0xb0] sm:$0x1] %v5810
        %v5812 = vld [vmem:[%s5704 + $0xb4] sm:$0xf]
        %v5813 = vsel %vm5706, %v5645, %v5812
        %5814 = vst [vmem:[%s5704 + $0xb4] sm:$0xf] %v5813
        %5815 = vst.msk [vmem:[%s5704 + $0xb8] sm:$0xf] %vm5180, %v5654
        %v5816 = vld [vmem:[%s5704 + $0xbc] sm:$0x1]
        %v5817 = vsel %vm5191, %v5655, %v5816
        %5818 = vst [vmem:[%s5704 + $0xbc] sm:$0x1] %v5817
        %v5819 = vld [vmem:[#allocation2] sm:$0xf]
        %v5820 = vld [vmem:[#allocation2 + $0x4] sm:$0xf]
        %v5821 = vld [vmem:[#allocation2 + $0xc] sm:$0xf]
        %v5822 = vld [vmem:[#allocation2 + $0x10] sm:$0xf]
        %v5823 = vld [vmem:[#allocation2 + $0x18] sm:$0xf]
        %v5824 = vld [vmem:[#allocation2 + $0x1c] sm:$0xf]
        %v5825 = vld [vmem:[#allocation2 + $0x24] sm:$0xf]
        %v5826 = vld [vmem:[#allocation2 + $0x28] sm:$0xf]
        %v5827 = vld [vmem:[#allocation2 + $0x30] sm:$0xf]
        %v5828 = vld [vmem:[#allocation2 + $0x34] sm:$0xf]
        %v5829 = vld [vmem:[#allocation2 + $0x3c] sm:$0xf]
        %v5830 = vld [vmem:[#allocation2 + $0x40] sm:$0xf]
        %v5831 = vld [vmem:[#allocation2 + $0x48] sm:$0xf]
        %v5832 = vld [vmem:[#allocation2 + $0x4c] sm:$0xf]
        %v5833 = vld [vmem:[#allocation2 + $0x54] sm:$0xf]
        %v5834 = vld [vmem:[#allocation2 + $0x58] sm:$0xf]
        %v5835 = vld [vmem:[#allocation2 + $0x60] sm:$0xf]
        %v5836 = vld [vmem:[#allocation2 + $0x64] sm:$0xf]
        %v5837 = vld [vmem:[#allocation2 + $0x6c] sm:$0xf]
        %v5838 = vld [vmem:[#allocation2 + $0x70] sm:$0xf]
        %v5839 = vld [vmem:[#allocation2 + $0x78] sm:$0xf]
        %v5840 = vld [vmem:[#allocation2 + $0x7c] sm:$0xf]
        %v5841 = vld [vmem:[#allocation2 + $0x84] sm:$0xf]
        %v5842 = vld [vmem:[#allocation2 + $0x88] sm:$0xf]
        %v5843 = vld [vmem:[#allocation2 + $0x90] sm:$0xf]
        %v5844 = vld [vmem:[#allocation2 + $0x94] sm:$0xf]
        %v5845 = vld [vmem:[#allocation2 + $0x9c] sm:$0xf]
        %v5846 = vld [vmem:[#allocation2 + $0xa0] sm:$0xf]
        %v5847 = vld [vmem:[#allocation2 + $0xa8] sm:$0xf]
        %v5848 = vld [vmem:[#allocation2 + $0xac] sm:$0xf]
        %v5849 = vld [vmem:[#allocation2 + $0xb4] sm:$0xf]
        %v5850 = vld [vmem:[#allocation2 + $0xb8] sm:$0xf]
        %v5851 = vld [vmem:[#allocation2 + $0xc0] sm:$0xf]
        %v5852 = vld [vmem:[#allocation2 + $0xc4] sm:$0xf]
        %v5853 = vld [vmem:[#allocation2 + $0xcc] sm:$0xf]
        %v5854 = vld [vmem:[#allocation2 + $0xd0] sm:$0xf]
        %v5855 = vunpack.c.l.bf16 %v5819
        %v5856 = vunpack.c.l.bf16 %v5820
        %v5857 = vunpack.c.l.bf16 %v5821
        %v5858 = vunpack.c.l.bf16 %v5822
        %v5859 = vunpack.c.l.bf16 %v5823
        %v5860 = vunpack.c.l.bf16 %v5824
        %v5861 = vunpack.c.l.bf16 %v5825
        %v5862 = vunpack.c.l.bf16 %v5826
        %v5863 = vunpack.c.l.bf16 %v5827
        %v5864 = vunpack.c.l.bf16 %v5828
        %v5865 = vunpack.c.l.bf16 %v5829
        %v5866 = vunpack.c.l.bf16 %v5830
        %v5867 = vunpack.c.l.bf16 %v5831
        %v5868 = vunpack.c.l.bf16 %v5832
        %v5869 = vunpack.c.l.bf16 %v5833
        %v5870 = vunpack.c.l.bf16 %v5834
        %v5871 = vunpack.c.l.bf16 %v5835
        %v5872 = vunpack.c.l.bf16 %v5836
        %v5873 = vunpack.c.l.bf16 %v5837
        %v5874 = vunpack.c.l.bf16 %v5838
        %v5875 = vunpack.c.l.bf16 %v5839
        %v5876 = vunpack.c.l.bf16 %v5840
        %v5877 = vunpack.c.l.bf16 %v5841
        %v5878 = vunpack.c.l.bf16 %v5842
        %v5879 = vunpack.c.l.bf16 %v5843
        %v5880 = vunpack.c.l.bf16 %v5844
        %v5881 = vunpack.c.l.bf16 %v5845
        %v5882 = vunpack.c.l.bf16 %v5846
        %v5883 = vunpack.c.l.bf16 %v5847
        %v5884 = vunpack.c.l.bf16 %v5848
        %v5885 = vunpack.c.l.bf16 %v5849
        %v5886 = vunpack.c.l.bf16 %v5850
        %v5887 = vunpack.c.l.bf16 %v5851
        %v5888 = vunpack.c.l.bf16 %v5852
        %v5889 = vunpack.c.l.bf16 %v5853
        %v5890 = vunpack.c.l.bf16 %v5854
        %v5891 = vld [vmem:[#allocation2 + $0x8] sm:$0x1]
        %v5892 = vld [vmem:[#allocation2 + $0x14] sm:$0x1]
        %v5893 = vld [vmem:[#allocation2 + $0x20] sm:$0x1]
        %v5894 = vld [vmem:[#allocation2 + $0x2c] sm:$0x1]
        %v5895 = vld [vmem:[#allocation2 + $0x38] sm:$0x1]
        %v5896 = vld [vmem:[#allocation2 + $0x44] sm:$0x1]
        %v5897 = vld [vmem:[#allocation2 + $0x50] sm:$0x1]
        %v5898 = vld [vmem:[#allocation2 + $0x5c] sm:$0x1]
        %v5899 = vld [vmem:[#allocation2 + $0x68] sm:$0x1]
        %v5900 = vld [vmem:[#allocation2 + $0x74] sm:$0x1]
        %v5901 = vld [vmem:[#allocation2 + $0x80] sm:$0x1]
        %v5902 = vld [vmem:[#allocation2 + $0x8c] sm:$0x1]
        %v5903 = vld [vmem:[#allocation2 + $0x98] sm:$0x1]
        %v5904 = vld [vmem:[#allocation2 + $0xa4] sm:$0x1]
        %v5905 = vld [vmem:[#allocation2 + $0xb0] sm:$0x1]
        %v5906 = vld [vmem:[#allocation2 + $0xbc] sm:$0x1]
        %v5907 = vld [vmem:[#allocation2 + $0xc8] sm:$0x1]
        %v5908 = vld [vmem:[#allocation2 + $0xd4] sm:$0x1]
        %v5909 = vunpack.c.l.bf16 %v5891
        %v5910 = vunpack.c.l.bf16 %v5892
        %v5911 = vunpack.c.l.bf16 %v5893
        %v5912 = vunpack.c.l.bf16 %v5894
        %v5913 = vunpack.c.l.bf16 %v5895
        %v5914 = vunpack.c.l.bf16 %v5896
        %v5915 = vunpack.c.l.bf16 %v5897
        %v5916 = vunpack.c.l.bf16 %v5898
        %v5917 = vunpack.c.l.bf16 %v5899
        %v5918 = vunpack.c.l.bf16 %v5900
        %v5919 = vunpack.c.l.bf16 %v5901
        %v5920 = vunpack.c.l.bf16 %v5902
        %v5921 = vunpack.c.l.bf16 %v5903
        %v5922 = vunpack.c.l.bf16 %v5904
        %v5923 = vunpack.c.l.bf16 %v5905
        %v5924 = vunpack.c.l.bf16 %v5906
        %v5925 = vunpack.c.l.bf16 %v5907
        %v5926 = vunpack.c.l.bf16 %v5908
        %v5927 = vld [vmem:[#allocation2] sm:$0xe]
        %v5928 = vld [vmem:[#allocation2 + $0xc] sm:$0xe]
        %v5929 = vld [vmem:[#allocation2 + $0x18] sm:$0xe]
        %v5930 = vld [vmem:[#allocation2 + $0x24] sm:$0xe]
        %v5931 = vld [vmem:[#allocation2 + $0x30] sm:$0xe]
        %v5932 = vld [vmem:[#allocation2 + $0x3c] sm:$0xe]
        %v5933 = vld [vmem:[#allocation2 + $0x48] sm:$0xe]
        %v5934 = vld [vmem:[#allocation2 + $0x54] sm:$0xe]
        %v5935 = vld [vmem:[#allocation2 + $0x60] sm:$0xe]
        %v5936 = vld [vmem:[#allocation2 + $0x6c] sm:$0xe]
        %v5937 = vld [vmem:[#allocation2 + $0x78] sm:$0xe]
        %v5938 = vld [vmem:[#allocation2 + $0x84] sm:$0xe]
        %v5939 = vld [vmem:[#allocation2 + $0x90] sm:$0xe]
        %v5940 = vld [vmem:[#allocation2 + $0x9c] sm:$0xe]
        %v5941 = vld [vmem:[#allocation2 + $0xa8] sm:$0xe]
        %v5942 = vld [vmem:[#allocation2 + $0xb4] sm:$0xe]
        %v5943 = vld [vmem:[#allocation2 + $0xc0] sm:$0xe]
        %v5944 = vld [vmem:[#allocation2 + $0xcc] sm:$0xe]
        %v5945 = vunpack.c.l.bf16 %v5927
        %v5946 = vunpack.c.l.bf16 %v5928
        %v5947 = vunpack.c.l.bf16 %v5929
        %v5948 = vunpack.c.l.bf16 %v5930
        %v5949 = vunpack.c.l.bf16 %v5931
        %v5950 = vunpack.c.l.bf16 %v5932
        %v5951 = vunpack.c.l.bf16 %v5933
        %v5952 = vunpack.c.l.bf16 %v5934
        %v5953 = vunpack.c.l.bf16 %v5935
        %v5954 = vunpack.c.l.bf16 %v5936
        %v5955 = vunpack.c.l.bf16 %v5937
        %v5956 = vunpack.c.l.bf16 %v5938
        %v5957 = vunpack.c.l.bf16 %v5939
        %v5958 = vunpack.c.l.bf16 %v5940
        %v5959 = vunpack.c.l.bf16 %v5941
        %v5960 = vunpack.c.l.bf16 %v5942
        %v5961 = vunpack.c.l.bf16 %v5943
        %v5962 = vunpack.c.l.bf16 %v5944
        %v5963 = vmul.f32 %v5855, 2.0
        %v5964 = vmul.f32 %v5856, 2.0
        %v5965 = vmul.f32 %v5909, 2.0
        %v5966 = vmul.f32 %v5857, 2.0
        %v5967 = vmul.f32 %v5858, 2.0
        %v5968 = vmul.f32 %v5910, 2.0
        %v5969 = vmul.f32 %v5859, 2.0
        %v5970 = vmul.f32 %v5860, 2.0
        %v5971 = vmul.f32 %v5911, 2.0
        %v5972 = vmul.f32 %v5861, 2.0
        %v5973 = vmul.f32 %v5862, 2.0
        %v5974 = vmul.f32 %v5912, 2.0
        %v5975 = vmul.f32 %v5863, 2.0
        %v5976 = vmul.f32 %v5864, 2.0
        %v5977 = vmul.f32 %v5913, 2.0
        %v5978 = vmul.f32 %v5865, 2.0
        %v5979 = vmul.f32 %v5866, 2.0
        %v5980 = vmul.f32 %v5914, 2.0
        %v5981 = vmul.f32 %v5867, 2.0
        %v5982 = vmul.f32 %v5868, 2.0
        %v5983 = vmul.f32 %v5915, 2.0
        %v5984 = vmul.f32 %v5869, 2.0
        %v5985 = vmul.f32 %v5870, 2.0
        %v5986 = vmul.f32 %v5916, 2.0
        %v5987 = vmul.f32 %v5871, 2.0
        %v5988 = vmul.f32 %v5872, 2.0
        %v5989 = vmul.f32 %v5917, 2.0
        %v5990 = vmul.f32 %v5873, 2.0
        %v5991 = vmul.f32 %v5874, 2.0
        %v5992 = vmul.f32 %v5918, 2.0
        %v5993 = vmul.f32 %v5875, 2.0
        %v5994 = vmul.f32 %v5876, 2.0
        %v5995 = vmul.f32 %v5919, 2.0
        %v5996 = vmul.f32 %v5877, 2.0
        %v5997 = vmul.f32 %v5878, 2.0
        %v5998 = vmul.f32 %v5920, 2.0
        %v5999 = vmul.f32 %v5879, 2.0
        %v6000 = vmul.f32 %v5880, 2.0
        %v6001 = vmul.f32 %v5921, 2.0
        %v6002 = vmul.f32 %v5881, 2.0
        %v6003 = vmul.f32 %v5882, 2.0
        %v6004 = vmul.f32 %v5922, 2.0
        %v6005 = vmul.f32 %v5883, 2.0
        %v6006 = vmul.f32 %v5884, 2.0
        %v6007 = vmul.f32 %v5923, 2.0
        %v6008 = vmul.f32 %v5885, 2.0
        %v6009 = vmul.f32 %v5886, 2.0
        %v6010 = vmul.f32 %v5924, 2.0
        %v6011 = vmul.f32 %v5887, 2.0
        %v6012 = vmul.f32 %v5888, 2.0
        %v6013 = vmul.f32 %v5925, 2.0
        %v6014 = vmul.f32 %v5889, 2.0
        %v6015 = vmul.f32 %v5890, 2.0
        %v6016 = vmul.f32 %v5926, 2.0
        %vm6071 = vcmask 1046528
        %v6072 = vrot.slane %v5963, 1
        %v6073 = vrot.slane %v5964, 1
        %v6074 = vsel %vm6071, %v6072, %v6073
        %v6075 = vrot.slane %v5965, 1
        %v6076 = vsel %vm6071, %v6073, %v6075
        %v6077 = vrot.slane %v5966, 1
        %v6078 = vrot.slane %v5967, 1
        %v6079 = vsel %vm6071, %v6077, %v6078
        %v6080 = vrot.slane %v5968, 1
        %v6081 = vsel %vm6071, %v6078, %v6080
        %v6082 = vrot.slane %v5969, 1
        %v6083 = vrot.slane %v5970, 1
        %v6084 = vsel %vm6071, %v6082, %v6083
        %v6085 = vrot.slane %v5971, 1
        %v6086 = vsel %vm6071, %v6083, %v6085
        %v6087 = vrot.slane %v5972, 1
        %v6088 = vrot.slane %v5973, 1
        %v6089 = vsel %vm6071, %v6087, %v6088
        %v6090 = vrot.slane %v5974, 1
        %v6091 = vsel %vm6071, %v6088, %v6090
        %v6092 = vrot.slane %v5975, 1
        %v6093 = vrot.slane %v5976, 1
        %v6094 = vsel %vm6071, %v6092, %v6093
        %v6095 = vrot.slane %v5977, 1
        %v6096 = vsel %vm6071, %v6093, %v6095
        %v6097 = vrot.slane %v5978, 1
        %v6098 = vrot.slane %v5979, 1
        %v6099 = vsel %vm6071, %v6097, %v6098
        %v6100 = vrot.slane %v5980, 1
        %v6101 = vsel %vm6071, %v6098, %v6100
        %v6102 = vrot.slane %v5981, 1
        %v6103 = vrot.slane %v5982, 1
        %v6104 = vsel %vm6071, %v6102, %v6103
        %v6105 = vrot.slane %v5983, 1
        %v6106 = vsel %vm6071, %v6103, %v6105
        %v6107 = vrot.slane %v5984, 1
        %v6108 = vrot.slane %v5985, 1
        %v6109 = vsel %vm6071, %v6107, %v6108
        %v6110 = vrot.slane %v5986, 1
        %v6111 = vsel %vm6071, %v6108, %v6110
        %v6112 = vrot.slane %v5987, 1
        %v6113 = vrot.slane %v5988, 1
        %v6114 = vsel %vm6071, %v6112, %v6113
        %v6115 = vrot.slane %v5989, 1
        %v6116 = vsel %vm6071, %v6113, %v6115
        %v6117 = vrot.slane %v5990, 1
        %v6118 = vrot.slane %v5991, 1
        %v6119 = vsel %vm6071, %v6117, %v6118
        %v6120 = vrot.slane %v5992, 1
        %v6121 = vsel %vm6071, %v6118, %v6120
        %v6122 = vrot.slane %v5993, 1
        %v6123 = vrot.slane %v5994, 1
        %v6124 = vsel %vm6071, %v6122, %v6123
        %v6125 = vrot.slane %v5995, 1
        %v6126 = vsel %vm6071, %v6123, %v6125
        %v6127 = vrot.slane %v5996, 1
        %v6128 = vrot.slane %v5997, 1
        %v6129 = vsel %vm6071, %v6127, %v6128
        %v6130 = vrot.slane %v5998, 1
        %v6131 = vsel %vm6071, %v6128, %v6130
        %v6132 = vrot.slane %v5999, 1
        %v6133 = vrot.slane %v6000, 1
        %v6134 = vsel %vm6071, %v6132, %v6133
        %v6135 = vrot.slane %v6001, 1
        %v6136 = vsel %vm6071, %v6133, %v6135
        %v6137 = vrot.slane %v6002, 1
        %v6138 = vrot.slane %v6003, 1
        %v6139 = vsel %vm6071, %v6137, %v6138
        %v6140 = vrot.slane %v6004, 1
        %v6141 = vsel %vm6071, %v6138, %v6140
        %v6142 = vrot.slane %v6005, 1
        %v6143 = vrot.slane %v6006, 1
        %v6144 = vsel %vm6071, %v6142, %v6143
        %v6145 = vrot.slane %v6007, 1
        %v6146 = vsel %vm6071, %v6143, %v6145
        %v6147 = vrot.slane %v6008, 1
        %v6148 = vrot.slane %v6009, 1
        %v6149 = vsel %vm6071, %v6147, %v6148
        %v6150 = vrot.slane %v6010, 1
        %v6151 = vsel %vm6071, %v6148, %v6150
        %v6152 = vrot.slane %v6011, 1
        %v6153 = vrot.slane %v6012, 1
        %v6154 = vsel %vm6071, %v6152, %v6153
        %v6155 = vrot.slane %v6013, 1
        %v6156 = vsel %vm6071, %v6153, %v6155
        %v6157 = vrot.slane %v6014, 1
        %v6158 = vrot.slane %v6015, 1
        %v6159 = vsel %vm6071, %v6157, %v6158
        %v6160 = vrot.slane %v6016, 1
        %v6161 = vsel %vm6071, %v6158, %v6160
        %v6198 = vadd.f32 %v5855, %v6074
        %v6199 = vadd.f32 %v5856, %v6076
        %v6200 = vadd.f32 %v5857, %v6079
        %v6201 = vadd.f32 %v5858, %v6081
        %v6202 = vadd.f32 %v5859, %v6084
        %v6203 = vadd.f32 %v5860, %v6086
        %v6204 = vadd.f32 %v5861, %v6089
        %v6205 = vadd.f32 %v5862, %v6091
        %v6206 = vadd.f32 %v5863, %v6094
        %v6207 = vadd.f32 %v5864, %v6096
        %v6208 = vadd.f32 %v5865, %v6099
        %v6209 = vadd.f32 %v5866, %v6101
        %v6210 = vadd.f32 %v5867, %v6104
        %v6211 = vadd.f32 %v5868, %v6106
        %v6212 = vadd.f32 %v5869, %v6109
        %v6213 = vadd.f32 %v5870, %v6111
        %v6214 = vadd.f32 %v5871, %v6114
        %v6215 = vadd.f32 %v5872, %v6116
        %v6216 = vadd.f32 %v5873, %v6119
        %v6217 = vadd.f32 %v5874, %v6121
        %v6218 = vadd.f32 %v5875, %v6124
        %v6219 = vadd.f32 %v5876, %v6126
        %v6220 = vadd.f32 %v5877, %v6129
        %v6221 = vadd.f32 %v5878, %v6131
        %v6222 = vadd.f32 %v5879, %v6134
        %v6223 = vadd.f32 %v5880, %v6136
        %v6224 = vadd.f32 %v5881, %v6139
        %v6225 = vadd.f32 %v5882, %v6141
        %v6226 = vadd.f32 %v5883, %v6144
        %v6227 = vadd.f32 %v5884, %v6146
        %v6228 = vadd.f32 %v5885, %v6149
        %v6229 = vadd.f32 %v5886, %v6151
        %v6230 = vadd.f32 %v5887, %v6154
        %v6231 = vadd.f32 %v5888, %v6156
        %v6232 = vadd.f32 %v5889, %v6159
        %v6233 = vadd.f32 %v5890, %v6161
        %vm6288 = vcmask 1045504
        %v6289 = vrot.slane %v5945, 2
        %v6290 = vrot.slane %v5856, 2
        %v6291 = vsel %vm6288, %v6289, %v6290
        %v6292 = vrot.slane %v5909, 2
        %v6293 = vsel %vm6288, %v6290, %v6292
        %v6294 = vrot.slane %v5946, 2
        %v6295 = vrot.slane %v5858, 2
        %v6296 = vsel %vm6288, %v6294, %v6295
        %v6297 = vrot.slane %v5910, 2
        %v6298 = vsel %vm6288, %v6295, %v6297
        %v6299 = vrot.slane %v5947, 2
        %v6300 = vrot.slane %v5860, 2
        %v6301 = vsel %vm6288, %v6299, %v6300
        %v6302 = vrot.slane %v5911, 2
        %v6303 = vsel %vm6288, %v6300, %v6302
        %v6304 = vrot.slane %v5948, 2
        %v6305 = vrot.slane %v5862, 2
        %v6306 = vsel %vm6288, %v6304, %v6305
        %v6307 = vrot.slane %v5912, 2
        %v6308 = vsel %vm6288, %v6305, %v6307
        %v6309 = vrot.slane %v5949, 2
        %v6310 = vrot.slane %v5864, 2
        %v6311 = vsel %vm6288, %v6309, %v6310
        %v6312 = vrot.slane %v5913, 2
        %v6313 = vsel %vm6288, %v6310, %v6312
        %v6314 = vrot.slane %v5950, 2
        %v6315 = vrot.slane %v5866, 2
        %v6316 = vsel %vm6288, %v6314, %v6315
        %v6317 = vrot.slane %v5914, 2
        %v6318 = vsel %vm6288, %v6315, %v6317
        %v6319 = vrot.slane %v5951, 2
        %v6320 = vrot.slane %v5868, 2
        %v6321 = vsel %vm6288, %v6319, %v6320
        %v6322 = vrot.slane %v5915, 2
        %v6323 = vsel %vm6288, %v6320, %v6322
        %v6324 = vrot.slane %v5952, 2
        %v6325 = vrot.slane %v5870, 2
        %v6326 = vsel %vm6288, %v6324, %v6325
        %v6327 = vrot.slane %v5916, 2
        %v6328 = vsel %vm6288, %v6325, %v6327
        %v6329 = vrot.slane %v5953, 2
        %v6330 = vrot.slane %v5872, 2
        %v6331 = vsel %vm6288, %v6329, %v6330
        %v6332 = vrot.slane %v5917, 2
        %v6333 = vsel %vm6288, %v6330, %v6332
        %v6334 = vrot.slane %v5954, 2
        %v6335 = vrot.slane %v5874, 2
        %v6336 = vsel %vm6288, %v6334, %v6335
        %v6337 = vrot.slane %v5918, 2
        %v6338 = vsel %vm6288, %v6335, %v6337
        %v6339 = vrot.slane %v5955, 2
        %v6340 = vrot.slane %v5876, 2
        %v6341 = vsel %vm6288, %v6339, %v6340
        %v6342 = vrot.slane %v5919, 2
        %v6343 = vsel %vm6288, %v6340, %v6342
        %v6344 = vrot.slane %v5956, 2
        %v6345 = vrot.slane %v5878, 2
        %v6346 = vsel %vm6288, %v6344, %v6345
        %v6347 = vrot.slane %v5920, 2
        %v6348 = vsel %vm6288, %v6345, %v6347
        %v6349 = vrot.slane %v5957, 2
        %v6350 = vrot.slane %v5880, 2
        %v6351 = vsel %vm6288, %v6349, %v6350
        %v6352 = vrot.slane %v5921, 2
        %v6353 = vsel %vm6288, %v6350, %v6352
        %v6354 = vrot.slane %v5958, 2
        %v6355 = vrot.slane %v5882, 2
        %v6356 = vsel %vm6288, %v6354, %v6355
        %v6357 = vrot.slane %v5922, 2
        %v6358 = vsel %vm6288, %v6355, %v6357
        %v6359 = vrot.slane %v5959, 2
        %v6360 = vrot.slane %v5884, 2
        %v6361 = vsel %vm6288, %v6359, %v6360
        %v6362 = vrot.slane %v5923, 2
        %v6363 = vsel %vm6288, %v6360, %v6362
        %v6364 = vrot.slane %v5960, 2
        %v6365 = vrot.slane %v5886, 2
        %v6366 = vsel %vm6288, %v6364, %v6365
        %v6367 = vrot.slane %v5924, 2
        %v6368 = vsel %vm6288, %v6365, %v6367
        %v6369 = vrot.slane %v5961, 2
        %v6370 = vrot.slane %v5888, 2
        %v6371 = vsel %vm6288, %v6369, %v6370
        %v6372 = vrot.slane %v5925, 2
        %v6373 = vsel %vm6288, %v6370, %v6372
        %v6374 = vrot.slane %v5962, 2
        %v6375 = vrot.slane %v5890, 2
        %v6376 = vsel %vm6288, %v6374, %v6375
        %v6377 = vrot.slane %v5926, 2
        %v6378 = vsel %vm6288, %v6375, %v6377
        %v6415 = vadd.f32 %v6198, %v6291
        %v6416 = vadd.f32 %v6199, %v6293
        %v6417 = vadd.f32 %v6200, %v6296
        %v6418 = vadd.f32 %v6201, %v6298
        %v6419 = vadd.f32 %v6202, %v6301
        %v6420 = vadd.f32 %v6203, %v6303
        %v6421 = vadd.f32 %v6204, %v6306
        %v6422 = vadd.f32 %v6205, %v6308
        %v6423 = vadd.f32 %v6206, %v6311
        %v6424 = vadd.f32 %v6207, %v6313
        %v6425 = vadd.f32 %v6208, %v6316
        %v6426 = vadd.f32 %v6209, %v6318
        %v6427 = vadd.f32 %v6210, %v6321
        %v6428 = vadd.f32 %v6211, %v6323
        %v6429 = vadd.f32 %v6212, %v6326
        %v6430 = vadd.f32 %v6213, %v6328
        %v6431 = vadd.f32 %v6214, %v6331
        %v6432 = vadd.f32 %v6215, %v6333
        %v6433 = vadd.f32 %v6216, %v6336
        %v6434 = vadd.f32 %v6217, %v6338
        %v6435 = vadd.f32 %v6218, %v6341
        %v6436 = vadd.f32 %v6219, %v6343
        %v6437 = vadd.f32 %v6220, %v6346
        %v6438 = vadd.f32 %v6221, %v6348
        %v6439 = vadd.f32 %v6222, %v6351
        %v6440 = vadd.f32 %v6223, %v6353
        %v6441 = vadd.f32 %v6224, %v6356
        %v6442 = vadd.f32 %v6225, %v6358
        %v6443 = vadd.f32 %v6226, %v6361
        %v6444 = vadd.f32 %v6227, %v6363
        %v6445 = vadd.f32 %v6228, %v6366
        %v6446 = vadd.f32 %v6229, %v6368
        %v6447 = vadd.f32 %v6230, %v6371
        %v6448 = vadd.f32 %v6231, %v6373
        %v6449 = vadd.f32 %v6232, %v6376
        %v6450 = vadd.f32 %v6233, %v6378
        %v6451 = vmul.f32 %v6417, 2.0
        %v6452 = vmul.f32 %v6418, 2.0
        %v6453 = vmul.f32 %v6419, 2.0
        %v6454 = vmul.f32 %v6420, 2.0
        %v6455 = vmul.f32 %v6421, 2.0
        %v6456 = vmul.f32 %v6422, 2.0
        %v6457 = vmul.f32 %v6423, 2.0
        %v6458 = vmul.f32 %v6424, 2.0
        %v6459 = vmul.f32 %v6425, 2.0
        %v6460 = vmul.f32 %v6426, 2.0
        %v6461 = vmul.f32 %v6427, 2.0
        %v6462 = vmul.f32 %v6428, 2.0
        %v6463 = vmul.f32 %v6429, 2.0
        %v6464 = vmul.f32 %v6430, 2.0
        %v6465 = vmul.f32 %v6431, 2.0
        %v6466 = vmul.f32 %v6432, 2.0
        %v6467 = vmul.f32 %v6433, 2.0
        %v6468 = vmul.f32 %v6434, 2.0
        %v6469 = vmul.f32 %v6435, 2.0
        %v6470 = vmul.f32 %v6436, 2.0
        %v6471 = vmul.f32 %v6437, 2.0
        %v6472 = vmul.f32 %v6438, 2.0
        %v6473 = vmul.f32 %v6439, 2.0
        %v6474 = vmul.f32 %v6440, 2.0
        %v6475 = vmul.f32 %v6441, 2.0
        %v6476 = vmul.f32 %v6442, 2.0
        %v6477 = vmul.f32 %v6443, 2.0
        %v6478 = vmul.f32 %v6444, 2.0
        %v6479 = vmul.f32 %v6445, 2.0
        %v6480 = vmul.f32 %v6446, 2.0
        %v6481 = vmul.f32 %v6447, 2.0
        %v6482 = vmul.f32 %v6448, 2.0
        %v6483 = vadd.f32 %v6415, %v6451
        %v6484 = vadd.f32 %v6416, %v6452
        %v6485 = vadd.f32 %v6417, %v6453
        %v6486 = vadd.f32 %v6418, %v6454
        %v6487 = vadd.f32 %v6419, %v6455
        %v6488 = vadd.f32 %v6420, %v6456
        %v6489 = vadd.f32 %v6421, %v6457
        %v6490 = vadd.f32 %v6422, %v6458
        %v6491 = vadd.f32 %v6423, %v6459
        %v6492 = vadd.f32 %v6424, %v6460
        %v6493 = vadd.f32 %v6425, %v6461
        %v6494 = vadd.f32 %v6426, %v6462
        %v6495 = vadd.f32 %v6427, %v6463
        %v6496 = vadd.f32 %v6428, %v6464
        %v6497 = vadd.f32 %v6429, %v6465
        %v6498 = vadd.f32 %v6430, %v6466
        %v6499 = vadd.f32 %v6431, %v6467
        %v6500 = vadd.f32 %v6432, %v6468
        %v6501 = vadd.f32 %v6433, %v6469
        %v6502 = vadd.f32 %v6434, %v6470
        %v6503 = vadd.f32 %v6435, %v6471
        %v6504 = vadd.f32 %v6436, %v6472
        %v6505 = vadd.f32 %v6437, %v6473
        %v6506 = vadd.f32 %v6438, %v6474
        %v6507 = vadd.f32 %v6439, %v6475
        %v6508 = vadd.f32 %v6440, %v6476
        %v6509 = vadd.f32 %v6441, %v6477
        %v6510 = vadd.f32 %v6442, %v6478
        %v6511 = vadd.f32 %v6443, %v6479
        %v6512 = vadd.f32 %v6444, %v6480
        %v6513 = vadd.f32 %v6445, %v6481
        %v6514 = vadd.f32 %v6446, %v6482
        %v6515 = vadd.f32 %v6483, %v6419
        %v6516 = vadd.f32 %v6484, %v6420
        %v6517 = vadd.f32 %v6485, %v6421
        %v6518 = vadd.f32 %v6486, %v6422
        %v6519 = vadd.f32 %v6487, %v6423
        %v6520 = vadd.f32 %v6488, %v6424
        %v6521 = vadd.f32 %v6489, %v6425
        %v6522 = vadd.f32 %v6490, %v6426
        %v6523 = vadd.f32 %v6491, %v6427
        %v6524 = vadd.f32 %v6492, %v6428
        %v6525 = vadd.f32 %v6493, %v6429
        %v6526 = vadd.f32 %v6494, %v6430
        %v6527 = vadd.f32 %v6495, %v6431
        %v6528 = vadd.f32 %v6496, %v6432
        %v6529 = vadd.f32 %v6497, %v6433
        %v6530 = vadd.f32 %v6498, %v6434
        %v6531 = vadd.f32 %v6499, %v6435
        %v6532 = vadd.f32 %v6500, %v6436
        %v6533 = vadd.f32 %v6501, %v6437
        %v6534 = vadd.f32 %v6502, %v6438
        %v6535 = vadd.f32 %v6503, %v6439
        %v6536 = vadd.f32 %v6504, %v6440
        %v6537 = vadd.f32 %v6505, %v6441
        %v6538 = vadd.f32 %v6506, %v6442
        %v6539 = vadd.f32 %v6507, %v6443
        %v6540 = vadd.f32 %v6508, %v6444
        %v6541 = vadd.f32 %v6509, %v6445
        %v6542 = vadd.f32 %v6510, %v6446
        %v6543 = vadd.f32 %v6511, %v6447
        %v6544 = vadd.f32 %v6512, %v6448
        %v6545 = vadd.f32 %v6513, %v6449
        %v6546 = vadd.f32 %v6514, %v6450
        %6547 = vst.msk [vmem:[#allocation3] sm:$0xf] %vm5180, 0
        %6548 = vst.msk [vmem:[#allocation3 + $0x4] sm:$0xf] %vm5180, 0
        %6549 = vst.msk [vmem:[#allocation3 + $0x8] sm:$0x1] %vm5183, 0
        %s6550 = scalar_lea.vmem [#allocation3], 204
        %6551 = vst.msk [vmem:[%s6550] sm:$0xf] %vm5180, 0
        %6552 = vst.msk [vmem:[%s6550 + $0x4] sm:$0xf] %vm5180, 0
        %6553 = vst.msk [vmem:[%s6550 + $0x8] sm:$0x1] %vm5183, 0
        %v6554 = vld [vmem:[#allocation3] sm:$0x1]
        %v6555 = vsel %vm5191, 0, %v6554
        %6556 = vst [vmem:[#allocation3] sm:$0x1] %v6555
        %v6557 = vld [vmem:[#allocation3 + $0xc] sm:$0x1]
        %v6558 = vsel %vm5191, 0, %v6557
        %6559 = vst [vmem:[#allocation3 + $0xc] sm:$0x1] %v6558
        %v6560 = vld [vmem:[#allocation3 + $0x18] sm:$0x1]
        %v6561 = vsel %vm5191, 0, %v6560
        %6562 = vst [vmem:[#allocation3 + $0x18] sm:$0x1] %v6561
        %v6563 = vld [vmem:[#allocation3 + $0x24] sm:$0x1]
        %v6564 = vsel %vm5191, 0, %v6563
        %6565 = vst [vmem:[#allocation3 + $0x24] sm:$0x1] %v6564
        %v6566 = vld [vmem:[#allocation3 + $0x30] sm:$0x1]
        %v6567 = vsel %vm5191, 0, %v6566
        %6568 = vst [vmem:[#allocation3 + $0x30] sm:$0x1] %v6567
        %v6569 = vld [vmem:[#allocation3 + $0x3c] sm:$0x1]
        %v6570 = vsel %vm5191, 0, %v6569
        %6571 = vst [vmem:[#allocation3 + $0x3c] sm:$0x1] %v6570
        %v6572 = vld [vmem:[#allocation3 + $0x48] sm:$0x1]
        %v6573 = vsel %vm5191, 0, %v6572
        %6574 = vst [vmem:[#allocation3 + $0x48] sm:$0x1] %v6573
        %v6575 = vld [vmem:[#allocation3 + $0x54] sm:$0x1]
        %v6576 = vsel %vm5191, 0, %v6575
        %6577 = vst [vmem:[#allocation3 + $0x54] sm:$0x1] %v6576
        %v6578 = vld [vmem:[#allocation3 + $0x60] sm:$0x1]
        %v6579 = vsel %vm5191, 0, %v6578
        %6580 = vst [vmem:[#allocation3 + $0x60] sm:$0x1] %v6579
        %v6581 = vld [vmem:[#allocation3 + $0x6c] sm:$0x1]
        %v6582 = vsel %vm5191, 0, %v6581
        %6583 = vst [vmem:[#allocation3 + $0x6c] sm:$0x1] %v6582
        %v6584 = vld [vmem:[#allocation3 + $0x78] sm:$0x1]
        %v6585 = vsel %vm5191, 0, %v6584
        %6586 = vst [vmem:[#allocation3 + $0x78] sm:$0x1] %v6585
        %v6587 = vld [vmem:[#allocation3 + $0x84] sm:$0x1]
        %v6588 = vsel %vm5191, 0, %v6587
        %6589 = vst [vmem:[#allocation3 + $0x84] sm:$0x1] %v6588
        %v6590 = vld [vmem:[#allocation3 + $0x90] sm:$0x1]
        %v6591 = vsel %vm5191, 0, %v6590
        %6592 = vst [vmem:[#allocation3 + $0x90] sm:$0x1] %v6591
        %v6593 = vld [vmem:[#allocation3 + $0x9c] sm:$0x1]
        %v6594 = vsel %vm5191, 0, %v6593
        %6595 = vst [vmem:[#allocation3 + $0x9c] sm:$0x1] %v6594
        %v6596 = vld [vmem:[#allocation3 + $0xa8] sm:$0x1]
        %v6597 = vsel %vm5191, 0, %v6596
        %6598 = vst [vmem:[#allocation3 + $0xa8] sm:$0x1] %v6597
        %v6599 = vld [vmem:[#allocation3 + $0xb4] sm:$0x1]
        %v6600 = vsel %vm5191, 0, %v6599
        %6601 = vst [vmem:[#allocation3 + $0xb4] sm:$0x1] %v6600
        %v6602 = vld [vmem:[#allocation3 + $0xc0] sm:$0x1]
        %v6603 = vsel %vm5191, 0, %v6602
        %6604 = vst [vmem:[#allocation3 + $0xc0] sm:$0x1] %v6603
        %v6605 = vld [vmem:[#allocation3 + $0xcc] sm:$0x1]
        %v6606 = vsel %vm5191, 0, %v6605
        %6607 = vst [vmem:[#allocation3 + $0xcc] sm:$0x1] %v6606
        %v6608 = vld [vmem:[#allocation3 + $0x8] sm:$0x1]
        %v6609 = vsel %vm5247, 0, %v6608
        %6610 = vst [vmem:[#allocation3 + $0x8] sm:$0x1] %v6609
        %v6611 = vld [vmem:[#allocation3 + $0x14] sm:$0x1]
        %v6612 = vsel %vm5247, 0, %v6611
        %6613 = vst [vmem:[#allocation3 + $0x14] sm:$0x1] %v6612
        %v6614 = vld [vmem:[#allocation3 + $0x20] sm:$0x1]
        %v6615 = vsel %vm5247, 0, %v6614
        %6616 = vst [vmem:[#allocation3 + $0x20] sm:$0x1] %v6615
        %v6617 = vld [vmem:[#allocation3 + $0x2c] sm:$0x1]
        %v6618 = vsel %vm5247, 0, %v6617
        %6619 = vst [vmem:[#allocation3 + $0x2c] sm:$0x1] %v6618
        %v6620 = vld [vmem:[#allocation3 + $0x38] sm:$0x1]
        %v6621 = vsel %vm5247, 0, %v6620
        %6622 = vst [vmem:[#allocation3 + $0x38] sm:$0x1] %v6621
        %v6623 = vld [vmem:[#allocation3 + $0x44] sm:$0x1]
        %v6624 = vsel %vm5247, 0, %v6623
        %6625 = vst [vmem:[#allocation3 + $0x44] sm:$0x1] %v6624
        %v6626 = vld [vmem:[#allocation3 + $0x50] sm:$0x1]
        %v6627 = vsel %vm5247, 0, %v6626
        %6628 = vst [vmem:[#allocation3 + $0x50] sm:$0x1] %v6627
        %v6629 = vld [vmem:[#allocation3 + $0x5c] sm:$0x1]
        %v6630 = vsel %vm5247, 0, %v6629
        %6631 = vst [vmem:[#allocation3 + $0x5c] sm:$0x1] %v6630
        %v6632 = vld [vmem:[#allocation3 + $0x68] sm:$0x1]
        %v6633 = vsel %vm5247, 0, %v6632
        %6634 = vst [vmem:[#allocation3 + $0x68] sm:$0x1] %v6633
        %v6635 = vld [vmem:[#allocation3 + $0x74] sm:$0x1]
        %v6636 = vsel %vm5247, 0, %v6635
        %6637 = vst [vmem:[#allocation3 + $0x74] sm:$0x1] %v6636
        %v6638 = vld [vmem:[#allocation3 + $0x80] sm:$0x1]
        %v6639 = vsel %vm5247, 0, %v6638
        %6640 = vst [vmem:[#allocation3 + $0x80] sm:$0x1] %v6639
        %v6641 = vld [vmem:[#allocation3 + $0x8c] sm:$0x1]
        %v6642 = vsel %vm5247, 0, %v6641
        %6643 = vst [vmem:[#allocation3 + $0x8c] sm:$0x1] %v6642
        %v6644 = vld [vmem:[#allocation3 + $0x98] sm:$0x1]
        %v6645 = vsel %vm5247, 0, %v6644
        %6646 = vst [vmem:[#allocation3 + $0x98] sm:$0x1] %v6645
        %v6647 = vld [vmem:[#allocation3 + $0xa4] sm:$0x1]
        %v6648 = vsel %vm5247, 0, %v6647
        %6649 = vst [vmem:[#allocation3 + $0xa4] sm:$0x1] %v6648
        %v6650 = vld [vmem:[#allocation3 + $0xb0] sm:$0x1]
        %v6651 = vsel %vm5247, 0, %v6650
        %6652 = vst [vmem:[#allocation3 + $0xb0] sm:$0x1] %v6651
        %v6653 = vld [vmem:[#allocation3 + $0xbc] sm:$0x1]
        %v6654 = vsel %vm5247, 0, %v6653
        %6655 = vst [vmem:[#allocation3 + $0xbc] sm:$0x1] %v6654
        %v6656 = vld [vmem:[#allocation3 + $0xc8] sm:$0x1]
        %v6657 = vsel %vm5247, 0, %v6656
        %6658 = vst [vmem:[#allocation3 + $0xc8] sm:$0x1] %v6657
        %v6659 = vld [vmem:[#allocation3 + $0xd4] sm:$0x1]
        %v6660 = vsel %vm5247, 0, %v6659
        %6661 = vst [vmem:[#allocation3 + $0xd4] sm:$0x1] %v6660
        %v6662 = vpack.c.bf16 %v6516, %v6515
        %v6663 = vpack.c.bf16 %v6518, %v6517
        %v6664 = vpack.c.bf16 %v6520, %v6519
        %v6665 = vpack.c.bf16 %v6522, %v6521
        %v6666 = vpack.c.bf16 %v6524, %v6523
        %v6667 = vpack.c.bf16 %v6526, %v6525
        %v6668 = vpack.c.bf16 %v6528, %v6527
        %v6669 = vpack.c.bf16 %v6530, %v6529
        %v6670 = vpack.c.bf16 %v6532, %v6531
        %v6671 = vpack.c.bf16 %v6534, %v6533
        %v6672 = vpack.c.bf16 %v6536, %v6535
        %v6673 = vpack.c.bf16 %v6538, %v6537
        %v6674 = vpack.c.bf16 %v6540, %v6539
        %v6675 = vpack.c.bf16 %v6542, %v6541
        %v6676 = vpack.c.bf16 %v6544, %v6543
        %v6677 = vpack.c.bf16 %v6546, %v6545
        %v6694 = vunpack.c.l.b16 %v6662
        %v6695 = vunpack.c.h.b16 %v6662
        %v6696 = vunpack.c.l.b16 %v6663
        %v6697 = vunpack.c.h.b16 %v6663
        %v6698 = vunpack.c.l.b16 %v6664
        %v6699 = vunpack.c.h.b16 %v6664
        %v6700 = vunpack.c.l.b16 %v6665
        %v6701 = vunpack.c.h.b16 %v6665
        %v6702 = vunpack.c.l.b16 %v6666
        %v6703 = vunpack.c.h.b16 %v6666
        %v6704 = vunpack.c.l.b16 %v6667
        %v6705 = vunpack.c.h.b16 %v6667
        %v6706 = vunpack.c.l.b16 %v6668
        %v6707 = vunpack.c.h.b16 %v6668
        %v6708 = vunpack.c.l.b16 %v6669
        %v6709 = vunpack.c.h.b16 %v6669
        %v6710 = vunpack.c.l.b16 %v6670
        %v6711 = vunpack.c.h.b16 %v6670
        %v6712 = vunpack.c.l.b16 %v6671
        %v6713 = vunpack.c.h.b16 %v6671
        %v6714 = vunpack.c.l.b16 %v6672
        %v6715 = vunpack.c.h.b16 %v6672
        %v6716 = vunpack.c.l.b16 %v6673
        %v6717 = vunpack.c.h.b16 %v6673
        %v6718 = vunpack.c.l.b16 %v6674
        %v6719 = vunpack.c.h.b16 %v6674
        %v6720 = vunpack.c.l.b16 %v6675
        %v6721 = vunpack.c.h.b16 %v6675
        %v6722 = vunpack.c.l.b16 %v6676
        %v6723 = vunpack.c.h.b16 %v6676
        %v6724 = vunpack.c.l.b16 %v6677
        %v6725 = vunpack.c.h.b16 %v6677
        %v6726 = vpack.c.b16 %v6694, %v6694
        %v6727 = vpack.c.b16 %v6695, %v6695
        %v6728 = vpack.c.b16 %v6696, %v6696
        %v6729 = vpack.c.b16 %v6697, %v6697
        %v6730 = vpack.c.b16 %v6698, %v6698
        %v6731 = vpack.c.b16 %v6699, %v6699
        %v6732 = vpack.c.b16 %v6700, %v6700
        %v6733 = vpack.c.b16 %v6701, %v6701
        %v6734 = vpack.c.b16 %v6702, %v6702
        %v6735 = vpack.c.b16 %v6703, %v6703
        %v6736 = vpack.c.b16 %v6704, %v6704
        %v6737 = vpack.c.b16 %v6705, %v6705
        %v6738 = vpack.c.b16 %v6706, %v6706
        %v6739 = vpack.c.b16 %v6707, %v6707
        %v6740 = vpack.c.b16 %v6708, %v6708
        %v6741 = vpack.c.b16 %v6709, %v6709
        %v6742 = vpack.c.b16 %v6710, %v6710
        %v6743 = vpack.c.b16 %v6711, %v6711
        %v6744 = vpack.c.b16 %v6712, %v6712
        %v6745 = vpack.c.b16 %v6713, %v6713
        %v6746 = vpack.c.b16 %v6714, %v6714
        %v6747 = vpack.c.b16 %v6715, %v6715
        %v6748 = vpack.c.b16 %v6716, %v6716
        %v6749 = vpack.c.b16 %v6717, %v6717
        %v6750 = vpack.c.b16 %v6718, %v6718
        %v6751 = vpack.c.b16 %v6719, %v6719
        %v6752 = vpack.c.b16 %v6720, %v6720
        %v6753 = vpack.c.b16 %v6721, %v6721
        %v6754 = vpack.c.b16 %v6722, %v6722
        %v6755 = vpack.c.b16 %v6723, %v6723
        %v6756 = vpack.c.b16 %v6724, %v6724
        %v6757 = vpack.c.b16 %v6725, %v6725
        %v6759 = vshrl.u32 %v6726, 16
        %v6761 = vrot.slane %v6759, 7
        %v6762 = vshll.u32 %v6726, 16
        %v6764 = vor.u32 %v6761, %v6762
        %v6765 = vrot.slane %v6761, 4
        %v6767 = vshrl.u32 %v6727, 16
        %v6769 = vrot.slane %v6767, 7
        %v6770 = vshll.u32 %v6727, 16
        %v6772 = vor.u32 %v6769, %v6770
        %v6773 = vsel %vm5383, %v6765, %v6772
        %v6774 = vrot.slane %v6769, 4
        %v6776 = vshrl.u32 %v6728, 16
        %v6778 = vrot.slane %v6776, 7
        %v6779 = vshll.u32 %v6728, 16
        %v6781 = vor.u32 %v6778, %v6779
        %v6782 = vrot.slane %v6778, 4
        %v6784 = vshrl.u32 %v6729, 16
        %v6786 = vrot.slane %v6784, 7
        %v6787 = vshll.u32 %v6729, 16
        %v6789 = vor.u32 %v6786, %v6787
        %v6790 = vsel %vm5383, %v6782, %v6789
        %v6791 = vrot.slane %v6786, 4
        %v6793 = vshrl.u32 %v6730, 16
        %v6795 = vrot.slane %v6793, 7
        %v6796 = vshll.u32 %v6730, 16
        %v6798 = vor.u32 %v6795, %v6796
        %v6799 = vrot.slane %v6795, 4
        %v6801 = vshrl.u32 %v6731, 16
        %v6803 = vrot.slane %v6801, 7
        %v6804 = vshll.u32 %v6731, 16
        %v6806 = vor.u32 %v6803, %v6804
        %v6807 = vsel %vm5383, %v6799, %v6806
        %v6808 = vrot.slane %v6803, 4
        %v6810 = vshrl.u32 %v6732, 16
        %v6812 = vrot.slane %v6810, 7
        %v6813 = vshll.u32 %v6732, 16
        %v6815 = vor.u32 %v6812, %v6813
        %v6816 = vrot.slane %v6812, 4
        %v6818 = vshrl.u32 %v6733, 16
        %v6820 = vrot.slane %v6818, 7
        %v6821 = vshll.u32 %v6733, 16
        %v6823 = vor.u32 %v6820, %v6821
        %v6824 = vsel %vm5383, %v6816, %v6823
        %v6825 = vrot.slane %v6820, 4
        %v6827 = vshrl.u32 %v6734, 16
        %v6829 = vrot.slane %v6827, 7
        %v6830 = vshll.u32 %v6734, 16
        %v6832 = vor.u32 %v6829, %v6830
        %v6833 = vrot.slane %v6829, 4
        %v6835 = vshrl.u32 %v6735, 16
        %v6837 = vrot.slane %v6835, 7
        %v6838 = vshll.u32 %v6735, 16
        %v6840 = vor.u32 %v6837, %v6838
        %v6841 = vsel %vm5383, %v6833, %v6840
        %v6842 = vrot.slane %v6837, 4
        %v6844 = vshrl.u32 %v6736, 16
        %v6846 = vrot.slane %v6844, 7
        %v6847 = vshll.u32 %v6736, 16
        %v6849 = vor.u32 %v6846, %v6847
        %v6850 = vrot.slane %v6846, 4
        %v6852 = vshrl.u32 %v6737, 16
        %v6854 = vrot.slane %v6852, 7
        %v6855 = vshll.u32 %v6737, 16
        %v6857 = vor.u32 %v6854, %v6855
        %v6858 = vsel %vm5383, %v6850, %v6857
        %v6859 = vrot.slane %v6854, 4
        %v6861 = vshrl.u32 %v6738, 16
        %v6863 = vrot.slane %v6861, 7
        %v6864 = vshll.u32 %v6738, 16
        %v6866 = vor.u32 %v6863, %v6864
        %v6867 = vrot.slane %v6863, 4
        %v6869 = vshrl.u32 %v6739, 16
        %v6871 = vrot.slane %v6869, 7
        %v6872 = vshll.u32 %v6739, 16
        %v6874 = vor.u32 %v6871, %v6872
        %v6875 = vsel %vm5383, %v6867, %v6874
        %v6876 = vrot.slane %v6871, 4
        %v6878 = vshrl.u32 %v6740, 16
        %v6880 = vrot.slane %v6878, 7
        %v6881 = vshll.u32 %v6740, 16
        %v6883 = vor.u32 %v6880, %v6881
        %v6884 = vrot.slane %v6880, 4
        %v6886 = vshrl.u32 %v6741, 16
        %v6888 = vrot.slane %v6886, 7
        %v6889 = vshll.u32 %v6741, 16
        %v6891 = vor.u32 %v6888, %v6889
        %v6892 = vsel %vm5383, %v6884, %v6891
        %v6893 = vrot.slane %v6888, 4
        %v6895 = vshrl.u32 %v6742, 16
        %v6897 = vrot.slane %v6895, 7
        %v6898 = vshll.u32 %v6742, 16
        %v6900 = vor.u32 %v6897, %v6898
        %v6901 = vrot.slane %v6897, 4
        %v6903 = vshrl.u32 %v6743, 16
        %v6905 = vrot.slane %v6903, 7
        %v6906 = vshll.u32 %v6743, 16
        %v6908 = vor.u32 %v6905, %v6906
        %v6909 = vsel %vm5383, %v6901, %v6908
        %v6910 = vrot.slane %v6905, 4
        %v6912 = vshrl.u32 %v6744, 16
        %v6914 = vrot.slane %v6912, 7
        %v6915 = vshll.u32 %v6744, 16
        %v6917 = vor.u32 %v6914, %v6915
        %v6918 = vrot.slane %v6914, 4
        %v6920 = vshrl.u32 %v6745, 16
        %v6922 = vrot.slane %v6920, 7
        %v6923 = vshll.u32 %v6745, 16
        %v6925 = vor.u32 %v6922, %v6923
        %v6926 = vsel %vm5383, %v6918, %v6925
        %v6927 = vrot.slane %v6922, 4
        %v6929 = vshrl.u32 %v6746, 16
        %v6931 = vrot.slane %v6929, 7
        %v6932 = vshll.u32 %v6746, 16
        %v6934 = vor.u32 %v6931, %v6932
        %v6935 = vrot.slane %v6931, 4
        %v6937 = vshrl.u32 %v6747, 16
        %v6939 = vrot.slane %v6937, 7
        %v6940 = vshll.u32 %v6747, 16
        %v6942 = vor.u32 %v6939, %v6940
        %v6943 = vsel %vm5383, %v6935, %v6942
        %v6944 = vrot.slane %v6939, 4
        %v6946 = vshrl.u32 %v6748, 16
        %v6948 = vrot.slane %v6946, 7
        %v6949 = vshll.u32 %v6748, 16
        %v6951 = vor.u32 %v6948, %v6949
        %v6952 = vrot.slane %v6948, 4
        %v6954 = vshrl.u32 %v6749, 16
        %v6956 = vrot.slane %v6954, 7
        %v6957 = vshll.u32 %v6749, 16
        %v6959 = vor.u32 %v6956, %v6957
        %v6960 = vsel %vm5383, %v6952, %v6959
        %v6961 = vrot.slane %v6956, 4
        %v6963 = vshrl.u32 %v6750, 16
        %v6965 = vrot.slane %v6963, 7
        %v6966 = vshll.u32 %v6750, 16
        %v6968 = vor.u32 %v6965, %v6966
        %v6969 = vrot.slane %v6965, 4
        %v6971 = vshrl.u32 %v6751, 16
        %v6973 = vrot.slane %v6971, 7
        %v6974 = vshll.u32 %v6751, 16
        %v6976 = vor.u32 %v6973, %v6974
        %v6977 = vsel %vm5383, %v6969, %v6976
        %v6978 = vrot.slane %v6973, 4
        %v6980 = vshrl.u32 %v6752, 16
        %v6982 = vrot.slane %v6980, 7
        %v6983 = vshll.u32 %v6752, 16
        %v6985 = vor.u32 %v6982, %v6983
        %v6986 = vrot.slane %v6982, 4
        %v6988 = vshrl.u32 %v6753, 16
        %v6990 = vrot.slane %v6988, 7
        %v6991 = vshll.u32 %v6753, 16
        %v6993 = vor.u32 %v6990, %v6991
        %v6994 = vsel %vm5383, %v6986, %v6993
        %v6995 = vrot.slane %v6990, 4
        %v6997 = vshrl.u32 %v6754, 16
        %v6999 = vrot.slane %v6997, 7
        %v7000 = vshll.u32 %v6754, 16
        %v7002 = vor.u32 %v6999, %v7000
        %v7003 = vrot.slane %v6999, 4
        %v7005 = vshrl.u32 %v6755, 16
        %v7007 = vrot.slane %v7005, 7
        %v7008 = vshll.u32 %v6755, 16
        %v7010 = vor.u32 %v7007, %v7008
        %v7011 = vsel %vm5383, %v7003, %v7010
        %v7012 = vrot.slane %v7007, 4
        %v7014 = vshrl.u32 %v6756, 16
        %v7016 = vrot.slane %v7014, 7
        %v7017 = vshll.u32 %v6756, 16
        %v7019 = vor.u32 %v7016, %v7017
        %v7020 = vrot.slane %v7016, 4
        %v7022 = vshrl.u32 %v6757, 16
        %v7024 = vrot.slane %v7022, 7
        %v7025 = vshll.u32 %v6757, 16
        %v7027 = vor.u32 %v7024, %v7025
        %v7028 = vsel %vm5383, %v7020, %v7027
        %v7029 = vrot.slane %v7024, 4
        %s7078 = scalar_lea.vmem [#allocation3], 12
        %v7079 = vld [vmem:[%s7078] sm:$0xf]
        %v7080 = vsel %vm5706, %v6764, %v7079
        %7081 = vst [vmem:[%s7078] sm:$0xf] %v7080
        %7082 = vst.msk [vmem:[%s7078 + $0x4] sm:$0xf] %vm5180, %v6773
        %v7083 = vld [vmem:[%s7078 + $0x8] sm:$0x1]
        %v7084 = vsel %vm5191, %v6774, %v7083
        %7085 = vst [vmem:[%s7078 + $0x8] sm:$0x1] %v7084
        %v7086 = vld [vmem:[%s7078 + $0xc] sm:$0xf]
        %v7087 = vsel %vm5706, %v6781, %v7086
        %7088 = vst [vmem:[%s7078 + $0xc] sm:$0xf] %v7087
        %7089 = vst.msk [vmem:[%s7078 + $0x10] sm:$0xf] %vm5180, %v6790
        %v7090 = vld [vmem:[%s7078 + $0x14] sm:$0x1]
        %v7091 = vsel %vm5191, %v6791, %v7090
        %7092 = vst [vmem:[%s7078 + $0x14] sm:$0x1] %v7091
        %v7093 = vld [vmem:[%s7078 + $0x18] sm:$0xf]
        %v7094 = vsel %vm5706, %v6798, %v7093
        %7095 = vst [vmem:[%s7078 + $0x18] sm:$0xf] %v7094
        %7096 = vst.msk [vmem:[%s7078 + $0x1c] sm:$0xf] %vm5180, %v6807
        %v7097 = vld [vmem:[%s7078 + $0x20] sm:$0x1]
        %v7098 = vsel %vm5191, %v6808, %v7097
        %7099 = vst [vmem:[%s7078 + $0x20] sm:$0x1] %v7098
        %v7100 = vld [vmem:[%s7078 + $0x24] sm:$0xf]
        %v7101 = vsel %vm5706, %v6815, %v7100
        %7102 = vst [vmem:[%s7078 + $0x24] sm:$0xf] %v7101
        %7103 = vst.msk [vmem:[%s7078 + $0x28] sm:$0xf] %vm5180, %v6824
        %v7104 = vld [vmem:[%s7078 + $0x2c] sm:$0x1]
        %v7105 = vsel %vm5191, %v6825, %v7104
        %7106 = vst [vmem:[%s7078 + $0x2c] sm:$0x1] %v7105
        %v7107 = vld [vmem:[%s7078 + $0x30] sm:$0xf]
        %v7108 = vsel %vm5706, %v6832, %v7107
        %7109 = vst [vmem:[%s7078 + $0x30] sm:$0xf] %v7108
        %7110 = vst.msk [vmem:[%s7078 + $0x34] sm:$0xf] %vm5180, %v6841
        %v7111 = vld [vmem:[%s7078 + $0x38] sm:$0x1]
        %v7112 = vsel %vm5191, %v6842, %v7111
        %7113 = vst [vmem:[%s7078 + $0x38] sm:$0x1] %v7112
        %v7114 = vld [vmem:[%s7078 + $0x3c] sm:$0xf]
        %v7115 = vsel %vm5706, %v6849, %v7114
        %7116 = vst [vmem:[%s7078 + $0x3c] sm:$0xf] %v7115
        %7117 = vst.msk [vmem:[%s7078 + $0x40] sm:$0xf] %vm5180, %v6858
        %v7118 = vld [vmem:[%s7078 + $0x44] sm:$0x1]
        %v7119 = vsel %vm5191, %v6859, %v7118
        %7120 = vst [vmem:[%s7078 + $0x44] sm:$0x1] %v7119
        %v7121 = vld [vmem:[%s7078 + $0x48] sm:$0xf]
        %v7122 = vsel %vm5706, %v6866, %v7121
        %7123 = vst [vmem:[%s7078 + $0x48] sm:$0xf] %v7122
        %7124 = vst.msk [vmem:[%s7078 + $0x4c] sm:$0xf] %vm5180, %v6875
        %v7125 = vld [vmem:[%s7078 + $0x50] sm:$0x1]
        %v7126 = vsel %vm5191, %v6876, %v7125
        %7127 = vst [vmem:[%s7078 + $0x50] sm:$0x1] %v7126
        %v7128 = vld [vmem:[%s7078 + $0x54] sm:$0xf]
        %v7129 = vsel %vm5706, %v6883, %v7128
        %7130 = vst [vmem:[%s7078 + $0x54] sm:$0xf] %v7129
        %7131 = vst.msk [vmem:[%s7078 + $0x58] sm:$0xf] %vm5180, %v6892
        %v7132 = vld [vmem:[%s7078 + $0x5c] sm:$0x1]
        %v7133 = vsel %vm5191, %v6893, %v7132
        %7134 = vst [vmem:[%s7078 + $0x5c] sm:$0x1] %v7133
        %v7135 = vld [vmem:[%s7078 + $0x60] sm:$0xf]
        %v7136 = vsel %vm5706, %v6900, %v7135
        %7137 = vst [vmem:[%s7078 + $0x60] sm:$0xf] %v7136
        %7138 = vst.msk [vmem:[%s7078 + $0x64] sm:$0xf] %vm5180, %v6909
        %v7139 = vld [vmem:[%s7078 + $0x68] sm:$0x1]
        %v7140 = vsel %vm5191, %v6910, %v7139
        %7141 = vst [vmem:[%s7078 + $0x68] sm:$0x1] %v7140
        %v7142 = vld [vmem:[%s7078 + $0x6c] sm:$0xf]
        %v7143 = vsel %vm5706, %v6917, %v7142
        %7144 = vst [vmem:[%s7078 + $0x6c] sm:$0xf] %v7143
        %7145 = vst.msk [vmem:[%s7078 + $0x70] sm:$0xf] %vm5180, %v6926
        %v7146 = vld [vmem:[%s7078 + $0x74] sm:$0x1]
        %v7147 = vsel %vm5191, %v6927, %v7146
        %7148 = vst [vmem:[%s7078 + $0x74] sm:$0x1] %v7147
        %v7149 = vld [vmem:[%s7078 + $0x78] sm:$0xf]
        %v7150 = vsel %vm5706, %v6934, %v7149
        %7151 = vst [vmem:[%s7078 + $0x78] sm:$0xf] %v7150
        %7152 = vst.msk [vmem:[%s7078 + $0x7c] sm:$0xf] %vm5180, %v6943
        %v7153 = vld [vmem:[%s7078 + $0x80] sm:$0x1]
        %v7154 = vsel %vm5191, %v6944, %v7153
        %7155 = vst [vmem:[%s7078 + $0x80] sm:$0x1] %v7154
        %v7156 = vld [vmem:[%s7078 + $0x84] sm:$0xf]
        %v7157 = vsel %vm5706, %v6951, %v7156
        %7158 = vst [vmem:[%s7078 + $0x84] sm:$0xf] %v7157
        %7159 = vst.msk [vmem:[%s7078 + $0x88] sm:$0xf] %vm5180, %v6960
        %v7160 = vld [vmem:[%s7078 + $0x8c] sm:$0x1]
        %v7161 = vsel %vm5191, %v6961, %v7160
        %7162 = vst [vmem:[%s7078 + $0x8c] sm:$0x1] %v7161
        %v7163 = vld [vmem:[%s7078 + $0x90] sm:$0xf]
        %v7164 = vsel %vm5706, %v6968, %v7163
        %7165 = vst [vmem:[%s7078 + $0x90] sm:$0xf] %v7164
        %7166 = vst.msk [vmem:[%s7078 + $0x94] sm:$0xf] %vm5180, %v6977
        %v7167 = vld [vmem:[%s7078 + $0x98] sm:$0x1]
        %v7168 = vsel %vm5191, %v6978, %v7167
        %7169 = vst [vmem:[%s7078 + $0x98] sm:$0x1] %v7168
        %v7170 = vld [vmem:[%s7078 + $0x9c] sm:$0xf]
        %v7171 = vsel %vm5706, %v6985, %v7170
        %7172 = vst [vmem:[%s7078 + $0x9c] sm:$0xf] %v7171
        %7173 = vst.msk [vmem:[%s7078 + $0xa0] sm:$0xf] %vm5180, %v6994
        %v7174 = vld [vmem:[%s7078 + $0xa4] sm:$0x1]
        %v7175 = vsel %vm5191, %v6995, %v7174
        %7176 = vst [vmem:[%s7078 + $0xa4] sm:$0x1] %v7175
        %v7177 = vld [vmem:[%s7078 + $0xa8] sm:$0xf]
        %v7178 = vsel %vm5706, %v7002, %v7177
        %7179 = vst [vmem:[%s7078 + $0xa8] sm:$0xf] %v7178
        %7180 = vst.msk [vmem:[%s7078 + $0xac] sm:$0xf] %vm5180, %v7011
        %v7181 = vld [vmem:[%s7078 + $0xb0] sm:$0x1]
        %v7182 = vsel %vm5191, %v7012, %v7181
        %7183 = vst [vmem:[%s7078 + $0xb0] sm:$0x1] %v7182
        %v7184 = vld [vmem:[%s7078 + $0xb4] sm:$0xf]
        %v7185 = vsel %vm5706, %v7019, %v7184
        %7186 = vst [vmem:[%s7078 + $0xb4] sm:$0xf] %v7185
        %7187 = vst.msk [vmem:[%s7078 + $0xb8] sm:$0xf] %vm5180, %v7028
        %v7188 = vld [vmem:[%s7078 + $0xbc] sm:$0x1]
        %v7189 = vsel %vm5191, %v7029, %v7188
        %7190 = vst [vmem:[%s7078 + $0xbc] sm:$0x1] %v7189
        %v7191 = vld [vmem:[#allocation3] sm:$0xf]
        %v7192 = vld [vmem:[#allocation3 + $0x4] sm:$0xf]
        %v7193 = vld [vmem:[#allocation3 + $0x18] sm:$0xf]
        %v7194 = vld [vmem:[#allocation3 + $0x1c] sm:$0xf]
        %v7195 = vld [vmem:[#allocation3 + $0x30] sm:$0xf]
        %v7196 = vld [vmem:[#allocation3 + $0x34] sm:$0xf]
        %v7197 = vld [vmem:[#allocation3 + $0x48] sm:$0xf]
        %v7198 = vld [vmem:[#allocation3 + $0x4c] sm:$0xf]
        %v7199 = vld [vmem:[#allocation3 + $0x60] sm:$0xf]
        %v7200 = vld [vmem:[#allocation3 + $0x64] sm:$0xf]
        %v7201 = vld [vmem:[#allocation3 + $0x78] sm:$0xf]
        %v7202 = vld [vmem:[#allocation3 + $0x7c] sm:$0xf]
        %v7203 = vld [vmem:[#allocation3 + $0x90] sm:$0xf]
        %v7204 = vld [vmem:[#allocation3 + $0x94] sm:$0xf]
        %v7205 = vld [vmem:[#allocation3 + $0xa8] sm:$0xf]
        %v7206 = vld [vmem:[#allocation3 + $0xac] sm:$0xf]
        %v7207 = vld [vmem:[%s3] sm:$0xf]
        %v7208 = vld [vmem:[%s3 + $0x4] sm:$0xf]
        %v7209 = vld [vmem:[%s3 + $0x8] sm:$0xf]
        %v7210 = vld [vmem:[%s3 + $0xc] sm:$0xf]
        %v7211 = vld [vmem:[%s3 + $0x10] sm:$0xf]
        %v7212 = vld [vmem:[%s3 + $0x14] sm:$0xf]
        %v7213 = vld [vmem:[%s3 + $0x18] sm:$0xf]
        %v7214 = vld [vmem:[%s3 + $0x1c] sm:$0xf]
        %v7215 = vld [vmem:[#allocation3 + $0x8] sm:$0x1]
        %v7216 = vld [vmem:[#allocation3 + $0x20] sm:$0x1]
        %v7217 = vld [vmem:[#allocation3 + $0x38] sm:$0x1]
        %v7218 = vld [vmem:[#allocation3 + $0x50] sm:$0x1]
        %v7219 = vld [vmem:[#allocation3 + $0x68] sm:$0x1]
        %v7220 = vld [vmem:[#allocation3 + $0x80] sm:$0x1]
        %v7221 = vld [vmem:[#allocation3 + $0x98] sm:$0x1]
        %v7222 = vld [vmem:[#allocation3 + $0xb0] sm:$0x1]
        %v7224 = vshrl.u32 %v7191, 16
        %v7226 = vrot.slane %v7224, 4
        %v7227 = vshll.u32 %v7191, 16
        %v7229 = vrot.slane %v7227, 5
        %v7230 = vor.u32 %v7226, %v7229
        %v7231 = vrot.slane %v7230, 4
        %v7233 = vshll.u32 %v7192, 16
        %v7235 = vrot.slane %v7233, 5
        %v7236 = vsel %vm309, %v7231, %v7235
        %v7237 = vshrl.u32 %v7192, 16
        %v7239 = vrot.slane %v7237, 4
        %v7240 = vor.u32 %v7239, %v7235
        %v7241 = vrot.slane %v7240, 4
        %v7243 = vshll.u32 %v7215, 16
        %v7245 = vrot.slane %v7243, 5
        %v7246 = vsel %vm309, %v7241, %v7245
        %v7248 = vshrl.u32 %v7193, 16
        %v7250 = vrot.slane %v7248, 4
        %v7251 = vshll.u32 %v7193, 16
        %v7253 = vrot.slane %v7251, 5
        %v7254 = vor.u32 %v7250, %v7253
        %v7255 = vrot.slane %v7254, 4
        %v7257 = vshll.u32 %v7194, 16
        %v7259 = vrot.slane %v7257, 5
        %v7260 = vsel %vm309, %v7255, %v7259
        %v7261 = vshrl.u32 %v7194, 16
        %v7263 = vrot.slane %v7261, 4
        %v7264 = vor.u32 %v7263, %v7259
        %v7265 = vrot.slane %v7264, 4
        %v7267 = vshll.u32 %v7216, 16
        %v7269 = vrot.slane %v7267, 5
        %v7270 = vsel %vm309, %v7265, %v7269
        %v7272 = vshrl.u32 %v7195, 16
        %v7274 = vrot.slane %v7272, 4
        %v7275 = vshll.u32 %v7195, 16
        %v7277 = vrot.slane %v7275, 5
        %v7278 = vor.u32 %v7274, %v7277
        %v7279 = vrot.slane %v7278, 4
        %v7281 = vshll.u32 %v7196, 16
        %v7283 = vrot.slane %v7281, 5
        %v7284 = vsel %vm309, %v7279, %v7283
        %v7285 = vshrl.u32 %v7196, 16
        %v7287 = vrot.slane %v7285, 4
        %v7288 = vor.u32 %v7287, %v7283
        %v7289 = vrot.slane %v7288, 4
        %v7291 = vshll.u32 %v7217, 16
        %v7293 = vrot.slane %v7291, 5
        %v7294 = vsel %vm309, %v7289, %v7293
        %v7296 = vshrl.u32 %v7197, 16
        %v7298 = vrot.slane %v7296, 4
        %v7299 = vshll.u32 %v7197, 16
        %v7301 = vrot.slane %v7299, 5
        %v7302 = vor.u32 %v7298, %v7301
        %v7303 = vrot.slane %v7302, 4
        %v7305 = vshll.u32 %v7198, 16
        %v7307 = vrot.slane %v7305, 5
        %v7308 = vsel %vm309, %v7303, %v7307
        %v7309 = vshrl.u32 %v7198, 16
        %v7311 = vrot.slane %v7309, 4
        %v7312 = vor.u32 %v7311, %v7307
        %v7313 = vrot.slane %v7312, 4
        %v7315 = vshll.u32 %v7218, 16
        %v7317 = vrot.slane %v7315, 5
        %v7318 = vsel %vm309, %v7313, %v7317
        %v7320 = vshrl.u32 %v7199, 16
        %v7322 = vrot.slane %v7320, 4
        %v7323 = vshll.u32 %v7199, 16
        %v7325 = vrot.slane %v7323, 5
        %v7326 = vor.u32 %v7322, %v7325
        %v7327 = vrot.slane %v7326, 4
        %v7329 = vshll.u32 %v7200, 16
        %v7331 = vrot.slane %v7329, 5
        %v7332 = vsel %vm309, %v7327, %v7331
        %v7333 = vshrl.u32 %v7200, 16
        %v7335 = vrot.slane %v7333, 4
        %v7336 = vor.u32 %v7335, %v7331
        %v7337 = vrot.slane %v7336, 4
        %v7339 = vshll.u32 %v7219, 16
        %v7341 = vrot.slane %v7339, 5
        %v7342 = vsel %vm309, %v7337, %v7341
        %v7344 = vshrl.u32 %v7201, 16
        %v7346 = vrot.slane %v7344, 4
        %v7347 = vshll.u32 %v7201, 16
        %v7349 = vrot.slane %v7347, 5
        %v7350 = vor.u32 %v7346, %v7349
        %v7351 = vrot.slane %v7350, 4
        %v7353 = vshll.u32 %v7202, 16
        %v7355 = vrot.slane %v7353, 5
        %v7356 = vsel %vm309, %v7351, %v7355
        %v7357 = vshrl.u32 %v7202, 16
        %v7359 = vrot.slane %v7357, 4
        %v7360 = vor.u32 %v7359, %v7355
        %v7361 = vrot.slane %v7360, 4
        %v7363 = vshll.u32 %v7220, 16
        %v7365 = vrot.slane %v7363, 5
        %v7366 = vsel %vm309, %v7361, %v7365
        %v7368 = vshrl.u32 %v7203, 16
        %v7370 = vrot.slane %v7368, 4
        %v7371 = vshll.u32 %v7203, 16
        %v7373 = vrot.slane %v7371, 5
        %v7374 = vor.u32 %v7370, %v7373
        %v7375 = vrot.slane %v7374, 4
        %v7377 = vshll.u32 %v7204, 16
        %v7379 = vrot.slane %v7377, 5
        %v7380 = vsel %vm309, %v7375, %v7379
        %v7381 = vshrl.u32 %v7204, 16
        %v7383 = vrot.slane %v7381, 4
        %v7384 = vor.u32 %v7383, %v7379
        %v7385 = vrot.slane %v7384, 4
        %v7387 = vshll.u32 %v7221, 16
        %v7389 = vrot.slane %v7387, 5
        %v7390 = vsel %vm309, %v7385, %v7389
        %v7392 = vshrl.u32 %v7205, 16
        %v7394 = vrot.slane %v7392, 4
        %v7395 = vshll.u32 %v7205, 16
        %v7397 = vrot.slane %v7395, 5
        %v7398 = vor.u32 %v7394, %v7397
        %v7399 = vrot.slane %v7398, 4
        %v7401 = vshll.u32 %v7206, 16
        %v7403 = vrot.slane %v7401, 5
        %v7404 = vsel %vm309, %v7399, %v7403
        %v7405 = vshrl.u32 %v7206, 16
        %v7407 = vrot.slane %v7405, 4
        %v7408 = vor.u32 %v7407, %v7403
        %v7409 = vrot.slane %v7408, 4
        %v7411 = vshll.u32 %v7222, 16
        %v7413 = vrot.slane %v7411, 5
        %v7414 = vsel %vm309, %v7409, %v7413
        %s7415 = scalar_lea.vmem %s3, 32
        %v7416 = vld [vmem:[%s7415] sm:$0xf]
        %v7417 = vld [vmem:[%s7415 + $0x4] sm:$0xf]
        %v7418 = vld [vmem:[%s7415 + $0x8] sm:$0xf]
        %v7419 = vld [vmem:[%s7415 + $0xc] sm:$0xf]
        %v7420 = vld [vmem:[%s7415 + $0x10] sm:$0xf]
        %v7421 = vld [vmem:[%s7415 + $0x14] sm:$0xf]
        %v7422 = vld [vmem:[%s7415 + $0x18] sm:$0xf]
        %v7423 = vld [vmem:[%s7415 + $0x1c] sm:$0xf]
        %v7424 = vunpack.c.l.b16 %v7236
        %v7425 = vunpack.c.l.b16 %v7246
        %v7426 = vunpack.c.l.b16 %v7260
        %v7427 = vunpack.c.l.b16 %v7270
        %v7428 = vunpack.c.l.b16 %v7284
        %v7429 = vunpack.c.l.b16 %v7294
        %v7430 = vunpack.c.l.b16 %v7308
        %v7431 = vunpack.c.l.b16 %v7318
        %v7432 = vunpack.c.l.b16 %v7332
        %v7433 = vunpack.c.l.b16 %v7342
        %v7434 = vunpack.c.l.b16 %v7356
        %v7435 = vunpack.c.l.b16 %v7366
        %v7436 = vunpack.c.l.b16 %v7380
        %v7437 = vunpack.c.l.b16 %v7390
        %v7438 = vunpack.c.l.b16 %v7404
        %v7439 = vunpack.c.l.b16 %v7414
        %v7440 = vpack.c.b16 %v7425, %v7424
        %v7441 = vpack.c.b16 %v7427, %v7426
        %v7442 = vpack.c.b16 %v7429, %v7428
        %v7443 = vpack.c.b16 %v7431, %v7430
        %v7444 = vpack.c.b16 %v7433, %v7432
        %v7445 = vpack.c.b16 %v7435, %v7434
        %v7446 = vpack.c.b16 %v7437, %v7436
        %v7447 = vpack.c.b16 %v7439, %v7438
        %v7456 = vunpack.c.l.b16 %v7416
        %v7457 = vunpack.c.l.b16 %v7417
        %v7458 = vunpack.c.l.b16 %v7418
        %v7459 = vunpack.c.l.b16 %v7419
        %v7460 = vunpack.c.l.b16 %v7420
        %v7461 = vunpack.c.l.b16 %v7421
        %v7462 = vunpack.c.l.b16 %v7422
        %v7463 = vunpack.c.l.b16 %v7423
        %v7464 = vpack.c.b16 %v7457, %v7456
        %v7465 = vpack.c.b16 %v7459, %v7458
        %v7466 = vpack.c.b16 %v7461, %v7460
        %v7467 = vpack.c.b16 %v7463, %v7462
        %v7473 = vsel %vm775, %v7440, 0
        %v7476 = vsel %vm775, %v7441, 0
        %v7479 = vsel %vm775, %v7442, 0
        %v7482 = vsel %vm775, %v7443, 0
        %v7485 = vsel %vm775, %v7444, 0
        %v7488 = vsel %vm775, %v7445, 0
        %v7491 = vsel %vm775, %v7446, 0
        %v7494 = vsel %vm775, %v7447, 0
        %7496 = vmatprep.subr.bf16.mxu0 0
        %7497 = vmatpush1.bf16.msra.mxu0 0
        %7498 = vmatprep.subr.bf16.mxu0 0
        %7499 = vmatpush1.bf16.msra.mxu0 0
        %7500 = vmatprep.subr.bf16.mxu0 0
        %7501 = vmatpush1.bf16.msra.mxu0 0
        %7502 = vmatprep.subr.bf16.mxu0 0
        %7503 = vmatpush1.bf16.msra.mxu0 0
        %7504 = vmatprep.subr.bf16.mxu0 0
        %7505 = vmatpush1.bf16.msra.mxu0 %v7467
        %7506 = vmatprep.subr.bf16.mxu0 0
        %7507 = vmatpush1.bf16.msra.mxu0 %v7466
        %7508 = vmatprep.subr.bf16.mxu0 0
        %7509 = vmatpush1.bf16.msra.mxu0 %v7465
        %7510 = vmatprep.subr.bf16.mxu0 0
        %7511 = vmatpush1.bf16.msra.mxu0 %v7464
        %7512 = vmatprep.subr.bf16.mxu0 0
        %7513 = vmatpush2.bf16.msra.mxu0 0
        %7514 = vmatprep.subr.bf16.mxu0 0
        %7515 = vmatpush2.bf16.msra.mxu0 0
        %7516 = vmatprep.subr.bf16.mxu0 0
        %7517 = vmatpush2.bf16.msra.mxu0 0
        %7518 = vmatprep.subr.bf16.mxu0 0
        %7519 = vmatpush2.bf16.msra.mxu0 0
        %7520 = vmatprep.subr.bf16.mxu0 0
        %7521 = vmatpush2.bf16.msra.mxu0 0
        %7522 = vmatprep.subr.bf16.mxu0 0
        %7523 = vmatpush2.bf16.msra.mxu0 0
        %7524 = vmatprep.subr.bf16.mxu0 0
        %7525 = vmatpush2.bf16.msra.mxu0 0
        %7526 = vmatprep.subr.bf16.mxu0 0
        %7527 = vmatpush2.bf16.msra.mxu0 0
        %7528 = vmatprep.mubr.bf16.mxu0 0
        %7529 = vmatmul.mubr.bf16.gmra.mxu0 %v7473
        %v7530 = vpop.f32.mrf.mxu0
        %v7531 = vadd.f32 0.0, %v7530
        %v7532 = vpop.f32.mrf.mxu0
        %v7533 = vpop.f32.mrf.mxu0
        %v7534 = vadd.f32 0.0, %v7533
        %v7535 = vpop.f32.mrf.mxu0
        %7536 = vmatprep.mubr.bf16.mxu0 0
        %7537 = vmatmul.mubr.bf16.gmra.mxu0 %v7476
        %v7538 = vpop.f32.mrf.mxu0
        %v7539 = vadd.f32 0.0, %v7538
        %v7540 = vpop.f32.mrf.mxu0
        %v7541 = vpop.f32.mrf.mxu0
        %v7542 = vadd.f32 0.0, %v7541
        %v7543 = vpop.f32.mrf.mxu0
        %7544 = vmatprep.mubr.bf16.mxu0 0
        %7545 = vmatmul.mubr.bf16.gmra.mxu0 %v7479
        %v7546 = vpop.f32.mrf.mxu0
        %v7547 = vadd.f32 0.0, %v7546
        %v7548 = vpop.f32.mrf.mxu0
        %v7549 = vpop.f32.mrf.mxu0
        %v7550 = vadd.f32 0.0, %v7549
        %v7551 = vpop.f32.mrf.mxu0
        %7552 = vmatprep.mubr.bf16.mxu0 0
        %7553 = vmatmul.mubr.bf16.gmra.mxu0 %v7482
        %v7554 = vpop.f32.mrf.mxu0
        %v7555 = vadd.f32 0.0, %v7554
        %v7556 = vpop.f32.mrf.mxu0
        %v7557 = vpop.f32.mrf.mxu0
        %v7558 = vadd.f32 0.0, %v7557
        %v7559 = vpop.f32.mrf.mxu0
        %7560 = vmatprep.mubr.bf16.mxu0 0
        %7561 = vmatmul.mubr.bf16.gmra.mxu0 %v7485
        %v7562 = vpop.f32.mrf.mxu0
        %v7563 = vadd.f32 0.0, %v7562
        %v7564 = vpop.f32.mrf.mxu0
        %v7565 = vpop.f32.mrf.mxu0
        %v7566 = vadd.f32 0.0, %v7565
        %v7567 = vpop.f32.mrf.mxu0
        %7568 = vmatprep.mubr.bf16.mxu0 0
        %7569 = vmatmul.mubr.bf16.gmra.mxu0 %v7488
        %v7570 = vpop.f32.mrf.mxu0
        %v7571 = vadd.f32 0.0, %v7570
        %v7572 = vpop.f32.mrf.mxu0
        %v7573 = vpop.f32.mrf.mxu0
        %v7574 = vadd.f32 0.0, %v7573
        %v7575 = vpop.f32.mrf.mxu0
        %7576 = vmatprep.mubr.bf16.mxu0 0
        %7577 = vmatmul.mubr.bf16.gmra.mxu0 %v7491
        %v7578 = vpop.f32.mrf.mxu0
        %v7579 = vadd.f32 0.0, %v7578
        %v7580 = vpop.f32.mrf.mxu0
        %v7581 = vpop.f32.mrf.mxu0
        %v7582 = vadd.f32 0.0, %v7581
        %v7583 = vpop.f32.mrf.mxu0
        %7584 = vmatprep.mubr.bf16.mxu0 0
        %7585 = vmatmul.mubr.bf16.gmra.mxu0 %v7494
        %v7586 = vpop.f32.mrf.mxu0
        %v7587 = vadd.f32 0.0, %v7586
        %v7588 = vpop.f32.mrf.mxu0
        %v7589 = vpop.f32.mrf.mxu0
        %v7590 = vadd.f32 0.0, %v7589
        %v7591 = vpop.f32.mrf.mxu0
        %7592 = vdwg.mxu0
        %v7609 = vunpack.c.l.b16 %v7191
        %v7610 = vunpack.c.l.b16 %v7192
        %v7611 = vunpack.c.l.b16 %v7193
        %v7612 = vunpack.c.l.b16 %v7194
        %v7613 = vunpack.c.l.b16 %v7195
        %v7614 = vunpack.c.l.b16 %v7196
        %v7615 = vunpack.c.l.b16 %v7197
        %v7616 = vunpack.c.l.b16 %v7198
        %v7617 = vunpack.c.l.b16 %v7199
        %v7618 = vunpack.c.l.b16 %v7200
        %v7619 = vunpack.c.l.b16 %v7201
        %v7620 = vunpack.c.l.b16 %v7202
        %v7621 = vunpack.c.l.b16 %v7203
        %v7622 = vunpack.c.l.b16 %v7204
        %v7623 = vunpack.c.l.b16 %v7205
        %v7624 = vunpack.c.l.b16 %v7206
        %v7625 = vpack.c.b16 %v7610, %v7609
        %v7626 = vpack.c.b16 %v7612, %v7611
        %v7627 = vpack.c.b16 %v7614, %v7613
        %v7628 = vpack.c.b16 %v7616, %v7615
        %v7629 = vpack.c.b16 %v7618, %v7617
        %v7630 = vpack.c.b16 %v7620, %v7619
        %v7631 = vpack.c.b16 %v7622, %v7621
        %v7632 = vpack.c.b16 %v7624, %v7623
        %v7641 = vunpack.c.l.b16 %v7207
        %v7642 = vunpack.c.l.b16 %v7208
        %v7643 = vunpack.c.l.b16 %v7209
        %v7644 = vunpack.c.l.b16 %v7210
        %v7645 = vunpack.c.l.b16 %v7211
        %v7646 = vunpack.c.l.b16 %v7212
        %v7647 = vunpack.c.l.b16 %v7213
        %v7648 = vunpack.c.l.b16 %v7214
        %v7649 = vpack.c.b16 %v7642, %v7641
        %v7650 = vpack.c.b16 %v7644, %v7643
        %v7651 = vpack.c.b16 %v7646, %v7645
        %v7652 = vpack.c.b16 %v7648, %v7647
        %v7658 = vsel %vm775, %v7625, 0
        %v7661 = vsel %vm775, %v7626, 0
        %v7664 = vsel %vm775, %v7627, 0
        %v7667 = vsel %vm775, %v7628, 0
        %v7670 = vsel %vm775, %v7629, 0
        %v7673 = vsel %vm775, %v7630, 0
        %v7676 = vsel %vm775, %v7631, 0
        %v7679 = vsel %vm775, %v7632, 0
        %7681 = vmatprep.subr.bf16.mxu0 0
        %7682 = vmatpush1.bf16.msra.mxu0 0
        %7683 = vmatprep.subr.bf16.mxu0 0
        %7684 = vmatpush1.bf16.msra.mxu0 0
        %7685 = vmatprep.subr.bf16.mxu0 0
        %7686 = vmatpush1.bf16.msra.mxu0 0
        %7687 = vmatprep.subr.bf16.mxu0 0
        %7688 = vmatpush1.bf16.msra.mxu0 0
        %7689 = vmatprep.subr.bf16.mxu0 0
        %7690 = vmatpush1.bf16.msra.mxu0 %v7652
        %7691 = vmatprep.subr.bf16.mxu0 0
        %7692 = vmatpush1.bf16.msra.mxu0 %v7651
        %7693 = vmatprep.subr.bf16.mxu0 0
        %7694 = vmatpush1.bf16.msra.mxu0 %v7650
        %7695 = vmatprep.subr.bf16.mxu0 0
        %7696 = vmatpush1.bf16.msra.mxu0 %v7649
        %7697 = vmatprep.subr.bf16.mxu0 0
        %7698 = vmatpush2.bf16.msra.mxu0 0
        %7699 = vmatprep.subr.bf16.mxu0 0
        %7700 = vmatpush2.bf16.msra.mxu0 0
        %7701 = vmatprep.subr.bf16.mxu0 0
        %7702 = vmatpush2.bf16.msra.mxu0 0
        %7703 = vmatprep.subr.bf16.mxu0 0
        %7704 = vmatpush2.bf16.msra.mxu0 0
        %7705 = vmatprep.subr.bf16.mxu0 0
        %7706 = vmatpush2.bf16.msra.mxu0 0
        %7707 = vmatprep.subr.bf16.mxu0 0
        %7708 = vmatpush2.bf16.msra.mxu0 0
        %7709 = vmatprep.subr.bf16.mxu0 0
        %7710 = vmatpush2.bf16.msra.mxu0 0
        %7711 = vmatprep.subr.bf16.mxu0 0
        %7712 = vmatpush2.bf16.msra.mxu0 0
        %7713 = vmatprep.mubr.bf16.mxu0 0
        %7714 = vmatmul.mubr.bf16.gmra.mxu0 %v7658
        %v7715 = vpop.f32.mrf.mxu0
        %v7716 = vadd.f32 %v7531, %v7715
        %v7717 = vpop.f32.mrf.mxu0
        %v7718 = vpop.f32.mrf.mxu0
        %v7719 = vadd.f32 %v7534, %v7718
        %v7720 = vpop.f32.mrf.mxu0
        %7721 = vmatprep.mubr.bf16.mxu0 0
        %7722 = vmatmul.mubr.bf16.gmra.mxu0 %v7661
        %v7723 = vpop.f32.mrf.mxu0
        %v7724 = vadd.f32 %v7539, %v7723
        %v7725 = vpop.f32.mrf.mxu0
        %v7726 = vpop.f32.mrf.mxu0
        %v7727 = vadd.f32 %v7542, %v7726
        %v7728 = vpop.f32.mrf.mxu0
        %7729 = vmatprep.mubr.bf16.mxu0 0
        %7730 = vmatmul.mubr.bf16.gmra.mxu0 %v7664
        %v7731 = vpop.f32.mrf.mxu0
        %v7732 = vadd.f32 %v7547, %v7731
        %v7733 = vpop.f32.mrf.mxu0
        %v7734 = vpop.f32.mrf.mxu0
        %v7735 = vadd.f32 %v7550, %v7734
        %v7736 = vpop.f32.mrf.mxu0
        %7737 = vmatprep.mubr.bf16.mxu0 0
        %7738 = vmatmul.mubr.bf16.gmra.mxu0 %v7667
        %v7739 = vpop.f32.mrf.mxu0
        %v7740 = vadd.f32 %v7555, %v7739
        %v7741 = vpop.f32.mrf.mxu0
        %v7742 = vpop.f32.mrf.mxu0
        %v7743 = vadd.f32 %v7558, %v7742
        %v7744 = vpop.f32.mrf.mxu0
        %7745 = vmatprep.mubr.bf16.mxu0 0
        %7746 = vmatmul.mubr.bf16.gmra.mxu0 %v7670
        %v7747 = vpop.f32.mrf.mxu0
        %v7748 = vadd.f32 %v7563, %v7747
        %v7749 = vpop.f32.mrf.mxu0
        %v7750 = vpop.f32.mrf.mxu0
        %v7751 = vadd.f32 %v7566, %v7750
        %v7752 = vpop.f32.mrf.mxu0
        %7753 = vmatprep.mubr.bf16.mxu0 0
        %7754 = vmatmul.mubr.bf16.gmra.mxu0 %v7673
        %v7755 = vpop.f32.mrf.mxu0
        %v7756 = vadd.f32 %v7571, %v7755
        %v7757 = vpop.f32.mrf.mxu0
        %v7758 = vpop.f32.mrf.mxu0
        %v7759 = vadd.f32 %v7574, %v7758
        %v7760 = vpop.f32.mrf.mxu0
        %7761 = vmatprep.mubr.bf16.mxu0 0
        %7762 = vmatmul.mubr.bf16.gmra.mxu0 %v7676
        %v7763 = vpop.f32.mrf.mxu0
        %v7764 = vadd.f32 %v7579, %v7763
        %v7765 = vpop.f32.mrf.mxu0
        %v7766 = vpop.f32.mrf.mxu0
        %v7767 = vadd.f32 %v7582, %v7766
        %v7768 = vpop.f32.mrf.mxu0
        %7769 = vmatprep.mubr.bf16.mxu0 0
        %7770 = vmatmul.mubr.bf16.gmra.mxu0 %v7679
        %v7771 = vpop.f32.mrf.mxu0
        %v7772 = vadd.f32 %v7587, %v7771
        %v7773 = vpop.f32.mrf.mxu0
        %v7774 = vpop.f32.mrf.mxu0
        %v7775 = vadd.f32 %v7590, %v7774
        %v7776 = vpop.f32.mrf.mxu0
        %7777 = vdwg.mxu0
        %v7778 = vld [vmem:[#allocation3] sm:$0xe]
        %v7779 = vld [vmem:[#allocation3 + $0x18] sm:$0xe]
        %v7780 = vld [vmem:[#allocation3 + $0x30] sm:$0xe]
        %v7781 = vld [vmem:[#allocation3 + $0x48] sm:$0xe]
        %v7782 = vld [vmem:[#allocation3 + $0x60] sm:$0xe]
        %v7783 = vld [vmem:[#allocation3 + $0x78] sm:$0xe]
        %v7784 = vld [vmem:[#allocation3 + $0x90] sm:$0xe]
        %v7785 = vld [vmem:[#allocation3 + $0xa8] sm:$0xe]
        %v7802 = vrot.slane %v7778, 5
        %v7803 = vrot.slane %v7802, 4
        %v7804 = vrot.slane %v7192, 5
        %v7805 = vsel %vm1348, %v7803, %v7804
        %v7806 = vrot.slane %v7804, 4
        %v7807 = vrot.slane %v7215, 5
        %v7808 = vsel %vm1348, %v7806, %v7807
        %v7809 = vrot.slane %v7779, 5
        %v7810 = vrot.slane %v7809, 4
        %v7811 = vrot.slane %v7194, 5
        %v7812 = vsel %vm1348, %v7810, %v7811
        %v7813 = vrot.slane %v7811, 4
        %v7814 = vrot.slane %v7216, 5
        %v7815 = vsel %vm1348, %v7813, %v7814
        %v7816 = vrot.slane %v7780, 5
        %v7817 = vrot.slane %v7816, 4
        %v7818 = vrot.slane %v7196, 5
        %v7819 = vsel %vm1348, %v7817, %v7818
        %v7820 = vrot.slane %v7818, 4
        %v7821 = vrot.slane %v7217, 5
        %v7822 = vsel %vm1348, %v7820, %v7821
        %v7823 = vrot.slane %v7781, 5
        %v7824 = vrot.slane %v7823, 4
        %v7825 = vrot.slane %v7198, 5
        %v7826 = vsel %vm1348, %v7824, %v7825
        %v7827 = vrot.slane %v7825, 4
        %v7828 = vrot.slane %v7218, 5
        %v7829 = vsel %vm1348, %v7827, %v7828
        %v7830 = vrot.slane %v7782, 5
        %v7831 = vrot.slane %v7830, 4
        %v7832 = vrot.slane %v7200, 5
        %v7833 = vsel %vm1348, %v7831, %v7832
        %v7834 = vrot.slane %v7832, 4
        %v7835 = vrot.slane %v7219, 5
        %v7836 = vsel %vm1348, %v7834, %v7835
        %v7837 = vrot.slane %v7783, 5
        %v7838 = vrot.slane %v7837, 4
        %v7839 = vrot.slane %v7202, 5
        %v7840 = vsel %vm1348, %v7838, %v7839
        %v7841 = vrot.slane %v7839, 4
        %v7842 = vrot.slane %v7220, 5
        %v7843 = vsel %vm1348, %v7841, %v7842
        %v7844 = vrot.slane %v7784, 5
        %v7845 = vrot.slane %v7844, 4
        %v7846 = vrot.slane %v7204, 5
        %v7847 = vsel %vm1348, %v7845, %v7846
        %v7848 = vrot.slane %v7846, 4
        %v7849 = vrot.slane %v7221, 5
        %v7850 = vsel %vm1348, %v7848, %v7849
        %v7851 = vrot.slane %v7785, 5
        %v7852 = vrot.slane %v7851, 4
        %v7853 = vrot.slane %v7206, 5
        %v7854 = vsel %vm1348, %v7852, %v7853
        %v7855 = vrot.slane %v7853, 4
        %v7856 = vrot.slane %v7222, 5
        %v7857 = vsel %vm1348, %v7855, %v7856
        %s7858 = scalar_lea.vmem %s3, 64
        %v7859 = vld [vmem:[%s7858] sm:$0xf]
        %v7860 = vld [vmem:[%s7858 + $0x4] sm:$0xf]
        %v7861 = vld [vmem:[%s7858 + $0x8] sm:$0xf]
        %v7862 = vld [vmem:[%s7858 + $0xc] sm:$0xf]
        %v7863 = vld [vmem:[%s7858 + $0x10] sm:$0xf]
        %v7864 = vld [vmem:[%s7858 + $0x14] sm:$0xf]
        %v7865 = vld [vmem:[%s7858 + $0x18] sm:$0xf]
        %v7866 = vld [vmem:[%s7858 + $0x1c] sm:$0xf]
        %v7867 = vunpack.c.l.b16 %v7805
        %v7868 = vunpack.c.l.b16 %v7808
        %v7869 = vunpack.c.l.b16 %v7812
        %v7870 = vunpack.c.l.b16 %v7815
        %v7871 = vunpack.c.l.b16 %v7819
        %v7872 = vunpack.c.l.b16 %v7822
        %v7873 = vunpack.c.l.b16 %v7826
        %v7874 = vunpack.c.l.b16 %v7829
        %v7875 = vunpack.c.l.b16 %v7833
        %v7876 = vunpack.c.l.b16 %v7836
        %v7877 = vunpack.c.l.b16 %v7840
        %v7878 = vunpack.c.l.b16 %v7843
        %v7879 = vunpack.c.l.b16 %v7847
        %v7880 = vunpack.c.l.b16 %v7850
        %v7881 = vunpack.c.l.b16 %v7854
        %v7882 = vunpack.c.l.b16 %v7857
        %v7883 = vpack.c.b16 %v7868, %v7867
        %v7884 = vpack.c.b16 %v7870, %v7869
        %v7885 = vpack.c.b16 %v7872, %v7871
        %v7886 = vpack.c.b16 %v7874, %v7873
        %v7887 = vpack.c.b16 %v7876, %v7875
        %v7888 = vpack.c.b16 %v7878, %v7877
        %v7889 = vpack.c.b16 %v7880, %v7879
        %v7890 = vpack.c.b16 %v7882, %v7881
        %v7899 = vunpack.c.l.b16 %v7859
        %v7900 = vunpack.c.l.b16 %v7860
        %v7901 = vunpack.c.l.b16 %v7861
        %v7902 = vunpack.c.l.b16 %v7862
        %v7903 = vunpack.c.l.b16 %v7863
        %v7904 = vunpack.c.l.b16 %v7864
        %v7905 = vunpack.c.l.b16 %v7865
        %v7906 = vunpack.c.l.b16 %v7866
        %v7907 = vpack.c.b16 %v7900, %v7899
        %v7908 = vpack.c.b16 %v7902, %v7901
        %v7909 = vpack.c.b16 %v7904, %v7903
        %v7910 = vpack.c.b16 %v7906, %v7905
        %v7916 = vsel %vm775, %v7883, 0
        %v7919 = vsel %vm775, %v7884, 0
        %v7922 = vsel %vm775, %v7885, 0
        %v7925 = vsel %vm775, %v7886, 0
        %v7928 = vsel %vm775, %v7887, 0
        %v7931 = vsel %vm775, %v7888, 0
        %v7934 = vsel %vm775, %v7889, 0
        %v7937 = vsel %vm775, %v7890, 0
        %7939 = vmatprep.subr.bf16.mxu0 0
        %7940 = vmatpush1.bf16.msra.mxu0 0
        %7941 = vmatprep.subr.bf16.mxu0 0
        %7942 = vmatpush1.bf16.msra.mxu0 0
        %7943 = vmatprep.subr.bf16.mxu0 0
        %7944 = vmatpush1.bf16.msra.mxu0 0
        %7945 = vmatprep.subr.bf16.mxu0 0
        %7946 = vmatpush1.bf16.msra.mxu0 0
        %7947 = vmatprep.subr.bf16.mxu0 0
        %7948 = vmatpush1.bf16.msra.mxu0 %v7910
        %7949 = vmatprep.subr.bf16.mxu0 0
        %7950 = vmatpush1.bf16.msra.mxu0 %v7909
        %7951 = vmatprep.subr.bf16.mxu0 0
        %7952 = vmatpush1.bf16.msra.mxu0 %v7908
        %7953 = vmatprep.subr.bf16.mxu0 0
        %7954 = vmatpush1.bf16.msra.mxu0 %v7907
        %7955 = vmatprep.subr.bf16.mxu0 0
        %7956 = vmatpush2.bf16.msra.mxu0 0
        %7957 = vmatprep.subr.bf16.mxu0 0
        %7958 = vmatpush2.bf16.msra.mxu0 0
        %7959 = vmatprep.subr.bf16.mxu0 0
        %7960 = vmatpush2.bf16.msra.mxu0 0
        %7961 = vmatprep.subr.bf16.mxu0 0
        %7962 = vmatpush2.bf16.msra.mxu0 0
        %7963 = vmatprep.subr.bf16.mxu0 0
        %7964 = vmatpush2.bf16.msra.mxu0 0
        %7965 = vmatprep.subr.bf16.mxu0 0
        %7966 = vmatpush2.bf16.msra.mxu0 0
        %7967 = vmatprep.subr.bf16.mxu0 0
        %7968 = vmatpush2.bf16.msra.mxu0 0
        %7969 = vmatprep.subr.bf16.mxu0 0
        %7970 = vmatpush2.bf16.msra.mxu0 0
        %7971 = vmatprep.mubr.bf16.mxu0 0
        %7972 = vmatmul.mubr.bf16.gmra.mxu0 %v7916
        %v7973 = vpop.f32.mrf.mxu0
        %v7974 = vadd.f32 0.0, %v7973
        %v7975 = vpop.f32.mrf.mxu0
        %v7976 = vpop.f32.mrf.mxu0
        %v7977 = vadd.f32 0.0, %v7976
        %v7978 = vpop.f32.mrf.mxu0
        %7979 = vmatprep.mubr.bf16.mxu0 0
        %7980 = vmatmul.mubr.bf16.gmra.mxu0 %v7919
        %v7981 = vpop.f32.mrf.mxu0
        %v7982 = vadd.f32 0.0, %v7981
        %v7983 = vpop.f32.mrf.mxu0
        %v7984 = vpop.f32.mrf.mxu0
        %v7985 = vadd.f32 0.0, %v7984
        %v7986 = vpop.f32.mrf.mxu0
        %7987 = vmatprep.mubr.bf16.mxu0 0
        %7988 = vmatmul.mubr.bf16.gmra.mxu0 %v7922
        %v7989 = vpop.f32.mrf.mxu0
        %v7990 = vadd.f32 0.0, %v7989
        %v7991 = vpop.f32.mrf.mxu0
        %v7992 = vpop.f32.mrf.mxu0
        %v7993 = vadd.f32 0.0, %v7992
        %v7994 = vpop.f32.mrf.mxu0
        %7995 = vmatprep.mubr.bf16.mxu0 0
        %7996 = vmatmul.mubr.bf16.gmra.mxu0 %v7925
        %v7997 = vpop.f32.mrf.mxu0
        %v7998 = vadd.f32 0.0, %v7997
        %v7999 = vpop.f32.mrf.mxu0
        %v8000 = vpop.f32.mrf.mxu0
        %v8001 = vadd.f32 0.0, %v8000
        %v8002 = vpop.f32.mrf.mxu0
        %8003 = vmatprep.mubr.bf16.mxu0 0
        %8004 = vmatmul.mubr.bf16.gmra.mxu0 %v7928
        %v8005 = vpop.f32.mrf.mxu0
        %v8006 = vadd.f32 0.0, %v8005
        %v8007 = vpop.f32.mrf.mxu0
        %v8008 = vpop.f32.mrf.mxu0
        %v8009 = vadd.f32 0.0, %v8008
        %v8010 = vpop.f32.mrf.mxu0
        %8011 = vmatprep.mubr.bf16.mxu0 0
        %8012 = vmatmul.mubr.bf16.gmra.mxu0 %v7931
        %v8013 = vpop.f32.mrf.mxu0
        %v8014 = vadd.f32 0.0, %v8013
        %v8015 = vpop.f32.mrf.mxu0
        %v8016 = vpop.f32.mrf.mxu0
        %v8017 = vadd.f32 0.0, %v8016
        %v8018 = vpop.f32.mrf.mxu0
        %8019 = vmatprep.mubr.bf16.mxu0 0
        %8020 = vmatmul.mubr.bf16.gmra.mxu0 %v7934
        %v8021 = vpop.f32.mrf.mxu0
        %v8022 = vadd.f32 0.0, %v8021
        %v8023 = vpop.f32.mrf.mxu0
        %v8024 = vpop.f32.mrf.mxu0
        %v8025 = vadd.f32 0.0, %v8024
        %v8026 = vpop.f32.mrf.mxu0
        %8027 = vmatprep.mubr.bf16.mxu0 0
        %8028 = vmatmul.mubr.bf16.gmra.mxu0 %v7937
        %v8029 = vpop.f32.mrf.mxu0
        %v8030 = vadd.f32 0.0, %v8029
        %v8031 = vpop.f32.mrf.mxu0
        %v8032 = vpop.f32.mrf.mxu0
        %v8033 = vadd.f32 0.0, %v8032
        %v8034 = vpop.f32.mrf.mxu0
        %8035 = vdwg.mxu0
        %v8036 = vadd.f32 %v7716, %v7974
        %v8037 = vadd.f32 %v7719, %v7977
        %v8038 = vadd.f32 %v7724, %v7982
        %v8039 = vadd.f32 %v7727, %v7985
        %v8040 = vadd.f32 %v7732, %v7990
        %v8041 = vadd.f32 %v7735, %v7993
        %v8042 = vadd.f32 %v7740, %v7998
        %v8043 = vadd.f32 %v7743, %v8001
        %v8044 = vadd.f32 %v7748, %v8006
        %v8045 = vadd.f32 %v7751, %v8009
        %v8046 = vadd.f32 %v7756, %v8014
        %v8047 = vadd.f32 %v7759, %v8017
        %v8048 = vadd.f32 %v7764, %v8022
        %v8049 = vadd.f32 %v7767, %v8025
        %v8050 = vadd.f32 %v7772, %v8030
        %v8051 = vadd.f32 %v7775, %v8033
        %v8052 = vld [vmem:[%s7078] sm:$0xf]
        %v8053 = vld [vmem:[%s7078 + $0x4] sm:$0xf]
        %v8054 = vld [vmem:[%s7078 + $0x18] sm:$0xf]
        %v8055 = vld [vmem:[%s7078 + $0x1c] sm:$0xf]
        %v8056 = vld [vmem:[%s7078 + $0x30] sm:$0xf]
        %v8057 = vld [vmem:[%s7078 + $0x34] sm:$0xf]
        %v8058 = vld [vmem:[%s7078 + $0x48] sm:$0xf]
        %v8059 = vld [vmem:[%s7078 + $0x4c] sm:$0xf]
        %v8060 = vld [vmem:[%s7078 + $0x60] sm:$0xf]
        %v8061 = vld [vmem:[%s7078 + $0x64] sm:$0xf]
        %v8062 = vld [vmem:[%s7078 + $0x78] sm:$0xf]
        %v8063 = vld [vmem:[%s7078 + $0x7c] sm:$0xf]
        %v8064 = vld [vmem:[%s7078 + $0x90] sm:$0xf]
        %v8065 = vld [vmem:[%s7078 + $0x94] sm:$0xf]
        %v8066 = vld [vmem:[%s7078 + $0xa8] sm:$0xf]
        %v8067 = vld [vmem:[%s7078 + $0xac] sm:$0xf]
        %s8068 = scalar_lea.vmem %s3, 96
        %v8069 = vld [vmem:[%s8068] sm:$0xf]
        %v8070 = vld [vmem:[%s8068 + $0x4] sm:$0xf]
        %v8071 = vld [vmem:[%s8068 + $0x8] sm:$0xf]
        %v8072 = vld [vmem:[%s8068 + $0xc] sm:$0xf]
        %v8073 = vld [vmem:[%s8068 + $0x10] sm:$0xf]
        %v8074 = vld [vmem:[%s8068 + $0x14] sm:$0xf]
        %v8075 = vld [vmem:[%s8068 + $0x18] sm:$0xf]
        %v8076 = vld [vmem:[%s8068 + $0x1c] sm:$0xf]
        %v8093 = vunpack.c.l.b16 %v8052
        %v8094 = vunpack.c.l.b16 %v8053
        %v8095 = vunpack.c.l.b16 %v8054
        %v8096 = vunpack.c.l.b16 %v8055
        %v8097 = vunpack.c.l.b16 %v8056
        %v8098 = vunpack.c.l.b16 %v8057
        %v8099 = vunpack.c.l.b16 %v8058
        %v8100 = vunpack.c.l.b16 %v8059
        %v8101 = vunpack.c.l.b16 %v8060
        %v8102 = vunpack.c.l.b16 %v8061
        %v8103 = vunpack.c.l.b16 %v8062
        %v8104 = vunpack.c.l.b16 %v8063
        %v8105 = vunpack.c.l.b16 %v8064
        %v8106 = vunpack.c.l.b16 %v8065
        %v8107 = vunpack.c.l.b16 %v8066
        %v8108 = vunpack.c.l.b16 %v8067
        %v8109 = vpack.c.b16 %v8094, %v8093
        %v8110 = vpack.c.b16 %v8096, %v8095
        %v8111 = vpack.c.b16 %v8098, %v8097
        %v8112 = vpack.c.b16 %v8100, %v8099
        %v8113 = vpack.c.b16 %v8102, %v8101
        %v8114 = vpack.c.b16 %v8104, %v8103
        %v8115 = vpack.c.b16 %v8106, %v8105
        %v8116 = vpack.c.b16 %v8108, %v8107
        %v8125 = vunpack.c.l.b16 %v8069
        %v8126 = vunpack.c.l.b16 %v8070
        %v8127 = vunpack.c.l.b16 %v8071
        %v8128 = vunpack.c.l.b16 %v8072
        %v8129 = vunpack.c.l.b16 %v8073
        %v8130 = vunpack.c.l.b16 %v8074
        %v8131 = vunpack.c.l.b16 %v8075
        %v8132 = vunpack.c.l.b16 %v8076
        %v8133 = vpack.c.b16 %v8126, %v8125
        %v8134 = vpack.c.b16 %v8128, %v8127
        %v8135 = vpack.c.b16 %v8130, %v8129
        %v8136 = vpack.c.b16 %v8132, %v8131
        %v8142 = vsel %vm775, %v8109, 0
        %v8145 = vsel %vm775, %v8110, 0
        %v8148 = vsel %vm775, %v8111, 0
        %v8151 = vsel %vm775, %v8112, 0
        %v8154 = vsel %vm775, %v8113, 0
        %v8157 = vsel %vm775, %v8114, 0
        %v8160 = vsel %vm775, %v8115, 0
        %v8163 = vsel %vm775, %v8116, 0
        %8165 = vmatprep.subr.bf16.mxu0 0
        %8166 = vmatpush1.bf16.msra.mxu0 0
        %8167 = vmatprep.subr.bf16.mxu0 0
        %8168 = vmatpush1.bf16.msra.mxu0 0
        %8169 = vmatprep.subr.bf16.mxu0 0
        %8170 = vmatpush1.bf16.msra.mxu0 0
        %8171 = vmatprep.subr.bf16.mxu0 0
        %8172 = vmatpush1.bf16.msra.mxu0 0
        %8173 = vmatprep.subr.bf16.mxu0 0
        %8174 = vmatpush1.bf16.msra.mxu0 %v8136
        %8175 = vmatprep.subr.bf16.mxu0 0
        %8176 = vmatpush1.bf16.msra.mxu0 %v8135
        %8177 = vmatprep.subr.bf16.mxu0 0
        %8178 = vmatpush1.bf16.msra.mxu0 %v8134
        %8179 = vmatprep.subr.bf16.mxu0 0
        %8180 = vmatpush1.bf16.msra.mxu0 %v8133
        %8181 = vmatprep.subr.bf16.mxu0 0
        %8182 = vmatpush2.bf16.msra.mxu0 0
        %8183 = vmatprep.subr.bf16.mxu0 0
        %8184 = vmatpush2.bf16.msra.mxu0 0
        %8185 = vmatprep.subr.bf16.mxu0 0
        %8186 = vmatpush2.bf16.msra.mxu0 0
        %8187 = vmatprep.subr.bf16.mxu0 0
        %8188 = vmatpush2.bf16.msra.mxu0 0
        %8189 = vmatprep.subr.bf16.mxu0 0
        %8190 = vmatpush2.bf16.msra.mxu0 0
        %8191 = vmatprep.subr.bf16.mxu0 0
        %8192 = vmatpush2.bf16.msra.mxu0 0
        %8193 = vmatprep.subr.bf16.mxu0 0
        %8194 = vmatpush2.bf16.msra.mxu0 0
        %8195 = vmatprep.subr.bf16.mxu0 0
        %8196 = vmatpush2.bf16.msra.mxu0 0
        %8197 = vmatprep.mubr.bf16.mxu0 0
        %8198 = vmatmul.mubr.bf16.gmra.mxu0 %v8142
        %v8199 = vpop.f32.mrf.mxu0
        %v8200 = vadd.f32 0.0, %v8199
        %v8201 = vpop.f32.mrf.mxu0
        %v8202 = vpop.f32.mrf.mxu0
        %v8203 = vadd.f32 0.0, %v8202
        %v8204 = vpop.f32.mrf.mxu0
        %8205 = vmatprep.mubr.bf16.mxu0 0
        %8206 = vmatmul.mubr.bf16.gmra.mxu0 %v8145
        %v8207 = vpop.f32.mrf.mxu0
        %v8208 = vadd.f32 0.0, %v8207
        %v8209 = vpop.f32.mrf.mxu0
        %v8210 = vpop.f32.mrf.mxu0
        %v8211 = vadd.f32 0.0, %v8210
        %v8212 = vpop.f32.mrf.mxu0
        %8213 = vmatprep.mubr.bf16.mxu0 0
        %8214 = vmatmul.mubr.bf16.gmra.mxu0 %v8148
        %v8215 = vpop.f32.mrf.mxu0
        %v8216 = vadd.f32 0.0, %v8215
        %v8217 = vpop.f32.mrf.mxu0
        %v8218 = vpop.f32.mrf.mxu0
        %v8219 = vadd.f32 0.0, %v8218
        %v8220 = vpop.f32.mrf.mxu0
        %8221 = vmatprep.mubr.bf16.mxu0 0
        %8222 = vmatmul.mubr.bf16.gmra.mxu0 %v8151
        %v8223 = vpop.f32.mrf.mxu0
        %v8224 = vadd.f32 0.0, %v8223
        %v8225 = vpop.f32.mrf.mxu0
        %v8226 = vpop.f32.mrf.mxu0
        %v8227 = vadd.f32 0.0, %v8226
        %v8228 = vpop.f32.mrf.mxu0
        %8229 = vmatprep.mubr.bf16.mxu0 0
        %8230 = vmatmul.mubr.bf16.gmra.mxu0 %v8154
        %v8231 = vpop.f32.mrf.mxu0
        %v8232 = vadd.f32 0.0, %v8231
        %v8233 = vpop.f32.mrf.mxu0
        %v8234 = vpop.f32.mrf.mxu0
        %v8235 = vadd.f32 0.0, %v8234
        %v8236 = vpop.f32.mrf.mxu0
        %8237 = vmatprep.mubr.bf16.mxu0 0
        %8238 = vmatmul.mubr.bf16.gmra.mxu0 %v8157
        %v8239 = vpop.f32.mrf.mxu0
        %v8240 = vadd.f32 0.0, %v8239
        %v8241 = vpop.f32.mrf.mxu0
        %v8242 = vpop.f32.mrf.mxu0
        %v8243 = vadd.f32 0.0, %v8242
        %v8244 = vpop.f32.mrf.mxu0
        %8245 = vmatprep.mubr.bf16.mxu0 0
        %8246 = vmatmul.mubr.bf16.gmra.mxu0 %v8160
        %v8247 = vpop.f32.mrf.mxu0
        %v8248 = vadd.f32 0.0, %v8247
        %v8249 = vpop.f32.mrf.mxu0
        %v8250 = vpop.f32.mrf.mxu0
        %v8251 = vadd.f32 0.0, %v8250
        %v8252 = vpop.f32.mrf.mxu0
        %8253 = vmatprep.mubr.bf16.mxu0 0
        %8254 = vmatmul.mubr.bf16.gmra.mxu0 %v8163
        %v8255 = vpop.f32.mrf.mxu0
        %v8256 = vadd.f32 0.0, %v8255
        %v8257 = vpop.f32.mrf.mxu0
        %v8258 = vpop.f32.mrf.mxu0
        %v8259 = vadd.f32 0.0, %v8258
        %v8260 = vpop.f32.mrf.mxu0
        %8261 = vdwg.mxu0
        %v8262 = vadd.f32 %v8036, %v8200
        %v8263 = vadd.f32 %v8037, %v8203
        %v8264 = vadd.f32 %v8038, %v8208
        %v8265 = vadd.f32 %v8039, %v8211
        %v8266 = vadd.f32 %v8040, %v8216
        %v8267 = vadd.f32 %v8041, %v8219
        %v8268 = vadd.f32 %v8042, %v8224
        %v8269 = vadd.f32 %v8043, %v8227
        %v8270 = vadd.f32 %v8044, %v8232
        %v8271 = vadd.f32 %v8045, %v8235
        %v8272 = vadd.f32 %v8046, %v8240
        %v8273 = vadd.f32 %v8047, %v8243
        %v8274 = vadd.f32 %v8048, %v8248
        %v8275 = vadd.f32 %v8049, %v8251
        %v8276 = vadd.f32 %v8050, %v8256
        %v8277 = vadd.f32 %v8051, %v8259
        %v8278 = vld [vmem:[%s7078] sm:$0xf]
        %v8279 = vld [vmem:[%s7078 + $0x4] sm:$0xf]
        %v8280 = vld [vmem:[%s7078 + $0x8] sm:$0x1]
        %v8281 = vld [vmem:[%s7078 + $0x18] sm:$0xf]
        %v8282 = vld [vmem:[%s7078 + $0x1c] sm:$0xf]
        %v8283 = vld [vmem:[%s7078 + $0x20] sm:$0x1]
        %v8284 = vld [vmem:[%s7078 + $0x30] sm:$0xf]
        %v8285 = vld [vmem:[%s7078 + $0x34] sm:$0xf]
        %v8286 = vld [vmem:[%s7078 + $0x38] sm:$0x1]
        %v8287 = vld [vmem:[%s7078 + $0x48] sm:$0xf]
        %v8288 = vld [vmem:[%s7078 + $0x4c] sm:$0xf]
        %v8289 = vld [vmem:[%s7078 + $0x50] sm:$0x1]
        %v8290 = vld [vmem:[%s7078 + $0x60] sm:$0xf]
        %v8291 = vld [vmem:[%s7078 + $0x64] sm:$0xf]
        %v8292 = vld [vmem:[%s7078 + $0x68] sm:$0x1]
        %v8293 = vld [vmem:[%s7078 + $0x78] sm:$0xf]
        %v8294 = vld [vmem:[%s7078 + $0x7c] sm:$0xf]
        %v8295 = vld [vmem:[%s7078 + $0x80] sm:$0x1]
        %v8296 = vld [vmem:[%s7078 + $0x90] sm:$0xf]
        %v8297 = vld [vmem:[%s7078 + $0x94] sm:$0xf]
        %v8298 = vld [vmem:[%s7078 + $0x98] sm:$0x1]
        %v8299 = vld [vmem:[%s7078 + $0xa8] sm:$0xf]
        %v8300 = vld [vmem:[%s7078 + $0xac] sm:$0xf]
        %v8301 = vld [vmem:[%s7078 + $0xb0] sm:$0x1]
        %v8303 = vshrl.u32 %v8278, 16
        %v8305 = vrot.slane %v8303, 4
        %v8306 = vshll.u32 %v8278, 16
        %v8308 = vrot.slane %v8306, 5
        %v8309 = vor.u32 %v8305, %v8308
        %v8310 = vrot.slane %v8309, 4
        %v8312 = vshll.u32 %v8279, 16
        %v8314 = vrot.slane %v8312, 5
        %v8315 = vsel %vm309, %v8310, %v8314
        %v8316 = vshrl.u32 %v8279, 16
        %v8318 = vrot.slane %v8316, 4
        %v8319 = vor.u32 %v8318, %v8314
        %v8320 = vrot.slane %v8319, 4
        %v8322 = vshll.u32 %v8280, 16
        %v8324 = vrot.slane %v8322, 5
        %v8325 = vsel %vm309, %v8320, %v8324
        %v8327 = vshrl.u32 %v8281, 16
        %v8329 = vrot.slane %v8327, 4
        %v8330 = vshll.u32 %v8281, 16
        %v8332 = vrot.slane %v8330, 5
        %v8333 = vor.u32 %v8329, %v8332
        %v8334 = vrot.slane %v8333, 4
        %v8336 = vshll.u32 %v8282, 16
        %v8338 = vrot.slane %v8336, 5
        %v8339 = vsel %vm309, %v8334, %v8338
        %v8340 = vshrl.u32 %v8282, 16
        %v8342 = vrot.slane %v8340, 4
        %v8343 = vor.u32 %v8342, %v8338
        %v8344 = vrot.slane %v8343, 4
        %v8346 = vshll.u32 %v8283, 16
        %v8348 = vrot.slane %v8346, 5
        %v8349 = vsel %vm309, %v8344, %v8348
        %v8351 = vshrl.u32 %v8284, 16
        %v8353 = vrot.slane %v8351, 4
        %v8354 = vshll.u32 %v8284, 16
        %v8356 = vrot.slane %v8354, 5
        %v8357 = vor.u32 %v8353, %v8356
        %v8358 = vrot.slane %v8357, 4
        %v8360 = vshll.u32 %v8285, 16
        %v8362 = vrot.slane %v8360, 5
        %v8363 = vsel %vm309, %v8358, %v8362
        %v8364 = vshrl.u32 %v8285, 16
        %v8366 = vrot.slane %v8364, 4
        %v8367 = vor.u32 %v8366, %v8362
        %v8368 = vrot.slane %v8367, 4
        %v8370 = vshll.u32 %v8286, 16
        %v8372 = vrot.slane %v8370, 5
        %v8373 = vsel %vm309, %v8368, %v8372
        %v8375 = vshrl.u32 %v8287, 16
        %v8377 = vrot.slane %v8375, 4
        %v8378 = vshll.u32 %v8287, 16
        %v8380 = vrot.slane %v8378, 5
        %v8381 = vor.u32 %v8377, %v8380
        %v8382 = vrot.slane %v8381, 4
        %v8384 = vshll.u32 %v8288, 16
        %v8386 = vrot.slane %v8384, 5
        %v8387 = vsel %vm309, %v8382, %v8386
        %v8388 = vshrl.u32 %v8288, 16
        %v8390 = vrot.slane %v8388, 4
        %v8391 = vor.u32 %v8390, %v8386
        %v8392 = vrot.slane %v8391, 4
        %v8394 = vshll.u32 %v8289, 16
        %v8396 = vrot.slane %v8394, 5
        %v8397 = vsel %vm309, %v8392, %v8396
        %v8399 = vshrl.u32 %v8290, 16
        %v8401 = vrot.slane %v8399, 4
        %v8402 = vshll.u32 %v8290, 16
        %v8404 = vrot.slane %v8402, 5
        %v8405 = vor.u32 %v8401, %v8404
        %v8406 = vrot.slane %v8405, 4
        %v8408 = vshll.u32 %v8291, 16
        %v8410 = vrot.slane %v8408, 5
        %v8411 = vsel %vm309, %v8406, %v8410
        %v8412 = vshrl.u32 %v8291, 16
        %v8414 = vrot.slane %v8412, 4
        %v8415 = vor.u32 %v8414, %v8410
        %v8416 = vrot.slane %v8415, 4
        %v8418 = vshll.u32 %v8292, 16
        %v8420 = vrot.slane %v8418, 5
        %v8421 = vsel %vm309, %v8416, %v8420
        %v8423 = vshrl.u32 %v8293, 16
        %v8425 = vrot.slane %v8423, 4
        %v8426 = vshll.u32 %v8293, 16
        %v8428 = vrot.slane %v8426, 5
        %v8429 = vor.u32 %v8425, %v8428
        %v8430 = vrot.slane %v8429, 4
        %v8432 = vshll.u32 %v8294, 16
        %v8434 = vrot.slane %v8432, 5
        %v8435 = vsel %vm309, %v8430, %v8434
        %v8436 = vshrl.u32 %v8294, 16
        %v8438 = vrot.slane %v8436, 4
        %v8439 = vor.u32 %v8438, %v8434
        %v8440 = vrot.slane %v8439, 4
        %v8442 = vshll.u32 %v8295, 16
        %v8444 = vrot.slane %v8442, 5
        %v8445 = vsel %vm309, %v8440, %v8444
        %v8447 = vshrl.u32 %v8296, 16
        %v8449 = vrot.slane %v8447, 4
        %v8450 = vshll.u32 %v8296, 16
        %v8452 = vrot.slane %v8450, 5
        %v8453 = vor.u32 %v8449, %v8452
        %v8454 = vrot.slane %v8453, 4
        %v8456 = vshll.u32 %v8297, 16
        %v8458 = vrot.slane %v8456, 5
        %v8459 = vsel %vm309, %v8454, %v8458
        %v8460 = vshrl.u32 %v8297, 16
        %v8462 = vrot.slane %v8460, 4
        %v8463 = vor.u32 %v8462, %v8458
        %v8464 = vrot.slane %v8463, 4
        %v8466 = vshll.u32 %v8298, 16
        %v8468 = vrot.slane %v8466, 5
        %v8469 = vsel %vm309, %v8464, %v8468
        %v8471 = vshrl.u32 %v8299, 16
        %v8473 = vrot.slane %v8471, 4
        %v8474 = vshll.u32 %v8299, 16
        %v8476 = vrot.slane %v8474, 5
        %v8477 = vor.u32 %v8473, %v8476
        %v8478 = vrot.slane %v8477, 4
        %v8480 = vshll.u32 %v8300, 16
        %v8482 = vrot.slane %v8480, 5
        %v8483 = vsel %vm309, %v8478, %v8482
        %v8484 = vshrl.u32 %v8300, 16
        %v8486 = vrot.slane %v8484, 4
        %v8487 = vor.u32 %v8486, %v8482
        %v8488 = vrot.slane %v8487, 4
        %v8490 = vshll.u32 %v8301, 16
        %v8492 = vrot.slane %v8490, 5
        %v8493 = vsel %vm309, %v8488, %v8492
        %s8494 = scalar_lea.vmem %s3, 128
        %v8495 = vld [vmem:[%s8494] sm:$0xf]
        %v8496 = vld [vmem:[%s8494 + $0x4] sm:$0xf]
        %v8497 = vld [vmem:[%s8494 + $0x8] sm:$0xf]
        %v8498 = vld [vmem:[%s8494 + $0xc] sm:$0xf]
        %v8499 = vld [vmem:[%s8494 + $0x10] sm:$0xf]
        %v8500 = vld [vmem:[%s8494 + $0x14] sm:$0xf]
        %v8501 = vld [vmem:[%s8494 + $0x18] sm:$0xf]
        %v8502 = vld [vmem:[%s8494 + $0x1c] sm:$0xf]
        %v8503 = vunpack.c.l.b16 %v8315
        %v8504 = vunpack.c.l.b16 %v8325
        %v8505 = vunpack.c.l.b16 %v8339
        %v8506 = vunpack.c.l.b16 %v8349
        %v8507 = vunpack.c.l.b16 %v8363
        %v8508 = vunpack.c.l.b16 %v8373
        %v8509 = vunpack.c.l.b16 %v8387
        %v8510 = vunpack.c.l.b16 %v8397
        %v8511 = vunpack.c.l.b16 %v8411
        %v8512 = vunpack.c.l.b16 %v8421
        %v8513 = vunpack.c.l.b16 %v8435
        %v8514 = vunpack.c.l.b16 %v8445
        %v8515 = vunpack.c.l.b16 %v8459
        %v8516 = vunpack.c.l.b16 %v8469
        %v8517 = vunpack.c.l.b16 %v8483
        %v8518 = vunpack.c.l.b16 %v8493
        %v8519 = vpack.c.b16 %v8504, %v8503
        %v8520 = vpack.c.b16 %v8506, %v8505
        %v8521 = vpack.c.b16 %v8508, %v8507
        %v8522 = vpack.c.b16 %v8510, %v8509
        %v8523 = vpack.c.b16 %v8512, %v8511
        %v8524 = vpack.c.b16 %v8514, %v8513
        %v8525 = vpack.c.b16 %v8516, %v8515
        %v8526 = vpack.c.b16 %v8518, %v8517
        %v8535 = vunpack.c.l.b16 %v8495
        %v8536 = vunpack.c.l.b16 %v8496
        %v8537 = vunpack.c.l.b16 %v8497
        %v8538 = vunpack.c.l.b16 %v8498
        %v8539 = vunpack.c.l.b16 %v8499
        %v8540 = vunpack.c.l.b16 %v8500
        %v8541 = vunpack.c.l.b16 %v8501
        %v8542 = vunpack.c.l.b16 %v8502
        %v8543 = vpack.c.b16 %v8536, %v8535
        %v8544 = vpack.c.b16 %v8538, %v8537
        %v8545 = vpack.c.b16 %v8540, %v8539
        %v8546 = vpack.c.b16 %v8542, %v8541
        %v8552 = vsel %vm775, %v8519, 0
        %v8555 = vsel %vm775, %v8520, 0
        %v8558 = vsel %vm775, %v8521, 0
        %v8561 = vsel %vm775, %v8522, 0
        %v8564 = vsel %vm775, %v8523, 0
        %v8567 = vsel %vm775, %v8524, 0
        %v8570 = vsel %vm775, %v8525, 0
        %v8573 = vsel %vm775, %v8526, 0
        %8575 = vmatprep.subr.bf16.mxu0 0
        %8576 = vmatpush1.bf16.msra.mxu0 0
        %8577 = vmatprep.subr.bf16.mxu0 0
        %8578 = vmatpush1.bf16.msra.mxu0 0
        %8579 = vmatprep.subr.bf16.mxu0 0
        %8580 = vmatpush1.bf16.msra.mxu0 0
        %8581 = vmatprep.subr.bf16.mxu0 0
        %8582 = vmatpush1.bf16.msra.mxu0 0
        %8583 = vmatprep.subr.bf16.mxu0 0
        %8584 = vmatpush1.bf16.msra.mxu0 %v8546
        %8585 = vmatprep.subr.bf16.mxu0 0
        %8586 = vmatpush1.bf16.msra.mxu0 %v8545
        %8587 = vmatprep.subr.bf16.mxu0 0
        %8588 = vmatpush1.bf16.msra.mxu0 %v8544
        %8589 = vmatprep.subr.bf16.mxu0 0
        %8590 = vmatpush1.bf16.msra.mxu0 %v8543
        %8591 = vmatprep.subr.bf16.mxu0 0
        %8592 = vmatpush2.bf16.msra.mxu0 0
        %8593 = vmatprep.subr.bf16.mxu0 0
        %8594 = vmatpush2.bf16.msra.mxu0 0
        %8595 = vmatprep.subr.bf16.mxu0 0
        %8596 = vmatpush2.bf16.msra.mxu0 0
        %8597 = vmatprep.subr.bf16.mxu0 0
        %8598 = vmatpush2.bf16.msra.mxu0 0
        %8599 = vmatprep.subr.bf16.mxu0 0
        %8600 = vmatpush2.bf16.msra.mxu0 0
        %8601 = vmatprep.subr.bf16.mxu0 0
        %8602 = vmatpush2.bf16.msra.mxu0 0
        %8603 = vmatprep.subr.bf16.mxu0 0
        %8604 = vmatpush2.bf16.msra.mxu0 0
        %8605 = vmatprep.subr.bf16.mxu0 0
        %8606 = vmatpush2.bf16.msra.mxu0 0
        %8607 = vmatprep.mubr.bf16.mxu0 0
        %8608 = vmatmul.mubr.bf16.gmra.mxu0 %v8552
        %v8609 = vpop.f32.mrf.mxu0
        %v8610 = vadd.f32 0.0, %v8609
        %v8611 = vpop.f32.mrf.mxu0
        %v8612 = vpop.f32.mrf.mxu0
        %v8613 = vadd.f32 0.0, %v8612
        %v8614 = vpop.f32.mrf.mxu0
        %8615 = vmatprep.mubr.bf16.mxu0 0
        %8616 = vmatmul.mubr.bf16.gmra.mxu0 %v8555
        %v8617 = vpop.f32.mrf.mxu0
        %v8618 = vadd.f32 0.0, %v8617
        %v8619 = vpop.f32.mrf.mxu0
        %v8620 = vpop.f32.mrf.mxu0
        %v8621 = vadd.f32 0.0, %v8620
        %v8622 = vpop.f32.mrf.mxu0
        %8623 = vmatprep.mubr.bf16.mxu0 0
        %8624 = vmatmul.mubr.bf16.gmra.mxu0 %v8558
        %v8625 = vpop.f32.mrf.mxu0
        %v8626 = vadd.f32 0.0, %v8625
        %v8627 = vpop.f32.mrf.mxu0
        %v8628 = vpop.f32.mrf.mxu0
        %v8629 = vadd.f32 0.0, %v8628
        %v8630 = vpop.f32.mrf.mxu0
        %8631 = vmatprep.mubr.bf16.mxu0 0
        %8632 = vmatmul.mubr.bf16.gmra.mxu0 %v8561
        %v8633 = vpop.f32.mrf.mxu0
        %v8634 = vadd.f32 0.0, %v8633
        %v8635 = vpop.f32.mrf.mxu0
        %v8636 = vpop.f32.mrf.mxu0
        %v8637 = vadd.f32 0.0, %v8636
        %v8638 = vpop.f32.mrf.mxu0
        %8639 = vmatprep.mubr.bf16.mxu0 0
        %8640 = vmatmul.mubr.bf16.gmra.mxu0 %v8564
        %v8641 = vpop.f32.mrf.mxu0
        %v8642 = vadd.f32 0.0, %v8641
        %v8643 = vpop.f32.mrf.mxu0
        %v8644 = vpop.f32.mrf.mxu0
        %v8645 = vadd.f32 0.0, %v8644
        %v8646 = vpop.f32.mrf.mxu0
        %8647 = vmatprep.mubr.bf16.mxu0 0
        %8648 = vmatmul.mubr.bf16.gmra.mxu0 %v8567
        %v8649 = vpop.f32.mrf.mxu0
        %v8650 = vadd.f32 0.0, %v8649
        %v8651 = vpop.f32.mrf.mxu0
        %v8652 = vpop.f32.mrf.mxu0
        %v8653 = vadd.f32 0.0, %v8652
        %v8654 = vpop.f32.mrf.mxu0
        %8655 = vmatprep.mubr.bf16.mxu0 0
        %8656 = vmatmul.mubr.bf16.gmra.mxu0 %v8570
        %v8657 = vpop.f32.mrf.mxu0
        %v8658 = vadd.f32 0.0, %v8657
        %v8659 = vpop.f32.mrf.mxu0
        %v8660 = vpop.f32.mrf.mxu0
        %v8661 = vadd.f32 0.0, %v8660
        %v8662 = vpop.f32.mrf.mxu0
        %8663 = vmatprep.mubr.bf16.mxu0 0
        %8664 = vmatmul.mubr.bf16.gmra.mxu0 %v8573
        %v8665 = vpop.f32.mrf.mxu0
        %v8666 = vadd.f32 0.0, %v8665
        %v8667 = vpop.f32.mrf.mxu0
        %v8668 = vpop.f32.mrf.mxu0
        %v8669 = vadd.f32 0.0, %v8668
        %v8670 = vpop.f32.mrf.mxu0
        %8671 = vdwg.mxu0
        %v8672 = vadd.f32 %v8262, %v8610
        %v8673 = vadd.f32 %v8263, %v8613
        %v8674 = vadd.f32 %v8264, %v8618
        %v8675 = vadd.f32 %v8265, %v8621
        %v8676 = vadd.f32 %v8266, %v8626
        %v8677 = vadd.f32 %v8267, %v8629
        %v8678 = vadd.f32 %v8268, %v8634
        %v8679 = vadd.f32 %v8269, %v8637
        %v8680 = vadd.f32 %v8270, %v8642
        %v8681 = vadd.f32 %v8271, %v8645
        %v8682 = vadd.f32 %v8272, %v8650
        %v8683 = vadd.f32 %v8273, %v8653
        %v8684 = vadd.f32 %v8274, %v8658
        %v8685 = vadd.f32 %v8275, %v8661
        %v8686 = vadd.f32 %v8276, %v8666
        %v8687 = vadd.f32 %v8277, %v8669
        %v8688 = vld [vmem:[%s7078] sm:$0xe]
        %v8689 = vld [vmem:[%s7078 + $0x18] sm:$0xe]
        %v8690 = vld [vmem:[%s7078 + $0x30] sm:$0xe]
        %v8691 = vld [vmem:[%s7078 + $0x48] sm:$0xe]
        %v8692 = vld [vmem:[%s7078 + $0x60] sm:$0xe]
        %v8693 = vld [vmem:[%s7078 + $0x78] sm:$0xe]
        %v8694 = vld [vmem:[%s7078 + $0x90] sm:$0xe]
        %v8695 = vld [vmem:[%s7078 + $0xa8] sm:$0xe]
        %v8720 = vrot.slane %v8688, 5
        %v8721 = vrot.slane %v8720, 4
        %v8722 = vrot.slane %v8279, 5
        %v8723 = vsel %vm1348, %v8721, %v8722
        %v8724 = vrot.slane %v8722, 4
        %v8725 = vrot.slane %v8280, 5
        %v8726 = vsel %vm1348, %v8724, %v8725
        %v8727 = vrot.slane %v8689, 5
        %v8728 = vrot.slane %v8727, 4
        %v8729 = vrot.slane %v8282, 5
        %v8730 = vsel %vm1348, %v8728, %v8729
        %v8731 = vrot.slane %v8729, 4
        %v8732 = vrot.slane %v8283, 5
        %v8733 = vsel %vm1348, %v8731, %v8732
        %v8734 = vrot.slane %v8690, 5
        %v8735 = vrot.slane %v8734, 4
        %v8736 = vrot.slane %v8285, 5
        %v8737 = vsel %vm1348, %v8735, %v8736
        %v8738 = vrot.slane %v8736, 4
        %v8739 = vrot.slane %v8286, 5
        %v8740 = vsel %vm1348, %v8738, %v8739
        %v8741 = vrot.slane %v8691, 5
        %v8742 = vrot.slane %v8741, 4
        %v8743 = vrot.slane %v8288, 5
        %v8744 = vsel %vm1348, %v8742, %v8743
        %v8745 = vrot.slane %v8743, 4
        %v8746 = vrot.slane %v8289, 5
        %v8747 = vsel %vm1348, %v8745, %v8746
        %v8748 = vrot.slane %v8692, 5
        %v8749 = vrot.slane %v8748, 4
        %v8750 = vrot.slane %v8291, 5
        %v8751 = vsel %vm1348, %v8749, %v8750
        %v8752 = vrot.slane %v8750, 4
        %v8753 = vrot.slane %v8292, 5
        %v8754 = vsel %vm1348, %v8752, %v8753
        %v8755 = vrot.slane %v8693, 5
        %v8756 = vrot.slane %v8755, 4
        %v8757 = vrot.slane %v8294, 5
        %v8758 = vsel %vm1348, %v8756, %v8757
        %v8759 = vrot.slane %v8757, 4
        %v8760 = vrot.slane %v8295, 5
        %v8761 = vsel %vm1348, %v8759, %v8760
        %v8762 = vrot.slane %v8694, 5
        %v8763 = vrot.slane %v8762, 4
        %v8764 = vrot.slane %v8297, 5
        %v8765 = vsel %vm1348, %v8763, %v8764
        %v8766 = vrot.slane %v8764, 4
        %v8767 = vrot.slane %v8298, 5
        %v8768 = vsel %vm1348, %v8766, %v8767
        %v8769 = vrot.slane %v8695, 5
        %v8770 = vrot.slane %v8769, 4
        %v8771 = vrot.slane %v8300, 5
        %v8772 = vsel %vm1348, %v8770, %v8771
        %v8773 = vrot.slane %v8771, 4
        %v8774 = vrot.slane %v8301, 5
        %v8775 = vsel %vm1348, %v8773, %v8774
        %s8776 = scalar_lea.vmem %s3, 160
        %v8777 = vld [vmem:[%s8776] sm:$0xf]
        %v8778 = vld [vmem:[%s8776 + $0x4] sm:$0xf]
        %v8779 = vld [vmem:[%s8776 + $0x8] sm:$0xf]
        %v8780 = vld [vmem:[%s8776 + $0xc] sm:$0xf]
        %v8781 = vld [vmem:[%s8776 + $0x10] sm:$0xf]
        %v8782 = vld [vmem:[%s8776 + $0x14] sm:$0xf]
        %v8783 = vld [vmem:[%s8776 + $0x18] sm:$0xf]
        %v8784 = vld [vmem:[%s8776 + $0x1c] sm:$0xf]
        %v8785 = vunpack.c.l.b16 %v8723
        %v8786 = vunpack.c.l.b16 %v8726
        %v8787 = vunpack.c.l.b16 %v8730
        %v8788 = vunpack.c.l.b16 %v8733
        %v8789 = vunpack.c.l.b16 %v8737
        %v8790 = vunpack.c.l.b16 %v8740
        %v8791 = vunpack.c.l.b16 %v8744
        %v8792 = vunpack.c.l.b16 %v8747
        %v8793 = vunpack.c.l.b16 %v8751
        %v8794 = vunpack.c.l.b16 %v8754
        %v8795 = vunpack.c.l.b16 %v8758
        %v8796 = vunpack.c.l.b16 %v8761
        %v8797 = vunpack.c.l.b16 %v8765
        %v8798 = vunpack.c.l.b16 %v8768
        %v8799 = vunpack.c.l.b16 %v8772
        %v8800 = vunpack.c.l.b16 %v8775
        %v8801 = vpack.c.b16 %v8786, %v8785
        %v8802 = vpack.c.b16 %v8788, %v8787
        %v8803 = vpack.c.b16 %v8790, %v8789
        %v8804 = vpack.c.b16 %v8792, %v8791
        %v8805 = vpack.c.b16 %v8794, %v8793
        %v8806 = vpack.c.b16 %v8796, %v8795
        %v8807 = vpack.c.b16 %v8798, %v8797
        %v8808 = vpack.c.b16 %v8800, %v8799
        %v8817 = vunpack.c.l.b16 %v8777
        %v8818 = vunpack.c.l.b16 %v8778
        %v8819 = vunpack.c.l.b16 %v8779
        %v8820 = vunpack.c.l.b16 %v8780
        %v8821 = vunpack.c.l.b16 %v8781
        %v8822 = vunpack.c.l.b16 %v8782
        %v8823 = vunpack.c.l.b16 %v8783
        %v8824 = vunpack.c.l.b16 %v8784
        %v8825 = vpack.c.b16 %v8818, %v8817
        %v8826 = vpack.c.b16 %v8820, %v8819
        %v8827 = vpack.c.b16 %v8822, %v8821
        %v8828 = vpack.c.b16 %v8824, %v8823
        %v8834 = vsel %vm775, %v8801, 0
        %v8837 = vsel %vm775, %v8802, 0
        %v8840 = vsel %vm775, %v8803, 0
        %v8843 = vsel %vm775, %v8804, 0
        %v8846 = vsel %vm775, %v8805, 0
        %v8849 = vsel %vm775, %v8806, 0
        %v8852 = vsel %vm775, %v8807, 0
        %v8855 = vsel %vm775, %v8808, 0
        %8857 = vmatprep.subr.bf16.mxu0 0
        %8858 = vmatpush1.bf16.msra.mxu0 0
        %8859 = vmatprep.subr.bf16.mxu0 0
        %8860 = vmatpush1.bf16.msra.mxu0 0
        %8861 = vmatprep.subr.bf16.mxu0 0
        %8862 = vmatpush1.bf16.msra.mxu0 0
        %8863 = vmatprep.subr.bf16.mxu0 0
        %8864 = vmatpush1.bf16.msra.mxu0 0
        %8865 = vmatprep.subr.bf16.mxu0 0
        %8866 = vmatpush1.bf16.msra.mxu0 %v8828
        %8867 = vmatprep.subr.bf16.mxu0 0
        %8868 = vmatpush1.bf16.msra.mxu0 %v8827
        %8869 = vmatprep.subr.bf16.mxu0 0
        %8870 = vmatpush1.bf16.msra.mxu0 %v8826
        %8871 = vmatprep.subr.bf16.mxu0 0
        %8872 = vmatpush1.bf16.msra.mxu0 %v8825
        %8873 = vmatprep.subr.bf16.mxu0 0
        %8874 = vmatpush2.bf16.msra.mxu0 0
        %8875 = vmatprep.subr.bf16.mxu0 0
        %8876 = vmatpush2.bf16.msra.mxu0 0
        %8877 = vmatprep.subr.bf16.mxu0 0
        %8878 = vmatpush2.bf16.msra.mxu0 0
        %8879 = vmatprep.subr.bf16.mxu0 0
        %8880 = vmatpush2.bf16.msra.mxu0 0
        %8881 = vmatprep.subr.bf16.mxu0 0
        %8882 = vmatpush2.bf16.msra.mxu0 0
        %8883 = vmatprep.subr.bf16.mxu0 0
        %8884 = vmatpush2.bf16.msra.mxu0 0
        %8885 = vmatprep.subr.bf16.mxu0 0
        %8886 = vmatpush2.bf16.msra.mxu0 0
        %8887 = vmatprep.subr.bf16.mxu0 0
        %8888 = vmatpush2.bf16.msra.mxu0 0
        %8889 = vmatprep.mubr.bf16.mxu0 0
        %8890 = vmatmul.mubr.bf16.gmra.mxu0 %v8834
        %v8891 = vpop.f32.mrf.mxu0
        %v8892 = vadd.f32 0.0, %v8891
        %v8893 = vpop.f32.mrf.mxu0
        %v8894 = vpop.f32.mrf.mxu0
        %v8895 = vadd.f32 0.0, %v8894
        %v8896 = vpop.f32.mrf.mxu0
        %8897 = vmatprep.mubr.bf16.mxu0 0
        %8898 = vmatmul.mubr.bf16.gmra.mxu0 %v8837
        %v8899 = vpop.f32.mrf.mxu0
        %v8900 = vadd.f32 0.0, %v8899
        %v8901 = vpop.f32.mrf.mxu0
        %v8902 = vpop.f32.mrf.mxu0
        %v8903 = vadd.f32 0.0, %v8902
        %v8904 = vpop.f32.mrf.mxu0
        %8905 = vmatprep.mubr.bf16.mxu0 0
        %8906 = vmatmul.mubr.bf16.gmra.mxu0 %v8840
        %v8907 = vpop.f32.mrf.mxu0
        %v8908 = vadd.f32 0.0, %v8907
        %v8909 = vpop.f32.mrf.mxu0
        %v8910 = vpop.f32.mrf.mxu0
        %v8911 = vadd.f32 0.0, %v8910
        %v8912 = vpop.f32.mrf.mxu0
        %8913 = vmatprep.mubr.bf16.mxu0 0
        %8914 = vmatmul.mubr.bf16.gmra.mxu0 %v8843
        %v8915 = vpop.f32.mrf.mxu0
        %v8916 = vadd.f32 0.0, %v8915
        %v8917 = vpop.f32.mrf.mxu0
        %v8918 = vpop.f32.mrf.mxu0
        %v8919 = vadd.f32 0.0, %v8918
        %v8920 = vpop.f32.mrf.mxu0
        %8921 = vmatprep.mubr.bf16.mxu0 0
        %8922 = vmatmul.mubr.bf16.gmra.mxu0 %v8846
        %v8923 = vpop.f32.mrf.mxu0
        %v8924 = vadd.f32 0.0, %v8923
        %v8925 = vpop.f32.mrf.mxu0
        %v8926 = vpop.f32.mrf.mxu0
        %v8927 = vadd.f32 0.0, %v8926
        %v8928 = vpop.f32.mrf.mxu0
        %8929 = vmatprep.mubr.bf16.mxu0 0
        %8930 = vmatmul.mubr.bf16.gmra.mxu0 %v8849
        %v8931 = vpop.f32.mrf.mxu0
        %v8932 = vadd.f32 0.0, %v8931
        %v8933 = vpop.f32.mrf.mxu0
        %v8934 = vpop.f32.mrf.mxu0
        %v8935 = vadd.f32 0.0, %v8934
        %v8936 = vpop.f32.mrf.mxu0
        %8937 = vmatprep.mubr.bf16.mxu0 0
        %8938 = vmatmul.mubr.bf16.gmra.mxu0 %v8852
        %v8939 = vpop.f32.mrf.mxu0
        %v8940 = vadd.f32 0.0, %v8939
        %v8941 = vpop.f32.mrf.mxu0
        %v8942 = vpop.f32.mrf.mxu0
        %v8943 = vadd.f32 0.0, %v8942
        %v8944 = vpop.f32.mrf.mxu0
        %8945 = vmatprep.mubr.bf16.mxu0 0
        %8946 = vmatmul.mubr.bf16.gmra.mxu0 %v8855
        %v8947 = vpop.f32.mrf.mxu0
        %v8948 = vadd.f32 0.0, %v8947
        %v8949 = vpop.f32.mrf.mxu0
        %v8950 = vpop.f32.mrf.mxu0
        %v8951 = vadd.f32 0.0, %v8950
        %v8952 = vpop.f32.mrf.mxu0
        %8953 = vdwg.mxu0
        %v8954 = vadd.f32 %v8672, %v8892
        %v8955 = vadd.f32 %v8673, %v8895
        %v8956 = vadd.f32 %v8674, %v8900
        %v8957 = vadd.f32 %v8675, %v8903
        %v8958 = vadd.f32 %v8676, %v8908
        %v8959 = vadd.f32 %v8677, %v8911
        %v8960 = vadd.f32 %v8678, %v8916
        %v8961 = vadd.f32 %v8679, %v8919
        %v8962 = vadd.f32 %v8680, %v8924
        %v8963 = vadd.f32 %v8681, %v8927
        %v8964 = vadd.f32 %v8682, %v8932
        %v8965 = vadd.f32 %v8683, %v8935
        %v8966 = vadd.f32 %v8684, %v8940
        %v8967 = vadd.f32 %v8685, %v8943
        %v8968 = vadd.f32 %v8686, %v8948
        %v8969 = vadd.f32 %v8687, %v8951
        %s8970 = scalar_lea.vmem [#allocation3], 24
        %v8971 = vld [vmem:[%s8970] sm:$0xf]
        %v8972 = vld [vmem:[%s8970 + $0x4] sm:$0xf]
        %v8973 = vld [vmem:[%s8970 + $0x18] sm:$0xf]
        %v8974 = vld [vmem:[%s8970 + $0x1c] sm:$0xf]
        %v8975 = vld [vmem:[%s8970 + $0x30] sm:$0xf]
        %v8976 = vld [vmem:[%s8970 + $0x34] sm:$0xf]
        %v8977 = vld [vmem:[%s8970 + $0x48] sm:$0xf]
        %v8978 = vld [vmem:[%s8970 + $0x4c] sm:$0xf]
        %v8979 = vld [vmem:[%s8970 + $0x60] sm:$0xf]
        %v8980 = vld [vmem:[%s8970 + $0x64] sm:$0xf]
        %v8981 = vld [vmem:[%s8970 + $0x78] sm:$0xf]
        %v8982 = vld [vmem:[%s8970 + $0x7c] sm:$0xf]
        %v8983 = vld [vmem:[%s8970 + $0x90] sm:$0xf]
        %v8984 = vld [vmem:[%s8970 + $0x94] sm:$0xf]
        %v8985 = vld [vmem:[%s8970 + $0xa8] sm:$0xf]
        %v8986 = vld [vmem:[%s8970 + $0xac] sm:$0xf]
        %s8987 = scalar_lea.vmem %s3, 192
        %v8988 = vld [vmem:[%s8987] sm:$0xf]
        %v8989 = vld [vmem:[%s8987 + $0x4] sm:$0xf]
        %v8990 = vld [vmem:[%s8987 + $0x8] sm:$0xf]
        %v8991 = vld [vmem:[%s8987 + $0xc] sm:$0xf]
        %v8992 = vld [vmem:[%s8987 + $0x10] sm:$0xf]
        %v8993 = vld [vmem:[%s8987 + $0x14] sm:$0xf]
        %v8994 = vld [vmem:[%s8987 + $0x18] sm:$0xf]
        %v8995 = vld [vmem:[%s8987 + $0x1c] sm:$0xf]
        %v9012 = vunpack.c.l.b16 %v8971
        %v9013 = vunpack.c.l.b16 %v8972
        %v9014 = vunpack.c.l.b16 %v8973
        %v9015 = vunpack.c.l.b16 %v8974
        %v9016 = vunpack.c.l.b16 %v8975
        %v9017 = vunpack.c.l.b16 %v8976
        %v9018 = vunpack.c.l.b16 %v8977
        %v9019 = vunpack.c.l.b16 %v8978
        %v9020 = vunpack.c.l.b16 %v8979
        %v9021 = vunpack.c.l.b16 %v8980
        %v9022 = vunpack.c.l.b16 %v8981
        %v9023 = vunpack.c.l.b16 %v8982
        %v9024 = vunpack.c.l.b16 %v8983
        %v9025 = vunpack.c.l.b16 %v8984
        %v9026 = vunpack.c.l.b16 %v8985
        %v9027 = vunpack.c.l.b16 %v8986
        %v9028 = vpack.c.b16 %v9013, %v9012
        %v9029 = vpack.c.b16 %v9015, %v9014
        %v9030 = vpack.c.b16 %v9017, %v9016
        %v9031 = vpack.c.b16 %v9019, %v9018
        %v9032 = vpack.c.b16 %v9021, %v9020
        %v9033 = vpack.c.b16 %v9023, %v9022
        %v9034 = vpack.c.b16 %v9025, %v9024
        %v9035 = vpack.c.b16 %v9027, %v9026
        %v9044 = vunpack.c.l.b16 %v8988
        %v9045 = vunpack.c.l.b16 %v8989
        %v9046 = vunpack.c.l.b16 %v8990
        %v9047 = vunpack.c.l.b16 %v8991
        %v9048 = vunpack.c.l.b16 %v8992
        %v9049 = vunpack.c.l.b16 %v8993
        %v9050 = vunpack.c.l.b16 %v8994
        %v9051 = vunpack.c.l.b16 %v8995
        %v9052 = vpack.c.b16 %v9045, %v9044
        %v9053 = vpack.c.b16 %v9047, %v9046
        %v9054 = vpack.c.b16 %v9049, %v9048
        %v9055 = vpack.c.b16 %v9051, %v9050
        %v9061 = vsel %vm775, %v9028, 0
        %v9064 = vsel %vm775, %v9029, 0
        %v9067 = vsel %vm775, %v9030, 0
        %v9070 = vsel %vm775, %v9031, 0
        %v9073 = vsel %vm775, %v9032, 0
        %v9076 = vsel %vm775, %v9033, 0
        %v9079 = vsel %vm775, %v9034, 0
        %v9082 = vsel %vm775, %v9035, 0
        %9084 = vmatprep.subr.bf16.mxu0 0
        %9085 = vmatpush1.bf16.msra.mxu0 0
        %9086 = vmatprep.subr.bf16.mxu0 0
        %9087 = vmatpush1.bf16.msra.mxu0 0
        %9088 = vmatprep.subr.bf16.mxu0 0
        %9089 = vmatpush1.bf16.msra.mxu0 0
        %9090 = vmatprep.subr.bf16.mxu0 0
        %9091 = vmatpush1.bf16.msra.mxu0 0
        %9092 = vmatprep.subr.bf16.mxu0 0
        %9093 = vmatpush1.bf16.msra.mxu0 %v9055
        %9094 = vmatprep.subr.bf16.mxu0 0
        %9095 = vmatpush1.bf16.msra.mxu0 %v9054
        %9096 = vmatprep.subr.bf16.mxu0 0
        %9097 = vmatpush1.bf16.msra.mxu0 %v9053
        %9098 = vmatprep.subr.bf16.mxu0 0
        %9099 = vmatpush1.bf16.msra.mxu0 %v9052
        %9100 = vmatprep.subr.bf16.mxu0 0
        %9101 = vmatpush2.bf16.msra.mxu0 0
        %9102 = vmatprep.subr.bf16.mxu0 0
        %9103 = vmatpush2.bf16.msra.mxu0 0
        %9104 = vmatprep.subr.bf16.mxu0 0
        %9105 = vmatpush2.bf16.msra.mxu0 0
        %9106 = vmatprep.subr.bf16.mxu0 0
        %9107 = vmatpush2.bf16.msra.mxu0 0
        %9108 = vmatprep.subr.bf16.mxu0 0
        %9109 = vmatpush2.bf16.msra.mxu0 0
        %9110 = vmatprep.subr.bf16.mxu0 0
        %9111 = vmatpush2.bf16.msra.mxu0 0
        %9112 = vmatprep.subr.bf16.mxu0 0
        %9113 = vmatpush2.bf16.msra.mxu0 0
        %9114 = vmatprep.subr.bf16.mxu0 0
        %9115 = vmatpush2.bf16.msra.mxu0 0
        %9116 = vmatprep.mubr.bf16.mxu0 0
        %9117 = vmatmul.mubr.bf16.gmra.mxu0 %v9061
        %v9118 = vpop.f32.mrf.mxu0
        %v9119 = vadd.f32 0.0, %v9118
        %v9120 = vpop.f32.mrf.mxu0
        %v9121 = vpop.f32.mrf.mxu0
        %v9122 = vadd.f32 0.0, %v9121
        %v9123 = vpop.f32.mrf.mxu0
        %9124 = vmatprep.mubr.bf16.mxu0 0
        %9125 = vmatmul.mubr.bf16.gmra.mxu0 %v9064
        %v9126 = vpop.f32.mrf.mxu0
        %v9127 = vadd.f32 0.0, %v9126
        %v9128 = vpop.f32.mrf.mxu0
        %v9129 = vpop.f32.mrf.mxu0
        %v9130 = vadd.f32 0.0, %v9129
        %v9131 = vpop.f32.mrf.mxu0
        %9132 = vmatprep.mubr.bf16.mxu0 0
        %9133 = vmatmul.mubr.bf16.gmra.mxu0 %v9067
        %v9134 = vpop.f32.mrf.mxu0
        %v9135 = vadd.f32 0.0, %v9134
        %v9136 = vpop.f32.mrf.mxu0
        %v9137 = vpop.f32.mrf.mxu0
        %v9138 = vadd.f32 0.0, %v9137
        %v9139 = vpop.f32.mrf.mxu0
        %9140 = vmatprep.mubr.bf16.mxu0 0
        %9141 = vmatmul.mubr.bf16.gmra.mxu0 %v9070
        %v9142 = vpop.f32.mrf.mxu0
        %v9143 = vadd.f32 0.0, %v9142
        %v9144 = vpop.f32.mrf.mxu0
        %v9145 = vpop.f32.mrf.mxu0
        %v9146 = vadd.f32 0.0, %v9145
        %v9147 = vpop.f32.mrf.mxu0
        %9148 = vmatprep.mubr.bf16.mxu0 0
        %9149 = vmatmul.mubr.bf16.gmra.mxu0 %v9073
        %v9150 = vpop.f32.mrf.mxu0
        %v9151 = vadd.f32 0.0, %v9150
        %v9152 = vpop.f32.mrf.mxu0
        %v9153 = vpop.f32.mrf.mxu0
        %v9154 = vadd.f32 0.0, %v9153
        %v9155 = vpop.f32.mrf.mxu0
        %9156 = vmatprep.mubr.bf16.mxu0 0
        %9157 = vmatmul.mubr.bf16.gmra.mxu0 %v9076
        %v9158 = vpop.f32.mrf.mxu0
        %v9159 = vadd.f32 0.0, %v9158
        %v9160 = vpop.f32.mrf.mxu0
        %v9161 = vpop.f32.mrf.mxu0
        %v9162 = vadd.f32 0.0, %v9161
        %v9163 = vpop.f32.mrf.mxu0
        %9164 = vmatprep.mubr.bf16.mxu0 0
        %9165 = vmatmul.mubr.bf16.gmra.mxu0 %v9079
        %v9166 = vpop.f32.mrf.mxu0
        %v9167 = vadd.f32 0.0, %v9166
        %v9168 = vpop.f32.mrf.mxu0
        %v9169 = vpop.f32.mrf.mxu0
        %v9170 = vadd.f32 0.0, %v9169
        %v9171 = vpop.f32.mrf.mxu0
        %9172 = vmatprep.mubr.bf16.mxu0 0
        %9173 = vmatmul.mubr.bf16.gmra.mxu0 %v9082
        %v9174 = vpop.f32.mrf.mxu0
        %v9175 = vadd.f32 0.0, %v9174
        %v9176 = vpop.f32.mrf.mxu0
        %v9177 = vpop.f32.mrf.mxu0
        %v9178 = vadd.f32 0.0, %v9177
        %v9179 = vpop.f32.mrf.mxu0
        %9180 = vdwg.mxu0
        %v9181 = vadd.f32 %v8954, %v9119
        %v9182 = vadd.f32 %v8955, %v9122
        %v9183 = vadd.f32 %v8956, %v9127
        %v9184 = vadd.f32 %v8957, %v9130
        %v9185 = vadd.f32 %v8958, %v9135
        %v9186 = vadd.f32 %v8959, %v9138
        %v9187 = vadd.f32 %v8960, %v9143
        %v9188 = vadd.f32 %v8961, %v9146
        %v9189 = vadd.f32 %v8962, %v9151
        %v9190 = vadd.f32 %v8963, %v9154
        %v9191 = vadd.f32 %v8964, %v9159
        %v9192 = vadd.f32 %v8965, %v9162
        %v9193 = vadd.f32 %v8966, %v9167
        %v9194 = vadd.f32 %v8967, %v9170
        %v9195 = vadd.f32 %v8968, %v9175
        %v9196 = vadd.f32 %v8969, %v9178
        %v9197 = vld [vmem:[%s8970] sm:$0xf]
        %v9198 = vld [vmem:[%s8970 + $0x4] sm:$0xf]
        %v9199 = vld [vmem:[%s8970 + $0x8] sm:$0x1]
        %v9200 = vld [vmem:[%s8970 + $0x18] sm:$0xf]
        %v9201 = vld [vmem:[%s8970 + $0x1c] sm:$0xf]
        %v9202 = vld [vmem:[%s8970 + $0x20] sm:$0x1]
        %v9203 = vld [vmem:[%s8970 + $0x30] sm:$0xf]
        %v9204 = vld [vmem:[%s8970 + $0x34] sm:$0xf]
        %v9205 = vld [vmem:[%s8970 + $0x38] sm:$0x1]
        %v9206 = vld [vmem:[%s8970 + $0x48] sm:$0xf]
        %v9207 = vld [vmem:[%s8970 + $0x4c] sm:$0xf]
        %v9208 = vld [vmem:[%s8970 + $0x50] sm:$0x1]
        %v9209 = vld [vmem:[%s8970 + $0x60] sm:$0xf]
        %v9210 = vld [vmem:[%s8970 + $0x64] sm:$0xf]
        %v9211 = vld [vmem:[%s8970 + $0x68] sm:$0x1]
        %v9212 = vld [vmem:[%s8970 + $0x78] sm:$0xf]
        %v9213 = vld [vmem:[%s8970 + $0x7c] sm:$0xf]
        %v9214 = vld [vmem:[%s8970 + $0x80] sm:$0x1]
        %v9215 = vld [vmem:[%s8970 + $0x90] sm:$0xf]
        %v9216 = vld [vmem:[%s8970 + $0x94] sm:$0xf]
        %v9217 = vld [vmem:[%s8970 + $0x98] sm:$0x1]
        %v9218 = vld [vmem:[%s8970 + $0xa8] sm:$0xf]
        %v9219 = vld [vmem:[%s8970 + $0xac] sm:$0xf]
        %v9220 = vld [vmem:[%s8970 + $0xb0] sm:$0x1]
        %v9222 = vshrl.u32 %v9197, 16
        %v9224 = vrot.slane %v9222, 4
        %v9225 = vshll.u32 %v9197, 16
        %v9227 = vrot.slane %v9225, 5
        %v9228 = vor.u32 %v9224, %v9227
        %v9229 = vrot.slane %v9228, 4
        %v9231 = vshll.u32 %v9198, 16
        %v9233 = vrot.slane %v9231, 5
        %v9234 = vsel %vm309, %v9229, %v9233
        %v9235 = vshrl.u32 %v9198, 16
        %v9237 = vrot.slane %v9235, 4
        %v9238 = vor.u32 %v9237, %v9233
        %v9239 = vrot.slane %v9238, 4
        %v9241 = vshll.u32 %v9199, 16
        %v9243 = vrot.slane %v9241, 5
        %v9244 = vsel %vm309, %v9239, %v9243
        %v9246 = vshrl.u32 %v9200, 16
        %v9248 = vrot.slane %v9246, 4
        %v9249 = vshll.u32 %v9200, 16
        %v9251 = vrot.slane %v9249, 5
        %v9252 = vor.u32 %v9248, %v9251
        %v9253 = vrot.slane %v9252, 4
        %v9255 = vshll.u32 %v9201, 16
        %v9257 = vrot.slane %v9255, 5
        %v9258 = vsel %vm309, %v9253, %v9257
        %v9259 = vshrl.u32 %v9201, 16
        %v9261 = vrot.slane %v9259, 4
        %v9262 = vor.u32 %v9261, %v9257
        %v9263 = vrot.slane %v9262, 4
        %v9265 = vshll.u32 %v9202, 16
        %v9267 = vrot.slane %v9265, 5
        %v9268 = vsel %vm309, %v9263, %v9267
        %v9270 = vshrl.u32 %v9203, 16
        %v9272 = vrot.slane %v9270, 4
        %v9273 = vshll.u32 %v9203, 16
        %v9275 = vrot.slane %v9273, 5
        %v9276 = vor.u32 %v9272, %v9275
        %v9277 = vrot.slane %v9276, 4
        %v9279 = vshll.u32 %v9204, 16
        %v9281 = vrot.slane %v9279, 5
        %v9282 = vsel %vm309, %v9277, %v9281
        %v9283 = vshrl.u32 %v9204, 16
        %v9285 = vrot.slane %v9283, 4
        %v9286 = vor.u32 %v9285, %v9281
        %v9287 = vrot.slane %v9286, 4
        %v9289 = vshll.u32 %v9205, 16
        %v9291 = vrot.slane %v9289, 5
        %v9292 = vsel %vm309, %v9287, %v9291
        %v9294 = vshrl.u32 %v9206, 16
        %v9296 = vrot.slane %v9294, 4
        %v9297 = vshll.u32 %v9206, 16
        %v9299 = vrot.slane %v9297, 5
        %v9300 = vor.u32 %v9296, %v9299
        %v9301 = vrot.slane %v9300, 4
        %v9303 = vshll.u32 %v9207, 16
        %v9305 = vrot.slane %v9303, 5
        %v9306 = vsel %vm309, %v9301, %v9305
        %v9307 = vshrl.u32 %v9207, 16
        %v9309 = vrot.slane %v9307, 4
        %v9310 = vor.u32 %v9309, %v9305
        %v9311 = vrot.slane %v9310, 4
        %v9313 = vshll.u32 %v9208, 16
        %v9315 = vrot.slane %v9313, 5
        %v9316 = vsel %vm309, %v9311, %v9315
        %v9318 = vshrl.u32 %v9209, 16
        %v9320 = vrot.slane %v9318, 4
        %v9321 = vshll.u32 %v9209, 16
        %v9323 = vrot.slane %v9321, 5
        %v9324 = vor.u32 %v9320, %v9323
        %v9325 = vrot.slane %v9324, 4
        %v9327 = vshll.u32 %v9210, 16
        %v9329 = vrot.slane %v9327, 5
        %v9330 = vsel %vm309, %v9325, %v9329
        %v9331 = vshrl.u32 %v9210, 16
        %v9333 = vrot.slane %v9331, 4
        %v9334 = vor.u32 %v9333, %v9329
        %v9335 = vrot.slane %v9334, 4
        %v9337 = vshll.u32 %v9211, 16
        %v9339 = vrot.slane %v9337, 5
        %v9340 = vsel %vm309, %v9335, %v9339
        %v9342 = vshrl.u32 %v9212, 16
        %v9344 = vrot.slane %v9342, 4
        %v9345 = vshll.u32 %v9212, 16
        %v9347 = vrot.slane %v9345, 5
        %v9348 = vor.u32 %v9344, %v9347
        %v9349 = vrot.slane %v9348, 4
        %v9351 = vshll.u32 %v9213, 16
        %v9353 = vrot.slane %v9351, 5
        %v9354 = vsel %vm309, %v9349, %v9353
        %v9355 = vshrl.u32 %v9213, 16
        %v9357 = vrot.slane %v9355, 4
        %v9358 = vor.u32 %v9357, %v9353
        %v9359 = vrot.slane %v9358, 4
        %v9361 = vshll.u32 %v9214, 16
        %v9363 = vrot.slane %v9361, 5
        %v9364 = vsel %vm309, %v9359, %v9363
        %v9366 = vshrl.u32 %v9215, 16
        %v9368 = vrot.slane %v9366, 4
        %v9369 = vshll.u32 %v9215, 16
        %v9371 = vrot.slane %v9369, 5
        %v9372 = vor.u32 %v9368, %v9371
        %v9373 = vrot.slane %v9372, 4
        %v9375 = vshll.u32 %v9216, 16
        %v9377 = vrot.slane %v9375, 5
        %v9378 = vsel %vm309, %v9373, %v9377
        %v9379 = vshrl.u32 %v9216, 16
        %v9381 = vrot.slane %v9379, 4
        %v9382 = vor.u32 %v9381, %v9377
        %v9383 = vrot.slane %v9382, 4
        %v9385 = vshll.u32 %v9217, 16
        %v9387 = vrot.slane %v9385, 5
        %v9388 = vsel %vm309, %v9383, %v9387
        %v9390 = vshrl.u32 %v9218, 16
        %v9392 = vrot.slane %v9390, 4
        %v9393 = vshll.u32 %v9218, 16
        %v9395 = vrot.slane %v9393, 5
        %v9396 = vor.u32 %v9392, %v9395
        %v9397 = vrot.slane %v9396, 4
        %v9399 = vshll.u32 %v9219, 16
        %v9401 = vrot.slane %v9399, 5
        %v9402 = vsel %vm309, %v9397, %v9401
        %v9403 = vshrl.u32 %v9219, 16
        %v9405 = vrot.slane %v9403, 4
        %v9406 = vor.u32 %v9405, %v9401
        %v9407 = vrot.slane %v9406, 4
        %v9409 = vshll.u32 %v9220, 16
        %v9411 = vrot.slane %v9409, 5
        %v9412 = vsel %vm309, %v9407, %v9411
        %s9413 = scalar_lea.vmem %s3, 224
        %v9414 = vld [vmem:[%s9413] sm:$0xf]
        %v9415 = vld [vmem:[%s9413 + $0x4] sm:$0xf]
        %v9416 = vld [vmem:[%s9413 + $0x8] sm:$0xf]
        %v9417 = vld [vmem:[%s9413 + $0xc] sm:$0xf]
        %v9418 = vld [vmem:[%s9413 + $0x10] sm:$0xf]
        %v9419 = vld [vmem:[%s9413 + $0x14] sm:$0xf]
        %v9420 = vld [vmem:[%s9413 + $0x18] sm:$0xf]
        %v9421 = vld [vmem:[%s9413 + $0x1c] sm:$0xf]
        %v9422 = vunpack.c.l.b16 %v9234
        %v9423 = vunpack.c.l.b16 %v9244
        %v9424 = vunpack.c.l.b16 %v9258
        %v9425 = vunpack.c.l.b16 %v9268
        %v9426 = vunpack.c.l.b16 %v9282
        %v9427 = vunpack.c.l.b16 %v9292
        %v9428 = vunpack.c.l.b16 %v9306
        %v9429 = vunpack.c.l.b16 %v9316
        %v9430 = vunpack.c.l.b16 %v9330
        %v9431 = vunpack.c.l.b16 %v9340
        %v9432 = vunpack.c.l.b16 %v9354
        %v9433 = vunpack.c.l.b16 %v9364
        %v9434 = vunpack.c.l.b16 %v9378
        %v9435 = vunpack.c.l.b16 %v9388
        %v9436 = vunpack.c.l.b16 %v9402
        %v9437 = vunpack.c.l.b16 %v9412
        %v9438 = vpack.c.b16 %v9423, %v9422
        %v9439 = vpack.c.b16 %v9425, %v9424
        %v9440 = vpack.c.b16 %v9427, %v9426
        %v9441 = vpack.c.b16 %v9429, %v9428
        %v9442 = vpack.c.b16 %v9431, %v9430
        %v9443 = vpack.c.b16 %v9433, %v9432
        %v9444 = vpack.c.b16 %v9435, %v9434
        %v9445 = vpack.c.b16 %v9437, %v9436
        %v9454 = vunpack.c.l.b16 %v9414
        %v9455 = vunpack.c.l.b16 %v9415
        %v9456 = vunpack.c.l.b16 %v9416
        %v9457 = vunpack.c.l.b16 %v9417
        %v9458 = vunpack.c.l.b16 %v9418
        %v9459 = vunpack.c.l.b16 %v9419
        %v9460 = vunpack.c.l.b16 %v9420
        %v9461 = vunpack.c.l.b16 %v9421
        %v9462 = vpack.c.b16 %v9455, %v9454
        %v9463 = vpack.c.b16 %v9457, %v9456
        %v9464 = vpack.c.b16 %v9459, %v9458
        %v9465 = vpack.c.b16 %v9461, %v9460
        %v9471 = vsel %vm775, %v9438, 0
        %v9474 = vsel %vm775, %v9439, 0
        %v9477 = vsel %vm775, %v9440, 0
        %v9480 = vsel %vm775, %v9441, 0
        %v9483 = vsel %vm775, %v9442, 0
        %v9486 = vsel %vm775, %v9443, 0
        %v9489 = vsel %vm775, %v9444, 0
        %v9492 = vsel %vm775, %v9445, 0
        %9494 = vmatprep.subr.bf16.mxu0 0
        %9495 = vmatpush1.bf16.msra.mxu0 0
        %9496 = vmatprep.subr.bf16.mxu0 0
        %9497 = vmatpush1.bf16.msra.mxu0 0
        %9498 = vmatprep.subr.bf16.mxu0 0
        %9499 = vmatpush1.bf16.msra.mxu0 0
        %9500 = vmatprep.subr.bf16.mxu0 0
        %9501 = vmatpush1.bf16.msra.mxu0 0
        %9502 = vmatprep.subr.bf16.mxu0 0
        %9503 = vmatpush1.bf16.msra.mxu0 %v9465
        %9504 = vmatprep.subr.bf16.mxu0 0
        %9505 = vmatpush1.bf16.msra.mxu0 %v9464
        %9506 = vmatprep.subr.bf16.mxu0 0
        %9507 = vmatpush1.bf16.msra.mxu0 %v9463
        %9508 = vmatprep.subr.bf16.mxu0 0
        %9509 = vmatpush1.bf16.msra.mxu0 %v9462
        %9510 = vmatprep.subr.bf16.mxu0 0
        %9511 = vmatpush2.bf16.msra.mxu0 0
        %9512 = vmatprep.subr.bf16.mxu0 0
        %9513 = vmatpush2.bf16.msra.mxu0 0
        %9514 = vmatprep.subr.bf16.mxu0 0
        %9515 = vmatpush2.bf16.msra.mxu0 0
        %9516 = vmatprep.subr.bf16.mxu0 0
        %9517 = vmatpush2.bf16.msra.mxu0 0
        %9518 = vmatprep.subr.bf16.mxu0 0
        %9519 = vmatpush2.bf16.msra.mxu0 0
        %9520 = vmatprep.subr.bf16.mxu0 0
        %9521 = vmatpush2.bf16.msra.mxu0 0
        %9522 = vmatprep.subr.bf16.mxu0 0
        %9523 = vmatpush2.bf16.msra.mxu0 0
        %9524 = vmatprep.subr.bf16.mxu0 0
        %9525 = vmatpush2.bf16.msra.mxu0 0
        %9526 = vmatprep.mubr.bf16.mxu0 0
        %9527 = vmatmul.mubr.bf16.gmra.mxu0 %v9471
        %v9528 = vpop.f32.mrf.mxu0
        %v9529 = vadd.f32 0.0, %v9528
        %v9530 = vpop.f32.mrf.mxu0
        %v9531 = vpop.f32.mrf.mxu0
        %v9532 = vadd.f32 0.0, %v9531
        %v9533 = vpop.f32.mrf.mxu0
        %9534 = vmatprep.mubr.bf16.mxu0 0
        %9535 = vmatmul.mubr.bf16.gmra.mxu0 %v9474
        %v9536 = vpop.f32.mrf.mxu0
        %v9537 = vadd.f32 0.0, %v9536
        %v9538 = vpop.f32.mrf.mxu0
        %v9539 = vpop.f32.mrf.mxu0
        %v9540 = vadd.f32 0.0, %v9539
        %v9541 = vpop.f32.mrf.mxu0
        %9542 = vmatprep.mubr.bf16.mxu0 0
        %9543 = vmatmul.mubr.bf16.gmra.mxu0 %v9477
        %v9544 = vpop.f32.mrf.mxu0
        %v9545 = vadd.f32 0.0, %v9544
        %v9546 = vpop.f32.mrf.mxu0
        %v9547 = vpop.f32.mrf.mxu0
        %v9548 = vadd.f32 0.0, %v9547
        %v9549 = vpop.f32.mrf.mxu0
        %9550 = vmatprep.mubr.bf16.mxu0 0
        %9551 = vmatmul.mubr.bf16.gmra.mxu0 %v9480
        %v9552 = vpop.f32.mrf.mxu0
        %v9553 = vadd.f32 0.0, %v9552
        %v9554 = vpop.f32.mrf.mxu0
        %v9555 = vpop.f32.mrf.mxu0
        %v9556 = vadd.f32 0.0, %v9555
        %v9557 = vpop.f32.mrf.mxu0
        %9558 = vmatprep.mubr.bf16.mxu0 0
        %9559 = vmatmul.mubr.bf16.gmra.mxu0 %v9483
        %v9560 = vpop.f32.mrf.mxu0
        %v9561 = vadd.f32 0.0, %v9560
        %v9562 = vpop.f32.mrf.mxu0
        %v9563 = vpop.f32.mrf.mxu0
        %v9564 = vadd.f32 0.0, %v9563
        %v9565 = vpop.f32.mrf.mxu0
        %9566 = vmatprep.mubr.bf16.mxu0 0
        %9567 = vmatmul.mubr.bf16.gmra.mxu0 %v9486
        %v9568 = vpop.f32.mrf.mxu0
        %v9569 = vadd.f32 0.0, %v9568
        %v9570 = vpop.f32.mrf.mxu0
        %v9571 = vpop.f32.mrf.mxu0
        %v9572 = vadd.f32 0.0, %v9571
        %v9573 = vpop.f32.mrf.mxu0
        %9574 = vmatprep.mubr.bf16.mxu0 0
        %9575 = vmatmul.mubr.bf16.gmra.mxu0 %v9489
        %v9576 = vpop.f32.mrf.mxu0
        %v9577 = vadd.f32 0.0, %v9576
        %v9578 = vpop.f32.mrf.mxu0
        %v9579 = vpop.f32.mrf.mxu0
        %v9580 = vadd.f32 0.0, %v9579
        %v9581 = vpop.f32.mrf.mxu0
        %9582 = vmatprep.mubr.bf16.mxu0 0
        %9583 = vmatmul.mubr.bf16.gmra.mxu0 %v9492
        %v9584 = vpop.f32.mrf.mxu0
        %v9585 = vadd.f32 0.0, %v9584
        %v9586 = vpop.f32.mrf.mxu0
        %v9587 = vpop.f32.mrf.mxu0
        %v9588 = vadd.f32 0.0, %v9587
        %v9589 = vpop.f32.mrf.mxu0
        %9590 = vdwg.mxu0
        %v9591 = vadd.f32 %v9181, %v9529
        %v9592 = vadd.f32 %v9182, %v9532
        %v9593 = vadd.f32 %v9183, %v9537
        %v9594 = vadd.f32 %v9184, %v9540
        %v9595 = vadd.f32 %v9185, %v9545
        %v9596 = vadd.f32 %v9186, %v9548
        %v9597 = vadd.f32 %v9187, %v9553
        %v9598 = vadd.f32 %v9188, %v9556
        %v9599 = vadd.f32 %v9189, %v9561
        %v9600 = vadd.f32 %v9190, %v9564
        %v9601 = vadd.f32 %v9191, %v9569
        %v9602 = vadd.f32 %v9192, %v9572
        %v9603 = vadd.f32 %v9193, %v9577
        %v9604 = vadd.f32 %v9194, %v9580
        %v9605 = vadd.f32 %v9195, %v9585
        %v9606 = vadd.f32 %v9196, %v9588
        %v9607 = vld [vmem:[%s8970] sm:$0xe]
        %v9608 = vld [vmem:[%s8970 + $0x18] sm:$0xe]
        %v9609 = vld [vmem:[%s8970 + $0x30] sm:$0xe]
        %v9610 = vld [vmem:[%s8970 + $0x48] sm:$0xe]
        %v9611 = vld [vmem:[%s8970 + $0x60] sm:$0xe]
        %v9612 = vld [vmem:[%s8970 + $0x78] sm:$0xe]
        %v9613 = vld [vmem:[%s8970 + $0x90] sm:$0xe]
        %v9614 = vld [vmem:[%s8970 + $0xa8] sm:$0xe]
        %v9639 = vrot.slane %v9607, 5
        %v9640 = vrot.slane %v9639, 4
        %v9641 = vrot.slane %v9198, 5
        %v9642 = vsel %vm1348, %v9640, %v9641
        %v9643 = vrot.slane %v9641, 4
        %v9644 = vrot.slane %v9199, 5
        %v9645 = vsel %vm1348, %v9643, %v9644
        %v9646 = vrot.slane %v9608, 5
        %v9647 = vrot.slane %v9646, 4
        %v9648 = vrot.slane %v9201, 5
        %v9649 = vsel %vm1348, %v9647, %v9648
        %v9650 = vrot.slane %v9648, 4
        %v9651 = vrot.slane %v9202, 5
        %v9652 = vsel %vm1348, %v9650, %v9651
        %v9653 = vrot.slane %v9609, 5
        %v9654 = vrot.slane %v9653, 4
        %v9655 = vrot.slane %v9204, 5
        %v9656 = vsel %vm1348, %v9654, %v9655
        %v9657 = vrot.slane %v9655, 4
        %v9658 = vrot.slane %v9205, 5
        %v9659 = vsel %vm1348, %v9657, %v9658
        %v9660 = vrot.slane %v9610, 5
        %v9661 = vrot.slane %v9660, 4
        %v9662 = vrot.slane %v9207, 5
        %v9663 = vsel %vm1348, %v9661, %v9662
        %v9664 = vrot.slane %v9662, 4
        %v9665 = vrot.slane %v9208, 5
        %v9666 = vsel %vm1348, %v9664, %v9665
        %v9667 = vrot.slane %v9611, 5
        %v9668 = vrot.slane %v9667, 4
        %v9669 = vrot.slane %v9210, 5
        %v9670 = vsel %vm1348, %v9668, %v9669
        %v9671 = vrot.slane %v9669, 4
        %v9672 = vrot.slane %v9211, 5
        %v9673 = vsel %vm1348, %v9671, %v9672
        %v9674 = vrot.slane %v9612, 5
        %v9675 = vrot.slane %v9674, 4
        %v9676 = vrot.slane %v9213, 5
        %v9677 = vsel %vm1348, %v9675, %v9676
        %v9678 = vrot.slane %v9676, 4
        %v9679 = vrot.slane %v9214, 5
        %v9680 = vsel %vm1348, %v9678, %v9679
        %v9681 = vrot.slane %v9613, 5
        %v9682 = vrot.slane %v9681, 4
        %v9683 = vrot.slane %v9216, 5
        %v9684 = vsel %vm1348, %v9682, %v9683
        %v9685 = vrot.slane %v9683, 4
        %v9686 = vrot.slane %v9217, 5
        %v9687 = vsel %vm1348, %v9685, %v9686
        %v9688 = vrot.slane %v9614, 5
        %v9689 = vrot.slane %v9688, 4
        %v9690 = vrot.slane %v9219, 5
        %v9691 = vsel %vm1348, %v9689, %v9690
        %v9692 = vrot.slane %v9690, 4
        %v9693 = vrot.slane %v9220, 5
        %v9694 = vsel %vm1348, %v9692, %v9693
        %s9695 = scalar_lea.vmem %s3, 256
        %v9696 = vld [vmem:[%s9695] sm:$0xf]
        %v9697 = vld [vmem:[%s9695 + $0x4] sm:$0xf]
        %v9698 = vld [vmem:[%s9695 + $0x8] sm:$0xf]
        %v9699 = vld [vmem:[%s9695 + $0xc] sm:$0xf]
        %v9700 = vld [vmem:[%s9695 + $0x10] sm:$0xf]
        %v9701 = vld [vmem:[%s9695 + $0x14] sm:$0xf]
        %v9702 = vld [vmem:[%s9695 + $0x18] sm:$0xf]
        %v9703 = vld [vmem:[%s9695 + $0x1c] sm:$0xf]
        %v9704 = vunpack.c.l.b16 %v9642
        %v9705 = vunpack.c.l.b16 %v9645
        %v9706 = vunpack.c.l.b16 %v9649
        %v9707 = vunpack.c.l.b16 %v9652
        %v9708 = vunpack.c.l.b16 %v9656
        %v9709 = vunpack.c.l.b16 %v9659
        %v9710 = vunpack.c.l.b16 %v9663
        %v9711 = vunpack.c.l.b16 %v9666
        %v9712 = vunpack.c.l.b16 %v9670
        %v9713 = vunpack.c.l.b16 %v9673
        %v9714 = vunpack.c.l.b16 %v9677
        %v9715 = vunpack.c.l.b16 %v9680
        %v9716 = vunpack.c.l.b16 %v9684
        %v9717 = vunpack.c.l.b16 %v9687
        %v9718 = vunpack.c.l.b16 %v9691
        %v9719 = vunpack.c.l.b16 %v9694
        %v9720 = vpack.c.b16 %v9705, %v9704
        %v9721 = vpack.c.b16 %v9707, %v9706
        %v9722 = vpack.c.b16 %v9709, %v9708
        %v9723 = vpack.c.b16 %v9711, %v9710
        %v9724 = vpack.c.b16 %v9713, %v9712
        %v9725 = vpack.c.b16 %v9715, %v9714
        %v9726 = vpack.c.b16 %v9717, %v9716
        %v9727 = vpack.c.b16 %v9719, %v9718
        %v9736 = vunpack.c.l.b16 %v9696
        %v9737 = vunpack.c.l.b16 %v9697
        %v9738 = vunpack.c.l.b16 %v9698
        %v9739 = vunpack.c.l.b16 %v9699
        %v9740 = vunpack.c.l.b16 %v9700
        %v9741 = vunpack.c.l.b16 %v9701
        %v9742 = vunpack.c.l.b16 %v9702
        %v9743 = vunpack.c.l.b16 %v9703
        %v9744 = vpack.c.b16 %v9737, %v9736
        %v9745 = vpack.c.b16 %v9739, %v9738
        %v9746 = vpack.c.b16 %v9741, %v9740
        %v9747 = vpack.c.b16 %v9743, %v9742
        %v9753 = vsel %vm775, %v9720, 0
        %v9756 = vsel %vm775, %v9721, 0
        %v9759 = vsel %vm775, %v9722, 0
        %v9762 = vsel %vm775, %v9723, 0
        %v9765 = vsel %vm775, %v9724, 0
        %v9768 = vsel %vm775, %v9725, 0
        %v9771 = vsel %vm775, %v9726, 0
        %v9774 = vsel %vm775, %v9727, 0
        %9776 = vmatprep.subr.bf16.mxu0 0
        %9777 = vmatpush1.bf16.msra.mxu0 0
        %9778 = vmatprep.subr.bf16.mxu0 0
        %9779 = vmatpush1.bf16.msra.mxu0 0
        %9780 = vmatprep.subr.bf16.mxu0 0
        %9781 = vmatpush1.bf16.msra.mxu0 0
        %9782 = vmatprep.subr.bf16.mxu0 0
        %9783 = vmatpush1.bf16.msra.mxu0 0
        %9784 = vmatprep.subr.bf16.mxu0 0
        %9785 = vmatpush1.bf16.msra.mxu0 %v9747
        %9786 = vmatprep.subr.bf16.mxu0 0
        %9787 = vmatpush1.bf16.msra.mxu0 %v9746
        %9788 = vmatprep.subr.bf16.mxu0 0
        %9789 = vmatpush1.bf16.msra.mxu0 %v9745
        %9790 = vmatprep.subr.bf16.mxu0 0
        %9791 = vmatpush1.bf16.msra.mxu0 %v9744
        %9792 = vmatprep.subr.bf16.mxu0 0
        %9793 = vmatpush2.bf16.msra.mxu0 0
        %9794 = vmatprep.subr.bf16.mxu0 0
        %9795 = vmatpush2.bf16.msra.mxu0 0
        %9796 = vmatprep.subr.bf16.mxu0 0
        %9797 = vmatpush2.bf16.msra.mxu0 0
        %9798 = vmatprep.subr.bf16.mxu0 0
        %9799 = vmatpush2.bf16.msra.mxu0 0
        %9800 = vmatprep.subr.bf16.mxu0 0
        %9801 = vmatpush2.bf16.msra.mxu0 0
        %9802 = vmatprep.subr.bf16.mxu0 0
        %9803 = vmatpush2.bf16.msra.mxu0 0
        %9804 = vmatprep.subr.bf16.mxu0 0
        %9805 = vmatpush2.bf16.msra.mxu0 0
        %9806 = vmatprep.subr.bf16.mxu0 0
        %9807 = vmatpush2.bf16.msra.mxu0 0
        %9808 = vmatprep.mubr.bf16.mxu0 0
        %9809 = vmatmul.mubr.bf16.gmra.mxu0 %v9753
        %v9810 = vpop.f32.mrf.mxu0
        %v9811 = vadd.f32 0.0, %v9810
        %v9812 = vpop.f32.mrf.mxu0
        %v9813 = vpop.f32.mrf.mxu0
        %v9814 = vadd.f32 0.0, %v9813
        %v9815 = vpop.f32.mrf.mxu0
        %9816 = vmatprep.mubr.bf16.mxu0 0
        %9817 = vmatmul.mubr.bf16.gmra.mxu0 %v9756
        %v9818 = vpop.f32.mrf.mxu0
        %v9819 = vadd.f32 0.0, %v9818
        %v9820 = vpop.f32.mrf.mxu0
        %v9821 = vpop.f32.mrf.mxu0
        %v9822 = vadd.f32 0.0, %v9821
        %v9823 = vpop.f32.mrf.mxu0
        %9824 = vmatprep.mubr.bf16.mxu0 0
        %9825 = vmatmul.mubr.bf16.gmra.mxu0 %v9759
        %v9826 = vpop.f32.mrf.mxu0
        %v9827 = vadd.f32 0.0, %v9826
        %v9828 = vpop.f32.mrf.mxu0
        %v9829 = vpop.f32.mrf.mxu0
        %v9830 = vadd.f32 0.0, %v9829
        %v9831 = vpop.f32.mrf.mxu0
        %9832 = vmatprep.mubr.bf16.mxu0 0
        %9833 = vmatmul.mubr.bf16.gmra.mxu0 %v9762
        %v9834 = vpop.f32.mrf.mxu0
        %v9835 = vadd.f32 0.0, %v9834
        %v9836 = vpop.f32.mrf.mxu0
        %v9837 = vpop.f32.mrf.mxu0
        %v9838 = vadd.f32 0.0, %v9837
        %v9839 = vpop.f32.mrf.mxu0
        %9840 = vmatprep.mubr.bf16.mxu0 0
        %9841 = vmatmul.mubr.bf16.gmra.mxu0 %v9765
        %v9842 = vpop.f32.mrf.mxu0
        %v9843 = vadd.f32 0.0, %v9842
        %v9844 = vpop.f32.mrf.mxu0
        %v9845 = vpop.f32.mrf.mxu0
        %v9846 = vadd.f32 0.0, %v9845
        %v9847 = vpop.f32.mrf.mxu0
        %9848 = vmatprep.mubr.bf16.mxu0 0
        %9849 = vmatmul.mubr.bf16.gmra.mxu0 %v9768
        %v9850 = vpop.f32.mrf.mxu0
        %v9851 = vadd.f32 0.0, %v9850
        %v9852 = vpop.f32.mrf.mxu0
        %v9853 = vpop.f32.mrf.mxu0
        %v9854 = vadd.f32 0.0, %v9853
        %v9855 = vpop.f32.mrf.mxu0
        %9856 = vmatprep.mubr.bf16.mxu0 0
        %9857 = vmatmul.mubr.bf16.gmra.mxu0 %v9771
        %v9858 = vpop.f32.mrf.mxu0
        %v9859 = vadd.f32 0.0, %v9858
        %v9860 = vpop.f32.mrf.mxu0
        %v9861 = vpop.f32.mrf.mxu0
        %v9862 = vadd.f32 0.0, %v9861
        %v9863 = vpop.f32.mrf.mxu0
        %9864 = vmatprep.mubr.bf16.mxu0 0
        %9865 = vmatmul.mubr.bf16.gmra.mxu0 %v9774
        %v9866 = vpop.f32.mrf.mxu0
        %v9867 = vadd.f32 0.0, %v9866
        %v9868 = vpop.f32.mrf.mxu0
        %v9869 = vpop.f32.mrf.mxu0
        %v9870 = vadd.f32 0.0, %v9869
        %v9871 = vpop.f32.mrf.mxu0
        %9872 = vdwg.mxu0
        %v9873 = vadd.f32 %v9591, %v9811
        %v9874 = vadd.f32 %v9592, %v9814
        %v9875 = vadd.f32 %v9593, %v9819
        %v9876 = vadd.f32 %v9594, %v9822
        %v9877 = vadd.f32 %v9595, %v9827
        %v9878 = vadd.f32 %v9596, %v9830
        %v9879 = vadd.f32 %v9597, %v9835
        %v9880 = vadd.f32 %v9598, %v9838
        %v9881 = vadd.f32 %v9599, %v9843
        %v9882 = vadd.f32 %v9600, %v9846
        %v9883 = vadd.f32 %v9601, %v9851
        %v9884 = vadd.f32 %v9602, %v9854
        %v9885 = vadd.f32 %v9603, %v9859
        %v9886 = vadd.f32 %v9604, %v9862
        %v9887 = vadd.f32 %v9605, %v9867
        %v9888 = vadd.f32 %v9606, %v9870
        %v9889 = vld [vmem:[%s4] sm:$0x1]
        %v9891 = vlaneseq
        %v9892 = vshrl.u32 %v9891, 7
        %v9893 = vsub.s32 0, %v9892
        %v9894 = vrot.slane %v9889, %v9893
        %v9896 = vadd.f32 %v9873, %v9894
        %v9897 = vadd.f32 %v9874, %v9894
        %v9898 = vadd.f32 %v9875, %v9894
        %v9899 = vadd.f32 %v9876, %v9894
        %v9900 = vadd.f32 %v9877, %v9894
        %v9901 = vadd.f32 %v9878, %v9894
        %v9902 = vadd.f32 %v9879, %v9894
        %v9903 = vadd.f32 %v9880, %v9894
        %v9904 = vadd.f32 %v9881, %v9894
        %v9905 = vadd.f32 %v9882, %v9894
        %v9906 = vadd.f32 %v9883, %v9894
        %v9907 = vadd.f32 %v9884, %v9894
        %v9908 = vadd.f32 %v9885, %v9894
        %v9909 = vadd.f32 %v9886, %v9894
        %v9910 = vadd.f32 %v9887, %v9894
        %v9911 = vadd.f32 %v9888, %v9894
        %v9912 = vmul.f32 %v9896, 0.2
        %v9913 = vmul.f32 %v9897, 0.2
        %v9914 = vmul.f32 %v9898, 0.2
        %v9915 = vmul.f32 %v9899, 0.2
        %v9916 = vmul.f32 %v9900, 0.2
        %v9917 = vmul.f32 %v9901, 0.2
        %v9918 = vmul.f32 %v9902, 0.2
        %v9919 = vmul.f32 %v9903, 0.2
        %v9920 = vmul.f32 %v9904, 0.2
        %v9921 = vmul.f32 %v9905, 0.2
        %v9922 = vmul.f32 %v9906, 0.2
        %v9923 = vmul.f32 %v9907, 0.2
        %v9924 = vmul.f32 %v9908, 0.2
        %v9925 = vmul.f32 %v9909, 0.2
        %v9926 = vmul.f32 %v9910, 0.2
        %v9927 = vmul.f32 %v9911, 0.2
        %v9928 = vmax.f32 %v9896, %v9912
        %v9929 = vmax.f32 %v9897, %v9913
        %v9930 = vmax.f32 %v9898, %v9914
        %v9931 = vmax.f32 %v9899, %v9915
        %v9932 = vmax.f32 %v9900, %v9916
        %v9933 = vmax.f32 %v9901, %v9917
        %v9934 = vmax.f32 %v9902, %v9918
        %v9935 = vmax.f32 %v9903, %v9919
        %v9936 = vmax.f32 %v9904, %v9920
        %v9937 = vmax.f32 %v9905, %v9921
        %v9938 = vmax.f32 %v9906, %v9922
        %v9939 = vmax.f32 %v9907, %v9923
        %v9940 = vmax.f32 %v9908, %v9924
        %v9941 = vmax.f32 %v9909, %v9925
        %v9942 = vmax.f32 %v9910, %v9926
        %v9943 = vmax.f32 %v9911, %v9927
        %v9944 = vld [vmem:[%s249] sm:$0xf]
        %v9945 = vld [vmem:[%s249 + $0x4] sm:$0xf]
        %v9946 = vld [vmem:[%s249 + $0xc] sm:$0xf]
        %v9947 = vld [vmem:[%s249 + $0x10] sm:$0xf]
        %v9948 = vld [vmem:[%s249 + $0x18] sm:$0xf]
        %v9949 = vld [vmem:[%s249 + $0x1c] sm:$0xf]
        %v9950 = vld [vmem:[%s249 + $0x24] sm:$0xf]
        %v9951 = vld [vmem:[%s249 + $0x28] sm:$0xf]
        %v9952 = vld [vmem:[%s249 + $0x30] sm:$0xf]
        %v9953 = vld [vmem:[%s249 + $0x34] sm:$0xf]
        %v9954 = vld [vmem:[%s249 + $0x3c] sm:$0xf]
        %v9955 = vld [vmem:[%s249 + $0x40] sm:$0xf]
        %v9956 = vld [vmem:[%s249 + $0x48] sm:$0xf]
        %v9957 = vld [vmem:[%s249 + $0x4c] sm:$0xf]
        %v9958 = vld [vmem:[%s249 + $0x54] sm:$0xf]
        %v9959 = vld [vmem:[%s249 + $0x58] sm:$0xf]
        %v9960 = vld [vmem:[%s249 + $0x60] sm:$0xf]
        %v9961 = vld [vmem:[%s249 + $0x64] sm:$0xf]
        %v9962 = vld [vmem:[%s249 + $0x6c] sm:$0xf]
        %v9963 = vld [vmem:[%s249 + $0x70] sm:$0xf]
        %v9964 = vld [vmem:[%s249 + $0x78] sm:$0xf]
        %v9965 = vld [vmem:[%s249 + $0x7c] sm:$0xf]
        %v9966 = vld [vmem:[%s249 + $0x84] sm:$0xf]
        %v9967 = vld [vmem:[%s249 + $0x88] sm:$0xf]
        %v9968 = vld [vmem:[%s249 + $0x90] sm:$0xf]
        %v9969 = vld [vmem:[%s249 + $0x94] sm:$0xf]
        %v9970 = vld [vmem:[%s249 + $0x9c] sm:$0xf]
        %v9971 = vld [vmem:[%s249 + $0xa0] sm:$0xf]
        %v9972 = vld [vmem:[%s249 + $0xa8] sm:$0xf]
        %v9973 = vld [vmem:[%s249 + $0xac] sm:$0xf]
        %v9974 = vld [vmem:[%s249 + $0xb4] sm:$0xf]
        %v9975 = vld [vmem:[%s249 + $0xb8] sm:$0xf]
        %v9976 = vld [vmem:[%s249 + $0xc0] sm:$0xf]
        %v9977 = vld [vmem:[%s249 + $0xc4] sm:$0xf]
        %v9978 = vunpack.c.l.bf16 %v9944
        %v9979 = vunpack.c.l.bf16 %v9945
        %v9980 = vunpack.c.l.bf16 %v9946
        %v9981 = vunpack.c.l.bf16 %v9947
        %v9982 = vunpack.c.l.bf16 %v9948
        %v9983 = vunpack.c.l.bf16 %v9949
        %v9984 = vunpack.c.l.bf16 %v9950
        %v9985 = vunpack.c.l.bf16 %v9951
        %v9986 = vunpack.c.l.bf16 %v9952
        %v9987 = vunpack.c.l.bf16 %v9953
        %v9988 = vunpack.c.l.bf16 %v9954
        %v9989 = vunpack.c.l.bf16 %v9955
        %v9990 = vunpack.c.l.bf16 %v9956
        %v9991 = vunpack.c.l.bf16 %v9957
        %v9992 = vunpack.c.l.bf16 %v9958
        %v9993 = vunpack.c.l.bf16 %v9959
        %v9994 = vunpack.c.l.bf16 %v9960
        %v9995 = vunpack.c.l.bf16 %v9961
        %v9996 = vunpack.c.l.bf16 %v9962
        %v9997 = vunpack.c.l.bf16 %v9963
        %v9998 = vunpack.c.l.bf16 %v9964
        %v9999 = vunpack.c.l.bf16 %v9965
        %v10000 = vunpack.c.l.bf16 %v9966
        %v10001 = vunpack.c.l.bf16 %v9967
        %v10002 = vunpack.c.l.bf16 %v9968
        %v10003 = vunpack.c.l.bf16 %v9969
        %v10004 = vunpack.c.l.bf16 %v9970
        %v10005 = vunpack.c.l.bf16 %v9971
        %v10006 = vunpack.c.l.bf16 %v9972
        %v10007 = vunpack.c.l.bf16 %v9973
        %v10008 = vunpack.c.l.bf16 %v9974
        %v10009 = vunpack.c.l.bf16 %v9975
        %v10010 = vunpack.c.l.bf16 %v9976
        %v10011 = vunpack.c.l.bf16 %v9977
        %v10012 = vld [vmem:[%s249 + $0x8] sm:$0x1]
        %v10013 = vld [vmem:[%s249 + $0x14] sm:$0x1]
        %v10014 = vld [vmem:[%s249 + $0x20] sm:$0x1]
        %v10015 = vld [vmem:[%s249 + $0x2c] sm:$0x1]
        %v10016 = vld [vmem:[%s249 + $0x38] sm:$0x1]
        %v10017 = vld [vmem:[%s249 + $0x44] sm:$0x1]
        %v10018 = vld [vmem:[%s249 + $0x50] sm:$0x1]
        %v10019 = vld [vmem:[%s249 + $0x5c] sm:$0x1]
        %v10020 = vld [vmem:[%s249 + $0x68] sm:$0x1]
        %v10021 = vld [vmem:[%s249 + $0x74] sm:$0x1]
        %v10022 = vld [vmem:[%s249 + $0x80] sm:$0x1]
        %v10023 = vld [vmem:[%s249 + $0x8c] sm:$0x1]
        %v10024 = vld [vmem:[%s249 + $0x98] sm:$0x1]
        %v10025 = vld [vmem:[%s249 + $0xa4] sm:$0x1]
        %v10026 = vld [vmem:[%s249 + $0xb0] sm:$0x1]
        %v10027 = vld [vmem:[%s249 + $0xbc] sm:$0x1]
        %v10028 = vld [vmem:[%s249 + $0xc8] sm:$0x1]
        %v10029 = vunpack.c.l.bf16 %v10012
        %v10030 = vunpack.c.l.bf16 %v10013
        %v10031 = vunpack.c.l.bf16 %v10014
        %v10032 = vunpack.c.l.bf16 %v10015
        %v10033 = vunpack.c.l.bf16 %v10016
        %v10034 = vunpack.c.l.bf16 %v10017
        %v10035 = vunpack.c.l.bf16 %v10018
        %v10036 = vunpack.c.l.bf16 %v10019
        %v10037 = vunpack.c.l.bf16 %v10020
        %v10038 = vunpack.c.l.bf16 %v10021
        %v10039 = vunpack.c.l.bf16 %v10022
        %v10040 = vunpack.c.l.bf16 %v10023
        %v10041 = vunpack.c.l.bf16 %v10024
        %v10042 = vunpack.c.l.bf16 %v10025
        %v10043 = vunpack.c.l.bf16 %v10026
        %v10044 = vunpack.c.l.bf16 %v10027
        %v10045 = vunpack.c.l.bf16 %v10028
        %v10046 = vld [vmem:[%s249] sm:$0xe]
        %v10047 = vld [vmem:[%s249 + $0xc] sm:$0xe]
        %v10048 = vld [vmem:[%s249 + $0x18] sm:$0xe]
        %v10049 = vld [vmem:[%s249 + $0x24] sm:$0xe]
        %v10050 = vld [vmem:[%s249 + $0x30] sm:$0xe]
        %v10051 = vld [vmem:[%s249 + $0x3c] sm:$0xe]
        %v10052 = vld [vmem:[%s249 + $0x48] sm:$0xe]
        %v10053 = vld [vmem:[%s249 + $0x54] sm:$0xe]
        %v10054 = vld [vmem:[%s249 + $0x60] sm:$0xe]
        %v10055 = vld [vmem:[%s249 + $0x6c] sm:$0xe]
        %v10056 = vld [vmem:[%s249 + $0x78] sm:$0xe]
        %v10057 = vld [vmem:[%s249 + $0x84] sm:$0xe]
        %v10058 = vld [vmem:[%s249 + $0x90] sm:$0xe]
        %v10059 = vld [vmem:[%s249 + $0x9c] sm:$0xe]
        %v10060 = vld [vmem:[%s249 + $0xa8] sm:$0xe]
        %v10061 = vld [vmem:[%s249 + $0xb4] sm:$0xe]
        %v10062 = vld [vmem:[%s249 + $0xc0] sm:$0xe]
        %v10063 = vunpack.c.l.bf16 %v10046
        %v10064 = vunpack.c.l.bf16 %v10047
        %v10065 = vunpack.c.l.bf16 %v10048
        %v10066 = vunpack.c.l.bf16 %v10049
        %v10067 = vunpack.c.l.bf16 %v10050
        %v10068 = vunpack.c.l.bf16 %v10051
        %v10069 = vunpack.c.l.bf16 %v10052
        %v10070 = vunpack.c.l.bf16 %v10053
        %v10071 = vunpack.c.l.bf16 %v10054
        %v10072 = vunpack.c.l.bf16 %v10055
        %v10073 = vunpack.c.l.bf16 %v10056
        %v10074 = vunpack.c.l.bf16 %v10057
        %v10075 = vunpack.c.l.bf16 %v10058
        %v10076 = vunpack.c.l.bf16 %v10059
        %v10077 = vunpack.c.l.bf16 %v10060
        %v10078 = vunpack.c.l.bf16 %v10061
        %v10079 = vunpack.c.l.bf16 %v10062
        %v10080 = vmul.f32 %v9978, 2.0
        %v10081 = vmul.f32 %v9979, 2.0
        %v10082 = vmul.f32 %v10029, 2.0
        %v10083 = vmul.f32 %v9980, 2.0
        %v10084 = vmul.f32 %v9981, 2.0
        %v10085 = vmul.f32 %v10030, 2.0
        %v10086 = vmul.f32 %v9982, 2.0
        %v10087 = vmul.f32 %v9983, 2.0
        %v10088 = vmul.f32 %v10031, 2.0
        %v10089 = vmul.f32 %v9984, 2.0
        %v10090 = vmul.f32 %v9985, 2.0
        %v10091 = vmul.f32 %v10032, 2.0
        %v10092 = vmul.f32 %v9986, 2.0
        %v10093 = vmul.f32 %v9987, 2.0
        %v10094 = vmul.f32 %v10033, 2.0
        %v10095 = vmul.f32 %v9988, 2.0
        %v10096 = vmul.f32 %v9989, 2.0
        %v10097 = vmul.f32 %v10034, 2.0
        %v10098 = vmul.f32 %v9990, 2.0
        %v10099 = vmul.f32 %v9991, 2.0
        %v10100 = vmul.f32 %v10035, 2.0
        %v10101 = vmul.f32 %v9992, 2.0
        %v10102 = vmul.f32 %v9993, 2.0
        %v10103 = vmul.f32 %v10036, 2.0
        %v10104 = vmul.f32 %v9994, 2.0
        %v10105 = vmul.f32 %v9995, 2.0
        %v10106 = vmul.f32 %v10037, 2.0
        %v10107 = vmul.f32 %v9996, 2.0
        %v10108 = vmul.f32 %v9997, 2.0
        %v10109 = vmul.f32 %v10038, 2.0
        %v10110 = vmul.f32 %v9998, 2.0
        %v10111 = vmul.f32 %v9999, 2.0
        %v10112 = vmul.f32 %v10039, 2.0
        %v10113 = vmul.f32 %v10000, 2.0
        %v10114 = vmul.f32 %v10001, 2.0
        %v10115 = vmul.f32 %v10040, 2.0
        %v10116 = vmul.f32 %v10002, 2.0
        %v10117 = vmul.f32 %v10003, 2.0
        %v10118 = vmul.f32 %v10041, 2.0
        %v10119 = vmul.f32 %v10004, 2.0
        %v10120 = vmul.f32 %v10005, 2.0
        %v10121 = vmul.f32 %v10042, 2.0
        %v10122 = vmul.f32 %v10006, 2.0
        %v10123 = vmul.f32 %v10007, 2.0
        %v10124 = vmul.f32 %v10043, 2.0
        %v10125 = vmul.f32 %v10008, 2.0
        %v10126 = vmul.f32 %v10009, 2.0
        %v10127 = vmul.f32 %v10044, 2.0
        %v10128 = vmul.f32 %v10010, 2.0
        %v10129 = vmul.f32 %v10011, 2.0
        %v10130 = vmul.f32 %v10045, 2.0
        %v10182 = vrot.slane %v10080, 1
        %v10183 = vrot.slane %v10081, 1
        %v10184 = vsel %vm6071, %v10182, %v10183
        %v10185 = vrot.slane %v10082, 1
        %v10186 = vsel %vm6071, %v10183, %v10185
        %v10187 = vrot.slane %v10083, 1
        %v10188 = vrot.slane %v10084, 1
        %v10189 = vsel %vm6071, %v10187, %v10188
        %v10190 = vrot.slane %v10085, 1
        %v10191 = vsel %vm6071, %v10188, %v10190
        %v10192 = vrot.slane %v10086, 1
        %v10193 = vrot.slane %v10087, 1
        %v10194 = vsel %vm6071, %v10192, %v10193
        %v10195 = vrot.slane %v10088, 1
        %v10196 = vsel %vm6071, %v10193, %v10195
        %v10197 = vrot.slane %v10089, 1
        %v10198 = vrot.slane %v10090, 1
        %v10199 = vsel %vm6071, %v10197, %v10198
        %v10200 = vrot.slane %v10091, 1
        %v10201 = vsel %vm6071, %v10198, %v10200
        %v10202 = vrot.slane %v10092, 1
        %v10203 = vrot.slane %v10093, 1
        %v10204 = vsel %vm6071, %v10202, %v10203
        %v10205 = vrot.slane %v10094, 1
        %v10206 = vsel %vm6071, %v10203, %v10205
        %v10207 = vrot.slane %v10095, 1
        %v10208 = vrot.slane %v10096, 1
        %v10209 = vsel %vm6071, %v10207, %v10208
        %v10210 = vrot.slane %v10097, 1
        %v10211 = vsel %vm6071, %v10208, %v10210
        %v10212 = vrot.slane %v10098, 1
        %v10213 = vrot.slane %v10099, 1
        %v10214 = vsel %vm6071, %v10212, %v10213
        %v10215 = vrot.slane %v10100, 1
        %v10216 = vsel %vm6071, %v10213, %v10215
        %v10217 = vrot.slane %v10101, 1
        %v10218 = vrot.slane %v10102, 1
        %v10219 = vsel %vm6071, %v10217, %v10218
        %v10220 = vrot.slane %v10103, 1
        %v10221 = vsel %vm6071, %v10218, %v10220
        %v10222 = vrot.slane %v10104, 1
        %v10223 = vrot.slane %v10105, 1
        %v10224 = vsel %vm6071, %v10222, %v10223
        %v10225 = vrot.slane %v10106, 1
        %v10226 = vsel %vm6071, %v10223, %v10225
        %v10227 = vrot.slane %v10107, 1
        %v10228 = vrot.slane %v10108, 1
        %v10229 = vsel %vm6071, %v10227, %v10228
        %v10230 = vrot.slane %v10109, 1
        %v10231 = vsel %vm6071, %v10228, %v10230
        %v10232 = vrot.slane %v10110, 1
        %v10233 = vrot.slane %v10111, 1
        %v10234 = vsel %vm6071, %v10232, %v10233
        %v10235 = vrot.slane %v10112, 1
        %v10236 = vsel %vm6071, %v10233, %v10235
        %v10237 = vrot.slane %v10113, 1
        %v10238 = vrot.slane %v10114, 1
        %v10239 = vsel %vm6071, %v10237, %v10238
        %v10240 = vrot.slane %v10115, 1
        %v10241 = vsel %vm6071, %v10238, %v10240
        %v10242 = vrot.slane %v10116, 1
        %v10243 = vrot.slane %v10117, 1
        %v10244 = vsel %vm6071, %v10242, %v10243
        %v10245 = vrot.slane %v10118, 1
        %v10246 = vsel %vm6071, %v10243, %v10245
        %v10247 = vrot.slane %v10119, 1
        %v10248 = vrot.slane %v10120, 1
        %v10249 = vsel %vm6071, %v10247, %v10248
        %v10250 = vrot.slane %v10121, 1
        %v10251 = vsel %vm6071, %v10248, %v10250
        %v10252 = vrot.slane %v10122, 1
        %v10253 = vrot.slane %v10123, 1
        %v10254 = vsel %vm6071, %v10252, %v10253
        %v10255 = vrot.slane %v10124, 1
        %v10256 = vsel %vm6071, %v10253, %v10255
        %v10257 = vrot.slane %v10125, 1
        %v10258 = vrot.slane %v10126, 1
        %v10259 = vsel %vm6071, %v10257, %v10258
        %v10260 = vrot.slane %v10127, 1
        %v10261 = vsel %vm6071, %v10258, %v10260
        %v10262 = vrot.slane %v10128, 1
        %v10263 = vrot.slane %v10129, 1
        %v10264 = vsel %vm6071, %v10262, %v10263
        %v10265 = vrot.slane %v10130, 1
        %v10266 = vsel %vm6071, %v10263, %v10265
        %v10301 = vadd.f32 %v9978, %v10184
        %v10302 = vadd.f32 %v9979, %v10186
        %v10303 = vadd.f32 %v9980, %v10189
        %v10304 = vadd.f32 %v9981, %v10191
        %v10305 = vadd.f32 %v9982, %v10194
        %v10306 = vadd.f32 %v9983, %v10196
        %v10307 = vadd.f32 %v9984, %v10199
        %v10308 = vadd.f32 %v9985, %v10201
        %v10309 = vadd.f32 %v9986, %v10204
        %v10310 = vadd.f32 %v9987, %v10206
        %v10311 = vadd.f32 %v9988, %v10209
        %v10312 = vadd.f32 %v9989, %v10211
        %v10313 = vadd.f32 %v9990, %v10214
        %v10314 = vadd.f32 %v9991, %v10216
        %v10315 = vadd.f32 %v9992, %v10219
        %v10316 = vadd.f32 %v9993, %v10221
        %v10317 = vadd.f32 %v9994, %v10224
        %v10318 = vadd.f32 %v9995, %v10226
        %v10319 = vadd.f32 %v9996, %v10229
        %v10320 = vadd.f32 %v9997, %v10231
        %v10321 = vadd.f32 %v9998, %v10234
        %v10322 = vadd.f32 %v9999, %v10236
        %v10323 = vadd.f32 %v10000, %v10239
        %v10324 = vadd.f32 %v10001, %v10241
        %v10325 = vadd.f32 %v10002, %v10244
        %v10326 = vadd.f32 %v10003, %v10246
        %v10327 = vadd.f32 %v10004, %v10249
        %v10328 = vadd.f32 %v10005, %v10251
        %v10329 = vadd.f32 %v10006, %v10254
        %v10330 = vadd.f32 %v10007, %v10256
        %v10331 = vadd.f32 %v10008, %v10259
        %v10332 = vadd.f32 %v10009, %v10261
        %v10333 = vadd.f32 %v10010, %v10264
        %v10334 = vadd.f32 %v10011, %v10266
        %v10386 = vrot.slane %v10063, 2
        %v10387 = vrot.slane %v9979, 2
        %v10388 = vsel %vm6288, %v10386, %v10387
        %v10389 = vrot.slane %v10029, 2
        %v10390 = vsel %vm6288, %v10387, %v10389
        %v10391 = vrot.slane %v10064, 2
        %v10392 = vrot.slane %v9981, 2
        %v10393 = vsel %vm6288, %v10391, %v10392
        %v10394 = vrot.slane %v10030, 2
        %v10395 = vsel %vm6288, %v10392, %v10394
        %v10396 = vrot.slane %v10065, 2
        %v10397 = vrot.slane %v9983, 2
        %v10398 = vsel %vm6288, %v10396, %v10397
        %v10399 = vrot.slane %v10031, 2
        %v10400 = vsel %vm6288, %v10397, %v10399
        %v10401 = vrot.slane %v10066, 2
        %v10402 = vrot.slane %v9985, 2
        %v10403 = vsel %vm6288, %v10401, %v10402
        %v10404 = vrot.slane %v10032, 2
        %v10405 = vsel %vm6288, %v10402, %v10404
        %v10406 = vrot.slane %v10067, 2
        %v10407 = vrot.slane %v9987, 2
        %v10408 = vsel %vm6288, %v10406, %v10407
        %v10409 = vrot.slane %v10033, 2
        %v10410 = vsel %vm6288, %v10407, %v10409
        %v10411 = vrot.slane %v10068, 2
        %v10412 = vrot.slane %v9989, 2
        %v10413 = vsel %vm6288, %v10411, %v10412
        %v10414 = vrot.slane %v10034, 2
        %v10415 = vsel %vm6288, %v10412, %v10414
        %v10416 = vrot.slane %v10069, 2
        %v10417 = vrot.slane %v9991, 2
        %v10418 = vsel %vm6288, %v10416, %v10417
        %v10419 = vrot.slane %v10035, 2
        %v10420 = vsel %vm6288, %v10417, %v10419
        %v10421 = vrot.slane %v10070, 2
        %v10422 = vrot.slane %v9993, 2
        %v10423 = vsel %vm6288, %v10421, %v10422
        %v10424 = vrot.slane %v10036, 2
        %v10425 = vsel %vm6288, %v10422, %v10424
        %v10426 = vrot.slane %v10071, 2
        %v10427 = vrot.slane %v9995, 2
        %v10428 = vsel %vm6288, %v10426, %v10427
        %v10429 = vrot.slane %v10037, 2
        %v10430 = vsel %vm6288, %v10427, %v10429
        %v10431 = vrot.slane %v10072, 2
        %v10432 = vrot.slane %v9997, 2
        %v10433 = vsel %vm6288, %v10431, %v10432
        %v10434 = vrot.slane %v10038, 2
        %v10435 = vsel %vm6288, %v10432, %v10434
        %v10436 = vrot.slane %v10073, 2
        %v10437 = vrot.slane %v9999, 2
        %v10438 = vsel %vm6288, %v10436, %v10437
        %v10439 = vrot.slane %v10039, 2
        %v10440 = vsel %vm6288, %v10437, %v10439
        %v10441 = vrot.slane %v10074, 2
        %v10442 = vrot.slane %v10001, 2
        %v10443 = vsel %vm6288, %v10441, %v10442
        %v10444 = vrot.slane %v10040, 2
        %v10445 = vsel %vm6288, %v10442, %v10444
        %v10446 = vrot.slane %v10075, 2
        %v10447 = vrot.slane %v10003, 2
        %v10448 = vsel %vm6288, %v10446, %v10447
        %v10449 = vrot.slane %v10041, 2
        %v10450 = vsel %vm6288, %v10447, %v10449
        %v10451 = vrot.slane %v10076, 2
        %v10452 = vrot.slane %v10005, 2
        %v10453 = vsel %vm6288, %v10451, %v10452
        %v10454 = vrot.slane %v10042, 2
        %v10455 = vsel %vm6288, %v10452, %v10454
        %v10456 = vrot.slane %v10077, 2
        %v10457 = vrot.slane %v10007, 2
        %v10458 = vsel %vm6288, %v10456, %v10457
        %v10459 = vrot.slane %v10043, 2
        %v10460 = vsel %vm6288, %v10457, %v10459
        %v10461 = vrot.slane %v10078, 2
        %v10462 = vrot.slane %v10009, 2
        %v10463 = vsel %vm6288, %v10461, %v10462
        %v10464 = vrot.slane %v10044, 2
        %v10465 = vsel %vm6288, %v10462, %v10464
        %v10466 = vrot.slane %v10079, 2
        %v10467 = vrot.slane %v10011, 2
        %v10468 = vsel %vm6288, %v10466, %v10467
        %v10469 = vrot.slane %v10045, 2
        %v10470 = vsel %vm6288, %v10467, %v10469
        %v10505 = vadd.f32 %v10301, %v10388
        %v10506 = vadd.f32 %v10302, %v10390
        %v10507 = vadd.f32 %v10303, %v10393
        %v10508 = vadd.f32 %v10304, %v10395
        %v10509 = vadd.f32 %v10305, %v10398
        %v10510 = vadd.f32 %v10306, %v10400
        %v10511 = vadd.f32 %v10307, %v10403
        %v10512 = vadd.f32 %v10308, %v10405
        %v10513 = vadd.f32 %v10309, %v10408
        %v10514 = vadd.f32 %v10310, %v10410
        %v10515 = vadd.f32 %v10311, %v10413
        %v10516 = vadd.f32 %v10312, %v10415
        %v10517 = vadd.f32 %v10313, %v10418
        %v10518 = vadd.f32 %v10314, %v10420
        %v10519 = vadd.f32 %v10315, %v10423
        %v10520 = vadd.f32 %v10316, %v10425
        %v10521 = vadd.f32 %v10317, %v10428
        %v10522 = vadd.f32 %v10318, %v10430
        %v10523 = vadd.f32 %v10319, %v10433
        %v10524 = vadd.f32 %v10320, %v10435
        %v10525 = vadd.f32 %v10321, %v10438
        %v10526 = vadd.f32 %v10322, %v10440
        %v10527 = vadd.f32 %v10323, %v10443
        %v10528 = vadd.f32 %v10324, %v10445
        %v10529 = vadd.f32 %v10325, %v10448
        %v10530 = vadd.f32 %v10326, %v10450
        %v10531 = vadd.f32 %v10327, %v10453
        %v10532 = vadd.f32 %v10328, %v10455
        %v10533 = vadd.f32 %v10329, %v10458
        %v10534 = vadd.f32 %v10330, %v10460
        %v10535 = vadd.f32 %v10331, %v10463
        %v10536 = vadd.f32 %v10332, %v10465
        %v10537 = vadd.f32 %v10333, %v10468
        %v10538 = vadd.f32 %v10334, %v10470
        %v10539 = vmul.f32 %v10507, 2.0
        %v10540 = vmul.f32 %v10508, 2.0
        %v10541 = vmul.f32 %v10511, 2.0
        %v10542 = vmul.f32 %v10512, 2.0
        %v10543 = vmul.f32 %v10515, 2.0
        %v10544 = vmul.f32 %v10516, 2.0
        %v10545 = vmul.f32 %v10519, 2.0
        %v10546 = vmul.f32 %v10520, 2.0
        %v10547 = vmul.f32 %v10523, 2.0
        %v10548 = vmul.f32 %v10524, 2.0
        %v10549 = vmul.f32 %v10527, 2.0
        %v10550 = vmul.f32 %v10528, 2.0
        %v10551 = vmul.f32 %v10531, 2.0
        %v10552 = vmul.f32 %v10532, 2.0
        %v10553 = vmul.f32 %v10535, 2.0
        %v10554 = vmul.f32 %v10536, 2.0
        %v10555 = vadd.f32 %v10505, %v10539
        %v10556 = vadd.f32 %v10506, %v10540
        %v10557 = vadd.f32 %v10509, %v10541
        %v10558 = vadd.f32 %v10510, %v10542
        %v10559 = vadd.f32 %v10513, %v10543
        %v10560 = vadd.f32 %v10514, %v10544
        %v10561 = vadd.f32 %v10517, %v10545
        %v10562 = vadd.f32 %v10518, %v10546
        %v10563 = vadd.f32 %v10521, %v10547
        %v10564 = vadd.f32 %v10522, %v10548
        %v10565 = vadd.f32 %v10525, %v10549
        %v10566 = vadd.f32 %v10526, %v10550
        %v10567 = vadd.f32 %v10529, %v10551
        %v10568 = vadd.f32 %v10530, %v10552
        %v10569 = vadd.f32 %v10533, %v10553
        %v10570 = vadd.f32 %v10534, %v10554
        %v10571 = vadd.f32 %v10555, %v10509
        %v10572 = vadd.f32 %v10556, %v10510
        %v10573 = vadd.f32 %v10557, %v10513
        %v10574 = vadd.f32 %v10558, %v10514
        %v10575 = vadd.f32 %v10559, %v10517
        %v10576 = vadd.f32 %v10560, %v10518
        %v10577 = vadd.f32 %v10561, %v10521
        %v10578 = vadd.f32 %v10562, %v10522
        %v10579 = vadd.f32 %v10563, %v10525
        %v10580 = vadd.f32 %v10564, %v10526
        %v10581 = vadd.f32 %v10565, %v10529
        %v10582 = vadd.f32 %v10566, %v10530
        %v10583 = vadd.f32 %v10567, %v10533
        %v10584 = vadd.f32 %v10568, %v10534
        %v10585 = vadd.f32 %v10569, %v10537
        %v10586 = vadd.f32 %v10570, %v10538
        %v10587 = vpack.c.bf16 %v10572, %v10571
        %v10588 = vpack.c.bf16 %v10574, %v10573
        %v10589 = vpack.c.bf16 %v10576, %v10575
        %v10590 = vpack.c.bf16 %v10578, %v10577
        %v10591 = vpack.c.bf16 %v10580, %v10579
        %v10592 = vpack.c.bf16 %v10582, %v10581
        %v10593 = vpack.c.bf16 %v10584, %v10583
        %v10594 = vpack.c.bf16 %v10586, %v10585
        %v10595 = vld [vmem:[%s5] sm:$0xf]
        %v10596 = vld [vmem:[%s5 + $0x4] sm:$0xf]
        %v10597 = vld [vmem:[%s5 + $0x8] sm:$0xf]
        %v10598 = vld [vmem:[%s5 + $0xc] sm:$0xf]
        %v10599 = vld [vmem:[%s5 + $0x10] sm:$0xf]
        %v10600 = vld [vmem:[%s5 + $0x14] sm:$0xf]
        %v10601 = vld [vmem:[%s5 + $0x18] sm:$0xf]
        %v10602 = vld [vmem:[%s5 + $0x1c] sm:$0xf]
        %v10611 = vunpack.c.l.b16 %v10595
        %v10612 = vunpack.c.l.b16 %v10596
        %v10613 = vunpack.c.l.b16 %v10597
        %v10614 = vunpack.c.l.b16 %v10598
        %v10615 = vunpack.c.l.b16 %v10599
        %v10616 = vunpack.c.l.b16 %v10600
        %v10617 = vunpack.c.l.b16 %v10601
        %v10618 = vunpack.c.l.b16 %v10602
        %v10619 = vpack.c.b16 %v10612, %v10611
        %v10620 = vpack.c.b16 %v10614, %v10613
        %v10621 = vpack.c.b16 %v10616, %v10615
        %v10622 = vpack.c.b16 %v10618, %v10617
        %v10628 = vsel %vm775, %v10587, 0
        %v10631 = vsel %vm775, %v10588, 0
        %v10634 = vsel %vm775, %v10589, 0
        %v10637 = vsel %vm775, %v10590, 0
        %v10640 = vsel %vm775, %v10591, 0
        %v10643 = vsel %vm775, %v10592, 0
        %v10646 = vsel %vm775, %v10593, 0
        %v10649 = vsel %vm775, %v10594, 0
        %10651 = vmatprep.subr.bf16.mxu0 0
        %10652 = vmatpush1.bf16.msra.mxu0 0
        %10653 = vmatprep.subr.bf16.mxu0 0
        %10654 = vmatpush1.bf16.msra.mxu0 0
        %10655 = vmatprep.subr.bf16.mxu0 0
        %10656 = vmatpush1.bf16.msra.mxu0 0
        %10657 = vmatprep.subr.bf16.mxu0 0
        %10658 = vmatpush1.bf16.msra.mxu0 0
        %10659 = vmatprep.subr.bf16.mxu0 0
        %10660 = vmatpush1.bf16.msra.mxu0 %v10622
        %10661 = vmatprep.subr.bf16.mxu0 0
        %10662 = vmatpush1.bf16.msra.mxu0 %v10621
        %10663 = vmatprep.subr.bf16.mxu0 0
        %10664 = vmatpush1.bf16.msra.mxu0 %v10620
        %10665 = vmatprep.subr.bf16.mxu0 0
        %10666 = vmatpush1.bf16.msra.mxu0 %v10619
        %10667 = vmatprep.subr.bf16.mxu0 0
        %10668 = vmatpush2.bf16.msra.mxu0 0
        %10669 = vmatprep.subr.bf16.mxu0 0
        %10670 = vmatpush2.bf16.msra.mxu0 0
        %10671 = vmatprep.subr.bf16.mxu0 0
        %10672 = vmatpush2.bf16.msra.mxu0 0
        %10673 = vmatprep.subr.bf16.mxu0 0
        %10674 = vmatpush2.bf16.msra.mxu0 0
        %10675 = vmatprep.subr.bf16.mxu0 0
        %10676 = vmatpush2.bf16.msra.mxu0 0
        %10677 = vmatprep.subr.bf16.mxu0 0
        %10678 = vmatpush2.bf16.msra.mxu0 0
        %10679 = vmatprep.subr.bf16.mxu0 0
        %10680 = vmatpush2.bf16.msra.mxu0 0
        %10681 = vmatprep.subr.bf16.mxu0 0
        %10682 = vmatpush2.bf16.msra.mxu0 0
        %10683 = vmatprep.mubr.bf16.mxu0 0
        %10684 = vmatmul.mubr.bf16.gmra.mxu0 %v10628
        %v10685 = vpop.f32.mrf.mxu0
        %v10686 = vadd.f32 0.0, %v10685
        %v10687 = vpop.f32.mrf.mxu0
        %v10688 = vpop.f32.mrf.mxu0
        %v10689 = vadd.f32 0.0, %v10688
        %v10690 = vpop.f32.mrf.mxu0
        %10691 = vmatprep.mubr.bf16.mxu0 0
        %10692 = vmatmul.mubr.bf16.gmra.mxu0 %v10631
        %v10693 = vpop.f32.mrf.mxu0
        %v10694 = vadd.f32 0.0, %v10693
        %v10695 = vpop.f32.mrf.mxu0
        %v10696 = vpop.f32.mrf.mxu0
        %v10697 = vadd.f32 0.0, %v10696
        %v10698 = vpop.f32.mrf.mxu0
        %10699 = vmatprep.mubr.bf16.mxu0 0
        %10700 = vmatmul.mubr.bf16.gmra.mxu0 %v10634
        %v10701 = vpop.f32.mrf.mxu0
        %v10702 = vadd.f32 0.0, %v10701
        %v10703 = vpop.f32.mrf.mxu0
        %v10704 = vpop.f32.mrf.mxu0
        %v10705 = vadd.f32 0.0, %v10704
        %v10706 = vpop.f32.mrf.mxu0
        %10707 = vmatprep.mubr.bf16.mxu0 0
        %10708 = vmatmul.mubr.bf16.gmra.mxu0 %v10637
        %v10709 = vpop.f32.mrf.mxu0
        %v10710 = vadd.f32 0.0, %v10709
        %v10711 = vpop.f32.mrf.mxu0
        %v10712 = vpop.f32.mrf.mxu0
        %v10713 = vadd.f32 0.0, %v10712
        %v10714 = vpop.f32.mrf.mxu0
        %10715 = vmatprep.mubr.bf16.mxu0 0
        %10716 = vmatmul.mubr.bf16.gmra.mxu0 %v10640
        %v10717 = vpop.f32.mrf.mxu0
        %v10718 = vadd.f32 0.0, %v10717
        %v10719 = vpop.f32.mrf.mxu0
        %v10720 = vpop.f32.mrf.mxu0
        %v10721 = vadd.f32 0.0, %v10720
        %v10722 = vpop.f32.mrf.mxu0
        %10723 = vmatprep.mubr.bf16.mxu0 0
        %10724 = vmatmul.mubr.bf16.gmra.mxu0 %v10643
        %v10725 = vpop.f32.mrf.mxu0
        %v10726 = vadd.f32 0.0, %v10725
        %v10727 = vpop.f32.mrf.mxu0
        %v10728 = vpop.f32.mrf.mxu0
        %v10729 = vadd.f32 0.0, %v10728
        %v10730 = vpop.f32.mrf.mxu0
        %10731 = vmatprep.mubr.bf16.mxu0 0
        %10732 = vmatmul.mubr.bf16.gmra.mxu0 %v10646
        %v10733 = vpop.f32.mrf.mxu0
        %v10734 = vadd.f32 0.0, %v10733
        %v10735 = vpop.f32.mrf.mxu0
        %v10736 = vpop.f32.mrf.mxu0
        %v10737 = vadd.f32 0.0, %v10736
        %v10738 = vpop.f32.mrf.mxu0
        %10739 = vmatprep.mubr.bf16.mxu0 0
        %10740 = vmatmul.mubr.bf16.gmra.mxu0 %v10649
        %v10741 = vpop.f32.mrf.mxu0
        %v10742 = vadd.f32 0.0, %v10741
        %v10743 = vpop.f32.mrf.mxu0
        %v10744 = vpop.f32.mrf.mxu0
        %v10745 = vadd.f32 0.0, %v10744
        %v10746 = vpop.f32.mrf.mxu0
        %10747 = vdwg.mxu0
        %v10748 = vadd.f32 %v9928, %v10686
        %v10749 = vadd.f32 %v9929, %v10689
        %v10750 = vadd.f32 %v9930, %v10694
        %v10751 = vadd.f32 %v9931, %v10697
        %v10752 = vadd.f32 %v9932, %v10702
        %v10753 = vadd.f32 %v9933, %v10705
        %v10754 = vadd.f32 %v9934, %v10710
        %v10755 = vadd.f32 %v9935, %v10713
        %v10756 = vadd.f32 %v9936, %v10718
        %v10757 = vadd.f32 %v9937, %v10721
        %v10758 = vadd.f32 %v9938, %v10726
        %v10759 = vadd.f32 %v9939, %v10729
        %v10760 = vadd.f32 %v9940, %v10734
        %v10761 = vadd.f32 %v9941, %v10737
        %v10762 = vadd.f32 %v9942, %v10742
        %v10763 = vadd.f32 %v9943, %v10745
        %10764 = vst [vmem:[#allocation4] sm:$0xff] %v10748
        %10765 = vst [vmem:[#allocation4 + $0x8] sm:$0xff] %v10749
        %10766 = vst [vmem:[#allocation4 + $0x10] sm:$0xff] %v10750
        %10767 = vst [vmem:[#allocation4 + $0x18] sm:$0xff] %v10751
        %10768 = vst [vmem:[#allocation4 + $0x20] sm:$0xff] %v10752
        %10769 = vst [vmem:[#allocation4 + $0x28] sm:$0xff] %v10753
        %10770 = vst [vmem:[#allocation4 + $0x30] sm:$0xff] %v10754
        %10771 = vst [vmem:[#allocation4 + $0x38] sm:$0xff] %v10755
        %10772 = vst [vmem:[#allocation4 + $0x40] sm:$0xff] %v10756
        %10773 = vst [vmem:[#allocation4 + $0x48] sm:$0xff] %v10757
        %10774 = vst [vmem:[#allocation4 + $0x50] sm:$0xff] %v10758
        %10775 = vst [vmem:[#allocation4 + $0x58] sm:$0xff] %v10759
        %10776 = vst [vmem:[#allocation4 + $0x60] sm:$0xff] %v10760
        %10777 = vst [vmem:[#allocation4 + $0x68] sm:$0xff] %v10761
        %10778 = vst [vmem:[#allocation4 + $0x70] sm:$0xff] %v10762
        %10779 = vst [vmem:[#allocation4 + $0x78] sm:$0xff] %v10763
        %v10780 = vld [vmem:[#allocation4] ss:$2 sm:$0xff]
        %s10781 = scalar_lea.vmem [#allocation4], 16
        %v10782 = vld [vmem:[%s10781] ss:$2 sm:$0xff]
        %s10783 = scalar_lea.vmem [#allocation4], 32
        %v10784 = vld [vmem:[%s10783] ss:$2 sm:$0xff]
        %s10785 = scalar_lea.vmem [#allocation4], 48
        %v10786 = vld [vmem:[%s10785] ss:$2 sm:$0xff]
        %s10787 = scalar_lea.vmem [#allocation4], 64
        %v10788 = vld [vmem:[%s10787] ss:$2 sm:$0xff]
        %s10789 = scalar_lea.vmem [#allocation4], 80
        %v10790 = vld [vmem:[%s10789] ss:$2 sm:$0xff]
        %s10791 = scalar_lea.vmem [#allocation4], 96
        %v10792 = vld [vmem:[%s10791] ss:$2 sm:$0xff]
        %s10793 = scalar_lea.vmem [#allocation4], 112
        %v10794 = vld [vmem:[%s10793] ss:$2 sm:$0xff]
        %10795 = vst [vmem:[%s244] sm:$0xff] %v10780
        %10796 = vst [vmem:[%s244 + $0x8] sm:$0xff] %v10782
        %10797 = vst [vmem:[%s244 + $0x10] sm:$0xff] %v10784
        %10798 = vst [vmem:[%s244 + $0x18] sm:$0xff] %v10786
        %10799 = vst [vmem:[%s244 + $0x20] sm:$0xff] %v10788
        %10800 = vst [vmem:[%s244 + $0x28] sm:$0xff] %v10790
        %10801 = vst [vmem:[%s244 + $0x30] sm:$0xff] %v10792
        %10802 = vst [vmem:[%s244 + $0x38] sm:$0xff] %v10794
        %s10803 = sand.u32 %s159, 1
        %s10804 = scalar_lea.sflag [#allocation6], %s10803
        %s10805 = sand.u32 %s159, 1
        %s10806 = smul.addr %s10805, 64
        %s10807 = scalar_lea.vmem [#allocation5], %s10806
        // Predicated region
        $region45: #{forward.1} parent=43 // pred_check
          %p10808 = pneg %p169
        $region46: #{forward.1} parent=43 // pred_check_branch
          %10810 = sbr.rel (%p10808) target = $region48
        $region47: #{forward.1} parent=43 // pred_region
          %s10812 = ssub.s32 1024, 1024
          %10813 = vsyncadd %s10804, %s10812
          %s10814 = smul.addr %s20, 8
          %s10815 = smul.addr %s10814, 128
          %s10816 = scalar_lea.hbm %s6, %s10815
          %s10817 = sshll.u32 %s10807, 4
          %s10818 = int_to_ptr.vmem [resolvable:$true] %s10817
          %10823 = dma.vmem_to_hbm [thread:$0]  %s10818, 1024, %s10816, %s10804, 128, 128, 8
        $region48: #{forward.1} parent=43 // pred_fallthru
          _
      $region44: #{forward.1} parent=5 // pred_fallthru
        _
      %p10824 = scmp.le.s32.totalorder 2, %s15
      // Predicated region
      $region49: #{forward.1} parent=5 // pred_check
        %p10825 = pneg %p10824
      $region50: #{forward.1} parent=5 // pred_check_branch
        %10827 = sbr.rel (%p10825) target = $region52
      $region51: #{forward.1} parent=5 // pred_region
        %s10828 = ssub.s32 %s15, 2
        // Predicated region
        $region53: #{forward.1} parent=51 // pred_check
          %p10829 = pneg %p175
        $region54: #{forward.1} parent=51 // pred_check_branch
          %10831 = sbr.rel (%p10829) target = $region56
        $region55: #{forward.1} parent=51 // pred_region
          %s10832 = sand.u32 %s160, 1
          %s10833 = scalar_lea.sflag [#allocation6], %s10832
          %s10834 = sand.u32 %s160, 1
          %s10835 = smul.addr %s10834, 64
          %s10836 = scalar_lea.vmem [#allocation5], %s10835
          %10837 = dma.done %s10833, 1024
        $region56: #{forward.1} parent=51 // pred_fallthru
          _
      $region52: #{forward.1} parent=5 // pred_fallthru
        _
    $region6: #{forward.1} parent=1 // loop_footer
      %s19 = sadd.s32 1, %s15
    $region7: #{forward.1} parent=1 // loop_footer_branch
      %14 = sbr.rel target = $region3
    $region8: #{forward.1} parent=1 // loop_exit
      _
    %10838 = vsyncpa [#allocation6], 1
    %s10839 = scalar_lea.sflag [#allocation6], 1
    %10840 = vsyncpa %s10839, 1

</llo_original>
